<compile_context>
chip_gen: v7x
topology: tpu7x:2x2x1
jax: 0.10.0
libtpu: 0.0.40
codegen_flags: <defaults>
</compile_context>

<pallas_src>
import functools

import jax
import jax.numpy as jnp
from jax import lax
from jax.experimental import pallas as pl
from jax.experimental.pallas import tpu as pltpu

H_REAL = 30   # torch hidden size of LSTM / GAT feature dim
H_PAD = 32    # padded, gate/lane-aligned hidden size used inside the kernels


# ----------------------------------------------------------------------------
# Shared LSTM recurrence (input projection already precomputed into gx_ref).
# PyTorch gate order: i, f, g, o.  Gate slices are 32-aligned (H_PAD = 32).
# ----------------------------------------------------------------------------
def _lstm_scan(gx_ref, whh, emit, seq_len, num_nodes, hp):
    h = jnp.zeros((num_nodes, hp), jnp.float32)
    c = jnp.zeros((num_nodes, hp), jnp.float32)
    for t in range(seq_len):                      # static, fully unrolled (T=8)
        row = t * num_nodes
        gates = gx_ref[row:row + num_nodes, :] + jnp.dot(
            h, whh, preferred_element_type=jnp.float32)
        i_g = jax.nn.sigmoid(gates[:, 0 * hp:1 * hp])
        f_g = jax.nn.sigmoid(gates[:, 1 * hp:2 * hp])
        g_g = jnp.tanh(gates[:, 2 * hp:3 * hp])
        o_g = jax.nn.sigmoid(gates[:, 3 * hp:4 * hp])
        c = f_g * c + i_g * g_g
        h = o_g * jnp.tanh(c)
        emit(row, h)


# ----------------------------------------------------------------------------
# Kernel 1: fc1 + PReLU + lstm1 + PReLU  (single launch, grid=(1,))
# ----------------------------------------------------------------------------
def _embed_lstm1_kernel(x_ref, fw_ref, fb_ref, wih_ref, whh_ref, b_ref,
                        o_ref, gx_sc, *, seq_len, num_nodes, hp, alpha):
    # fc1 + PReLU for all (t, n) rows in one MXU-filling (T*N)-row matmul.
    h0 = jnp.dot(x_ref[...], fw_ref[...],
                 preferred_element_type=jnp.float32) + fb_ref[...]
    h0 = jnp.where(h0 > 0, h0, alpha * h0)
    # Batched LSTM input projection for the whole sequence (bias folded in).
    gx_sc[...] = jnp.dot(h0, wih_ref[...],
                         preferred_element_type=jnp.float32) + b_ref[...]
    whh = whh_ref[...]

    def emit(row, h):
        o_ref[row:row + num_nodes, :] = jnp.where(h > 0, h, alpha * h)

    _lstm_scan(gx_sc, whh, emit, seq_len, num_nodes, hp)


def embed_lstm1(x2d, kp, seq_len, num_nodes, alpha):
    tn, fin = x2d.shape
    hp = H_PAD
    w_spec = lambda a: pl.BlockSpec(a.shape, lambda i: (0, 0))
    return pl.pallas_call(
        functools.partial(_embed_lstm1_kernel, seq_len=seq_len,
                          num_nodes=num_nodes, hp=hp, alpha=alpha),
        grid=(1,),
        out_shape=jax.ShapeDtypeStruct((tn, hp), jnp.float32),
        in_specs=[
            pl.BlockSpec((tn, fin), lambda i: (0, 0)),
            w_spec(kp["fc1_w"]), w_spec(kp["fc1_b"]),
            w_spec(kp["l1_wih"]), w_spec(kp["l1_whh"]), w_spec(kp["l1_b"]),
        ],
        out_specs=pl.BlockSpec((tn, hp), lambda i: (0, 0)),
        scratch_shapes=[pltpu.VMEM((tn, 4 * hp), jnp.float32)],
    )(x2d, kp["fc1_w"], kp["fc1_b"], kp["l1_wih"], kp["l1_whh"], kp["l1_b"])


# ----------------------------------------------------------------------------
# Kernel 2: GAT1 + PReLU + residual + GAT2 + PReLU + residual + MLP + PReLU.
# One grid step per time step; independent steps -> "parallel" (v7x megacore).
# Edge (j -> i) exists iff adj[j, i] != 0 or j == i (PyG add_self_loops).
# ----------------------------------------------------------------------------
def _gat_mlp_kernel(xg_ref, adj_ref,
                    g1w_ref, g1as_ref, g1ad_ref, g1hm_ref, g1b_ref,
                    g2w_ref, g2as_ref, g2ad_ref, g2b_ref,
                    m1w_ref, m1b_ref, m2w_ref, m2b_ref,
                    o_ref, *, heads, alpha):
    x = xg_ref[0]                       # (N, H_PAD), padded cols are 0
    adj = adj_ref[0]                    # (N, N)
    n = adj.shape[0]

    # Self-loop mask built once per time step, reused by both GAT layers.
    row = lax.broadcasted_iota(jnp.int32, (n, n), 0)
    col = lax.broadcasted_iota(jnp.int32, (n, n), 1)
    mask = (adj != 0.0) | (row == col)

    def prelu(v):
        return jnp.where(v > 0, v, alpha * v)

    def gat(h_in, w, a_src, a_dst, hmask, bias, nheads):
        proj = jnp.dot(h_in, w, preferred_element_type=jnp.float32)  # (N, 32)
        out = jnp.zeros_like(proj)
        for hd in range(nheads):        # heads in {1, 2}: unrolled
            # a_src/a_dst are zero-placed per head -> no width-15 lane slices.
            a_s = jnp.sum(proj * a_src[hd:hd + 1, :], axis=1, keepdims=True)
            a_d = jnp.sum(proj * a_dst[hd:hd + 1, :], axis=1, keepdims=True)
            e = a_s + jnp.transpose(a_d)             # e[j, i] = src j -> dst i
            e = jnp.where(e > 0, e, 0.2 * e)         # LeakyReLU(0.2)
            e = jnp.where(mask, e, -1e30)
            e = e - jnp.max(e, axis=0, keepdims=True)
            p = jnp.where(mask, jnp.exp(e), 0.0)
            attn = p / jnp.sum(p, axis=0, keepdims=True)   # softmax over src j
            agg = lax.dot_general(attn, proj, (((0,), (0,)), ((), ())),
                                  preferred_element_type=jnp.float32)
            if nheads > 1:
                agg = agg * hmask[hd:hd + 1, :]      # keep this head's columns
            out = out + agg
        return out + bias

    x1 = gat(x, g1w_ref[...], g1as_ref[...], g1ad_ref[...], g1hm_ref[...],
             g1b_ref[...], heads)
    x2 = prelu(x1) + x                  # dropout(p=0.2) == identity (inference)
    g2 = gat(x2, g2w_ref[...], g2as_ref[...], g2ad_ref[...], None,
             g2b_ref[...], 1)
    x2b = prelu(g2) + x2
    m = jnp.maximum(
        jnp.dot(x2b, m1w_ref[...], preferred_element_type=jnp.float32)
        + m1b_ref[...], 0.0)
    x3 = jnp.dot(m, m2w_ref[...],
                 preferred_element_type=jnp.float32) + m2b_ref[...]
    o_ref[0] = prelu(x3)


def gat_mlp_block(x_gru, adj_t, kp, heads, alpha):
    seq_len, n, hp = x_gru.shape
    w_spec = lambda a: pl.BlockSpec(a.shape, lambda t: (0, 0))
    return pl.pallas_call(
        functools.partial(_gat_mlp_kernel, heads=heads, alpha=alpha),
        grid=(seq_len,),
        out_shape=jax.ShapeDtypeStruct((seq_len, n, hp), jnp.float32),
        in_specs=[
            pl.BlockSpec((1, n, hp), lambda t: (t, 0, 0)),
            pl.BlockSpec((1, n, n), lambda t: (t, 0, 0)),
            w_spec(kp["g1_w"]), w_spec(kp["g1_as"]), w_spec(kp["g1_ad"]),
            w_spec(kp["g1_hm"]), w_spec(kp["g1_b"]),
            w_spec(kp["g2_w"]), w_spec(kp["g2_as"]), w_spec(kp["g2_ad"]),
            w_spec(kp["g2_b"]),
            w_spec(kp["mlp_w1"]), w_spec(kp["mlp_b1"]),
            w_spec(kp["mlp_w2"]), w_spec(kp["mlp_b2"]),
        ],
        out_specs=pl.BlockSpec((1, n, hp), lambda t: (t, 0, 0)),
        compiler_params=pltpu.CompilerParams(
            dimension_semantics=("parallel",)),
    )(x_gru, adj_t,
      kp["g1_w"], kp["g1_as"], kp["g1_ad"], kp["g1_hm"], kp["g1_b"],
      kp["g2_w"], kp["g2_as"], kp["g2_ad"], kp["g2_b"],
      kp["mlp_w1"], kp["mlp_b1"], kp["mlp_w2"], kp["mlp_b2"])


# ----------------------------------------------------------------------------
# Kernel 3: 2-layer lstm2 + PReLU (single launch). Input projections of both
# layers are hoisted into full-sequence batched matmuls.
# ----------------------------------------------------------------------------
def _lstm2_kernel(x_ref, wa_ih_ref, wa_hh_ref, ba_ref,
                  wb_ih_ref, wb_hh_ref, bb_ref,
                  o_ref, gx_sc, ha_sc, *, seq_len, num_nodes, hp, alpha):
    # layer 1
    gx_sc[...] = jnp.dot(x_ref[...], wa_ih_ref[...],
                         preferred_element_type=jnp.float32) + ba_ref[...]

    def emit_a(row, h):
        ha_sc[row:row + num_nodes, :] = h

    _lstm_scan(gx_sc, wa_hh_ref[...], emit_a, seq_len, num_nodes, hp)

    # layer 2 (batched input projection of layer-1 outputs)
    gx_sc[...] = jnp.dot(ha_sc[...], wb_ih_ref[...],
                         preferred_element_type=jnp.float32) + bb_ref[...]

    def emit_b(row, h):
        o_ref[row:row + num_nodes, :] = jnp.where(h > 0, h, alpha * h)

    _lstm_scan(gx_sc, wb_hh_ref[...], emit_b, seq_len, num_nodes, hp)


def lstm2(x2d, kp, seq_len, num_nodes, alpha):
    tn, hp = x2d.shape
    w_spec = lambda a: pl.BlockSpec(a.shape, lambda i: (0, 0))
    return pl.pallas_call(
        functools.partial(_lstm2_kernel, seq_len=seq_len,
                          num_nodes=num_nodes, hp=hp, alpha=alpha),
        grid=(1,),
        out_shape=jax.ShapeDtypeStruct((tn, hp), jnp.float32),
        in_specs=[
            pl.BlockSpec((tn, hp), lambda i: (0, 0)),
            w_spec(kp["l2a_wih"]), w_spec(kp["l2a_whh"]), w_spec(kp["l2a_b"]),
            w_spec(kp["l2b_wih"]), w_spec(kp["l2b_whh"]), w_spec(kp["l2b_b"]),
        ],
        out_specs=pl.BlockSpec((tn, hp), lambda i: (0, 0)),
        scratch_shapes=[pltpu.VMEM((tn, 4 * hp), jnp.float32),
                        pltpu.VMEM((tn, hp), jnp.float32)],
    )(x2d, kp["l2a_wih"], kp["l2a_whh"], kp["l2a_b"],
      kp["l2b_wih"], kp["l2b_whh"], kp["l2b_b"])


# ----------------------------------------------------------------------------
# Kernel 4: conv(3x3, pad=1) + PReLU + out1 + PReLU + out2.
# conv done as one lane-dense (P, Cin*9) @ (Cin*9, N*W) matmul; out1/out2 are
# block-diagonal per-node matmuls, so no reshape/transpose is needed in-kernel.
# ----------------------------------------------------------------------------
def _conv_head_kernel(patch_ref, cw_ref, cb_ref, o1w_ref, o1b_ref,
                      o2w_ref, o2b_ref, o_ref, *, alpha):
    def prelu(v):
        return jnp.where(v > 0, v, alpha * v)

    y = jnp.dot(cw_ref[...], patch_ref[...],
                preferred_element_type=jnp.float32) + cb_ref[...]
    y = prelu(y)                                           # (P, N*W) lane dense
    h1 = prelu(jnp.dot(y, o1w_ref[...],
                       preferred_element_type=jnp.float32) + o1b_ref[...])
    o_ref[...] = jnp.dot(h1, o2w_ref[...],
                         preferred_element_type=jnp.float32) + o2b_ref[...]


def conv_head(patches, kp, pred_seq_len, num_nodes, out_features, alpha):
    kc, nw = patches.shape
    w_spec = lambda a: pl.BlockSpec(a.shape, lambda i: (0, 0))
    return pl.pallas_call(
        functools.partial(_conv_head_kernel, alpha=alpha),
        grid=(1,),
        out_shape=jax.ShapeDtypeStruct(
            (pred_seq_len, num_nodes * out_features), jnp.float32),
        in_specs=[
            pl.BlockSpec((kc, nw), lambda i: (0, 0)),
            w_spec(kp["conv_w"]), w_spec(kp["conv_b"]),
            w_spec(kp["out1_w"]), w_spec(kp["out1_b"]),
            w_spec(kp["out2_w"]), w_spec(kp["out2_b"]),
        ],
        out_specs=pl.BlockSpec(
            (pred_seq_len, num_nodes * out_features), lambda i: (0, 0)),
    )(patches, kp["conv_w"], kp["conv_b"], kp["out1_w"], kp["out1_b"],
      kp["out2_w"], kp["out2_b"])


# ----------------------------------------------------------------------------
# Parameter init (deterministic, synthetic) and kernel-layout preparation.
# ----------------------------------------------------------------------------
def init_params(key, in_features, hidden_features, out_features,
                obs_seq_len, pred_seq_len, num_heads):
    ks = iter(jax.random.split(key, 64))

    def w(shape, scale=0.1):
        return (scale * jax.random.normal(next(ks), shape)).astype(jnp.float32)

    d1 = 30 // num_heads
    # NOTE: a single LSTM bias vector is used (== torch b_ih + b_hh summed).
    p = {
        "prelu": 0.25,                                     # nn.PReLU() default
        "fc1_w": w((in_features, 32)), "fc1_b": w((32,)),
        "l1_wih": w((32, 120)), "l1_whh": w((30, 120)), "l1_b": w((120,)),
        "g1_w": w((30, 30)), "g1_as": w((num_heads, d1)),
        "g1_ad": w((num_heads, d1)), "g1_b": w((30,)),
        "g2_w": w((30, 30)), "g2_as": w((1, 30)),
        "g2_ad": w((1, 30)), "g2_b": w((30,)),
        "mlp_w1": w((30, 64)), "mlp_b1": w((64,)),
        "mlp_w2": w((64, 30)), "mlp_b2": w((30,)),
        "l2a_wih": w((30, 120)), "l2a_whh": w((30, 120)), "l2a_b": w((120,)),
        "l2b_wih": w((30, 120)), "l2b_whh": w((30, 120)), "l2b_b": w((120,)),
        "conv_w": w((pred_seq_len, obs_seq_len, 3, 3)),
        "conv_b": w((pred_seq_len,)),
        "out1_w": w((30, hidden_features)), "out1_b": w((hidden_features,)),
        "out2_w": w((hidden_features, out_features)),
        "out2_b": w((out_features,)),
    }
    return p


def prepare_params(p, num_heads, num_nodes):
    """Zero-pad / re-layout torch-native weights into kernel-friendly shapes.
    All padding is exact (padded rows/cols are zero, so padded state stays 0)."""
    H, Hp, N = H_REAL, H_PAD, num_nodes

    def pad_gate_cols(m):
        r = m.shape[0]
        return jnp.pad(m.reshape(r, 4, H),
                       ((0, 0), (0, 0), (0, Hp - H))).reshape(r, 4 * Hp)

    def pad_lstm(wih, whh, b, pad_input):
        wih_p = pad_gate_cols(wih)
        if pad_input:
            wih_p = jnp.pad(wih_p, ((0, Hp - H), (0, 0)))
        whh_p = jnp.pad(pad_gate_cols(whh), ((0, Hp - H), (0, 0)))
        b_p = pad_gate_cols(b.reshape(1, 4 * H))
        return wih_p, whh_p, b_p

    def pad_gat(w, asrc, adst, b, heads):
        d = H // heads
        w_p = jnp.pad(w, ((0, Hp - H), (0, Hp - H)))
        as_p = jnp.zeros((heads, Hp), jnp.float32)
        ad_p = jnp.zeros((heads, Hp), jnp.float32)
        hm_p = jnp.zeros((heads, Hp), jnp.float32)
        for hd in range(heads):
            as_p = as_p.at[hd, hd * d:(hd + 1) * d].set(asrc[hd])
            ad_p = ad_p.at[hd, hd * d:(hd + 1) * d].set(adst[hd])
            hm_p = hm_p.at[hd, hd * d:(hd + 1) * d].set(1.0)
        b_p = jnp.pad(b, (0, Hp - H)).reshape(1, Hp)
        return w_p, as_p, ad_p, hm_p, b_p

    kp = {"fc1_w": p["fc1_w"], "fc1_b": p["fc1_b"].reshape(1, -1)}
    kp["l1_wih"], kp["l1_whh"], kp["l1_b"] = pad_lstm(
        p["l1_wih"], p["l1_whh"], p["l1_b"], pad_input=False)
    (kp["g1_w"], kp["g1_as"], kp["g1_ad"], kp["g1_hm"], kp["g1_b"]) = pad_gat(
        p["g1_w"], p["g1_as"], p["g1_ad"], p["g1_b"], num_heads)
    (kp["g2_w"], kp["g2_as"], kp["g2_ad"], _, kp["g2_b"]) = pad_gat(
        p["g2_w"], p["g2_as"], p["g2_ad"], p["g2_b"], 1)
    kp["mlp_w1"] = jnp.pad(p["mlp_w1"], ((0, Hp - H), (0, 0)))
    kp["mlp_b1"] = p["mlp_b1"].reshape(1, -1)
    kp["mlp_w2"] = jnp.pad(p["mlp_w2"], ((0, 0), (0, Hp - H)))
    kp["mlp_b2"] = jnp.pad(p["mlp_b2"], (0, Hp - H)).reshape(1, -1)
    kp["l2a_wih"], kp["l2a_whh"], kp["l2a_b"] = pad_lstm(
        p["l2a_wih"], p["l2a_whh"], p["l2a_b"], pad_input=True)
    kp["l2b_wih"], kp["l2b_whh"], kp["l2b_b"] = pad_lstm(
        p["l2b_wih"], p["l2b_whh"], p["l2b_b"], pad_input=True)
    # conv: (P, C, 3, 3) -> (P, 9*C) with column layout (kh*3+kw)*C + c
    cw = p["conv_w"]
    kp["conv_w"] = jnp.transpose(cw, (0, 2, 3, 1)).reshape(cw.shape[0], -1)
    kp["conv_b"] = p["conv_b"].reshape(-1, 1)
    # out1 / out2 as block-diagonal per-node matrices (out1 padded 30 -> 32 on
    # its input rows, which also kills the conv's garbage in padded columns).
    o1w_pad = jnp.pad(p["out1_w"], ((0, Hp - H), (0, 0)))        # (32, hidden)
    eye_n = jnp.eye(N, dtype=jnp.float32)
    kp["out1_w"] = jnp.kron(eye_n, o1w_pad)                      # (N*32, N*hid)
    kp["out1_b"] = jnp.tile(p["out1_b"], (N,)).reshape(1, -1)
    kp["out2_w"] = jnp.kron(eye_n, p["out2_w"])                  # (N*hid, N*out)
    kp["out2_b"] = jnp.tile(p["out2_b"], (N,)).reshape(1, -1)
    return kp


# ----------------------------------------------------------------------------
# Full forward (4 fused Pallas kernels + tiny XLA glue, all under one jit).
# ----------------------------------------------------------------------------
def forward(kp, x, adj, *, alpha, num_heads, pred_seq_len, out_features):
    B, T, N, Fin = x.shape
    assert B == 1, "reference module semantics require batch_size == 1"
    hp = H_PAD

    # K1: fc1 + PReLU + lstm1 + PReLU
    x2d = x[0].reshape(T * N, Fin)
    x_gru = embed_lstm1(x2d, kp, T, N, alpha)                    # (T*N, 32)

    # K2: gat1 + res + gat2 + res + mlp + PReLU (grid over T, parallel)
    x3 = gat_mlp_block(x_gru.reshape(T, N, hp), adj[0], kp, num_heads, alpha)

    # K3: 2-layer lstm2 + PReLU
    x4 = lstm2(x3.reshape(T * N, hp), kp, T, N, alpha)           # (T*N, 32)

    # im2col for the 3x3 conv (tiny XLA glue; padded cols 30:32 are zero so
    # the padded-width conv matches the reference width-30 conv exactly).
    x4c = x4.reshape(T, N, hp)
    xpad = jnp.pad(x4c, ((0, 0), (1, 1), (1, 1)))
    cols = [xpad[:, kh:kh + N, kw:kw + hp]
            for kh in range(3) for kw in range(3)]
    patches = jnp.stack(cols, axis=0).reshape(9 * T, N * hp)     # (9C, N*W)

    # K4: conv + PReLU + out1 + PReLU + out2
    out = conv_head(patches, kp, pred_seq_len, N, out_features, alpha)
    return out.reshape(1, pred_seq_len, N, out_features)


if __name__ == "__main__":
    # Shapes implied by the module: fc_seq=Linear(8,12) and
    # conv=Conv2d(obs_seq_len, pred_seq_len, ...) => obs_seq_len=8, pred=12.
    B, T, N, Fin = 1, 8, 16, 4
    HIDDEN, OUT, PRED, HEADS = 32, 2, 12, 2

    key = jax.random.PRNGKey(0)
    kparam, kx, ka = jax.random.split(key, 3)
    params = init_params(kparam, Fin, HIDDEN, OUT, T, PRED, HEADS)
    kernel_params = prepare_params(params, HEADS, N)

    x = jax.random.normal(kx, (B, T, N, Fin), dtype=jnp.float32)
    adj = jax.random.bernoulli(ka, 0.3, (B, T, N, N)).astype(jnp.float32)

    fwd = jax.jit(functools.partial(
        forward, alpha=float(params["prelu"]), num_heads=HEADS,
        pred_seq_len=PRED, out_features=OUT))
    y = jax.block_until_ready(fwd(kernel_params, x, adj))
    assert y.shape == (B, PRED, N, OUT), y.shape
    assert bool(jnp.all(jnp.isfinite(y)))
    print("KERNEL_OK")
</pallas_src>

<mosaic_0001>
module attributes {stable_mosaic.version = 11 : i64} {
  func.func @_gat_mlp_kernel(%arg0: i32, %arg1: memref<1x16x32xf32, #tpu.memory_space<vmem>>, %arg2: memref<1x16x16xf32, #tpu.memory_space<vmem>>, %arg3: memref<32x32xf32, #tpu.memory_space<vmem>>, %arg4: memref<2x32xf32, #tpu.memory_space<vmem>>, %arg5: memref<2x32xf32, #tpu.memory_space<vmem>>, %arg6: memref<2x32xf32, #tpu.memory_space<vmem>>, %arg7: memref<1x32xf32, #tpu.memory_space<vmem>>, %arg8: memref<32x32xf32, #tpu.memory_space<vmem>>, %arg9: memref<1x32xf32, #tpu.memory_space<vmem>>, %arg10: memref<1x32xf32, #tpu.memory_space<vmem>>, %arg11: memref<1x32xf32, #tpu.memory_space<vmem>>, %arg12: memref<32x64xf32, #tpu.memory_space<vmem>>, %arg13: memref<1x64xf32, #tpu.memory_space<vmem>>, %arg14: memref<64x32xf32, #tpu.memory_space<vmem>>, %arg15: memref<1x32xf32, #tpu.memory_space<vmem>>, %arg16: memref<1x16x32xf32, #tpu.memory_space<vmem>>) attributes {dimension_semantics = [#tpu.dimension_semantics<parallel>], iteration_bounds = array<i64: 8>, scalar_prefetch = 0 : i64, scratch_operands = 0 : i64, tpu.core_type = #tpu.core_type<tc>, window_params = [{transform_indices = @transform_0, window_bounds = array<i64: 1, 16, 32>}, {transform_indices = @transform_1, window_bounds = array<i64: 1, 16, 16>}, {pipeline_mode = #tpu.pipeline_mode<synchronous>, transform_indices = @transform_2, window_bounds = array<i64: 32, 32>}, {pipeline_mode = #tpu.pipeline_mode<synchronous>, transform_indices = @transform_3, window_bounds = array<i64: 2, 32>}, {pipeline_mode = #tpu.pipeline_mode<synchronous>, transform_indices = @transform_4, window_bounds = array<i64: 2, 32>}, {pipeline_mode = #tpu.pipeline_mode<synchronous>, transform_indices = @transform_5, window_bounds = array<i64: 2, 32>}, {pipeline_mode = #tpu.pipeline_mode<synchronous>, transform_indices = @transform_6, window_bounds = array<i64: 1, 32>}, {pipeline_mode = #tpu.pipeline_mode<synchronous>, transform_indices = @transform_7, window_bounds = array<i64: 32, 32>}, {pipeline_mode = #tpu.pipeline_mode<synchronous>, transform_indices = @transform_8, window_bounds = array<i64: 1, 32>}, {pipeline_mode = #tpu.pipeline_mode<synchronous>, transform_indices = @transform_9, window_bounds = array<i64: 1, 32>}, {pipeline_mode = #tpu.pipeline_mode<synchronous>, transform_indices = @transform_10, window_bounds = array<i64: 1, 32>}, {pipeline_mode = #tpu.pipeline_mode<synchronous>, transform_indices = @transform_11, window_bounds = array<i64: 32, 64>}, {pipeline_mode = #tpu.pipeline_mode<synchronous>, transform_indices = @transform_12, window_bounds = array<i64: 1, 64>}, {pipeline_mode = #tpu.pipeline_mode<synchronous>, transform_indices = @transform_13, window_bounds = array<i64: 64, 32>}, {pipeline_mode = #tpu.pipeline_mode<synchronous>, transform_indices = @transform_14, window_bounds = array<i64: 1, 32>}, {transform_indices = @transform_15, window_bounds = array<i64: 1, 16, 32>}]} {
    %c0 = arith.constant 0 : index
    %c0_0 = arith.constant 0 : index
    %c0_1 = arith.constant 0 : index
    %0 = vector.load %arg1[%c0, %c0_0, %c0_1] : memref<1x16x32xf32, #tpu.memory_space<vmem>>, vector<1x16x32xf32>
    %1 = vector.shape_cast %0 : vector<1x16x32xf32> to vector<16x32xf32>
    %c0_2 = arith.constant 0 : index
    %c0_3 = arith.constant 0 : index
    %c0_4 = arith.constant 0 : index
    %2 = vector.load %arg2[%c0_2, %c0_3, %c0_4] : memref<1x16x16xf32, #tpu.memory_space<vmem>>, vector<1x16x16xf32>
    %3 = vector.shape_cast %2 : vector<1x16x16xf32> to vector<16x16xf32>
    %4 = tpu.iota {dimensions = array<i32: 0>} : vector<16x16xi32>
    %5 = tpu.iota {dimensions = array<i32: 1>} : vector<16x16xi32>
    %cst = arith.constant 0.000000e+00 : f32
    %6 = vector.broadcast %cst : f32 to vector<16x16xf32>
    %7 = arith.cmpf one, %3, %6 : vector<16x16xf32>
    %8 = arith.cmpi eq, %4, %5 : vector<16x16xi32>
    %9 = arith.ori %7, %8 : vector<16x16xi1>
    %c0_5 = arith.constant 0 : index
    %c0_6 = arith.constant 0 : index
    %10 = vector.load %arg3[%c0_5, %c0_6] : memref<32x32xf32, #tpu.memory_space<vmem>>, vector<32x32xf32>
    %c0_7 = arith.constant 0 : index
    %c0_8 = arith.constant 0 : index
    %11 = vector.load %arg4[%c0_7, %c0_8] : memref<2x32xf32, #tpu.memory_space<vmem>>, vector<2x32xf32>
    %c0_9 = arith.constant 0 : index
    %c0_10 = arith.constant 0 : index
    %12 = vector.load %arg5[%c0_9, %c0_10] : memref<2x32xf32, #tpu.memory_space<vmem>>, vector<2x32xf32>
    %c0_11 = arith.constant 0 : index
    %c0_12 = arith.constant 0 : index
    %13 = vector.load %arg6[%c0_11, %c0_12] : memref<2x32xf32, #tpu.memory_space<vmem>>, vector<2x32xf32>
    %c0_13 = arith.constant 0 : index
    %c0_14 = arith.constant 0 : index
    %14 = vector.load %arg7[%c0_13, %c0_14] : memref<1x32xf32, #tpu.memory_space<vmem>>, vector<1x32xf32>
    %cst_15 = arith.constant dense<0.000000e+00> : vector<16x32xf32>
    %15 = tpu.matmul %1, %10, %cst_15 {dimension_numbers = #tpu.dot_dimension_numbers<[1], [0], [0], [1], [0, 0, 1, 1], [], []>} : vector<16x32xf32>, vector<32x32xf32>, vector<16x32xf32> -> vector<16x32xf32>
    %cst_16 = arith.constant 0.000000e+00 : f32
    %16 = vector.broadcast %cst_16 : f32 to vector<16x32xf32>
    %17 = vector.extract_strided_slice %11 {offsets = [0, 0], sizes = [1, 32], strides = [1, 1]} : vector<2x32xf32> to vector<1x32xf32>
    %18 = vector.broadcast %17 : vector<1x32xf32> to vector<16x32xf32>
    %19 = arith.mulf %15, %18 : vector<16x32xf32>
    %cst_17 = arith.constant dense<0.000000e+00> : vector<16xf32>
    %20 = vector.multi_reduction <add>, %19, %cst_17 [1] : vector<16x32xf32> to vector<16xf32>
    %21 = vector.shape_cast %20 : vector<16xf32> to vector<16x1xf32>
    %22 = vector.extract_strided_slice %12 {offsets = [0, 0], sizes = [1, 32], strides = [1, 1]} : vector<2x32xf32> to vector<1x32xf32>
    %23 = vector.broadcast %22 : vector<1x32xf32> to vector<16x32xf32>
    %24 = arith.mulf %15, %23 : vector<16x32xf32>
    %cst_18 = arith.constant dense<0.000000e+00> : vector<16xf32>
    %25 = vector.multi_reduction <add>, %24, %cst_18 [1] : vector<16x32xf32> to vector<16xf32>
    %26 = vector.shape_cast %25 : vector<16xf32> to vector<16x1xf32>
    %27 = tpu.transpose %26, [1, 0] : vector<16x1xf32> -> vector<1x16xf32>
    %28 = vector.broadcast %21 : vector<16x1xf32> to vector<16x16xf32>
    %29 = vector.broadcast %27 : vector<1x16xf32> to vector<16x16xf32>
    %30 = arith.addf %28, %29 : vector<16x16xf32>
    %cst_19 = arith.constant 0.000000e+00 : f32
    %31 = vector.broadcast %cst_19 : f32 to vector<16x16xf32>
    %32 = arith.cmpf ogt, %30, %31 : vector<16x16xf32>
    %cst_20 = arith.constant 2.000000e-01 : f32
    %33 = vector.broadcast %cst_20 : f32 to vector<16x16xf32>
    %34 = arith.mulf %33, %30 : vector<16x16xf32>
    %35 = arith.select %32, %30, %34 : vector<16x16xi1>, vector<16x16xf32>
    %cst_21 = arith.constant -1.000000e+30 : f32
    %36 = vector.broadcast %cst_21 : f32 to vector<16x16xf32>
    %37 = arith.select %9, %35, %36 : vector<16x16xi1>, vector<16x16xf32>
    %cst_22 = arith.constant dense<0xFF800000> : vector<16xf32>
    %38 = vector.multi_reduction <maximumf>, %37, %cst_22 [0] : vector<16x16xf32> to vector<16xf32>
    %39 = vector.shape_cast %38 : vector<16xf32> to vector<1x16xf32>
    %40 = vector.broadcast %39 : vector<1x16xf32> to vector<16x16xf32>
    %41 = arith.subf %37, %40 : vector<16x16xf32>
    %42 = math.exp %41 : vector<16x16xf32>
    %cst_23 = arith.constant 0.000000e+00 : f32
    %43 = vector.broadcast %cst_23 : f32 to vector<16x16xf32>
    %44 = arith.select %9, %42, %43 : vector<16x16xi1>, vector<16x16xf32>
    %cst_24 = arith.constant dense<0.000000e+00> : vector<16xf32>
    %45 = vector.multi_reduction <add>, %44, %cst_24 [0] : vector<16x16xf32> to vector<16xf32>
    %46 = vector.shape_cast %45 : vector<16xf32> to vector<1x16xf32>
    %47 = vector.broadcast %46 : vector<1x16xf32> to vector<16x16xf32>
    %48 = arith.divf %44, %47 : vector<16x16xf32>
    %cst_25 = arith.constant dense<0.000000e+00> : vector<16x32xf32>
    %49 = tpu.matmul %48, %15, %cst_25 {dimension_numbers = #tpu.dot_dimension_numbers<[0], [0], [1], [1], [0, 1, 1, 1], [], []>} : vector<16x16xf32>, vector<16x32xf32>, vector<16x32xf32> -> vector<16x32xf32>
    %50 = vector.extract_strided_slice %13 {offsets = [0, 0], sizes = [1, 32], strides = [1, 1]} : vector<2x32xf32> to vector<1x32xf32>
    %51 = vector.broadcast %50 : vector<1x32xf32> to vector<16x32xf32>
    %52 = arith.mulf %49, %51 : vector<16x32xf32>
    %53 = arith.addf %16, %52 : vector<16x32xf32>
    %54 = vector.extract_strided_slice %11 {offsets = [1, 0], sizes = [1, 32], strides = [1, 1]} : vector<2x32xf32> to vector<1x32xf32>
    %55 = vector.broadcast %54 : vector<1x32xf32> to vector<16x32xf32>
    %56 = arith.mulf %15, %55 : vector<16x32xf32>
    %cst_26 = arith.constant dense<0.000000e+00> : vector<16xf32>
    %57 = vector.multi_reduction <add>, %56, %cst_26 [1] : vector<16x32xf32> to vector<16xf32>
    %58 = vector.shape_cast %57 : vector<16xf32> to vector<16x1xf32>
    %59 = vector.extract_strided_slice %12 {offsets = [1, 0], sizes = [1, 32], strides = [1, 1]} : vector<2x32xf32> to vector<1x32xf32>
    %60 = vector.broadcast %59 : vector<1x32xf32> to vector<16x32xf32>
    %61 = arith.mulf %15, %60 : vector<16x32xf32>
    %cst_27 = arith.constant dense<0.000000e+00> : vector<16xf32>
    %62 = vector.multi_reduction <add>, %61, %cst_27 [1] : vector<16x32xf32> to vector<16xf32>
    %63 = vector.shape_cast %62 : vector<16xf32> to vector<16x1xf32>
    %64 = tpu.transpose %63, [1, 0] : vector<16x1xf32> -> vector<1x16xf32>
    %65 = vector.broadcast %58 : vector<16x1xf32> to vector<16x16xf32>
    %66 = vector.broadcast %64 : vector<1x16xf32> to vector<16x16xf32>
    %67 = arith.addf %65, %66 : vector<16x16xf32>
    %cst_28 = arith.constant 0.000000e+00 : f32
    %68 = vector.broadcast %cst_28 : f32 to vector<16x16xf32>
    %69 = arith.cmpf ogt, %67, %68 : vector<16x16xf32>
    %cst_29 = arith.constant 2.000000e-01 : f32
    %70 = vector.broadcast %cst_29 : f32 to vector<16x16xf32>
    %71 = arith.mulf %70, %67 : vector<16x16xf32>
    %72 = arith.select %69, %67, %71 : vector<16x16xi1>, vector<16x16xf32>
    %cst_30 = arith.constant -1.000000e+30 : f32
    %73 = vector.broadcast %cst_30 : f32 to vector<16x16xf32>
    %74 = arith.select %9, %72, %73 : vector<16x16xi1>, vector<16x16xf32>
    %cst_31 = arith.constant dense<0xFF800000> : vector<16xf32>
    %75 = vector.multi_reduction <maximumf>, %74, %cst_31 [0] : vector<16x16xf32> to vector<16xf32>
    %76 = vector.shape_cast %75 : vector<16xf32> to vector<1x16xf32>
    %77 = vector.broadcast %76 : vector<1x16xf32> to vector<16x16xf32>
    %78 = arith.subf %74, %77 : vector<16x16xf32>
    %79 = math.exp %78 : vector<16x16xf32>
    %cst_32 = arith.constant 0.000000e+00 : f32
    %80 = vector.broadcast %cst_32 : f32 to vector<16x16xf32>
    %81 = arith.select %9, %79, %80 : vector<16x16xi1>, vector<16x16xf32>
    %cst_33 = arith.constant dense<0.000000e+00> : vector<16xf32>
    %82 = vector.multi_reduction <add>, %81, %cst_33 [0] : vector<16x16xf32> to vector<16xf32>
    %83 = vector.shape_cast %82 : vector<16xf32> to vector<1x16xf32>
    %84 = vector.broadcast %83 : vector<1x16xf32> to vector<16x16xf32>
    %85 = arith.divf %81, %84 : vector<16x16xf32>
    %cst_34 = arith.constant dense<0.000000e+00> : vector<16x32xf32>
    %86 = tpu.matmul %85, %15, %cst_34 {dimension_numbers = #tpu.dot_dimension_numbers<[0], [0], [1], [1], [0, 1, 1, 1], [], []>} : vector<16x16xf32>, vector<16x32xf32>, vector<16x32xf32> -> vector<16x32xf32>
    %87 = vector.extract_strided_slice %13 {offsets = [1, 0], sizes = [1, 32], strides = [1, 1]} : vector<2x32xf32> to vector<1x32xf32>
    %88 = vector.broadcast %87 : vector<1x32xf32> to vector<16x32xf32>
    %89 = arith.mulf %86, %88 : vector<16x32xf32>
    %90 = arith.addf %53, %89 : vector<16x32xf32>
    %91 = vector.broadcast %14 : vector<1x32xf32> to vector<16x32xf32>
    %92 = arith.addf %90, %91 : vector<16x32xf32>
    %cst_35 = arith.constant 0.000000e+00 : f32
    %93 = vector.broadcast %cst_35 : f32 to vector<16x32xf32>
    %94 = arith.cmpf ogt, %92, %93 : vector<16x32xf32>
    %cst_36 = arith.constant 2.500000e-01 : f32
    %95 = vector.broadcast %cst_36 : f32 to vector<16x32xf32>
    %96 = arith.mulf %95, %92 : vector<16x32xf32>
    %97 = arith.select %94, %92, %96 : vector<16x32xi1>, vector<16x32xf32>
    %98 = arith.addf %97, %1 : vector<16x32xf32>
    %c0_37 = arith.constant 0 : index
    %c0_38 = arith.constant 0 : index
    %99 = vector.load %arg8[%c0_37, %c0_38] : memref<32x32xf32, #tpu.memory_space<vmem>>, vector<32x32xf32>
    %c0_39 = arith.constant 0 : index
    %c0_40 = arith.constant 0 : index
    %100 = vector.load %arg9[%c0_39, %c0_40] : memref<1x32xf32, #tpu.memory_space<vmem>>, vector<1x32xf32>
    %c0_41 = arith.constant 0 : index
    %c0_42 = arith.constant 0 : index
    %101 = vector.load %arg10[%c0_41, %c0_42] : memref<1x32xf32, #tpu.memory_space<vmem>>, vector<1x32xf32>
    %c0_43 = arith.constant 0 : index
    %c0_44 = arith.constant 0 : index
    %102 = vector.load %arg11[%c0_43, %c0_44] : memref<1x32xf32, #tpu.memory_space<vmem>>, vector<1x32xf32>
    %cst_45 = arith.constant dense<0.000000e+00> : vector<16x32xf32>
    %103 = tpu.matmul %98, %99, %cst_45 {dimension_numbers = #tpu.dot_dimension_numbers<[1], [0], [0], [1], [0, 0, 1, 1], [], []>} : vector<16x32xf32>, vector<32x32xf32>, vector<16x32xf32> -> vector<16x32xf32>
    %cst_46 = arith.constant 0.000000e+00 : f32
    %104 = vector.broadcast %cst_46 : f32 to vector<16x32xf32>
    %105 = vector.broadcast %100 : vector<1x32xf32> to vector<16x32xf32>
    %106 = arith.mulf %103, %105 : vector<16x32xf32>
    %cst_47 = arith.constant dense<0.000000e+00> : vector<16xf32>
    %107 = vector.multi_reduction <add>, %106, %cst_47 [1] : vector<16x32xf32> to vector<16xf32>
    %108 = vector.shape_cast %107 : vector<16xf32> to vector<16x1xf32>
    %109 = vector.broadcast %101 : vector<1x32xf32> to vector<16x32xf32>
    %110 = arith.mulf %103, %109 : vector<16x32xf32>
    %cst_48 = arith.constant dense<0.000000e+00> : vector<16xf32>
    %111 = vector.multi_reduction <add>, %110, %cst_48 [1] : vector<16x32xf32> to vector<16xf32>
    %112 = vector.shape_cast %111 : vector<16xf32> to vector<16x1xf32>
    %113 = tpu.transpose %112, [1, 0] : vector<16x1xf32> -> vector<1x16xf32>
    %114 = vector.broadcast %108 : vector<16x1xf32> to vector<16x16xf32>
    %115 = vector.broadcast %113 : vector<1x16xf32> to vector<16x16xf32>
    %116 = arith.addf %114, %115 : vector<16x16xf32>
    %cst_49 = arith.constant 0.000000e+00 : f32
    %117 = vector.broadcast %cst_49 : f32 to vector<16x16xf32>
    %118 = arith.cmpf ogt, %116, %117 : vector<16x16xf32>
    %cst_50 = arith.constant 2.000000e-01 : f32
    %119 = vector.broadcast %cst_50 : f32 to vector<16x16xf32>
    %120 = arith.mulf %119, %116 : vector<16x16xf32>
    %121 = arith.select %118, %116, %120 : vector<16x16xi1>, vector<16x16xf32>
    %cst_51 = arith.constant -1.000000e+30 : f32
    %122 = vector.broadcast %cst_51 : f32 to vector<16x16xf32>
    %123 = arith.select %9, %121, %122 : vector<16x16xi1>, vector<16x16xf32>
    %cst_52 = arith.constant dense<0xFF800000> : vector<16xf32>
    %124 = vector.multi_reduction <maximumf>, %123, %cst_52 [0] : vector<16x16xf32> to vector<16xf32>
    %125 = vector.shape_cast %124 : vector<16xf32> to vector<1x16xf32>
    %126 = vector.broadcast %125 : vector<1x16xf32> to vector<16x16xf32>
    %127 = arith.subf %123, %126 : vector<16x16xf32>
    %128 = math.exp %127 : vector<16x16xf32>
    %cst_53 = arith.constant 0.000000e+00 : f32
    %129 = vector.broadcast %cst_53 : f32 to vector<16x16xf32>
    %130 = arith.select %9, %128, %129 : vector<16x16xi1>, vector<16x16xf32>
    %cst_54 = arith.constant dense<0.000000e+00> : vector<16xf32>
    %131 = vector.multi_reduction <add>, %130, %cst_54 [0] : vector<16x16xf32> to vector<16xf32>
    %132 = vector.shape_cast %131 : vector<16xf32> to vector<1x16xf32>
    %133 = vector.broadcast %132 : vector<1x16xf32> to vector<16x16xf32>
    %134 = arith.divf %130, %133 : vector<16x16xf32>
    %cst_55 = arith.constant dense<0.000000e+00> : vector<16x32xf32>
    %135 = tpu.matmul %134, %103, %cst_55 {dimension_numbers = #tpu.dot_dimension_numbers<[0], [0], [1], [1], [0, 1, 1, 1], [], []>} : vector<16x16xf32>, vector<16x32xf32>, vector<16x32xf32> -> vector<16x32xf32>
    %136 = arith.addf %104, %135 : vector<16x32xf32>
    %137 = vector.broadcast %102 : vector<1x32xf32> to vector<16x32xf32>
    %138 = arith.addf %136, %137 : vector<16x32xf32>
    %cst_56 = arith.constant 0.000000e+00 : f32
    %139 = vector.broadcast %cst_56 : f32 to vector<16x32xf32>
    %140 = arith.cmpf ogt, %138, %139 : vector<16x32xf32>
    %cst_57 = arith.constant 2.500000e-01 : f32
    %141 = vector.broadcast %cst_57 : f32 to vector<16x32xf32>
    %142 = arith.mulf %141, %138 : vector<16x32xf32>
    %143 = arith.select %140, %138, %142 : vector<16x32xi1>, vector<16x32xf32>
    %144 = arith.addf %143, %98 : vector<16x32xf32>
    %c0_58 = arith.constant 0 : index
    %c0_59 = arith.constant 0 : index
    %145 = vector.load %arg12[%c0_58, %c0_59] : memref<32x64xf32, #tpu.memory_space<vmem>>, vector<32x64xf32>
    %cst_60 = arith.constant dense<0.000000e+00> : vector<16x64xf32>
    %146 = tpu.matmul %144, %145, %cst_60 {dimension_numbers = #tpu.dot_dimension_numbers<[1], [0], [0], [1], [0, 0, 1, 1], [], []>} : vector<16x32xf32>, vector<32x64xf32>, vector<16x64xf32> -> vector<16x64xf32>
    %c0_61 = arith.constant 0 : index
    %c0_62 = arith.constant 0 : index
    %147 = vector.load %arg13[%c0_61, %c0_62] : memref<1x64xf32, #tpu.memory_space<vmem>>, vector<1x64xf32>
    %148 = vector.broadcast %147 : vector<1x64xf32> to vector<16x64xf32>
    %149 = arith.addf %146, %148 : vector<16x64xf32>
    %cst_63 = arith.constant 0.000000e+00 : f32
    %150 = vector.broadcast %cst_63 : f32 to vector<16x64xf32>
    %151 = arith.maximumf %149, %150 : vector<16x64xf32>
    %c0_64 = arith.constant 0 : index
    %c0_65 = arith.constant 0 : index
    %152 = vector.load %arg14[%c0_64, %c0_65] : memref<64x32xf32, #tpu.memory_space<vmem>>, vector<64x32xf32>
    %cst_66 = arith.constant dense<0.000000e+00> : vector<16x32xf32>
    %153 = tpu.matmul %151, %152, %cst_66 {dimension_numbers = #tpu.dot_dimension_numbers<[1], [0], [0], [1], [0, 0, 1, 1], [], []>} : vector<16x64xf32>, vector<64x32xf32>, vector<16x32xf32> -> vector<16x32xf32>
    %c0_67 = arith.constant 0 : index
    %c0_68 = arith.constant 0 : index
    %154 = vector.load %arg15[%c0_67, %c0_68] : memref<1x32xf32, #tpu.memory_space<vmem>>, vector<1x32xf32>
    %155 = vector.broadcast %154 : vector<1x32xf32> to vector<16x32xf32>
    %156 = arith.addf %153, %155 : vector<16x32xf32>
    %cst_69 = arith.constant 0.000000e+00 : f32
    %157 = vector.broadcast %cst_69 : f32 to vector<16x32xf32>
    %158 = arith.cmpf ogt, %156, %157 : vector<16x32xf32>
    %cst_70 = arith.constant 2.500000e-01 : f32
    %159 = vector.broadcast %cst_70 : f32 to vector<16x32xf32>
    %160 = arith.mulf %159, %156 : vector<16x32xf32>
    %161 = arith.select %158, %156, %160 : vector<16x32xi1>, vector<16x32xf32>
    %c0_71 = arith.constant 0 : index
    %c0_72 = arith.constant 0 : index
    %c0_73 = arith.constant 0 : index
    %162 = vector.load %arg16[%c0_71, %c0_72, %c0_73] : memref<1x16x32xf32, #tpu.memory_space<vmem>>, vector<1x16x32xf32>
    %163 = vector.shape_cast %162 : vector<1x16x32xf32> to vector<16x32xf32>
    %164 = vector.shape_cast %161 : vector<16x32xf32> to vector<1x16x32xf32>
    tpu.vector_store %arg16[%c0_71, %c0_72, %c0_73], %164 {strides = array<i32>} : memref<1x16x32xf32, #tpu.memory_space<vmem>>, vector<1x16x32xf32>,
    return
  }
  func.func @transform_0(%arg0: i32) -> (i32, i32, i32) {
    %c0_i32 = arith.constant 0 : i32
    %c0_i32_0 = arith.constant 0 : i32
    %c0_i32_1 = arith.constant 0 : i32
    return %arg0, %c0_i32, %c0_i32_0 : i32, i32, i32
  }
  func.func @transform_1(%arg0: i32) -> (i32, i32, i32) {
    %c0_i32 = arith.constant 0 : i32
    %c0_i32_0 = arith.constant 0 : i32
    %c0_i32_1 = arith.constant 0 : i32
    return %arg0, %c0_i32, %c0_i32_0 : i32, i32, i32
  }
  func.func @transform_2(%arg0: i32) -> (i32, i32) {
    %c0_i32 = arith.constant 0 : i32
    %c0_i32_0 = arith.constant 0 : i32
    %c0_i32_1 = arith.constant 0 : i32
    return %c0_i32, %c0_i32_0 : i32, i32
  }
  func.func @transform_3(%arg0: i32) -> (i32, i32) {
    %c0_i32 = arith.constant 0 : i32
    %c0_i32_0 = arith.constant 0 : i32
    %c0_i32_1 = arith.constant 0 : i32
    return %c0_i32, %c0_i32_0 : i32, i32
  }
  func.func @transform_4(%arg0: i32) -> (i32, i32) {
    %c0_i32 = arith.constant 0 : i32
    %c0_i32_0 = arith.constant 0 : i32
    %c0_i32_1 = arith.constant 0 : i32
    return %c0_i32, %c0_i32_0 : i32, i32
  }
  func.func @transform_5(%arg0: i32) -> (i32, i32) {
    %c0_i32 = arith.constant 0 : i32
    %c0_i32_0 = arith.constant 0 : i32
    %c0_i32_1 = arith.constant 0 : i32
    return %c0_i32, %c0_i32_0 : i32, i32
  }
  func.func @transform_6(%arg0: i32) -> (i32, i32) {
    %c0_i32 = arith.constant 0 : i32
    %c0_i32_0 = arith.constant 0 : i32
    %c0_i32_1 = arith.constant 0 : i32
    return %c0_i32, %c0_i32_0 : i32, i32
  }
  func.func @transform_7(%arg0: i32) -> (i32, i32) {
    %c0_i32 = arith.constant 0 : i32
    %c0_i32_0 = arith.constant 0 : i32
    %c0_i32_1 = arith.constant 0 : i32
    return %c0_i32, %c0_i32_0 : i32, i32
  }
  func.func @transform_8(%arg0: i32) -> (i32, i32) {
    %c0_i32 = arith.constant 0 : i32
    %c0_i32_0 = arith.constant 0 : i32
    %c0_i32_1 = arith.constant 0 : i32
    return %c0_i32, %c0_i32_0 : i32, i32
  }
  func.func @transform_9(%arg0: i32) -> (i32, i32) {
    %c0_i32 = arith.constant 0 : i32
    %c0_i32_0 = arith.constant 0 : i32
    %c0_i32_1 = arith.constant 0 : i32
    return %c0_i32, %c0_i32_0 : i32, i32
  }
  func.func @transform_10(%arg0: i32) -> (i32, i32) {
    %c0_i32 = arith.constant 0 : i32
    %c0_i32_0 = arith.constant 0 : i32
    %c0_i32_1 = arith.constant 0 : i32
    return %c0_i32, %c0_i32_0 : i32, i32
  }
  func.func @transform_11(%arg0: i32) -> (i32, i32) {
    %c0_i32 = arith.constant 0 : i32
    %c0_i32_0 = arith.constant 0 : i32
    %c0_i32_1 = arith.constant 0 : i32
    return %c0_i32, %c0_i32_0 : i32, i32
  }
  func.func @transform_12(%arg0: i32) -> (i32, i32) {
    %c0_i32 = arith.constant 0 : i32
    %c0_i32_0 = arith.constant 0 : i32
    %c0_i32_1 = arith.constant 0 : i32
    return %c0_i32, %c0_i32_0 : i32, i32
  }
  func.func @transform_13(%arg0: i32) -> (i32, i32) {
    %c0_i32 = arith.constant 0 : i32
    %c0_i32_0 = arith.constant 0 : i32
    %c0_i32_1 = arith.constant 0 : i32
    return %c0_i32, %c0_i32_0 : i32, i32
  }
  func.func @transform_14(%arg0: i32) -> (i32, i32) {
    %c0_i32 = arith.constant 0 : i32
    %c0_i32_0 = arith.constant 0 : i32
    %c0_i32_1 = arith.constant 0 : i32
    return %c0_i32, %c0_i32_0 : i32, i32
  }
  func.func @transform_15(%arg0: i32) -> (i32, i32, i32) {
    %c0_i32 = arith.constant 0 : i32
    %c0_i32_0 = arith.constant 0 : i32
    %c0_i32_1 = arith.constant 0 : i32
    return %arg0, %c0_i32, %c0_i32_0 : i32, i32, i32
  }
}

module attributes {stable_mosaic.version = 11 : i64} {
  func.func @_embed_lstm1_kernel(%arg0: i32, %arg1: memref<128x4xf32, #tpu.memory_space<vmem>>, %arg2: memref<4x32xf32, #tpu.memory_space<vmem>>, %arg3: memref<1x32xf32, #tpu.memory_space<vmem>>, %arg4: memref<32x128xf32, #tpu.memory_space<vmem>>, %arg5: memref<32x128xf32, #tpu.memory_space<vmem>>, %arg6: memref<1x128xf32, #tpu.memory_space<vmem>>, %arg7: memref<128x32xf32, #tpu.memory_space<vmem>>, %arg8: memref<128x128xf32, #tpu.memory_space<vmem>>) attributes {dimension_semantics = [#tpu.dimension_semantics<arbitrary>], iteration_bounds = array<i64: 1>, scalar_prefetch = 0 : i64, scratch_operands = 1 : i64, tpu.core_type = #tpu.core_type<tc>, window_params = [{pipeline_mode = #tpu.pipeline_mode<synchronous>, transform_indices = @transform_0, window_bounds = array<i64: 128, 4>}, {pipeline_mode = #tpu.pipeline_mode<synchronous>, transform_indices = @transform_1, window_bounds = array<i64: 4, 32>}, {pipeline_mode = #tpu.pipeline_mode<synchronous>, transform_indices = @transform_2, window_bounds = array<i64: 1, 32>}, {pipeline_mode = #tpu.pipeline_mode<synchronous>, transform_indices = @transform_3, window_bounds = array<i64: 32, 128>}, {pipeline_mode = #tpu.pipeline_mode<synchronous>, transform_indices = @transform_4, window_bounds = array<i64: 32, 128>}, {pipeline_mode = #tpu.pipeline_mode<synchronous>, transform_indices = @transform_5, window_bounds = array<i64: 1, 128>}, {pipeline_mode = #tpu.pipeline_mode<synchronous>, transform_indices = @transform_6, window_bounds = array<i64: 128, 32>}]} {
    %c0 = arith.constant 0 : index
    %c0_0 = arith.constant 0 : index
    %0 = vector.load %arg1[%c0, %c0_0] : memref<128x4xf32, #tpu.memory_space<vmem>>, vector<128x4xf32>
    %c0_1 = arith.constant 0 : index
    %c0_2 = arith.constant 0 : index
    %1 = vector.load %arg2[%c0_1, %c0_2] : memref<4x32xf32, #tpu.memory_space<vmem>>, vector<4x32xf32>
    %cst = arith.constant dense<0.000000e+00> : vector<128x32xf32>
    %2 = tpu.matmul %0, %1, %cst {dimension_numbers = #tpu.dot_dimension_numbers<[1], [0], [0], [1], [0, 0, 1, 1], [], []>} : vector<128x4xf32>, vector<4x32xf32>, vector<128x32xf32> -> vector<128x32xf32>
    %c0_3 = arith.constant 0 : index
    %c0_4 = arith.constant 0 : index
    %3 = vector.load %arg3[%c0_3, %c0_4] : memref<1x32xf32, #tpu.memory_space<vmem>>, vector<1x32xf32>
    %4 = vector.broadcast %3 : vector<1x32xf32> to vector<128x32xf32>
    %5 = arith.addf %2, %4 : vector<128x32xf32>
    %cst_5 = arith.constant 0.000000e+00 : f32
    %6 = vector.broadcast %cst_5 : f32 to vector<128x32xf32>
    %7 = arith.cmpf ogt, %5, %6 : vector<128x32xf32>
    %cst_6 = arith.constant 2.500000e-01 : f32
    %8 = vector.broadcast %cst_6 : f32 to vector<128x32xf32>
    %9 = arith.mulf %8, %5 : vector<128x32xf32>
    %10 = arith.select %7, %5, %9 : vector<128x32xi1>, vector<128x32xf32>
    %c0_7 = arith.constant 0 : index
    %c0_8 = arith.constant 0 : index
    %11 = vector.load %arg4[%c0_7, %c0_8] : memref<32x128xf32, #tpu.memory_space<vmem>>, vector<32x128xf32>
    %cst_9 = arith.constant dense<0.000000e+00> : vector<128x128xf32>
    %12 = tpu.matmul %10, %11, %cst_9 {dimension_numbers = #tpu.dot_dimension_numbers<[1], [0], [0], [1], [0, 0, 1, 1], [], []>} : vector<128x32xf32>, vector<32x128xf32>, vector<128x128xf32> -> vector<128x128xf32>
    %c0_10 = arith.constant 0 : index
    %c0_11 = arith.constant 0 : index
    %13 = vector.load %arg6[%c0_10, %c0_11] : memref<1x128xf32, #tpu.memory_space<vmem>>, vector<1x128xf32>
    %14 = vector.broadcast %13 : vector<1x128xf32> to vector<128x128xf32>
    %15 = arith.addf %12, %14 : vector<128x128xf32>
    %c0_12 = arith.constant 0 : index
    %c0_13 = arith.constant 0 : index
    %16 = vector.load %arg8[%c0_12, %c0_13] : memref<128x128xf32, #tpu.memory_space<vmem>>, vector<128x128xf32>
    tpu.vector_store %arg8[%c0_12, %c0_13], %15 {strides = array<i32>} : memref<128x128xf32, #tpu.memory_space<vmem>>, vector<128x128xf32>,
    %c0_14 = arith.constant 0 : index
    %c0_15 = arith.constant 0 : index
    %17 = vector.load %arg5[%c0_14, %c0_15] : memref<32x128xf32, #tpu.memory_space<vmem>>, vector<32x128xf32>
    %cst_16 = arith.constant 0.000000e+00 : f32
    %18 = vector.broadcast %cst_16 : f32 to vector<16x32xf32>
    %cst_17 = arith.constant 0.000000e+00 : f32
    %19 = vector.broadcast %cst_17 : f32 to vector<16x32xf32>
    %c0_18 = arith.constant 0 : index
    %c0_19 = arith.constant 0 : index
    %20 = vector.load %arg8[%c0_18, %c0_19] : memref<128x128xf32, #tpu.memory_space<vmem>>, vector<16x128xf32>
    %cst_20 = arith.constant dense<0.000000e+00> : vector<16x128xf32>
    %21 = tpu.matmul %18, %17, %cst_20 {dimension_numbers = #tpu.dot_dimension_numbers<[1], [0], [0], [1], [0, 0, 1, 1], [], []>} : vector<16x32xf32>, vector<32x128xf32>, vector<16x128xf32> -> vector<16x128xf32>
    %22 = arith.addf %20, %21 : vector<16x128xf32>
    %23 = vector.extract_strided_slice %22 {offsets = [0, 0], sizes = [16, 32], strides = [1, 1]} : vector<16x128xf32> to vector<16x32xf32>
    %24 = arith.negf %23 : vector<16x32xf32>
    %25 = math.exp %24 : vector<16x32xf32>
    %cst_21 = arith.constant 1.000000e+00 : f32
    %26 = vector.broadcast %cst_21 : f32 to vector<16x32xf32>
    %27 = arith.addf %26, %25 : vector<16x32xf32>
    %28 = arith.divf %26, %27 : vector<16x32xf32>
    %29 = vector.extract_strided_slice %22 {offsets = [0, 32], sizes = [16, 32], strides = [1, 1]} : vector<16x128xf32> to vector<16x32xf32>
    %30 = arith.negf %29 : vector<16x32xf32>
    %31 = math.exp %30 : vector<16x32xf32>
    %cst_22 = arith.constant 1.000000e+00 : f32
    %32 = vector.broadcast %cst_22 : f32 to vector<16x32xf32>
    %33 = arith.addf %32, %31 : vector<16x32xf32>
    %34 = arith.divf %32, %33 : vector<16x32xf32>
    %35 = vector.extract_strided_slice %22 {offsets = [0, 64], sizes = [16, 32], strides = [1, 1]} : vector<16x128xf32> to vector<16x32xf32>
    %36 = math.tanh %35 : vector<16x32xf32>
    %37 = vector.extract_strided_slice %22 {offsets = [0, 96], sizes = [16, 32], strides = [1, 1]} : vector<16x128xf32> to vector<16x32xf32>
    %38 = arith.negf %37 : vector<16x32xf32>
    %39 = math.exp %38 : vector<16x32xf32>
    %cst_23 = arith.constant 1.000000e+00 : f32
    %40 = vector.broadcast %cst_23 : f32 to vector<16x32xf32>
    %41 = arith.addf %40, %39 : vector<16x32xf32>
    %42 = arith.divf %40, %41 : vector<16x32xf32>
    %43 = arith.mulf %34, %19 : vector<16x32xf32>
    %44 = arith.mulf %28, %36 : vector<16x32xf32>
    %45 = arith.addf %43, %44 : vector<16x32xf32>
    %46 = math.tanh %45 : vector<16x32xf32>
    %47 = arith.mulf %42, %46 : vector<16x32xf32>
    %cst_24 = arith.constant 0.000000e+00 : f32
    %48 = vector.broadcast %cst_24 : f32 to vector<16x32xf32>
    %49 = arith.cmpf ogt, %47, %48 : vector<16x32xf32>
    %cst_25 = arith.constant 2.500000e-01 : f32
    %50 = vector.broadcast %cst_25 : f32 to vector<16x32xf32>
    %51 = arith.mulf %50, %47 : vector<16x32xf32>
    %52 = arith.select %49, %47, %51 : vector<16x32xi1>, vector<16x32xf32>
    %c0_26 = arith.constant 0 : index
    %c0_27 = arith.constant 0 : index
    %53 = vector.load %arg7[%c0_26, %c0_27] : memref<128x32xf32, #tpu.memory_space<vmem>>, vector<16x32xf32>
    tpu.vector_store %arg7[%c0_26, %c0_27], %52 {strides = array<i32>} : memref<128x32xf32, #tpu.memory_space<vmem>>, vector<16x32xf32>,
    %c16 = arith.constant 16 : index
    %c0_28 = arith.constant 0 : index
    %54 = vector.load %arg8[%c16, %c0_28] : memref<128x128xf32, #tpu.memory_space<vmem>>, vector<16x128xf32>
    %cst_29 = arith.constant dense<0.000000e+00> : vector<16x128xf32>
    %55 = tpu.matmul %47, %17, %cst_29 {dimension_numbers = #tpu.dot_dimension_numbers<[1], [0], [0], [1], [0, 0, 1, 1], [], []>} : vector<16x32xf32>, vector<32x128xf32>, vector<16x128xf32> -> vector<16x128xf32>
    %56 = arith.addf %54, %55 : vector<16x128xf32>
    %57 = vector.extract_strided_slice %56 {offsets = [0, 0], sizes = [16, 32], strides = [1, 1]} : vector<16x128xf32> to vector<16x32xf32>
    %58 = arith.negf %57 : vector<16x32xf32>
    %59 = math.exp %58 : vector<16x32xf32>
    %cst_30 = arith.constant 1.000000e+00 : f32
    %60 = vector.broadcast %cst_30 : f32 to vector<16x32xf32>
    %61 = arith.addf %60, %59 : vector<16x32xf32>
    %62 = arith.divf %60, %61 : vector<16x32xf32>
    %63 = vector.extract_strided_slice %56 {offsets = [0, 32], sizes = [16, 32], strides = [1, 1]} : vector<16x128xf32> to vector<16x32xf32>
    %64 = arith.negf %63 : vector<16x32xf32>
    %65 = math.exp %64 : vector<16x32xf32>
    %cst_31 = arith.constant 1.000000e+00 : f32
    %66 = vector.broadcast %cst_31 : f32 to vector<16x32xf32>
    %67 = arith.addf %66, %65 : vector<16x32xf32>
    %68 = arith.divf %66, %67 : vector<16x32xf32>
    %69 = vector.extract_strided_slice %56 {offsets = [0, 64], sizes = [16, 32], strides = [1, 1]} : vector<16x128xf32> to vector<16x32xf32>
    %70 = math.tanh %69 : vector<16x32xf32>
    %71 = vector.extract_strided_slice %56 {offsets = [0, 96], sizes = [16, 32], strides = [1, 1]} : vector<16x128xf32> to vector<16x32xf32>
    %72 = arith.negf %71 : vector<16x32xf32>
    %73 = math.exp %72 : vector<16x32xf32>
    %cst_32 = arith.constant 1.000000e+00 : f32
    %74 = vector.broadcast %cst_32 : f32 to vector<16x32xf32>
    %75 = arith.addf %74, %73 : vector<16x32xf32>
    %76 = arith.divf %74, %75 : vector<16x32xf32>
    %77 = arith.mulf %68, %45 : vector<16x32xf32>
    %78 = arith.mulf %62, %70 : vector<16x32xf32>
    %79 = arith.addf %77, %78 : vector<16x32xf32>
    %80 = math.tanh %79 : vector<16x32xf32>
    %81 = arith.mulf %76, %80 : vector<16x32xf32>
    %cst_33 = arith.constant 0.000000e+00 : f32
    %82 = vector.broadcast %cst_33 : f32 to vector<16x32xf32>
    %83 = arith.cmpf ogt, %81, %82 : vector<16x32xf32>
    %cst_34 = arith.constant 2.500000e-01 : f32
    %84 = vector.broadcast %cst_34 : f32 to vector<16x32xf32>
    %85 = arith.mulf %84, %81 : vector<16x32xf32>
    %86 = arith.select %83, %81, %85 : vector<16x32xi1>, vector<16x32xf32>
    %c16_35 = arith.constant 16 : index
    %c0_36 = arith.constant 0 : index
    %87 = vector.load %arg7[%c16_35, %c0_36] : memref<128x32xf32, #tpu.memory_space<vmem>>, vector<16x32xf32>
    tpu.vector_store %arg7[%c16_35, %c0_36], %86 {strides = array<i32>} : memref<128x32xf32, #tpu.memory_space<vmem>>, vector<16x32xf32>,
    %c32 = arith.constant 32 : index
    %c0_37 = arith.constant 0 : index
    %88 = vector.load %arg8[%c32, %c0_37] : memref<128x128xf32, #tpu.memory_space<vmem>>, vector<16x128xf32>
    %cst_38 = arith.constant dense<0.000000e+00> : vector<16x128xf32>
    %89 = tpu.matmul %81, %17, %cst_38 {dimension_numbers = #tpu.dot_dimension_numbers<[1], [0], [0], [1], [0, 0, 1, 1], [], []>} : vector<16x32xf32>, vector<32x128xf32>, vector<16x128xf32> -> vector<16x128xf32>
    %90 = arith.addf %88, %89 : vector<16x128xf32>
    %91 = vector.extract_strided_slice %90 {offsets = [0, 0], sizes = [16, 32], strides = [1, 1]} : vector<16x128xf32> to vector<16x32xf32>
    %92 = arith.negf %91 : vector<16x32xf32>
    %93 = math.exp %92 : vector<16x32xf32>
    %cst_39 = arith.constant 1.000000e+00 : f32
    %94 = vector.broadcast %cst_39 : f32 to vector<16x32xf32>
    %95 = arith.addf %94, %93 : vector<16x32xf32>
    %96 = arith.divf %94, %95 : vector<16x32xf32>
    %97 = vector.extract_strided_slice %90 {offsets = [0, 32], sizes = [16, 32], strides = [1, 1]} : vector<16x128xf32> to vector<16x32xf32>
    %98 = arith.negf %97 : vector<16x32xf32>
    %99 = math.exp %98 : vector<16x32xf32>
    %cst_40 = arith.constant 1.000000e+00 : f32
    %100 = vector.broadcast %cst_40 : f32 to vector<16x32xf32>
    %101 = arith.addf %100, %99 : vector<16x32xf32>
    %102 = arith.divf %100, %101 : vector<16x32xf32>
    %103 = vector.extract_strided_slice %90 {offsets = [0, 64], sizes = [16, 32], strides = [1, 1]} : vector<16x128xf32> to vector<16x32xf32>
    %104 = math.tanh %103 : vector<16x32xf32>
    %105 = vector.extract_strided_slice %90 {offsets = [0, 96], sizes = [16, 32], strides = [1, 1]} : vector<16x128xf32> to vector<16x32xf32>
    %106 = arith.negf %105 : vector<16x32xf32>
    %107 = math.exp %106 : vector<16x32xf32>
    %cst_41 = arith.constant 1.000000e+00 : f32
    %108 = vector.broadcast %cst_41 : f32 to vector<16x32xf32>
    %109 = arith.addf %108, %107 : vector<16x32xf32>
    %110 = arith.divf %108, %109 : vector<16x32xf32>
    %111 = arith.mulf %102, %79 : vector<16x32xf32>
    %112 = arith.mulf %96, %104 : vector<16x32xf32>
    %113 = arith.addf %111, %112 : vector<16x32xf32>
    %114 = math.tanh %113 : vector<16x32xf32>
    %115 = arith.mulf %110, %114 : vector<16x32xf32>
    %cst_42 = arith.constant 0.000000e+00 : f32
    %116 = vector.broadcast %cst_42 : f32 to vector<16x32xf32>
    %117 = arith.cmpf ogt, %115, %116 : vector<16x32xf32>
    %cst_43 = arith.constant 2.500000e-01 : f32
    %118 = vector.broadcast %cst_43 : f32 to vector<16x32xf32>
    %119 = arith.mulf %118, %115 : vector<16x32xf32>
    %120 = arith.select %117, %115, %119 : vector<16x32xi1>, vector<16x32xf32>
    %c32_44 = arith.constant 32 : index
    %c0_45 = arith.constant 0 : index
    %121 = vector.load %arg7[%c32_44, %c0_45] : memref<128x32xf32, #tpu.memory_space<vmem>>, vector<16x32xf32>
    tpu.vector_store %arg7[%c32_44, %c0_45], %120 {strides = array<i32>} : memref<128x32xf32, #tpu.memory_space<vmem>>, vector<16x32xf32>,
    %c48 = arith.constant 48 : index
    %c0_46 = arith.constant 0 : index
    %122 = vector.load %arg8[%c48, %c0_46] : memref<128x128xf32, #tpu.memory_space<vmem>>, vector<16x128xf32>
    %cst_47 = arith.constant dense<0.000000e+00> : vector<16x128xf32>
    %123 = tpu.matmul %115, %17, %cst_47 {dimension_numbers = #tpu.dot_dimension_numbers<[1], [0], [0], [1], [0, 0, 1, 1], [], []>} : vector<16x32xf32>, vector<32x128xf32>, vector<16x128xf32> -> vector<16x128xf32>
    %124 = arith.addf %122, %123 : vector<16x128xf32>
    %125 = vector.extract_strided_slice %124 {offsets = [0, 0], sizes = [16, 32], strides = [1, 1]} : vector<16x128xf32> to vector<16x32xf32>
    %126 = arith.negf %125 : vector<16x32xf32>
    %127 = math.exp %126 : vector<16x32xf32>
    %cst_48 = arith.constant 1.000000e+00 : f32
    %128 = vector.broadcast %cst_48 : f32 to vector<16x32xf32>
    %129 = arith.addf %128, %127 : vector<16x32xf32>
    %130 = arith.divf %128, %129 : vector<16x32xf32>
    %131 = vector.extract_strided_slice %124 {offsets = [0, 32], sizes = [16, 32], strides = [1, 1]} : vector<16x128xf32> to vector<16x32xf32>
    %132 = arith.negf %131 : vector<16x32xf32>
    %133 = math.exp %132 : vector<16x32xf32>
    %cst_49 = arith.constant 1.000000e+00 : f32
    %134 = vector.broadcast %cst_49 : f32 to vector<16x32xf32>
    %135 = arith.addf %134, %133 : vector<16x32xf32>
    %136 = arith.divf %134, %135 : vector<16x32xf32>
    %137 = vector.extract_strided_slice %124 {offsets = [0, 64], sizes = [16, 32], strides = [1, 1]} : vector<16x128xf32> to vector<16x32xf32>
    %138 = math.tanh %137 : vector<16x32xf32>
    %139 = vector.extract_strided_slice %124 {offsets = [0, 96], sizes = [16, 32], strides = [1, 1]} : vector<16x128xf32> to vector<16x32xf32>
    %140 = arith.negf %139 : vector<16x32xf32>
    %141 = math.exp %140 : vector<16x32xf32>
    %cst_50 = arith.constant 1.000000e+00 : f32
    %142 = vector.broadcast %cst_50 : f32 to vector<16x32xf32>
    %143 = arith.addf %142, %141 : vector<16x32xf32>
    %144 = arith.divf %142, %143 : vector<16x32xf32>
    %145 = arith.mulf %136, %113 : vector<16x32xf32>
    %146 = arith.mulf %130, %138 : vector<16x32xf32>
    %147 = arith.addf %145, %146 : vector<16x32xf32>
    %148 = math.tanh %147 : vector<16x32xf32>
    %149 = arith.mulf %144, %148 : vector<16x32xf32>
    %cst_51 = arith.constant 0.000000e+00 : f32
    %150 = vector.broadcast %cst_51 : f32 to vector<16x32xf32>
    %151 = arith.cmpf ogt, %149, %150 : vector<16x32xf32>
    %cst_52 = arith.constant 2.500000e-01 : f32
    %152 = vector.broadcast %cst_52 : f32 to vector<16x32xf32>
    %153 = arith.mulf %152, %149 : vector<16x32xf32>
    %154 = arith.select %151, %149, %153 : vector<16x32xi1>, vector<16x32xf32>
    %c48_53 = arith.constant 48 : index
    %c0_54 = arith.constant 0 : index
    %155 = vector.load %arg7[%c48_53, %c0_54] : memref<128x32xf32, #tpu.memory_space<vmem>>, vector<16x32xf32>
    tpu.vector_store %arg7[%c48_53, %c0_54], %154 {strides = array<i32>} : memref<128x32xf32, #tpu.memory_space<vmem>>, vector<16x32xf32>,
    %c64 = arith.constant 64 : index
    %c0_55 = arith.constant 0 : index
    %156 = vector.load %arg8[%c64, %c0_55] : memref<128x128xf32, #tpu.memory_space<vmem>>, vector<16x128xf32>
    %cst_56 = arith.constant dense<0.000000e+00> : vector<16x128xf32>
    %157 = tpu.matmul %149, %17, %cst_56 {dimension_numbers = #tpu.dot_dimension_numbers<[1], [0], [0], [1], [0, 0, 1, 1], [], []>} : vector<16x32xf32>, vector<32x128xf32>, vector<16x128xf32> -> vector<16x128xf32>
    %158 = arith.addf %156, %157 : vector<16x128xf32>
    %159 = vector.extract_strided_slice %158 {offsets = [0, 0], sizes = [16, 32], strides = [1, 1]} : vector<16x128xf32> to vector<16x32xf32>
    %160 = arith.negf %159 : vector<16x32xf32>
    %161 = math.exp %160 : vector<16x32xf32>
    %cst_57 = arith.constant 1.000000e+00 : f32
    %162 = vector.broadcast %cst_57 : f32 to vector<16x32xf32>
    %163 = arith.addf %162, %161 : vector<16x32xf32>
    %164 = arith.divf %162, %163 : vector<16x32xf32>
    %165 = vector.extract_strided_slice %158 {offsets = [0, 32], sizes = [16, 32], strides = [1, 1]} : vector<16x128xf32> to vector<16x32xf32>
    %166 = arith.negf %165 : vector<16x32xf32>
    %167 = math.exp %166 : vector<16x32xf32>
    %cst_58 = arith.constant 1.000000e+00 : f32
    %168 = vector.broadcast %cst_58 : f32 to vector<16x32xf32>
    %169 = arith.addf %168, %167 : vector<16x32xf32>
    %170 = arith.divf %168, %169 : vector<16x32xf32>
    %171 = vector.extract_strided_slice %158 {offsets = [0, 64], sizes = [16, 32], strides = [1, 1]} : vector<16x128xf32> to vector<16x32xf32>
    %172 = math.tanh %171 : vector<16x32xf32>
    %173 = vector.extract_strided_slice %158 {offsets = [0, 96], sizes = [16, 32], strides = [1, 1]} : vector<16x128xf32> to vector<16x32xf32>
    %174 = arith.negf %173 : vector<16x32xf32>
    %175 = math.exp %174 : vector<16x32xf32>
    %cst_59 = arith.constant 1.000000e+00 : f32
    %176 = vector.broadcast %cst_59 : f32 to vector<16x32xf32>
    %177 = arith.addf %176, %175 : vector<16x32xf32>
    %178 = arith.divf %176, %177 : vector<16x32xf32>
    %179 = arith.mulf %170, %147 : vector<16x32xf32>
    %180 = arith.mulf %164, %172 : vector<16x32xf32>
    %181 = arith.addf %179, %180 : vector<16x32xf32>
    %182 = math.tanh %181 : vector<16x32xf32>
    %183 = arith.mulf %178, %182 : vector<16x32xf32>
    %cst_60 = arith.constant 0.000000e+00 : f32
    %184 = vector.broadcast %cst_60 : f32 to vector<16x32xf32>
    %185 = arith.cmpf ogt, %183, %184 : vector<16x32xf32>
    %cst_61 = arith.constant 2.500000e-01 : f32
    %186 = vector.broadcast %cst_61 : f32 to vector<16x32xf32>
    %187 = arith.mulf %186, %183 : vector<16x32xf32>
    %188 = arith.select %185, %183, %187 : vector<16x32xi1>, vector<16x32xf32>
    %c64_62 = arith.constant 64 : index
    %c0_63 = arith.constant 0 : index
    %189 = vector.load %arg7[%c64_62, %c0_63] : memref<128x32xf32, #tpu.memory_space<vmem>>, vector<16x32xf32>
    tpu.vector_store %arg7[%c64_62, %c0_63], %188 {strides = array<i32>} : memref<128x32xf32, #tpu.memory_space<vmem>>, vector<16x32xf32>,
    %c80 = arith.constant 80 : index
    %c0_64 = arith.constant 0 : index
    %190 = vector.load %arg8[%c80, %c0_64] : memref<128x128xf32, #tpu.memory_space<vmem>>, vector<16x128xf32>
    %cst_65 = arith.constant dense<0.000000e+00> : vector<16x128xf32>
    %191 = tpu.matmul %183, %17, %cst_65 {dimension_numbers = #tpu.dot_dimension_numbers<[1], [0], [0], [1], [0, 0, 1, 1], [], []>} : vector<16x32xf32>, vector<32x128xf32>, vector<16x128xf32> -> vector<16x128xf32>
    %192 = arith.addf %190, %191 : vector<16x128xf32>
    %193 = vector.extract_strided_slice %192 {offsets = [0, 0], sizes = [16, 32], strides = [1, 1]} : vector<16x128xf32> to vector<16x32xf32>
    %194 = arith.negf %193 : vector<16x32xf32>
    %195 = math.exp %194 : vector<16x32xf32>
    %cst_66 = arith.constant 1.000000e+00 : f32
    %196 = vector.broadcast %cst_66 : f32 to vector<16x32xf32>
    %197 = arith.addf %196, %195 : vector<16x32xf32>
    %198 = arith.divf %196, %197 : vector<16x32xf32>
    %199 = vector.extract_strided_slice %192 {offsets = [0, 32], sizes = [16, 32], strides = [1, 1]} : vector<16x128xf32> to vector<16x32xf32>
    %200 = arith.negf %199 : vector<16x32xf32>
    %201 = math.exp %200 : vector<16x32xf32>
    %cst_67 = arith.constant 1.000000e+00 : f32
    %202 = vector.broadcast %cst_67 : f32 to vector<16x32xf32>
    %203 = arith.addf %202, %201 : vector<16x32xf32>
    %204 = arith.divf %202, %203 : vector<16x32xf32>
    %205 = vector.extract_strided_slice %192 {offsets = [0, 64], sizes = [16, 32], strides = [1, 1]} : vector<16x128xf32> to vector<16x32xf32>
    %206 = math.tanh %205 : vector<16x32xf32>
    %207 = vector.extract_strided_slice %192 {offsets = [0, 96], sizes = [16, 32], strides = [1, 1]} : vector<16x128xf32> to vector<16x32xf32>
    %208 = arith.negf %207 : vector<16x32xf32>
    %209 = math.exp %208 : vector<16x32xf32>
    %cst_68 = arith.constant 1.000000e+00 : f32
    %210 = vector.broadcast %cst_68 : f32 to vector<16x32xf32>
    %211 = arith.addf %210, %209 : vector<16x32xf32>
    %212 = arith.divf %210, %211 : vector<16x32xf32>
    %213 = arith.mulf %204, %181 : vector<16x32xf32>
    %214 = arith.mulf %198, %206 : vector<16x32xf32>
    %215 = arith.addf %213, %214 : vector<16x32xf32>
    %216 = math.tanh %215 : vector<16x32xf32>
    %217 = arith.mulf %212, %216 : vector<16x32xf32>
    %cst_69 = arith.constant 0.000000e+00 : f32
    %218 = vector.broadcast %cst_69 : f32 to vector<16x32xf32>
    %219 = arith.cmpf ogt, %217, %218 : vector<16x32xf32>
    %cst_70 = arith.constant 2.500000e-01 : f32
    %220 = vector.broadcast %cst_70 : f32 to vector<16x32xf32>
    %221 = arith.mulf %220, %217 : vector<16x32xf32>
    %222 = arith.select %219, %217, %221 : vector<16x32xi1>, vector<16x32xf32>
    %c80_71 = arith.constant 80 : index
    %c0_72 = arith.constant 0 : index
    %223 = vector.load %arg7[%c80_71, %c0_72] : memref<128x32xf32, #tpu.memory_space<vmem>>, vector<16x32xf32>
    tpu.vector_store %arg7[%c80_71, %c0_72], %222 {strides = array<i32>} : memref<128x32xf32, #tpu.memory_space<vmem>>, vector<16x32xf32>,
    %c96 = arith.constant 96 : index
    %c0_73 = arith.constant 0 : index
    %224 = vector.load %arg8[%c96, %c0_73] : memref<128x128xf32, #tpu.memory_space<vmem>>, vector<16x128xf32>
    %cst_74 = arith.constant dense<0.000000e+00> : vector<16x128xf32>
    %225 = tpu.matmul %217, %17, %cst_74 {dimension_numbers = #tpu.dot_dimension_numbers<[1], [0], [0], [1], [0, 0, 1, 1], [], []>} : vector<16x32xf32>, vector<32x128xf32>, vector<16x128xf32> -> vector<16x128xf32>
    %226 = arith.addf %224, %225 : vector<16x128xf32>
    %227 = vector.extract_strided_slice %226 {offsets = [0, 0], sizes = [16, 32], strides = [1, 1]} : vector<16x128xf32> to vector<16x32xf32>
    %228 = arith.negf %227 : vector<16x32xf32>
    %229 = math.exp %228 : vector<16x32xf32>
    %cst_75 = arith.constant 1.000000e+00 : f32
    %230 = vector.broadcast %cst_75 : f32 to vector<16x32xf32>
    %231 = arith.addf %230, %229 : vector<16x32xf32>
    %232 = arith.divf %230, %231 : vector<16x32xf32>
    %233 = vector.extract_strided_slice %226 {offsets = [0, 32], sizes = [16, 32], strides = [1, 1]} : vector<16x128xf32> to vector<16x32xf32>
    %234 = arith.negf %233 : vector<16x32xf32>
    %235 = math.exp %234 : vector<16x32xf32>
    %cst_76 = arith.constant 1.000000e+00 : f32
    %236 = vector.broadcast %cst_76 : f32 to vector<16x32xf32>
    %237 = arith.addf %236, %235 : vector<16x32xf32>
    %238 = arith.divf %236, %237 : vector<16x32xf32>
    %239 = vector.extract_strided_slice %226 {offsets = [0, 64], sizes = [16, 32], strides = [1, 1]} : vector<16x128xf32> to vector<16x32xf32>
    %240 = math.tanh %239 : vector<16x32xf32>
    %241 = vector.extract_strided_slice %226 {offsets = [0, 96], sizes = [16, 32], strides = [1, 1]} : vector<16x128xf32> to vector<16x32xf32>
    %242 = arith.negf %241 : vector<16x32xf32>
    %243 = math.exp %242 : vector<16x32xf32>
    %cst_77 = arith.constant 1.000000e+00 : f32
    %244 = vector.broadcast %cst_77 : f32 to vector<16x32xf32>
    %245 = arith.addf %244, %243 : vector<16x32xf32>
    %246 = arith.divf %244, %245 : vector<16x32xf32>
    %247 = arith.mulf %238, %215 : vector<16x32xf32>
    %248 = arith.mulf %232, %240 : vector<16x32xf32>
    %249 = arith.addf %247, %248 : vector<16x32xf32>
    %250 = math.tanh %249 : vector<16x32xf32>
    %251 = arith.mulf %246, %250 : vector<16x32xf32>
    %cst_78 = arith.constant 0.000000e+00 : f32
    %252 = vector.broadcast %cst_78 : f32 to vector<16x32xf32>
    %253 = arith.cmpf ogt, %251, %252 : vector<16x32xf32>
    %cst_79 = arith.constant 2.500000e-01 : f32
    %254 = vector.broadcast %cst_79 : f32 to vector<16x32xf32>
    %255 = arith.mulf %254, %251 : vector<16x32xf32>
    %256 = arith.select %253, %251, %255 : vector<16x32xi1>, vector<16x32xf32>
    %c96_80 = arith.constant 96 : index
    %c0_81 = arith.constant 0 : index
    %257 = vector.load %arg7[%c96_80, %c0_81] : memref<128x32xf32, #tpu.memory_space<vmem>>, vector<16x32xf32>
    tpu.vector_store %arg7[%c96_80, %c0_81], %256 {strides = array<i32>} : memref<128x32xf32, #tpu.memory_space<vmem>>, vector<16x32xf32>,
    %c112 = arith.constant 112 : index
    %c0_82 = arith.constant 0 : index
    %258 = vector.load %arg8[%c112, %c0_82] : memref<128x128xf32, #tpu.memory_space<vmem>>, vector<16x128xf32>
    %cst_83 = arith.constant dense<0.000000e+00> : vector<16x128xf32>
    %259 = tpu.matmul %251, %17, %cst_83 {dimension_numbers = #tpu.dot_dimension_numbers<[1], [0], [0], [1], [0, 0, 1, 1], [], []>} : vector<16x32xf32>, vector<32x128xf32>, vector<16x128xf32> -> vector<16x128xf32>
    %260 = arith.addf %258, %259 : vector<16x128xf32>
    %261 = vector.extract_strided_slice %260 {offsets = [0, 0], sizes = [16, 32], strides = [1, 1]} : vector<16x128xf32> to vector<16x32xf32>
    %262 = arith.negf %261 : vector<16x32xf32>
    %263 = math.exp %262 : vector<16x32xf32>
    %cst_84 = arith.constant 1.000000e+00 : f32
    %264 = vector.broadcast %cst_84 : f32 to vector<16x32xf32>
    %265 = arith.addf %264, %263 : vector<16x32xf32>
    %266 = arith.divf %264, %265 : vector<16x32xf32>
    %267 = vector.extract_strided_slice %260 {offsets = [0, 32], sizes = [16, 32], strides = [1, 1]} : vector<16x128xf32> to vector<16x32xf32>
    %268 = arith.negf %267 : vector<16x32xf32>
    %269 = math.exp %268 : vector<16x32xf32>
    %cst_85 = arith.constant 1.000000e+00 : f32
    %270 = vector.broadcast %cst_85 : f32 to vector<16x32xf32>
    %271 = arith.addf %270, %269 : vector<16x32xf32>
    %272 = arith.divf %270, %271 : vector<16x32xf32>
    %273 = vector.extract_strided_slice %260 {offsets = [0, 64], sizes = [16, 32], strides = [1, 1]} : vector<16x128xf32> to vector<16x32xf32>
    %274 = math.tanh %273 : vector<16x32xf32>
    %275 = vector.extract_strided_slice %260 {offsets = [0, 96], sizes = [16, 32], strides = [1, 1]} : vector<16x128xf32> to vector<16x32xf32>
    %276 = arith.negf %275 : vector<16x32xf32>
    %277 = math.exp %276 : vector<16x32xf32>
    %cst_86 = arith.constant 1.000000e+00 : f32
    %278 = vector.broadcast %cst_86 : f32 to vector<16x32xf32>
    %279 = arith.addf %278, %277 : vector<16x32xf32>
    %280 = arith.divf %278, %279 : vector<16x32xf32>
    %281 = arith.mulf %272, %249 : vector<16x32xf32>
    %282 = arith.mulf %266, %274 : vector<16x32xf32>
    %283 = arith.addf %281, %282 : vector<16x32xf32>
    %284 = math.tanh %283 : vector<16x32xf32>
    %285 = arith.mulf %280, %284 : vector<16x32xf32>
    %cst_87 = arith.constant 0.000000e+00 : f32
    %286 = vector.broadcast %cst_87 : f32 to vector<16x32xf32>
    %287 = arith.cmpf ogt, %285, %286 : vector<16x32xf32>
    %cst_88 = arith.constant 2.500000e-01 : f32
    %288 = vector.broadcast %cst_88 : f32 to vector<16x32xf32>
    %289 = arith.mulf %288, %285 : vector<16x32xf32>
    %290 = arith.select %287, %285, %289 : vector<16x32xi1>, vector<16x32xf32>
    %c112_89 = arith.constant 112 : index
    %c0_90 = arith.constant 0 : index
    %291 = vector.load %arg7[%c112_89, %c0_90] : memref<128x32xf32, #tpu.memory_space<vmem>>, vector<16x32xf32>
    tpu.vector_store %arg7[%c112_89, %c0_90], %290 {strides = array<i32>} : memref<128x32xf32, #tpu.memory_space<vmem>>, vector<16x32xf32>,
    return
  }
  func.func @transform_0(%arg0: i32) -> (i32, i32) {
    %c0_i32 = arith.constant 0 : i32
    %c0_i32_0 = arith.constant 0 : i32
    %c0_i32_1 = arith.constant 0 : i32
    return %c0_i32, %c0_i32_0 : i32, i32
  }
  func.func @transform_1(%arg0: i32) -> (i32, i32) {
    %c0_i32 = arith.constant 0 : i32
    %c0_i32_0 = arith.constant 0 : i32
    %c0_i32_1 = arith.constant 0 : i32
    return %c0_i32, %c0_i32_0 : i32, i32
  }
  func.func @transform_2(%arg0: i32) -> (i32, i32) {
    %c0_i32 = arith.constant 0 : i32
    %c0_i32_0 = arith.constant 0 : i32
    %c0_i32_1 = arith.constant 0 : i32
    return %c0_i32, %c0_i32_0 : i32, i32
  }
  func.func @transform_3(%arg0: i32) -> (i32, i32) {
    %c0_i32 = arith.constant 0 : i32
    %c0_i32_0 = arith.constant 0 : i32
    %c0_i32_1 = arith.constant 0 : i32
    return %c0_i32, %c0_i32_0 : i32, i32
  }
  func.func @transform_4(%arg0: i32) -> (i32, i32) {
    %c0_i32 = arith.constant 0 : i32
    %c0_i32_0 = arith.constant 0 : i32
    %c0_i32_1 = arith.constant 0 : i32
    return %c0_i32, %c0_i32_0 : i32, i32
  }
  func.func @transform_5(%arg0: i32) -> (i32, i32) {
    %c0_i32 = arith.constant 0 : i32
    %c0_i32_0 = arith.constant 0 : i32
    %c0_i32_1 = arith.constant 0 : i32
    return %c0_i32, %c0_i32_0 : i32, i32
  }
  func.func @transform_6(%arg0: i32) -> (i32, i32) {
    %c0_i32 = arith.constant 0 : i32
    %c0_i32_0 = arith.constant 0 : i32
    %c0_i32_1 = arith.constant 0 : i32
    return %c0_i32, %c0_i32_0 : i32, i32
  }
}

module attributes {stable_mosaic.version = 11 : i64} {
  func.func @_lstm2_kernel(%arg0: i32, %arg1: memref<128x32xf32, #tpu.memory_space<vmem>>, %arg2: memref<32x128xf32, #tpu.memory_space<vmem>>, %arg3: memref<32x128xf32, #tpu.memory_space<vmem>>, %arg4: memref<1x128xf32, #tpu.memory_space<vmem>>, %arg5: memref<32x128xf32, #tpu.memory_space<vmem>>, %arg6: memref<32x128xf32, #tpu.memory_space<vmem>>, %arg7: memref<1x128xf32, #tpu.memory_space<vmem>>, %arg8: memref<128x32xf32, #tpu.memory_space<vmem>>, %arg9: memref<128x128xf32, #tpu.memory_space<vmem>>, %arg10: memref<128x32xf32, #tpu.memory_space<vmem>>) attributes {dimension_semantics = [#tpu.dimension_semantics<arbitrary>], iteration_bounds = array<i64: 1>, scalar_prefetch = 0 : i64, scratch_operands = 2 : i64, tpu.core_type = #tpu.core_type<tc>, window_params = [{pipeline_mode = #tpu.pipeline_mode<synchronous>, transform_indices = @transform_0, window_bounds = array<i64: 128, 32>}, {pipeline_mode = #tpu.pipeline_mode<synchronous>, transform_indices = @transform_1, window_bounds = array<i64: 32, 128>}, {pipeline_mode = #tpu.pipeline_mode<synchronous>, transform_indices = @transform_2, window_bounds = array<i64: 32, 128>}, {pipeline_mode = #tpu.pipeline_mode<synchronous>, transform_indices = @transform_3, window_bounds = array<i64: 1, 128>}, {pipeline_mode = #tpu.pipeline_mode<synchronous>, transform_indices = @transform_4, window_bounds = array<i64: 32, 128>}, {pipeline_mode = #tpu.pipeline_mode<synchronous>, transform_indices = @transform_5, window_bounds = array<i64: 32, 128>}, {pipeline_mode = #tpu.pipeline_mode<synchronous>, transform_indices = @transform_6, window_bounds = array<i64: 1, 128>}, {pipeline_mode = #tpu.pipeline_mode<synchronous>, transform_indices = @transform_7, window_bounds = array<i64: 128, 32>}]} {
    %c0 = arith.constant 0 : index
    %c0_0 = arith.constant 0 : index
    %0 = vector.load %arg1[%c0, %c0_0] : memref<128x32xf32, #tpu.memory_space<vmem>>, vector<128x32xf32>
    %c0_1 = arith.constant 0 : index
    %c0_2 = arith.constant 0 : index
    %1 = vector.load %arg2[%c0_1, %c0_2] : memref<32x128xf32, #tpu.memory_space<vmem>>, vector<32x128xf32>
    %cst = arith.constant dense<0.000000e+00> : vector<128x128xf32>
    %2 = tpu.matmul %0, %1, %cst {dimension_numbers = #tpu.dot_dimension_numbers<[1], [0], [0], [1], [0, 0, 1, 1], [], []>} : vector<128x32xf32>, vector<32x128xf32>, vector<128x128xf32> -> vector<128x128xf32>
    %c0_3 = arith.constant 0 : index
    %c0_4 = arith.constant 0 : index
    %3 = vector.load %arg4[%c0_3, %c0_4] : memref<1x128xf32, #tpu.memory_space<vmem>>, vector<1x128xf32>
    %4 = vector.broadcast %3 : vector<1x128xf32> to vector<128x128xf32>
    %5 = arith.addf %2, %4 : vector<128x128xf32>
    %c0_5 = arith.constant 0 : index
    %c0_6 = arith.constant 0 : index
    %6 = vector.load %arg9[%c0_5, %c0_6] : memref<128x128xf32, #tpu.memory_space<vmem>>, vector<128x128xf32>
    tpu.vector_store %arg9[%c0_5, %c0_6], %5 {strides = array<i32>} : memref<128x128xf32, #tpu.memory_space<vmem>>, vector<128x128xf32>,
    %c0_7 = arith.constant 0 : index
    %c0_8 = arith.constant 0 : index
    %7 = vector.load %arg3[%c0_7, %c0_8] : memref<32x128xf32, #tpu.memory_space<vmem>>, vector<32x128xf32>
    %cst_9 = arith.constant 0.000000e+00 : f32
    %8 = vector.broadcast %cst_9 : f32 to vector<16x32xf32>
    %cst_10 = arith.constant 0.000000e+00 : f32
    %9 = vector.broadcast %cst_10 : f32 to vector<16x32xf32>
    %c0_11 = arith.constant 0 : index
    %c0_12 = arith.constant 0 : index
    %10 = vector.load %arg9[%c0_11, %c0_12] : memref<128x128xf32, #tpu.memory_space<vmem>>, vector<16x128xf32>
    %cst_13 = arith.constant dense<0.000000e+00> : vector<16x128xf32>
    %11 = tpu.matmul %8, %7, %cst_13 {dimension_numbers = #tpu.dot_dimension_numbers<[1], [0], [0], [1], [0, 0, 1, 1], [], []>} : vector<16x32xf32>, vector<32x128xf32>, vector<16x128xf32> -> vector<16x128xf32>
    %12 = arith.addf %10, %11 : vector<16x128xf32>
    %13 = vector.extract_strided_slice %12 {offsets = [0, 0], sizes = [16, 32], strides = [1, 1]} : vector<16x128xf32> to vector<16x32xf32>
    %14 = arith.negf %13 : vector<16x32xf32>
    %15 = math.exp %14 : vector<16x32xf32>
    %cst_14 = arith.constant 1.000000e+00 : f32
    %16 = vector.broadcast %cst_14 : f32 to vector<16x32xf32>
    %17 = arith.addf %16, %15 : vector<16x32xf32>
    %18 = arith.divf %16, %17 : vector<16x32xf32>
    %19 = vector.extract_strided_slice %12 {offsets = [0, 32], sizes = [16, 32], strides = [1, 1]} : vector<16x128xf32> to vector<16x32xf32>
    %20 = arith.negf %19 : vector<16x32xf32>
    %21 = math.exp %20 : vector<16x32xf32>
    %cst_15 = arith.constant 1.000000e+00 : f32
    %22 = vector.broadcast %cst_15 : f32 to vector<16x32xf32>
    %23 = arith.addf %22, %21 : vector<16x32xf32>
    %24 = arith.divf %22, %23 : vector<16x32xf32>
    %25 = vector.extract_strided_slice %12 {offsets = [0, 64], sizes = [16, 32], strides = [1, 1]} : vector<16x128xf32> to vector<16x32xf32>
    %26 = math.tanh %25 : vector<16x32xf32>
    %27 = vector.extract_strided_slice %12 {offsets = [0, 96], sizes = [16, 32], strides = [1, 1]} : vector<16x128xf32> to vector<16x32xf32>
    %28 = arith.negf %27 : vector<16x32xf32>
    %29 = math.exp %28 : vector<16x32xf32>
    %cst_16 = arith.constant 1.000000e+00 : f32
    %30 = vector.broadcast %cst_16 : f32 to vector<16x32xf32>
    %31 = arith.addf %30, %29 : vector<16x32xf32>
    %32 = arith.divf %30, %31 : vector<16x32xf32>
    %33 = arith.mulf %24, %9 : vector<16x32xf32>
    %34 = arith.mulf %18, %26 : vector<16x32xf32>
    %35 = arith.addf %33, %34 : vector<16x32xf32>
    %36 = math.tanh %35 : vector<16x32xf32>
    %37 = arith.mulf %32, %36 : vector<16x32xf32>
    %c0_17 = arith.constant 0 : index
    %c0_18 = arith.constant 0 : index
    %38 = vector.load %arg10[%c0_17, %c0_18] : memref<128x32xf32, #tpu.memory_space<vmem>>, vector<16x32xf32>
    tpu.vector_store %arg10[%c0_17, %c0_18], %37 {strides = array<i32>} : memref<128x32xf32, #tpu.memory_space<vmem>>, vector<16x32xf32>,
    %c16 = arith.constant 16 : index
    %c0_19 = arith.constant 0 : index
    %39 = vector.load %arg9[%c16, %c0_19] : memref<128x128xf32, #tpu.memory_space<vmem>>, vector<16x128xf32>
    %cst_20 = arith.constant dense<0.000000e+00> : vector<16x128xf32>
    %40 = tpu.matmul %37, %7, %cst_20 {dimension_numbers = #tpu.dot_dimension_numbers<[1], [0], [0], [1], [0, 0, 1, 1], [], []>} : vector<16x32xf32>, vector<32x128xf32>, vector<16x128xf32> -> vector<16x128xf32>
    %41 = arith.addf %39, %40 : vector<16x128xf32>
    %42 = vector.extract_strided_slice %41 {offsets = [0, 0], sizes = [16, 32], strides = [1, 1]} : vector<16x128xf32> to vector<16x32xf32>
    %43 = arith.negf %42 : vector<16x32xf32>
    %44 = math.exp %43 : vector<16x32xf32>
    %cst_21 = arith.constant 1.000000e+00 : f32
    %45 = vector.broadcast %cst_21 : f32 to vector<16x32xf32>
    %46 = arith.addf %45, %44 : vector<16x32xf32>
    %47 = arith.divf %45, %46 : vector<16x32xf32>
    %48 = vector.extract_strided_slice %41 {offsets = [0, 32], sizes = [16, 32], strides = [1, 1]} : vector<16x128xf32> to vector<16x32xf32>
    %49 = arith.negf %48 : vector<16x32xf32>
    %50 = math.exp %49 : vector<16x32xf32>
    %cst_22 = arith.constant 1.000000e+00 : f32
    %51 = vector.broadcast %cst_22 : f32 to vector<16x32xf32>
    %52 = arith.addf %51, %50 : vector<16x32xf32>
    %53 = arith.divf %51, %52 : vector<16x32xf32>
    %54 = vector.extract_strided_slice %41 {offsets = [0, 64], sizes = [16, 32], strides = [1, 1]} : vector<16x128xf32> to vector<16x32xf32>
    %55 = math.tanh %54 : vector<16x32xf32>
    %56 = vector.extract_strided_slice %41 {offsets = [0, 96], sizes = [16, 32], strides = [1, 1]} : vector<16x128xf32> to vector<16x32xf32>
    %57 = arith.negf %56 : vector<16x32xf32>
    %58 = math.exp %57 : vector<16x32xf32>
    %cst_23 = arith.constant 1.000000e+00 : f32
    %59 = vector.broadcast %cst_23 : f32 to vector<16x32xf32>
    %60 = arith.addf %59, %58 : vector<16x32xf32>
    %61 = arith.divf %59, %60 : vector<16x32xf32>
    %62 = arith.mulf %53, %35 : vector<16x32xf32>
    %63 = arith.mulf %47, %55 : vector<16x32xf32>
    %64 = arith.addf %62, %63 : vector<16x32xf32>
    %65 = math.tanh %64 : vector<16x32xf32>
    %66 = arith.mulf %61, %65 : vector<16x32xf32>
    %c16_24 = arith.constant 16 : index
    %c0_25 = arith.constant 0 : index
    %67 = vector.load %arg10[%c16_24, %c0_25] : memref<128x32xf32, #tpu.memory_space<vmem>>, vector<16x32xf32>
    tpu.vector_store %arg10[%c16_24, %c0_25], %66 {strides = array<i32>} : memref<128x32xf32, #tpu.memory_space<vmem>>, vector<16x32xf32>,
    %c32 = arith.constant 32 : index
    %c0_26 = arith.constant 0 : index
    %68 = vector.load %arg9[%c32, %c0_26] : memref<128x128xf32, #tpu.memory_space<vmem>>, vector<16x128xf32>
    %cst_27 = arith.constant dense<0.000000e+00> : vector<16x128xf32>
    %69 = tpu.matmul %66, %7, %cst_27 {dimension_numbers = #tpu.dot_dimension_numbers<[1], [0], [0], [1], [0, 0, 1, 1], [], []>} : vector<16x32xf32>, vector<32x128xf32>, vector<16x128xf32> -> vector<16x128xf32>
    %70 = arith.addf %68, %69 : vector<16x128xf32>
    %71 = vector.extract_strided_slice %70 {offsets = [0, 0], sizes = [16, 32], strides = [1, 1]} : vector<16x128xf32> to vector<16x32xf32>
    %72 = arith.negf %71 : vector<16x32xf32>
    %73 = math.exp %72 : vector<16x32xf32>
    %cst_28 = arith.constant 1.000000e+00 : f32
    %74 = vector.broadcast %cst_28 : f32 to vector<16x32xf32>
    %75 = arith.addf %74, %73 : vector<16x32xf32>
    %76 = arith.divf %74, %75 : vector<16x32xf32>
    %77 = vector.extract_strided_slice %70 {offsets = [0, 32], sizes = [16, 32], strides = [1, 1]} : vector<16x128xf32> to vector<16x32xf32>
    %78 = arith.negf %77 : vector<16x32xf32>
    %79 = math.exp %78 : vector<16x32xf32>
    %cst_29 = arith.constant 1.000000e+00 : f32
    %80 = vector.broadcast %cst_29 : f32 to vector<16x32xf32>
    %81 = arith.addf %80, %79 : vector<16x32xf32>
    %82 = arith.divf %80, %81 : vector<16x32xf32>
    %83 = vector.extract_strided_slice %70 {offsets = [0, 64], sizes = [16, 32], strides = [1, 1]} : vector<16x128xf32> to vector<16x32xf32>
    %84 = math.tanh %83 : vector<16x32xf32>
    %85 = vector.extract_strided_slice %70 {offsets = [0, 96], sizes = [16, 32], strides = [1, 1]} : vector<16x128xf32> to vector<16x32xf32>
    %86 = arith.negf %85 : vector<16x32xf32>
    %87 = math.exp %86 : vector<16x32xf32>
    %cst_30 = arith.constant 1.000000e+00 : f32
    %88 = vector.broadcast %cst_30 : f32 to vector<16x32xf32>
    %89 = arith.addf %88, %87 : vector<16x32xf32>
    %90 = arith.divf %88, %89 : vector<16x32xf32>
    %91 = arith.mulf %82, %64 : vector<16x32xf32>
    %92 = arith.mulf %76, %84 : vector<16x32xf32>
    %93 = arith.addf %91, %92 : vector<16x32xf32>
    %94 = math.tanh %93 : vector<16x32xf32>
    %95 = arith.mulf %90, %94 : vector<16x32xf32>
    %c32_31 = arith.constant 32 : index
    %c0_32 = arith.constant 0 : index
    %96 = vector.load %arg10[%c32_31, %c0_32] : memref<128x32xf32, #tpu.memory_space<vmem>>, vector<16x32xf32>
    tpu.vector_store %arg10[%c32_31, %c0_32], %95 {strides = array<i32>} : memref<128x32xf32, #tpu.memory_space<vmem>>, vector<16x32xf32>,
    %c48 = arith.constant 48 : index
    %c0_33 = arith.constant 0 : index
    %97 = vector.load %arg9[%c48, %c0_33] : memref<128x128xf32, #tpu.memory_space<vmem>>, vector<16x128xf32>
    %cst_34 = arith.constant dense<0.000000e+00> : vector<16x128xf32>
    %98 = tpu.matmul %95, %7, %cst_34 {dimension_numbers = #tpu.dot_dimension_numbers<[1], [0], [0], [1], [0, 0, 1, 1], [], []>} : vector<16x32xf32>, vector<32x128xf32>, vector<16x128xf32> -> vector<16x128xf32>
    %99 = arith.addf %97, %98 : vector<16x128xf32>
    %100 = vector.extract_strided_slice %99 {offsets = [0, 0], sizes = [16, 32], strides = [1, 1]} : vector<16x128xf32> to vector<16x32xf32>
    %101 = arith.negf %100 : vector<16x32xf32>
    %102 = math.exp %101 : vector<16x32xf32>
    %cst_35 = arith.constant 1.000000e+00 : f32
    %103 = vector.broadcast %cst_35 : f32 to vector<16x32xf32>
    %104 = arith.addf %103, %102 : vector<16x32xf32>
    %105 = arith.divf %103, %104 : vector<16x32xf32>
    %106 = vector.extract_strided_slice %99 {offsets = [0, 32], sizes = [16, 32], strides = [1, 1]} : vector<16x128xf32> to vector<16x32xf32>
    %107 = arith.negf %106 : vector<16x32xf32>
    %108 = math.exp %107 : vector<16x32xf32>
    %cst_36 = arith.constant 1.000000e+00 : f32
    %109 = vector.broadcast %cst_36 : f32 to vector<16x32xf32>
    %110 = arith.addf %109, %108 : vector<16x32xf32>
    %111 = arith.divf %109, %110 : vector<16x32xf32>
    %112 = vector.extract_strided_slice %99 {offsets = [0, 64], sizes = [16, 32], strides = [1, 1]} : vector<16x128xf32> to vector<16x32xf32>
    %113 = math.tanh %112 : vector<16x32xf32>
    %114 = vector.extract_strided_slice %99 {offsets = [0, 96], sizes = [16, 32], strides = [1, 1]} : vector<16x128xf32> to vector<16x32xf32>
    %115 = arith.negf %114 : vector<16x32xf32>
    %116 = math.exp %115 : vector<16x32xf32>
    %cst_37 = arith.constant 1.000000e+00 : f32
    %117 = vector.broadcast %cst_37 : f32 to vector<16x32xf32>
    %118 = arith.addf %117, %116 : vector<16x32xf32>
    %119 = arith.divf %117, %118 : vector<16x32xf32>
    %120 = arith.mulf %111, %93 : vector<16x32xf32>
    %121 = arith.mulf %105, %113 : vector<16x32xf32>
    %122 = arith.addf %120, %121 : vector<16x32xf32>
    %123 = math.tanh %122 : vector<16x32xf32>
    %124 = arith.mulf %119, %123 : vector<16x32xf32>
    %c48_38 = arith.constant 48 : index
    %c0_39 = arith.constant 0 : index
    %125 = vector.load %arg10[%c48_38, %c0_39] : memref<128x32xf32, #tpu.memory_space<vmem>>, vector<16x32xf32>
    tpu.vector_store %arg10[%c48_38, %c0_39], %124 {strides = array<i32>} : memref<128x32xf32, #tpu.memory_space<vmem>>, vector<16x32xf32>,
    %c64 = arith.constant 64 : index
    %c0_40 = arith.constant 0 : index
    %126 = vector.load %arg9[%c64, %c0_40] : memref<128x128xf32, #tpu.memory_space<vmem>>, vector<16x128xf32>
    %cst_41 = arith.constant dense<0.000000e+00> : vector<16x128xf32>
    %127 = tpu.matmul %124, %7, %cst_41 {dimension_numbers = #tpu.dot_dimension_numbers<[1], [0], [0], [1], [0, 0, 1, 1], [], []>} : vector<16x32xf32>, vector<32x128xf32>, vector<16x128xf32> -> vector<16x128xf32>
    %128 = arith.addf %126, %127 : vector<16x128xf32>
    %129 = vector.extract_strided_slice %128 {offsets = [0, 0], sizes = [16, 32], strides = [1, 1]} : vector<16x128xf32> to vector<16x32xf32>
    %130 = arith.negf %129 : vector<16x32xf32>
    %131 = math.exp %130 : vector<16x32xf32>
    %cst_42 = arith.constant 1.000000e+00 : f32
    %132 = vector.broadcast %cst_42 : f32 to vector<16x32xf32>
    %133 = arith.addf %132, %131 : vector<16x32xf32>
    %134 = arith.divf %132, %133 : vector<16x32xf32>
    %135 = vector.extract_strided_slice %128 {offsets = [0, 32], sizes = [16, 32], strides = [1, 1]} : vector<16x128xf32> to vector<16x32xf32>
    %136 = arith.negf %135 : vector<16x32xf32>
    %137 = math.exp %136 : vector<16x32xf32>
    %cst_43 = arith.constant 1.000000e+00 : f32
    %138 = vector.broadcast %cst_43 : f32 to vector<16x32xf32>
    %139 = arith.addf %138, %137 : vector<16x32xf32>
    %140 = arith.divf %138, %139 : vector<16x32xf32>
    %141 = vector.extract_strided_slice %128 {offsets = [0, 64], sizes = [16, 32], strides = [1, 1]} : vector<16x128xf32> to vector<16x32xf32>
    %142 = math.tanh %141 : vector<16x32xf32>
    %143 = vector.extract_strided_slice %128 {offsets = [0, 96], sizes = [16, 32], strides = [1, 1]} : vector<16x128xf32> to vector<16x32xf32>
    %144 = arith.negf %143 : vector<16x32xf32>
    %145 = math.exp %144 : vector<16x32xf32>
    %cst_44 = arith.constant 1.000000e+00 : f32
    %146 = vector.broadcast %cst_44 : f32 to vector<16x32xf32>
    %147 = arith.addf %146, %145 : vector<16x32xf32>
    %148 = arith.divf %146, %147 : vector<16x32xf32>
    %149 = arith.mulf %140, %122 : vector<16x32xf32>
    %150 = arith.mulf %134, %142 : vector<16x32xf32>
    %151 = arith.addf %149, %150 : vector<16x32xf32>
    %152 = math.tanh %151 : vector<16x32xf32>
    %153 = arith.mulf %148, %152 : vector<16x32xf32>
    %c64_45 = arith.constant 64 : index
    %c0_46 = arith.constant 0 : index
    %154 = vector.load %arg10[%c64_45, %c0_46] : memref<128x32xf32, #tpu.memory_space<vmem>>, vector<16x32xf32>
    tpu.vector_store %arg10[%c64_45, %c0_46], %153 {strides = array<i32>} : memref<128x32xf32, #tpu.memory_space<vmem>>, vector<16x32xf32>,
    %c80 = arith.constant 80 : index
    %c0_47 = arith.constant 0 : index
    %155 = vector.load %arg9[%c80, %c0_47] : memref<128x128xf32, #tpu.memory_space<vmem>>, vector<16x128xf32>
    %cst_48 = arith.constant dense<0.000000e+00> : vector<16x128xf32>
    %156 = tpu.matmul %153, %7, %cst_48 {dimension_numbers = #tpu.dot_dimension_numbers<[1], [0], [0], [1], [0, 0, 1, 1], [], []>} : vector<16x32xf32>, vector<32x128xf32>, vector<16x128xf32> -> vector<16x128xf32>
    %157 = arith.addf %155, %156 : vector<16x128xf32>
    %158 = vector.extract_strided_slice %157 {offsets = [0, 0], sizes = [16, 32], strides = [1, 1]} : vector<16x128xf32> to vector<16x32xf32>
    %159 = arith.negf %158 : vector<16x32xf32>
    %160 = math.exp %159 : vector<16x32xf32>
    %cst_49 = arith.constant 1.000000e+00 : f32
    %161 = vector.broadcast %cst_49 : f32 to vector<16x32xf32>
    %162 = arith.addf %161, %160 : vector<16x32xf32>
    %163 = arith.divf %161, %162 : vector<16x32xf32>
    %164 = vector.extract_strided_slice %157 {offsets = [0, 32], sizes = [16, 32], strides = [1, 1]} : vector<16x128xf32> to vector<16x32xf32>
    %165 = arith.negf %164 : vector<16x32xf32>
    %166 = math.exp %165 : vector<16x32xf32>
    %cst_50 = arith.constant 1.000000e+00 : f32
    %167 = vector.broadcast %cst_50 : f32 to vector<16x32xf32>
    %168 = arith.addf %167, %166 : vector<16x32xf32>
    %169 = arith.divf %167, %168 : vector<16x32xf32>
    %170 = vector.extract_strided_slice %157 {offsets = [0, 64], sizes = [16, 32], strides = [1, 1]} : vector<16x128xf32> to vector<16x32xf32>
    %171 = math.tanh %170 : vector<16x32xf32>
    %172 = vector.extract_strided_slice %157 {offsets = [0, 96], sizes = [16, 32], strides = [1, 1]} : vector<16x128xf32> to vector<16x32xf32>
    %173 = arith.negf %172 : vector<16x32xf32>
    %174 = math.exp %173 : vector<16x32xf32>
    %cst_51 = arith.constant 1.000000e+00 : f32
    %175 = vector.broadcast %cst_51 : f32 to vector<16x32xf32>
    %176 = arith.addf %175, %174 : vector<16x32xf32>
    %177 = arith.divf %175, %176 : vector<16x32xf32>
    %178 = arith.mulf %169, %151 : vector<16x32xf32>
    %179 = arith.mulf %163, %171 : vector<16x32xf32>
    %180 = arith.addf %178, %179 : vector<16x32xf32>
    %181 = math.tanh %180 : vector<16x32xf32>
    %182 = arith.mulf %177, %181 : vector<16x32xf32>
    %c80_52 = arith.constant 80 : index
    %c0_53 = arith.constant 0 : index
    %183 = vector.load %arg10[%c80_52, %c0_53] : memref<128x32xf32, #tpu.memory_space<vmem>>, vector<16x32xf32>
    tpu.vector_store %arg10[%c80_52, %c0_53], %182 {strides = array<i32>} : memref<128x32xf32, #tpu.memory_space<vmem>>, vector<16x32xf32>,
    %c96 = arith.constant 96 : index
    %c0_54 = arith.constant 0 : index
    %184 = vector.load %arg9[%c96, %c0_54] : memref<128x128xf32, #tpu.memory_space<vmem>>, vector<16x128xf32>
    %cst_55 = arith.constant dense<0.000000e+00> : vector<16x128xf32>
    %185 = tpu.matmul %182, %7, %cst_55 {dimension_numbers = #tpu.dot_dimension_numbers<[1], [0], [0], [1], [0, 0, 1, 1], [], []>} : vector<16x32xf32>, vector<32x128xf32>, vector<16x128xf32> -> vector<16x128xf32>
    %186 = arith.addf %184, %185 : vector<16x128xf32>
    %187 = vector.extract_strided_slice %186 {offsets = [0, 0], sizes = [16, 32], strides = [1, 1]} : vector<16x128xf32> to vector<16x32xf32>
    %188 = arith.negf %187 : vector<16x32xf32>
    %189 = math.exp %188 : vector<16x32xf32>
    %cst_56 = arith.constant 1.000000e+00 : f32
    %190 = vector.broadcast %cst_56 : f32 to vector<16x32xf32>
    %191 = arith.addf %190, %189 : vector<16x32xf32>
    %192 = arith.divf %190, %191 : vector<16x32xf32>
    %193 = vector.extract_strided_slice %186 {offsets = [0, 32], sizes = [16, 32], strides = [1, 1]} : vector<16x128xf32> to vector<16x32xf32>
    %194 = arith.negf %193 : vector<16x32xf32>
    %195 = math.exp %194 : vector<16x32xf32>
    %cst_57 = arith.constant 1.000000e+00 : f32
    %196 = vector.broadcast %cst_57 : f32 to vector<16x32xf32>
    %197 = arith.addf %196, %195 : vector<16x32xf32>
    %198 = arith.divf %196, %197 : vector<16x32xf32>
    %199 = vector.extract_strided_slice %186 {offsets = [0, 64], sizes = [16, 32], strides = [1, 1]} : vector<16x128xf32> to vector<16x32xf32>
    %200 = math.tanh %199 : vector<16x32xf32>
    %201 = vector.extract_strided_slice %186 {offsets = [0, 96], sizes = [16, 32], strides = [1, 1]} : vector<16x128xf32> to vector<16x32xf32>
    %202 = arith.negf %201 : vector<16x32xf32>
    %203 = math.exp %202 : vector<16x32xf32>
    %cst_58 = arith.constant 1.000000e+00 : f32
    %204 = vector.broadcast %cst_58 : f32 to vector<16x32xf32>
    %205 = arith.addf %204, %203 : vector<16x32xf32>
    %206 = arith.divf %204, %205 : vector<16x32xf32>
    %207 = arith.mulf %198, %180 : vector<16x32xf32>
    %208 = arith.mulf %192, %200 : vector<16x32xf32>
    %209 = arith.addf %207, %208 : vector<16x32xf32>
    %210 = math.tanh %209 : vector<16x32xf32>
    %211 = arith.mulf %206, %210 : vector<16x32xf32>
    %c96_59 = arith.constant 96 : index
    %c0_60 = arith.constant 0 : index
    %212 = vector.load %arg10[%c96_59, %c0_60] : memref<128x32xf32, #tpu.memory_space<vmem>>, vector<16x32xf32>
    tpu.vector_store %arg10[%c96_59, %c0_60], %211 {strides = array<i32>} : memref<128x32xf32, #tpu.memory_space<vmem>>, vector<16x32xf32>,
    %c112 = arith.constant 112 : index
    %c0_61 = arith.constant 0 : index
    %213 = vector.load %arg9[%c112, %c0_61] : memref<128x128xf32, #tpu.memory_space<vmem>>, vector<16x128xf32>
    %cst_62 = arith.constant dense<0.000000e+00> : vector<16x128xf32>
    %214 = tpu.matmul %211, %7, %cst_62 {dimension_numbers = #tpu.dot_dimension_numbers<[1], [0], [0], [1], [0, 0, 1, 1], [], []>} : vector<16x32xf32>, vector<32x128xf32>, vector<16x128xf32> -> vector<16x128xf32>
    %215 = arith.addf %213, %214 : vector<16x128xf32>
    %216 = vector.extract_strided_slice %215 {offsets = [0, 0], sizes = [16, 32], strides = [1, 1]} : vector<16x128xf32> to vector<16x32xf32>
    %217 = arith.negf %216 : vector<16x32xf32>
    %218 = math.exp %217 : vector<16x32xf32>
    %cst_63 = arith.constant 1.000000e+00 : f32
    %219 = vector.broadcast %cst_63 : f32 to vector<16x32xf32>
    %220 = arith.addf %219, %218 : vector<16x32xf32>
    %221 = arith.divf %219, %220 : vector<16x32xf32>
    %222 = vector.extract_strided_slice %215 {offsets = [0, 32], sizes = [16, 32], strides = [1, 1]} : vector<16x128xf32> to vector<16x32xf32>
    %223 = arith.negf %222 : vector<16x32xf32>
    %224 = math.exp %223 : vector<16x32xf32>
    %cst_64 = arith.constant 1.000000e+00 : f32
    %225 = vector.broadcast %cst_64 : f32 to vector<16x32xf32>
    %226 = arith.addf %225, %224 : vector<16x32xf32>
    %227 = arith.divf %225, %226 : vector<16x32xf32>
    %228 = vector.extract_strided_slice %215 {offsets = [0, 64], sizes = [16, 32], strides = [1, 1]} : vector<16x128xf32> to vector<16x32xf32>
    %229 = math.tanh %228 : vector<16x32xf32>
    %230 = vector.extract_strided_slice %215 {offsets = [0, 96], sizes = [16, 32], strides = [1, 1]} : vector<16x128xf32> to vector<16x32xf32>
    %231 = arith.negf %230 : vector<16x32xf32>
    %232 = math.exp %231 : vector<16x32xf32>
    %cst_65 = arith.constant 1.000000e+00 : f32
    %233 = vector.broadcast %cst_65 : f32 to vector<16x32xf32>
    %234 = arith.addf %233, %232 : vector<16x32xf32>
    %235 = arith.divf %233, %234 : vector<16x32xf32>
    %236 = arith.mulf %227, %209 : vector<16x32xf32>
    %237 = arith.mulf %221, %229 : vector<16x32xf32>
    %238 = arith.addf %236, %237 : vector<16x32xf32>
    %239 = math.tanh %238 : vector<16x32xf32>
    %240 = arith.mulf %235, %239 : vector<16x32xf32>
    %c112_66 = arith.constant 112 : index
    %c0_67 = arith.constant 0 : index
    %241 = vector.load %arg10[%c112_66, %c0_67] : memref<128x32xf32, #tpu.memory_space<vmem>>, vector<16x32xf32>
    tpu.vector_store %arg10[%c112_66, %c0_67], %240 {strides = array<i32>} : memref<128x32xf32, #tpu.memory_space<vmem>>, vector<16x32xf32>,
    %c0_68 = arith.constant 0 : index
    %c0_69 = arith.constant 0 : index
    %242 = vector.load %arg10[%c0_68, %c0_69] : memref<128x32xf32, #tpu.memory_space<vmem>>, vector<128x32xf32>
    %c0_70 = arith.constant 0 : index
    %c0_71 = arith.constant 0 : index
    %243 = vector.load %arg5[%c0_70, %c0_71] : memref<32x128xf32, #tpu.memory_space<vmem>>, vector<32x128xf32>
    %cst_72 = arith.constant dense<0.000000e+00> : vector<128x128xf32>
    %244 = tpu.matmul %242, %243, %cst_72 {dimension_numbers = #tpu.dot_dimension_numbers<[1], [0], [0], [1], [0, 0, 1, 1], [], []>} : vector<128x32xf32>, vector<32x128xf32>, vector<128x128xf32> -> vector<128x128xf32>
    %c0_73 = arith.constant 0 : index
    %c0_74 = arith.constant 0 : index
    %245 = vector.load %arg7[%c0_73, %c0_74] : memref<1x128xf32, #tpu.memory_space<vmem>>, vector<1x128xf32>
    %246 = vector.broadcast %245 : vector<1x128xf32> to vector<128x128xf32>
    %247 = arith.addf %244, %246 : vector<128x128xf32>
    %c0_75 = arith.constant 0 : index
    %c0_76 = arith.constant 0 : index
    %248 = vector.load %arg9[%c0_75, %c0_76] : memref<128x128xf32, #tpu.memory_space<vmem>>, vector<128x128xf32>
    tpu.vector_store %arg9[%c0_75, %c0_76], %247 {strides = array<i32>} : memref<128x128xf32, #tpu.memory_space<vmem>>, vector<128x128xf32>,
    %c0_77 = arith.constant 0 : index
    %c0_78 = arith.constant 0 : index
    %249 = vector.load %arg6[%c0_77, %c0_78] : memref<32x128xf32, #tpu.memory_space<vmem>>, vector<32x128xf32>
    %cst_79 = arith.constant 0.000000e+00 : f32
    %250 = vector.broadcast %cst_79 : f32 to vector<16x32xf32>
    %cst_80 = arith.constant 0.000000e+00 : f32
    %251 = vector.broadcast %cst_80 : f32 to vector<16x32xf32>
    %c0_81 = arith.constant 0 : index
    %c0_82 = arith.constant 0 : index
    %252 = vector.load %arg9[%c0_81, %c0_82] : memref<128x128xf32, #tpu.memory_space<vmem>>, vector<16x128xf32>
    %cst_83 = arith.constant dense<0.000000e+00> : vector<16x128xf32>
    %253 = tpu.matmul %250, %249, %cst_83 {dimension_numbers = #tpu.dot_dimension_numbers<[1], [0], [0], [1], [0, 0, 1, 1], [], []>} : vector<16x32xf32>, vector<32x128xf32>, vector<16x128xf32> -> vector<16x128xf32>
    %254 = arith.addf %252, %253 : vector<16x128xf32>
    %255 = vector.extract_strided_slice %254 {offsets = [0, 0], sizes = [16, 32], strides = [1, 1]} : vector<16x128xf32> to vector<16x32xf32>
    %256 = arith.negf %255 : vector<16x32xf32>
    %257 = math.exp %256 : vector<16x32xf32>
    %cst_84 = arith.constant 1.000000e+00 : f32
    %258 = vector.broadcast %cst_84 : f32 to vector<16x32xf32>
    %259 = arith.addf %258, %257 : vector<16x32xf32>
    %260 = arith.divf %258, %259 : vector<16x32xf32>
    %261 = vector.extract_strided_slice %254 {offsets = [0, 32], sizes = [16, 32], strides = [1, 1]} : vector<16x128xf32> to vector<16x32xf32>
    %262 = arith.negf %261 : vector<16x32xf32>
    %263 = math.exp %262 : vector<16x32xf32>
    %cst_85 = arith.constant 1.000000e+00 : f32
    %264 = vector.broadcast %cst_85 : f32 to vector<16x32xf32>
    %265 = arith.addf %264, %263 : vector<16x32xf32>
    %266 = arith.divf %264, %265 : vector<16x32xf32>
    %267 = vector.extract_strided_slice %254 {offsets = [0, 64], sizes = [16, 32], strides = [1, 1]} : vector<16x128xf32> to vector<16x32xf32>
    %268 = math.tanh %267 : vector<16x32xf32>
    %269 = vector.extract_strided_slice %254 {offsets = [0, 96], sizes = [16, 32], strides = [1, 1]} : vector<16x128xf32> to vector<16x32xf32>
    %270 = arith.negf %269 : vector<16x32xf32>
    %271 = math.exp %270 : vector<16x32xf32>
    %cst_86 = arith.constant 1.000000e+00 : f32
    %272 = vector.broadcast %cst_86 : f32 to vector<16x32xf32>
    %273 = arith.addf %272, %271 : vector<16x32xf32>
    %274 = arith.divf %272, %273 : vector<16x32xf32>
    %275 = arith.mulf %266, %251 : vector<16x32xf32>
    %276 = arith.mulf %260, %268 : vector<16x32xf32>
    %277 = arith.addf %275, %276 : vector<16x32xf32>
    %278 = math.tanh %277 : vector<16x32xf32>
    %279 = arith.mulf %274, %278 : vector<16x32xf32>
    %cst_87 = arith.constant 0.000000e+00 : f32
    %280 = vector.broadcast %cst_87 : f32 to vector<16x32xf32>
    %281 = arith.cmpf ogt, %279, %280 : vector<16x32xf32>
    %cst_88 = arith.constant 2.500000e-01 : f32
    %282 = vector.broadcast %cst_88 : f32 to vector<16x32xf32>
    %283 = arith.mulf %282, %279 : vector<16x32xf32>
    %284 = arith.select %281, %279, %283 : vector<16x32xi1>, vector<16x32xf32>
    %c0_89 = arith.constant 0 : index
    %c0_90 = arith.constant 0 : index
    %285 = vector.load %arg8[%c0_89, %c0_90] : memref<128x32xf32, #tpu.memory_space<vmem>>, vector<16x32xf32>
    tpu.vector_store %arg8[%c0_89, %c0_90], %284 {strides = array<i32>} : memref<128x32xf32, #tpu.memory_space<vmem>>, vector<16x32xf32>,
    %c16_91 = arith.constant 16 : index
    %c0_92 = arith.constant 0 : index
    %286 = vector.load %arg9[%c16_91, %c0_92] : memref<128x128xf32, #tpu.memory_space<vmem>>, vector<16x128xf32>
    %cst_93 = arith.constant dense<0.000000e+00> : vector<16x128xf32>
    %287 = tpu.matmul %279, %249, %cst_93 {dimension_numbers = #tpu.dot_dimension_numbers<[1], [0], [0], [1], [0, 0, 1, 1], [], []>} : vector<16x32xf32>, vector<32x128xf32>, vector<16x128xf32> -> vector<16x128xf32>
    %288 = arith.addf %286, %287 : vector<16x128xf32>
    %289 = vector.extract_strided_slice %288 {offsets = [0, 0], sizes = [16, 32], strides = [1, 1]} : vector<16x128xf32> to vector<16x32xf32>
    %290 = arith.negf %289 : vector<16x32xf32>
    %291 = math.exp %290 : vector<16x32xf32>
    %cst_94 = arith.constant 1.000000e+00 : f32
    %292 = vector.broadcast %cst_94 : f32 to vector<16x32xf32>
    %293 = arith.addf %292, %291 : vector<16x32xf32>
    %294 = arith.divf %292, %293 : vector<16x32xf32>
    %295 = vector.extract_strided_slice %288 {offsets = [0, 32], sizes = [16, 32], strides = [1, 1]} : vector<16x128xf32> to vector<16x32xf32>
    %296 = arith.negf %295 : vector<16x32xf32>
    %297 = math.exp %296 : vector<16x32xf32>
    %cst_95 = arith.constant 1.000000e+00 : f32
    %298 = vector.broadcast %cst_95 : f32 to vector<16x32xf32>
    %299 = arith.addf %298, %297 : vector<16x32xf32>
    %300 = arith.divf %298, %299 : vector<16x32xf32>
    %301 = vector.extract_strided_slice %288 {offsets = [0, 64], sizes = [16, 32], strides = [1, 1]} : vector<16x128xf32> to vector<16x32xf32>
    %302 = math.tanh %301 : vector<16x32xf32>
    %303 = vector.extract_strided_slice %288 {offsets = [0, 96], sizes = [16, 32], strides = [1, 1]} : vector<16x128xf32> to vector<16x32xf32>
    %304 = arith.negf %303 : vector<16x32xf32>
    %305 = math.exp %304 : vector<16x32xf32>
    %cst_96 = arith.constant 1.000000e+00 : f32
    %306 = vector.broadcast %cst_96 : f32 to vector<16x32xf32>
    %307 = arith.addf %306, %305 : vector<16x32xf32>
    %308 = arith.divf %306, %307 : vector<16x32xf32>
    %309 = arith.mulf %300, %277 : vector<16x32xf32>
    %310 = arith.mulf %294, %302 : vector<16x32xf32>
    %311 = arith.addf %309, %310 : vector<16x32xf32>
    %312 = math.tanh %311 : vector<16x32xf32>
    %313 = arith.mulf %308, %312 : vector<16x32xf32>
    %cst_97 = arith.constant 0.000000e+00 : f32
    %314 = vector.broadcast %cst_97 : f32 to vector<16x32xf32>
    %315 = arith.cmpf ogt, %313, %314 : vector<16x32xf32>
    %cst_98 = arith.constant 2.500000e-01 : f32
    %316 = vector.broadcast %cst_98 : f32 to vector<16x32xf32>
    %317 = arith.mulf %316, %313 : vector<16x32xf32>
    %318 = arith.select %315, %313, %317 : vector<16x32xi1>, vector<16x32xf32>
    %c16_99 = arith.constant 16 : index
    %c0_100 = arith.constant 0 : index
    %319 = vector.load %arg8[%c16_99, %c0_100] : memref<128x32xf32, #tpu.memory_space<vmem>>, vector<16x32xf32>
    tpu.vector_store %arg8[%c16_99, %c0_100], %318 {strides = array<i32>} : memref<128x32xf32, #tpu.memory_space<vmem>>, vector<16x32xf32>,
    %c32_101 = arith.constant 32 : index
    %c0_102 = arith.constant 0 : index
    %320 = vector.load %arg9[%c32_101, %c0_102] : memref<128x128xf32, #tpu.memory_space<vmem>>, vector<16x128xf32>
    %cst_103 = arith.constant dense<0.000000e+00> : vector<16x128xf32>
    %321 = tpu.matmul %313, %249, %cst_103 {dimension_numbers = #tpu.dot_dimension_numbers<[1], [0], [0], [1], [0, 0, 1, 1], [], []>} : vector<16x32xf32>, vector<32x128xf32>, vector<16x128xf32> -> vector<16x128xf32>
    %322 = arith.addf %320, %321 : vector<16x128xf32>
    %323 = vector.extract_strided_slice %322 {offsets = [0, 0], sizes = [16, 32], strides = [1, 1]} : vector<16x128xf32> to vector<16x32xf32>
    %324 = arith.negf %323 : vector<16x32xf32>
    %325 = math.exp %324 : vector<16x32xf32>
    %cst_104 = arith.constant 1.000000e+00 : f32
    %326 = vector.broadcast %cst_104 : f32 to vector<16x32xf32>
    %327 = arith.addf %326, %325 : vector<16x32xf32>
    %328 = arith.divf %326, %327 : vector<16x32xf32>
    %329 = vector.extract_strided_slice %322 {offsets = [0, 32], sizes = [16, 32], strides = [1, 1]} : vector<16x128xf32> to vector<16x32xf32>
    %330 = arith.negf %329 : vector<16x32xf32>
    %331 = math.exp %330 : vector<16x32xf32>
    %cst_105 = arith.constant 1.000000e+00 : f32
    %332 = vector.broadcast %cst_105 : f32 to vector<16x32xf32>
    %333 = arith.addf %332, %331 : vector<16x32xf32>
    %334 = arith.divf %332, %333 : vector<16x32xf32>
    %335 = vector.extract_strided_slice %322 {offsets = [0, 64], sizes = [16, 32], strides = [1, 1]} : vector<16x128xf32> to vector<16x32xf32>
    %336 = math.tanh %335 : vector<16x32xf32>
    %337 = vector.extract_strided_slice %322 {offsets = [0, 96], sizes = [16, 32], strides = [1, 1]} : vector<16x128xf32> to vector<16x32xf32>
    %338 = arith.negf %337 : vector<16x32xf32>
    %339 = math.exp %338 : vector<16x32xf32>
    %cst_106 = arith.constant 1.000000e+00 : f32
    %340 = vector.broadcast %cst_106 : f32 to vector<16x32xf32>
    %341 = arith.addf %340, %339 : vector<16x32xf32>
    %342 = arith.divf %340, %341 : vector<16x32xf32>
    %343 = arith.mulf %334, %311 : vector<16x32xf32>
    %344 = arith.mulf %328, %336 : vector<16x32xf32>
    %345 = arith.addf %343, %344 : vector<16x32xf32>
    %346 = math.tanh %345 : vector<16x32xf32>
    %347 = arith.mulf %342, %346 : vector<16x32xf32>
    %cst_107 = arith.constant 0.000000e+00 : f32
    %348 = vector.broadcast %cst_107 : f32 to vector<16x32xf32>
    %349 = arith.cmpf ogt, %347, %348 : vector<16x32xf32>
    %cst_108 = arith.constant 2.500000e-01 : f32
    %350 = vector.broadcast %cst_108 : f32 to vector<16x32xf32>
    %351 = arith.mulf %350, %347 : vector<16x32xf32>
    %352 = arith.select %349, %347, %351 : vector<16x32xi1>, vector<16x32xf32>
    %c32_109 = arith.constant 32 : index
    %c0_110 = arith.constant 0 : index
    %353 = vector.load %arg8[%c32_109, %c0_110] : memref<128x32xf32, #tpu.memory_space<vmem>>, vector<16x32xf32>
    tpu.vector_store %arg8[%c32_109, %c0_110], %352 {strides = array<i32>} : memref<128x32xf32, #tpu.memory_space<vmem>>, vector<16x32xf32>,
    %c48_111 = arith.constant 48 : index
    %c0_112 = arith.constant 0 : index
    %354 = vector.load %arg9[%c48_111, %c0_112] : memref<128x128xf32, #tpu.memory_space<vmem>>, vector<16x128xf32>
    %cst_113 = arith.constant dense<0.000000e+00> : vector<16x128xf32>
    %355 = tpu.matmul %347, %249, %cst_113 {dimension_numbers = #tpu.dot_dimension_numbers<[1], [0], [0], [1], [0, 0, 1, 1], [], []>} : vector<16x32xf32>, vector<32x128xf32>, vector<16x128xf32> -> vector<16x128xf32>
    %356 = arith.addf %354, %355 : vector<16x128xf32>
    %357 = vector.extract_strided_slice %356 {offsets = [0, 0], sizes = [16, 32], strides = [1, 1]} : vector<16x128xf32> to vector<16x32xf32>
    %358 = arith.negf %357 : vector<16x32xf32>
    %359 = math.exp %358 : vector<16x32xf32>
    %cst_114 = arith.constant 1.000000e+00 : f32
    %360 = vector.broadcast %cst_114 : f32 to vector<16x32xf32>
    %361 = arith.addf %360, %359 : vector<16x32xf32>
    %362 = arith.divf %360, %361 : vector<16x32xf32>
    %363 = vector.extract_strided_slice %356 {offsets = [0, 32], sizes = [16, 32], strides = [1, 1]} : vector<16x128xf32> to vector<16x32xf32>
    %364 = arith.negf %363 : vector<16x32xf32>
    %365 = math.exp %364 : vector<16x32xf32>
    %cst_115 = arith.constant 1.000000e+00 : f32
    %366 = vector.broadcast %cst_115 : f32 to vector<16x32xf32>
    %367 = arith.addf %366, %365 : vector<16x32xf32>
    %368 = arith.divf %366, %367 : vector<16x32xf32>
    %369 = vector.extract_strided_slice %356 {offsets = [0, 64], sizes = [16, 32], strides = [1, 1]} : vector<16x128xf32> to vector<16x32xf32>
    %370 = math.tanh %369 : vector<16x32xf32>
    %371 = vector.extract_strided_slice %356 {offsets = [0, 96], sizes = [16, 32], strides = [1, 1]} : vector<16x128xf32> to vector<16x32xf32>
    %372 = arith.negf %371 : vector<16x32xf32>
    %373 = math.exp %372 : vector<16x32xf32>
    %cst_116 = arith.constant 1.000000e+00 : f32
    %374 = vector.broadcast %cst_116 : f32 to vector<16x32xf32>
    %375 = arith.addf %374, %373 : vector<16x32xf32>
    %376 = arith.divf %374, %375 : vector<16x32xf32>
    %377 = arith.mulf %368, %345 : vector<16x32xf32>
    %378 = arith.mulf %362, %370 : vector<16x32xf32>
    %379 = arith.addf %377, %378 : vector<16x32xf32>
    %380 = math.tanh %379 : vector<16x32xf32>
    %381 = arith.mulf %376, %380 : vector<16x32xf32>
    %cst_117 = arith.constant 0.000000e+00 : f32
    %382 = vector.broadcast %cst_117 : f32 to vector<16x32xf32>
    %383 = arith.cmpf ogt, %381, %382 : vector<16x32xf32>
    %cst_118 = arith.constant 2.500000e-01 : f32
    %384 = vector.broadcast %cst_118 : f32 to vector<16x32xf32>
    %385 = arith.mulf %384, %381 : vector<16x32xf32>
    %386 = arith.select %383, %381, %385 : vector<16x32xi1>, vector<16x32xf32>
    %c48_119 = arith.constant 48 : index
    %c0_120 = arith.constant 0 : index
    %387 = vector.load %arg8[%c48_119, %c0_120] : memref<128x32xf32, #tpu.memory_space<vmem>>, vector<16x32xf32>
    tpu.vector_store %arg8[%c48_119, %c0_120], %386 {strides = array<i32>} : memref<128x32xf32, #tpu.memory_space<vmem>>, vector<16x32xf32>,
    %c64_121 = arith.constant 64 : index
    %c0_122 = arith.constant 0 : index
    %388 = vector.load %arg9[%c64_121, %c0_122] : memref<128x128xf32, #tpu.memory_space<vmem>>, vector<16x128xf32>
    %cst_123 = arith.constant dense<0.000000e+00> : vector<16x128xf32>
    %389 = tpu.matmul %381, %249, %cst_123 {dimension_numbers = #tpu.dot_dimension_numbers<[1], [0], [0], [1], [0, 0, 1, 1], [], []>} : vector<16x32xf32>, vector<32x128xf32>, vector<16x128xf32> -> vector<16x128xf32>
    %390 = arith.addf %388, %389 : vector<16x128xf32>
    %391 = vector.extract_strided_slice %390 {offsets = [0, 0], sizes = [16, 32], strides = [1, 1]} : vector<16x128xf32> to vector<16x32xf32>
    %392 = arith.negf %391 : vector<16x32xf32>
    %393 = math.exp %392 : vector<16x32xf32>
    %cst_124 = arith.constant 1.000000e+00 : f32
    %394 = vector.broadcast %cst_124 : f32 to vector<16x32xf32>
    %395 = arith.addf %394, %393 : vector<16x32xf32>
    %396 = arith.divf %394, %395 : vector<16x32xf32>
    %397 = vector.extract_strided_slice %390 {offsets = [0, 32], sizes = [16, 32], strides = [1, 1]} : vector<16x128xf32> to vector<16x32xf32>
    %398 = arith.negf %397 : vector<16x32xf32>
    %399 = math.exp %398 : vector<16x32xf32>
    %cst_125 = arith.constant 1.000000e+00 : f32
    %400 = vector.broadcast %cst_125 : f32 to vector<16x32xf32>
    %401 = arith.addf %400, %399 : vector<16x32xf32>
    %402 = arith.divf %400, %401 : vector<16x32xf32>
    %403 = vector.extract_strided_slice %390 {offsets = [0, 64], sizes = [16, 32], strides = [1, 1]} : vector<16x128xf32> to vector<16x32xf32>
    %404 = math.tanh %403 : vector<16x32xf32>
    %405 = vector.extract_strided_slice %390 {offsets = [0, 96], sizes = [16, 32], strides = [1, 1]} : vector<16x128xf32> to vector<16x32xf32>
    %406 = arith.negf %405 : vector<16x32xf32>
    %407 = math.exp %406 : vector<16x32xf32>
    %cst_126 = arith.constant 1.000000e+00 : f32
    %408 = vector.broadcast %cst_126 : f32 to vector<16x32xf32>
    %409 = arith.addf %408, %407 : vector<16x32xf32>
    %410 = arith.divf %408, %409 : vector<16x32xf32>
    %411 = arith.mulf %402, %379 : vector<16x32xf32>
    %412 = arith.mulf %396, %404 : vector<16x32xf32>
    %413 = arith.addf %411, %412 : vector<16x32xf32>
    %414 = math.tanh %413 : vector<16x32xf32>
    %415 = arith.mulf %410, %414 : vector<16x32xf32>
    %cst_127 = arith.constant 0.000000e+00 : f32
    %416 = vector.broadcast %cst_127 : f32 to vector<16x32xf32>
    %417 = arith.cmpf ogt, %415, %416 : vector<16x32xf32>
    %cst_128 = arith.constant 2.500000e-01 : f32
    %418 = vector.broadcast %cst_128 : f32 to vector<16x32xf32>
    %419 = arith.mulf %418, %415 : vector<16x32xf32>
    %420 = arith.select %417, %415, %419 : vector<16x32xi1>, vector<16x32xf32>
    %c64_129 = arith.constant 64 : index
    %c0_130 = arith.constant 0 : index
    %421 = vector.load %arg8[%c64_129, %c0_130] : memref<128x32xf32, #tpu.memory_space<vmem>>, vector<16x32xf32>
    tpu.vector_store %arg8[%c64_129, %c0_130], %420 {strides = array<i32>} : memref<128x32xf32, #tpu.memory_space<vmem>>, vector<16x32xf32>,
    %c80_131 = arith.constant 80 : index
    %c0_132 = arith.constant 0 : index
    %422 = vector.load %arg9[%c80_131, %c0_132] : memref<128x128xf32, #tpu.memory_space<vmem>>, vector<16x128xf32>
    %cst_133 = arith.constant dense<0.000000e+00> : vector<16x128xf32>
    %423 = tpu.matmul %415, %249, %cst_133 {dimension_numbers = #tpu.dot_dimension_numbers<[1], [0], [0], [1], [0, 0, 1, 1], [], []>} : vector<16x32xf32>, vector<32x128xf32>, vector<16x128xf32> -> vector<16x128xf32>
    %424 = arith.addf %422, %423 : vector<16x128xf32>
    %425 = vector.extract_strided_slice %424 {offsets = [0, 0], sizes = [16, 32], strides = [1, 1]} : vector<16x128xf32> to vector<16x32xf32>
    %426 = arith.negf %425 : vector<16x32xf32>
    %427 = math.exp %426 : vector<16x32xf32>
    %cst_134 = arith.constant 1.000000e+00 : f32
    %428 = vector.broadcast %cst_134 : f32 to vector<16x32xf32>
    %429 = arith.addf %428, %427 : vector<16x32xf32>
    %430 = arith.divf %428, %429 : vector<16x32xf32>
    %431 = vector.extract_strided_slice %424 {offsets = [0, 32], sizes = [16, 32], strides = [1, 1]} : vector<16x128xf32> to vector<16x32xf32>
    %432 = arith.negf %431 : vector<16x32xf32>
    %433 = math.exp %432 : vector<16x32xf32>
    %cst_135 = arith.constant 1.000000e+00 : f32
    %434 = vector.broadcast %cst_135 : f32 to vector<16x32xf32>
    %435 = arith.addf %434, %433 : vector<16x32xf32>
    %436 = arith.divf %434, %435 : vector<16x32xf32>
    %437 = vector.extract_strided_slice %424 {offsets = [0, 64], sizes = [16, 32], strides = [1, 1]} : vector<16x128xf32> to vector<16x32xf32>
    %438 = math.tanh %437 : vector<16x32xf32>
    %439 = vector.extract_strided_slice %424 {offsets = [0, 96], sizes = [16, 32], strides = [1, 1]} : vector<16x128xf32> to vector<16x32xf32>
    %440 = arith.negf %439 : vector<16x32xf32>
    %441 = math.exp %440 : vector<16x32xf32>
    %cst_136 = arith.constant 1.000000e+00 : f32
    %442 = vector.broadcast %cst_136 : f32 to vector<16x32xf32>
    %443 = arith.addf %442, %441 : vector<16x32xf32>
    %444 = arith.divf %442, %443 : vector<16x32xf32>
    %445 = arith.mulf %436, %413 : vector<16x32xf32>
    %446 = arith.mulf %430, %438 : vector<16x32xf32>
    %447 = arith.addf %445, %446 : vector<16x32xf32>
    %448 = math.tanh %447 : vector<16x32xf32>
    %449 = arith.mulf %444, %448 : vector<16x32xf32>
    %cst_137 = arith.constant 0.000000e+00 : f32
    %450 = vector.broadcast %cst_137 : f32 to vector<16x32xf32>
    %451 = arith.cmpf ogt, %449, %450 : vector<16x32xf32>
    %cst_138 = arith.constant 2.500000e-01 : f32
    %452 = vector.broadcast %cst_138 : f32 to vector<16x32xf32>
    %453 = arith.mulf %452, %449 : vector<16x32xf32>
    %454 = arith.select %451, %449, %453 : vector<16x32xi1>, vector<16x32xf32>
    %c80_139 = arith.constant 80 : index
    %c0_140 = arith.constant 0 : index
    %455 = vector.load %arg8[%c80_139, %c0_140] : memref<128x32xf32, #tpu.memory_space<vmem>>, vector<16x32xf32>
    tpu.vector_store %arg8[%c80_139, %c0_140], %454 {strides = array<i32>} : memref<128x32xf32, #tpu.memory_space<vmem>>, vector<16x32xf32>,
    %c96_141 = arith.constant 96 : index
    %c0_142 = arith.constant 0 : index
    %456 = vector.load %arg9[%c96_141, %c0_142] : memref<128x128xf32, #tpu.memory_space<vmem>>, vector<16x128xf32>
    %cst_143 = arith.constant dense<0.000000e+00> : vector<16x128xf32>
    %457 = tpu.matmul %449, %249, %cst_143 {dimension_numbers = #tpu.dot_dimension_numbers<[1], [0], [0], [1], [0, 0, 1, 1], [], []>} : vector<16x32xf32>, vector<32x128xf32>, vector<16x128xf32> -> vector<16x128xf32>
    %458 = arith.addf %456, %457 : vector<16x128xf32>
    %459 = vector.extract_strided_slice %458 {offsets = [0, 0], sizes = [16, 32], strides = [1, 1]} : vector<16x128xf32> to vector<16x32xf32>
    %460 = arith.negf %459 : vector<16x32xf32>
    %461 = math.exp %460 : vector<16x32xf32>
    %cst_144 = arith.constant 1.000000e+00 : f32
    %462 = vector.broadcast %cst_144 : f32 to vector<16x32xf32>
    %463 = arith.addf %462, %461 : vector<16x32xf32>
    %464 = arith.divf %462, %463 : vector<16x32xf32>
    %465 = vector.extract_strided_slice %458 {offsets = [0, 32], sizes = [16, 32], strides = [1, 1]} : vector<16x128xf32> to vector<16x32xf32>
    %466 = arith.negf %465 : vector<16x32xf32>
    %467 = math.exp %466 : vector<16x32xf32>
    %cst_145 = arith.constant 1.000000e+00 : f32
    %468 = vector.broadcast %cst_145 : f32 to vector<16x32xf32>
    %469 = arith.addf %468, %467 : vector<16x32xf32>
    %470 = arith.divf %468, %469 : vector<16x32xf32>
    %471 = vector.extract_strided_slice %458 {offsets = [0, 64], sizes = [16, 32], strides = [1, 1]} : vector<16x128xf32> to vector<16x32xf32>
    %472 = math.tanh %471 : vector<16x32xf32>
    %473 = vector.extract_strided_slice %458 {offsets = [0, 96], sizes = [16, 32], strides = [1, 1]} : vector<16x128xf32> to vector<16x32xf32>
    %474 = arith.negf %473 : vector<16x32xf32>
    %475 = math.exp %474 : vector<16x32xf32>
    %cst_146 = arith.constant 1.000000e+00 : f32
    %476 = vector.broadcast %cst_146 : f32 to vector<16x32xf32>
    %477 = arith.addf %476, %475 : vector<16x32xf32>
    %478 = arith.divf %476, %477 : vector<16x32xf32>
    %479 = arith.mulf %470, %447 : vector<16x32xf32>
    %480 = arith.mulf %464, %472 : vector<16x32xf32>
    %481 = arith.addf %479, %480 : vector<16x32xf32>
    %482 = math.tanh %481 : vector<16x32xf32>
    %483 = arith.mulf %478, %482 : vector<16x32xf32>
    %cst_147 = arith.constant 0.000000e+00 : f32
    %484 = vector.broadcast %cst_147 : f32 to vector<16x32xf32>
    %485 = arith.cmpf ogt, %483, %484 : vector<16x32xf32>
    %cst_148 = arith.constant 2.500000e-01 : f32
    %486 = vector.broadcast %cst_148 : f32 to vector<16x32xf32>
    %487 = arith.mulf %486, %483 : vector<16x32xf32>
    %488 = arith.select %485, %483, %487 : vector<16x32xi1>, vector<16x32xf32>
    %c96_149 = arith.constant 96 : index
    %c0_150 = arith.constant 0 : index
    %489 = vector.load %arg8[%c96_149, %c0_150] : memref<128x32xf32, #tpu.memory_space<vmem>>, vector<16x32xf32>
    tpu.vector_store %arg8[%c96_149, %c0_150], %488 {strides = array<i32>} : memref<128x32xf32, #tpu.memory_space<vmem>>, vector<16x32xf32>,
    %c112_151 = arith.constant 112 : index
    %c0_152 = arith.constant 0 : index
    %490 = vector.load %arg9[%c112_151, %c0_152] : memref<128x128xf32, #tpu.memory_space<vmem>>, vector<16x128xf32>
    %cst_153 = arith.constant dense<0.000000e+00> : vector<16x128xf32>
    %491 = tpu.matmul %483, %249, %cst_153 {dimension_numbers = #tpu.dot_dimension_numbers<[1], [0], [0], [1], [0, 0, 1, 1], [], []>} : vector<16x32xf32>, vector<32x128xf32>, vector<16x128xf32> -> vector<16x128xf32>
    %492 = arith.addf %490, %491 : vector<16x128xf32>
    %493 = vector.extract_strided_slice %492 {offsets = [0, 0], sizes = [16, 32], strides = [1, 1]} : vector<16x128xf32> to vector<16x32xf32>
    %494 = arith.negf %493 : vector<16x32xf32>
    %495 = math.exp %494 : vector<16x32xf32>
    %cst_154 = arith.constant 1.000000e+00 : f32
    %496 = vector.broadcast %cst_154 : f32 to vector<16x32xf32>
    %497 = arith.addf %496, %495 : vector<16x32xf32>
    %498 = arith.divf %496, %497 : vector<16x32xf32>
    %499 = vector.extract_strided_slice %492 {offsets = [0, 32], sizes = [16, 32], strides = [1, 1]} : vector<16x128xf32> to vector<16x32xf32>
    %500 = arith.negf %499 : vector<16x32xf32>
    %501 = math.exp %500 : vector<16x32xf32>
    %cst_155 = arith.constant 1.000000e+00 : f32
    %502 = vector.broadcast %cst_155 : f32 to vector<16x32xf32>
    %503 = arith.addf %502, %501 : vector<16x32xf32>
    %504 = arith.divf %502, %503 : vector<16x32xf32>
    %505 = vector.extract_strided_slice %492 {offsets = [0, 64], sizes = [16, 32], strides = [1, 1]} : vector<16x128xf32> to vector<16x32xf32>
    %506 = math.tanh %505 : vector<16x32xf32>
    %507 = vector.extract_strided_slice %492 {offsets = [0, 96], sizes = [16, 32], strides = [1, 1]} : vector<16x128xf32> to vector<16x32xf32>
    %508 = arith.negf %507 : vector<16x32xf32>
    %509 = math.exp %508 : vector<16x32xf32>
    %cst_156 = arith.constant 1.000000e+00 : f32
    %510 = vector.broadcast %cst_156 : f32 to vector<16x32xf32>
    %511 = arith.addf %510, %509 : vector<16x32xf32>
    %512 = arith.divf %510, %511 : vector<16x32xf32>
    %513 = arith.mulf %504, %481 : vector<16x32xf32>
    %514 = arith.mulf %498, %506 : vector<16x32xf32>
    %515 = arith.addf %513, %514 : vector<16x32xf32>
    %516 = math.tanh %515 : vector<16x32xf32>
    %517 = arith.mulf %512, %516 : vector<16x32xf32>
    %cst_157 = arith.constant 0.000000e+00 : f32
    %518 = vector.broadcast %cst_157 : f32 to vector<16x32xf32>
    %519 = arith.cmpf ogt, %517, %518 : vector<16x32xf32>
    %cst_158 = arith.constant 2.500000e-01 : f32
    %520 = vector.broadcast %cst_158 : f32 to vector<16x32xf32>
    %521 = arith.mulf %520, %517 : vector<16x32xf32>
    %522 = arith.select %519, %517, %521 : vector<16x32xi1>, vector<16x32xf32>
    %c112_159 = arith.constant 112 : index
    %c0_160 = arith.constant 0 : index
    %523 = vector.load %arg8[%c112_159, %c0_160] : memref<128x32xf32, #tpu.memory_space<vmem>>, vector<16x32xf32>
    tpu.vector_store %arg8[%c112_159, %c0_160], %522 {strides = array<i32>} : memref<128x32xf32, #tpu.memory_space<vmem>>, vector<16x32xf32>,
    return
  }
  func.func @transform_0(%arg0: i32) -> (i32, i32) {
    %c0_i32 = arith.constant 0 : i32
    %c0_i32_0 = arith.constant 0 : i32
    %c0_i32_1 = arith.constant 0 : i32
    return %c0_i32, %c0_i32_0 : i32, i32
  }
  func.func @transform_1(%arg0: i32) -> (i32, i32) {
    %c0_i32 = arith.constant 0 : i32
    %c0_i32_0 = arith.constant 0 : i32
    %c0_i32_1 = arith.constant 0 : i32
    return %c0_i32, %c0_i32_0 : i32, i32
  }
  func.func @transform_2(%arg0: i32) -> (i32, i32) {
    %c0_i32 = arith.constant 0 : i32
    %c0_i32_0 = arith.constant 0 : i32
    %c0_i32_1 = arith.constant 0 : i32
    return %c0_i32, %c0_i32_0 : i32, i32
  }
  func.func @transform_3(%arg0: i32) -> (i32, i32) {
    %c0_i32 = arith.constant 0 : i32
    %c0_i32_0 = arith.constant 0 : i32
    %c0_i32_1 = arith.constant 0 : i32
    return %c0_i32, %c0_i32_0 : i32, i32
  }
  func.func @transform_4(%arg0: i32) -> (i32, i32) {
    %c0_i32 = arith.constant 0 : i32
    %c0_i32_0 = arith.constant 0 : i32
    %c0_i32_1 = arith.constant 0 : i32
    return %c0_i32, %c0_i32_0 : i32, i32
  }
  func.func @transform_5(%arg0: i32) -> (i32, i32) {
    %c0_i32 = arith.constant 0 : i32
    %c0_i32_0 = arith.constant 0 : i32
    %c0_i32_1 = arith.constant 0 : i32
    return %c0_i32, %c0_i32_0 : i32, i32
  }
  func.func @transform_6(%arg0: i32) -> (i32, i32) {
    %c0_i32 = arith.constant 0 : i32
    %c0_i32_0 = arith.constant 0 : i32
    %c0_i32_1 = arith.constant 0 : i32
    return %c0_i32, %c0_i32_0 : i32, i32
  }
  func.func @transform_7(%arg0: i32) -> (i32, i32) {
    %c0_i32 = arith.constant 0 : i32
    %c0_i32_0 = arith.constant 0 : i32
    %c0_i32_1 = arith.constant 0 : i32
    return %c0_i32, %c0_i32_0 : i32, i32
  }
}

module attributes {stable_mosaic.version = 11 : i64} {
  func.func @_conv_head_kernel(%arg0: i32, %arg1: memref<72x512xf32, #tpu.memory_space<vmem>>, %arg2: memref<12x72xf32, #tpu.memory_space<vmem>>, %arg3: memref<12x1xf32, #tpu.memory_space<vmem>>, %arg4: memref<512x512xf32, #tpu.memory_space<vmem>>, %arg5: memref<1x512xf32, #tpu.memory_space<vmem>>, %arg6: memref<512x32xf32, #tpu.memory_space<vmem>>, %arg7: memref<1x32xf32, #tpu.memory_space<vmem>>, %arg8: memref<12x32xf32, #tpu.memory_space<vmem>>) attributes {dimension_semantics = [#tpu.dimension_semantics<arbitrary>], iteration_bounds = array<i64: 1>, scalar_prefetch = 0 : i64, scratch_operands = 0 : i64, tpu.core_type = #tpu.core_type<tc>, window_params = [{pipeline_mode = #tpu.pipeline_mode<synchronous>, transform_indices = @transform_0, window_bounds = array<i64: 72, 512>}, {pipeline_mode = #tpu.pipeline_mode<synchronous>, transform_indices = @transform_1, window_bounds = array<i64: 12, 72>}, {pipeline_mode = #tpu.pipeline_mode<synchronous>, transform_indices = @transform_2, window_bounds = array<i64: 12, 1>}, {pipeline_mode = #tpu.pipeline_mode<synchronous>, transform_indices = @transform_3, window_bounds = array<i64: 512, 512>}, {pipeline_mode = #tpu.pipeline_mode<synchronous>, transform_indices = @transform_4, window_bounds = array<i64: 1, 512>}, {pipeline_mode = #tpu.pipeline_mode<synchronous>, transform_indices = @transform_5, window_bounds = array<i64: 512, 32>}, {pipeline_mode = #tpu.pipeline_mode<synchronous>, transform_indices = @transform_6, window_bounds = array<i64: 1, 32>}, {pipeline_mode = #tpu.pipeline_mode<synchronous>, transform_indices = @transform_7, window_bounds = array<i64: 12, 32>}]} {
    %c0 = arith.constant 0 : index
    %c0_0 = arith.constant 0 : index
    %0 = vector.load %arg2[%c0, %c0_0] : memref<12x72xf32, #tpu.memory_space<vmem>>, vector<12x72xf32>
    %c0_1 = arith.constant 0 : index
    %c0_2 = arith.constant 0 : index
    %1 = vector.load %arg1[%c0_1, %c0_2] : memref<72x512xf32, #tpu.memory_space<vmem>>, vector<72x512xf32>
    %cst = arith.constant dense<0.000000e+00> : vector<12x512xf32>
    %2 = tpu.matmul %0, %1, %cst {dimension_numbers = #tpu.dot_dimension_numbers<[1], [0], [0], [1], [0, 0, 1, 1], [], []>} : vector<12x72xf32>, vector<72x512xf32>, vector<12x512xf32> -> vector<12x512xf32>
    %c0_3 = arith.constant 0 : index
    %c0_4 = arith.constant 0 : index
    %3 = vector.load %arg3[%c0_3, %c0_4] : memref<12x1xf32, #tpu.memory_space<vmem>>, vector<12x1xf32>
    %4 = vector.broadcast %3 : vector<12x1xf32> to vector<12x512xf32>
    %5 = arith.addf %2, %4 : vector<12x512xf32>
    %cst_5 = arith.constant 0.000000e+00 : f32
    %6 = vector.broadcast %cst_5 : f32 to vector<12x512xf32>
    %7 = arith.cmpf ogt, %5, %6 : vector<12x512xf32>
    %cst_6 = arith.constant 2.500000e-01 : f32
    %8 = vector.broadcast %cst_6 : f32 to vector<12x512xf32>
    %9 = arith.mulf %8, %5 : vector<12x512xf32>
    %10 = arith.select %7, %5, %9 : vector<12x512xi1>, vector<12x512xf32>
    %c0_7 = arith.constant 0 : index
    %c0_8 = arith.constant 0 : index
    %11 = vector.load %arg4[%c0_7, %c0_8] : memref<512x512xf32, #tpu.memory_space<vmem>>, vector<512x512xf32>
    %cst_9 = arith.constant dense<0.000000e+00> : vector<12x512xf32>
    %12 = tpu.matmul %10, %11, %cst_9 {dimension_numbers = #tpu.dot_dimension_numbers<[1], [0], [0], [1], [0, 0, 1, 1], [], []>} : vector<12x512xf32>, vector<512x512xf32>, vector<12x512xf32> -> vector<12x512xf32>
    %c0_10 = arith.constant 0 : index
    %c0_11 = arith.constant 0 : index
    %13 = vector.load %arg5[%c0_10, %c0_11] : memref<1x512xf32, #tpu.memory_space<vmem>>, vector<1x512xf32>
    %14 = vector.broadcast %13 : vector<1x512xf32> to vector<12x512xf32>
    %15 = arith.addf %12, %14 : vector<12x512xf32>
    %cst_12 = arith.constant 0.000000e+00 : f32
    %16 = vector.broadcast %cst_12 : f32 to vector<12x512xf32>
    %17 = arith.cmpf ogt, %15, %16 : vector<12x512xf32>
    %cst_13 = arith.constant 2.500000e-01 : f32
    %18 = vector.broadcast %cst_13 : f32 to vector<12x512xf32>
    %19 = arith.mulf %18, %15 : vector<12x512xf32>
    %20 = arith.select %17, %15, %19 : vector<12x512xi1>, vector<12x512xf32>
    %c0_14 = arith.constant 0 : index
    %c0_15 = arith.constant 0 : index
    %21 = vector.load %arg6[%c0_14, %c0_15] : memref<512x32xf32, #tpu.memory_space<vmem>>, vector<512x32xf32>
    %cst_16 = arith.constant dense<0.000000e+00> : vector<12x32xf32>
    %22 = tpu.matmul %20, %21, %cst_16 {dimension_numbers = #tpu.dot_dimension_numbers<[1], [0], [0], [1], [0, 0, 1, 1], [], []>} : vector<12x512xf32>, vector<512x32xf32>, vector<12x32xf32> -> vector<12x32xf32>
    %c0_17 = arith.constant 0 : index
    %c0_18 = arith.constant 0 : index
    %23 = vector.load %arg7[%c0_17, %c0_18] : memref<1x32xf32, #tpu.memory_space<vmem>>, vector<1x32xf32>
    %24 = vector.broadcast %23 : vector<1x32xf32> to vector<12x32xf32>
    %25 = arith.addf %22, %24 : vector<12x32xf32>
    %c0_19 = arith.constant 0 : index
    %c0_20 = arith.constant 0 : index
    %26 = vector.load %arg8[%c0_19, %c0_20] : memref<12x32xf32, #tpu.memory_space<vmem>>, vector<12x32xf32>
    tpu.vector_store %arg8[%c0_19, %c0_20], %25 {strides = array<i32>} : memref<12x32xf32, #tpu.memory_space<vmem>>, vector<12x32xf32>,
    return
  }
  func.func @transform_0(%arg0: i32) -> (i32, i32) {
    %c0_i32 = arith.constant 0 : i32
    %c0_i32_0 = arith.constant 0 : i32
    %c0_i32_1 = arith.constant 0 : i32
    return %c0_i32, %c0_i32_0 : i32, i32
  }
  func.func @transform_1(%arg0: i32) -> (i32, i32) {
    %c0_i32 = arith.constant 0 : i32
    %c0_i32_0 = arith.constant 0 : i32
    %c0_i32_1 = arith.constant 0 : i32
    return %c0_i32, %c0_i32_0 : i32, i32
  }
  func.func @transform_2(%arg0: i32) -> (i32, i32) {
    %c0_i32 = arith.constant 0 : i32
    %c0_i32_0 = arith.constant 0 : i32
    %c0_i32_1 = arith.constant 0 : i32
    return %c0_i32, %c0_i32_0 : i32, i32
  }
  func.func @transform_3(%arg0: i32) -> (i32, i32) {
    %c0_i32 = arith.constant 0 : i32
    %c0_i32_0 = arith.constant 0 : i32
    %c0_i32_1 = arith.constant 0 : i32
    return %c0_i32, %c0_i32_0 : i32, i32
  }
  func.func @transform_4(%arg0: i32) -> (i32, i32) {
    %c0_i32 = arith.constant 0 : i32
    %c0_i32_0 = arith.constant 0 : i32
    %c0_i32_1 = arith.constant 0 : i32
    return %c0_i32, %c0_i32_0 : i32, i32
  }
  func.func @transform_5(%arg0: i32) -> (i32, i32) {
    %c0_i32 = arith.constant 0 : i32
    %c0_i32_0 = arith.constant 0 : i32
    %c0_i32_1 = arith.constant 0 : i32
    return %c0_i32, %c0_i32_0 : i32, i32
  }
  func.func @transform_6(%arg0: i32) -> (i32, i32) {
    %c0_i32 = arith.constant 0 : i32
    %c0_i32_0 = arith.constant 0 : i32
    %c0_i32_1 = arith.constant 0 : i32
    return %c0_i32, %c0_i32_0 : i32, i32
  }
  func.func @transform_7(%arg0: i32) -> (i32, i32) {
    %c0_i32 = arith.constant 0 : i32
    %c0_i32_0 = arith.constant 0 : i32
    %c0_i32_1 = arith.constant 0 : i32
    return %c0_i32, %c0_i32_0 : i32, i32
  }
}

</mosaic_0001>

<llo_original>
// kernel: forward.5
$region0: #{forward.5}
  #allocation0 [shape = 'u32[]', space=smem, size = 0x4, offset = 0x4, fixed_abs, tag = 'smem constant byte address 0x4 - core index']
  #allocation1 [shape = 'u32[144,128]{1,0:T(1,128)}', space=vmem, size = 0x12000, scoped, tag = 'internal scratch']
  %s0 = inlined_call_operand.vmem [shape: f32[8,16,32], index: 0, kind: input, shape index: {}]
  %s1 = inlined_call_operand.vmem [shape: f32[8,16,16], index: 1, kind: input, shape index: {}]
  %s2 = inlined_call_operand.vmem [shape: f32[32,32], index: 2, kind: input, shape index: {}]
  %s3 = inlined_call_operand.vmem [shape: f32[2,32], index: 3, kind: input, shape index: {}]
  %s4 = inlined_call_operand.vmem [shape: f32[2,32], index: 4, kind: input, shape index: {}]
  %s5 = inlined_call_operand.vmem [shape: f32[2,32], index: 5, kind: input, shape index: {}]
  %s6 = inlined_call_operand.vmem [shape: f32[1,32], index: 6, kind: input, shape index: {}]
  %s7 = inlined_call_operand.vmem [shape: f32[32,32], index: 7, kind: input, shape index: {}]
  %s8 = inlined_call_operand.vmem [shape: f32[1,32], index: 8, kind: input, shape index: {}]
  %s9 = inlined_call_operand.vmem [shape: f32[1,32], index: 9, kind: input, shape index: {}]
  %s10 = inlined_call_operand.vmem [shape: f32[1,32], index: 10, kind: input, shape index: {}]
  %s11 = inlined_call_operand.vmem [shape: f32[32,64], index: 11, kind: input, shape index: {}]
  %s12 = inlined_call_operand.vmem [shape: f32[1,64], index: 12, kind: input, shape index: {}]
  %s13 = inlined_call_operand.vmem [shape: f32[64,32], index: 13, kind: input, shape index: {}]
  %s14 = inlined_call_operand.vmem [shape: f32[1,32], index: 14, kind: input, shape index: {}]
  %s15 = inlined_call_operand.vmem [shape: f32[8,16,32], index: 15, kind: output, shape index: {}]
  %s16 = sld [smem:[#allocation0]]
  $region93: #{forward.5} parent=0
    _
  %s18 = ssub.s32 1, %s16
  %s19 = scalar_select 0, %s18, %s16
  loop: start=0, step=1, limit=10
  $region2: #{forward.5} parent=0 // loop_pre_header
    _
  $region3: #{forward.5} parent=0 // loop_header
    %s21 = sphi 0, %s25
    %p22 = scmp.ge.s32.totalorder %s21, 10
    %s31 = sphi 0, %s33
    %s34 = sphi 0, %s31
    %s35 = sphi 0, %s34
    %s51 = sphi 0, %s35
    %s57 = sphi 0, %s59
    %s60 = sphi 0, %s57
    %s61 = sphi 0, %s60
    %s77 = sphi 0, %s61
    %s81 = sphi 0, %s81
    %s83 = sphi 0, %s81
    %s84 = sphi 0, %s83
    %s98 = sphi 0, %s84
    %s102 = sphi 0, %s102
    %s104 = sphi 0, %s102
    %s105 = sphi 0, %s104
    %s119 = sphi 0, %s105
    %s123 = sphi 0, %s123
    %s125 = sphi 0, %s123
    %s126 = sphi 0, %s125
    %s140 = sphi 0, %s126
    %s144 = sphi 0, %s144
    %s146 = sphi 0, %s144
    %s147 = sphi 0, %s146
    %s161 = sphi 0, %s147
    %s165 = sphi 0, %s165
    %s167 = sphi 0, %s165
    %s168 = sphi 0, %s167
    %s182 = sphi 0, %s168
    %s186 = sphi 0, %s186
    %s188 = sphi 0, %s186
    %s189 = sphi 0, %s188
    %s203 = sphi 0, %s189
    %s207 = sphi 0, %s207
    %s209 = sphi 0, %s207
    %s210 = sphi 0, %s209
    %s224 = sphi 0, %s210
    %s228 = sphi 0, %s228
    %s230 = sphi 0, %s228
    %s231 = sphi 0, %s230
    %s245 = sphi 0, %s231
    %s249 = sphi 0, %s249
    %s251 = sphi 0, %s249
    %s252 = sphi 0, %s251
    %s266 = sphi 0, %s252
    %s270 = sphi 0, %s270
    %s272 = sphi 0, %s270
    %s273 = sphi 0, %s272
    %s287 = sphi 0, %s273
    %s291 = sphi 0, %s291
    %s293 = sphi 0, %s291
    %s294 = sphi 0, %s293
    %s308 = sphi 0, %s294
    %s312 = sphi 0, %s312
    %s314 = sphi 0, %s312
    %s315 = sphi 0, %s314
    %s329 = sphi 0, %s315
    %s333 = sphi 0, %s333
    %s335 = sphi 0, %s333
    %s336 = sphi 0, %s335
    %s350 = sphi 0, %s336
    %s356 = sphi 0, %s358
    %s359 = sphi 0, %s356
    %s360 = sphi 0, %s359
    %s376 = sphi 0, %s360
  $region4: #{forward.5} parent=0 // loop_header_branch
    %24 = sbr.rel (%p22) target = $region8
  $region5: #{forward.5} parent=0 // loop_body
    %s26 = ssub.s32 %s21, 1
    %s27 = ssub.s32 %s21, 2
    %s28 = sadd.s32 %s21, 1
    %s29 = ssub.s32 %s21, %s28
    %p30 = scmp.eq.s32.totalorder %s29, 0
    %s32 = sadd.s32 %s31, 1
    %s33 = scalar_select %p30, %s31, %s32
    %p36 = pneg %p30
    %p37 = scmp.eq.s32.totalorder %s21, 7
    %p38 = por %p36, %p37
    %p39 = scmp.ne.s32.totalorder %s31, %s34
    %p40 = scmp.eq.s32.totalorder %s21, 0
    %p41 = por %p39, %p40
    %p42 = scmp.ne.s32.totalorder %s31, %s34
    %p43 = scmp.eq.s32.totalorder %s26, 7
    %p44 = por %p42, %p43
    %p45 = scmp.ne.s32.totalorder %s34, %s35
    %p46 = scmp.eq.s32.totalorder %s26, 0
    %p47 = por %p45, %p46
    %p48 = scmp.ne.s32.totalorder %s34, %s35
    %p49 = scmp.eq.s32.totalorder %s27, 7
    %p50 = por %p48, %p49
    %p52 = scmp.ne.s32.totalorder %s35, %s51
    %p53 = scmp.eq.s32.totalorder %s27, 0
    %p54 = por %p52, %p53
    %s55 = ssub.s32 %s21, %s28
    %p56 = scmp.eq.s32.totalorder %s55, 0
    %s58 = sadd.s32 %s57, 1
    %s59 = scalar_select %p56, %s57, %s58
    %p62 = pneg %p56
    %p63 = scmp.eq.s32.totalorder %s21, 7
    %p64 = por %p62, %p63
    %p65 = scmp.ne.s32.totalorder %s57, %s60
    %p66 = scmp.eq.s32.totalorder %s21, 0
    %p67 = por %p65, %p66
    %p68 = scmp.ne.s32.totalorder %s57, %s60
    %p69 = scmp.eq.s32.totalorder %s26, 7
    %p70 = por %p68, %p69
    %p71 = scmp.ne.s32.totalorder %s60, %s61
    %p72 = scmp.eq.s32.totalorder %s26, 0
    %p73 = por %p71, %p72
    %p74 = scmp.ne.s32.totalorder %s60, %s61
    %p75 = scmp.eq.s32.totalorder %s27, 7
    %p76 = por %p74, %p75
    %p78 = scmp.ne.s32.totalorder %s61, %s77
    %p79 = scmp.eq.s32.totalorder %s27, 0
    %p80 = por %p78, %p79
    %s82 = sadd.s32 %s81, 1
    %p85 = scmp.eq.s32.totalorder %s21, 7
    %p86 = scmp.ne.s32.totalorder %s81, %s83
    %p87 = scmp.eq.s32.totalorder %s21, 0
    %p88 = por %p86, %p87
    %p89 = scmp.ne.s32.totalorder %s81, %s83
    %p90 = scmp.eq.s32.totalorder %s26, 7
    %p91 = por %p89, %p90
    %p92 = scmp.ne.s32.totalorder %s83, %s84
    %p93 = scmp.eq.s32.totalorder %s26, 0
    %p94 = por %p92, %p93
    %p95 = scmp.ne.s32.totalorder %s83, %s84
    %p96 = scmp.eq.s32.totalorder %s27, 7
    %p97 = por %p95, %p96
    %p99 = scmp.ne.s32.totalorder %s84, %s98
    %p100 = scmp.eq.s32.totalorder %s27, 0
    %p101 = por %p99, %p100
    %s103 = sadd.s32 %s102, 1
    %p106 = scmp.eq.s32.totalorder %s21, 7
    %p107 = scmp.ne.s32.totalorder %s102, %s104
    %p108 = scmp.eq.s32.totalorder %s21, 0
    %p109 = por %p107, %p108
    %p110 = scmp.ne.s32.totalorder %s102, %s104
    %p111 = scmp.eq.s32.totalorder %s26, 7
    %p112 = por %p110, %p111
    %p113 = scmp.ne.s32.totalorder %s104, %s105
    %p114 = scmp.eq.s32.totalorder %s26, 0
    %p115 = por %p113, %p114
    %p116 = scmp.ne.s32.totalorder %s104, %s105
    %p117 = scmp.eq.s32.totalorder %s27, 7
    %p118 = por %p116, %p117
    %p120 = scmp.ne.s32.totalorder %s105, %s119
    %p121 = scmp.eq.s32.totalorder %s27, 0
    %p122 = por %p120, %p121
    %s124 = sadd.s32 %s123, 1
    %p127 = scmp.eq.s32.totalorder %s21, 7
    %p128 = scmp.ne.s32.totalorder %s123, %s125
    %p129 = scmp.eq.s32.totalorder %s21, 0
    %p130 = por %p128, %p129
    %p131 = scmp.ne.s32.totalorder %s123, %s125
    %p132 = scmp.eq.s32.totalorder %s26, 7
    %p133 = por %p131, %p132
    %p134 = scmp.ne.s32.totalorder %s125, %s126
    %p135 = scmp.eq.s32.totalorder %s26, 0
    %p136 = por %p134, %p135
    %p137 = scmp.ne.s32.totalorder %s125, %s126
    %p138 = scmp.eq.s32.totalorder %s27, 7
    %p139 = por %p137, %p138
    %p141 = scmp.ne.s32.totalorder %s126, %s140
    %p142 = scmp.eq.s32.totalorder %s27, 0
    %p143 = por %p141, %p142
    %s145 = sadd.s32 %s144, 1
    %p148 = scmp.eq.s32.totalorder %s21, 7
    %p149 = scmp.ne.s32.totalorder %s144, %s146
    %p150 = scmp.eq.s32.totalorder %s21, 0
    %p151 = por %p149, %p150
    %p152 = scmp.ne.s32.totalorder %s144, %s146
    %p153 = scmp.eq.s32.totalorder %s26, 7
    %p154 = por %p152, %p153
    %p155 = scmp.ne.s32.totalorder %s146, %s147
    %p156 = scmp.eq.s32.totalorder %s26, 0
    %p157 = por %p155, %p156
    %p158 = scmp.ne.s32.totalorder %s146, %s147
    %p159 = scmp.eq.s32.totalorder %s27, 7
    %p160 = por %p158, %p159
    %p162 = scmp.ne.s32.totalorder %s147, %s161
    %p163 = scmp.eq.s32.totalorder %s27, 0
    %p164 = por %p162, %p163
    %s166 = sadd.s32 %s165, 1
    %p169 = scmp.eq.s32.totalorder %s21, 7
    %p170 = scmp.ne.s32.totalorder %s165, %s167
    %p171 = scmp.eq.s32.totalorder %s21, 0
    %p172 = por %p170, %p171
    %p173 = scmp.ne.s32.totalorder %s165, %s167
    %p174 = scmp.eq.s32.totalorder %s26, 7
    %p175 = por %p173, %p174
    %p176 = scmp.ne.s32.totalorder %s167, %s168
    %p177 = scmp.eq.s32.totalorder %s26, 0
    %p178 = por %p176, %p177
    %p179 = scmp.ne.s32.totalorder %s167, %s168
    %p180 = scmp.eq.s32.totalorder %s27, 7
    %p181 = por %p179, %p180
    %p183 = scmp.ne.s32.totalorder %s168, %s182
    %p184 = scmp.eq.s32.totalorder %s27, 0
    %p185 = por %p183, %p184
    %s187 = sadd.s32 %s186, 1
    %p190 = scmp.eq.s32.totalorder %s21, 7
    %p191 = scmp.ne.s32.totalorder %s186, %s188
    %p192 = scmp.eq.s32.totalorder %s21, 0
    %p193 = por %p191, %p192
    %p194 = scmp.ne.s32.totalorder %s186, %s188
    %p195 = scmp.eq.s32.totalorder %s26, 7
    %p196 = por %p194, %p195
    %p197 = scmp.ne.s32.totalorder %s188, %s189
    %p198 = scmp.eq.s32.totalorder %s26, 0
    %p199 = por %p197, %p198
    %p200 = scmp.ne.s32.totalorder %s188, %s189
    %p201 = scmp.eq.s32.totalorder %s27, 7
    %p202 = por %p200, %p201
    %p204 = scmp.ne.s32.totalorder %s189, %s203
    %p205 = scmp.eq.s32.totalorder %s27, 0
    %p206 = por %p204, %p205
    %s208 = sadd.s32 %s207, 1
    %p211 = scmp.eq.s32.totalorder %s21, 7
    %p212 = scmp.ne.s32.totalorder %s207, %s209
    %p213 = scmp.eq.s32.totalorder %s21, 0
    %p214 = por %p212, %p213
    %p215 = scmp.ne.s32.totalorder %s207, %s209
    %p216 = scmp.eq.s32.totalorder %s26, 7
    %p217 = por %p215, %p216
    %p218 = scmp.ne.s32.totalorder %s209, %s210
    %p219 = scmp.eq.s32.totalorder %s26, 0
    %p220 = por %p218, %p219
    %p221 = scmp.ne.s32.totalorder %s209, %s210
    %p222 = scmp.eq.s32.totalorder %s27, 7
    %p223 = por %p221, %p222
    %p225 = scmp.ne.s32.totalorder %s210, %s224
    %p226 = scmp.eq.s32.totalorder %s27, 0
    %p227 = por %p225, %p226
    %s229 = sadd.s32 %s228, 1
    %p232 = scmp.eq.s32.totalorder %s21, 7
    %p233 = scmp.ne.s32.totalorder %s228, %s230
    %p234 = scmp.eq.s32.totalorder %s21, 0
    %p235 = por %p233, %p234
    %p236 = scmp.ne.s32.totalorder %s228, %s230
    %p237 = scmp.eq.s32.totalorder %s26, 7
    %p238 = por %p236, %p237
    %p239 = scmp.ne.s32.totalorder %s230, %s231
    %p240 = scmp.eq.s32.totalorder %s26, 0
    %p241 = por %p239, %p240
    %p242 = scmp.ne.s32.totalorder %s230, %s231
    %p243 = scmp.eq.s32.totalorder %s27, 7
    %p244 = por %p242, %p243
    %p246 = scmp.ne.s32.totalorder %s231, %s245
    %p247 = scmp.eq.s32.totalorder %s27, 0
    %p248 = por %p246, %p247
    %s250 = sadd.s32 %s249, 1
    %p253 = scmp.eq.s32.totalorder %s21, 7
    %p254 = scmp.ne.s32.totalorder %s249, %s251
    %p255 = scmp.eq.s32.totalorder %s21, 0
    %p256 = por %p254, %p255
    %p257 = scmp.ne.s32.totalorder %s249, %s251
    %p258 = scmp.eq.s32.totalorder %s26, 7
    %p259 = por %p257, %p258
    %p260 = scmp.ne.s32.totalorder %s251, %s252
    %p261 = scmp.eq.s32.totalorder %s26, 0
    %p262 = por %p260, %p261
    %p263 = scmp.ne.s32.totalorder %s251, %s252
    %p264 = scmp.eq.s32.totalorder %s27, 7
    %p265 = por %p263, %p264
    %p267 = scmp.ne.s32.totalorder %s252, %s266
    %p268 = scmp.eq.s32.totalorder %s27, 0
    %p269 = por %p267, %p268
    %s271 = sadd.s32 %s270, 1
    %p274 = scmp.eq.s32.totalorder %s21, 7
    %p275 = scmp.ne.s32.totalorder %s270, %s272
    %p276 = scmp.eq.s32.totalorder %s21, 0
    %p277 = por %p275, %p276
    %p278 = scmp.ne.s32.totalorder %s270, %s272
    %p279 = scmp.eq.s32.totalorder %s26, 7
    %p280 = por %p278, %p279
    %p281 = scmp.ne.s32.totalorder %s272, %s273
    %p282 = scmp.eq.s32.totalorder %s26, 0
    %p283 = por %p281, %p282
    %p284 = scmp.ne.s32.totalorder %s272, %s273
    %p285 = scmp.eq.s32.totalorder %s27, 7
    %p286 = por %p284, %p285
    %p288 = scmp.ne.s32.totalorder %s273, %s287
    %p289 = scmp.eq.s32.totalorder %s27, 0
    %p290 = por %p288, %p289
    %s292 = sadd.s32 %s291, 1
    %p295 = scmp.eq.s32.totalorder %s21, 7
    %p296 = scmp.ne.s32.totalorder %s291, %s293
    %p297 = scmp.eq.s32.totalorder %s21, 0
    %p298 = por %p296, %p297
    %p299 = scmp.ne.s32.totalorder %s291, %s293
    %p300 = scmp.eq.s32.totalorder %s26, 7
    %p301 = por %p299, %p300
    %p302 = scmp.ne.s32.totalorder %s293, %s294
    %p303 = scmp.eq.s32.totalorder %s26, 0
    %p304 = por %p302, %p303
    %p305 = scmp.ne.s32.totalorder %s293, %s294
    %p306 = scmp.eq.s32.totalorder %s27, 7
    %p307 = por %p305, %p306
    %p309 = scmp.ne.s32.totalorder %s294, %s308
    %p310 = scmp.eq.s32.totalorder %s27, 0
    %p311 = por %p309, %p310
    %s313 = sadd.s32 %s312, 1
    %p316 = scmp.eq.s32.totalorder %s21, 7
    %p317 = scmp.ne.s32.totalorder %s312, %s314
    %p318 = scmp.eq.s32.totalorder %s21, 0
    %p319 = por %p317, %p318
    %p320 = scmp.ne.s32.totalorder %s312, %s314
    %p321 = scmp.eq.s32.totalorder %s26, 7
    %p322 = por %p320, %p321
    %p323 = scmp.ne.s32.totalorder %s314, %s315
    %p324 = scmp.eq.s32.totalorder %s26, 0
    %p325 = por %p323, %p324
    %p326 = scmp.ne.s32.totalorder %s314, %s315
    %p327 = scmp.eq.s32.totalorder %s27, 7
    %p328 = por %p326, %p327
    %p330 = scmp.ne.s32.totalorder %s315, %s329
    %p331 = scmp.eq.s32.totalorder %s27, 0
    %p332 = por %p330, %p331
    %s334 = sadd.s32 %s333, 1
    %p337 = scmp.eq.s32.totalorder %s21, 7
    %p338 = scmp.ne.s32.totalorder %s333, %s335
    %p339 = scmp.eq.s32.totalorder %s21, 0
    %p340 = por %p338, %p339
    %p341 = scmp.ne.s32.totalorder %s333, %s335
    %p342 = scmp.eq.s32.totalorder %s26, 7
    %p343 = por %p341, %p342
    %p344 = scmp.ne.s32.totalorder %s335, %s336
    %p345 = scmp.eq.s32.totalorder %s26, 0
    %p346 = por %p344, %p345
    %p347 = scmp.ne.s32.totalorder %s335, %s336
    %p348 = scmp.eq.s32.totalorder %s27, 7
    %p349 = por %p347, %p348
    %p351 = scmp.ne.s32.totalorder %s336, %s350
    %p352 = scmp.eq.s32.totalorder %s27, 0
    %p353 = por %p351, %p352
    %s354 = ssub.s32 %s21, %s28
    %p355 = scmp.eq.s32.totalorder %s354, 0
    %s357 = sadd.s32 %s356, 1
    %s358 = scalar_select %p355, %s356, %s357
    %p361 = pneg %p355
    %p362 = scmp.eq.s32.totalorder %s21, 7
    %p363 = por %p361, %p362
    %p364 = scmp.ne.s32.totalorder %s356, %s359
    %p365 = scmp.eq.s32.totalorder %s21, 0
    %p366 = por %p364, %p365
    %p367 = scmp.ne.s32.totalorder %s356, %s359
    %p368 = scmp.eq.s32.totalorder %s26, 7
    %p369 = por %p367, %p368
    %p370 = scmp.ne.s32.totalorder %s359, %s360
    %p371 = scmp.eq.s32.totalorder %s26, 0
    %p372 = por %p370, %p371
    %p373 = scmp.ne.s32.totalorder %s359, %s360
    %p374 = scmp.eq.s32.totalorder %s27, 7
    %p375 = por %p373, %p374
    %p377 = scmp.ne.s32.totalorder %s360, %s376
    %p378 = scmp.eq.s32.totalorder %s27, 0
    %p379 = por %p377, %p378
    %p380 = scmp.le.s32.totalorder 1, %s21
    %p381 = scmp.lt.s32.totalorder %s21, 9
    %p382 = pnand %p380, %p381
    %p383 = pneg %p382
    // Predicated region
    $region9: #{forward.5} parent=5 // pred_check
      _
    $region10: #{forward.5} parent=5 // pred_check_branch
      %385 = sbr.rel (%p382) target = $region12
    $region11: #{forward.5} parent=5 // pred_region
      %s386 = ssub.s32 %s21, 1
      // Predicated region
      $region13: #{forward.5} parent=11 // pred_check
        %p387 = pneg %p94
      $region14: #{forward.5} parent=11 // pred_check_branch
        %389 = sbr.rel (%p387) target = $region16
      $region15: #{forward.5} parent=11 // pred_region
        _
      $region16: #{forward.5} parent=11 // pred_fallthru
        _
      // Predicated region
      $region17: #{forward.5} parent=11 // pred_check
        %p390 = pneg %p115
      $region18: #{forward.5} parent=11 // pred_check_branch
        %392 = sbr.rel (%p390) target = $region20
      $region19: #{forward.5} parent=11 // pred_region
        _
      $region20: #{forward.5} parent=11 // pred_fallthru
        _
      // Predicated region
      $region21: #{forward.5} parent=11 // pred_check
        %p393 = pneg %p136
      $region22: #{forward.5} parent=11 // pred_check_branch
        %395 = sbr.rel (%p393) target = $region24
      $region23: #{forward.5} parent=11 // pred_region
        _
      $region24: #{forward.5} parent=11 // pred_fallthru
        _
      // Predicated region
      $region25: #{forward.5} parent=11 // pred_check
        %p396 = pneg %p157
      $region26: #{forward.5} parent=11 // pred_check_branch
        %398 = sbr.rel (%p396) target = $region28
      $region27: #{forward.5} parent=11 // pred_region
        _
      $region28: #{forward.5} parent=11 // pred_fallthru
        _
      // Predicated region
      $region29: #{forward.5} parent=11 // pred_check
        %p399 = pneg %p178
      $region30: #{forward.5} parent=11 // pred_check_branch
        %401 = sbr.rel (%p399) target = $region32
      $region31: #{forward.5} parent=11 // pred_region
        _
      $region32: #{forward.5} parent=11 // pred_fallthru
        _
      // Predicated region
      $region33: #{forward.5} parent=11 // pred_check
        %p402 = pneg %p199
      $region34: #{forward.5} parent=11 // pred_check_branch
        %404 = sbr.rel (%p402) target = $region36
      $region35: #{forward.5} parent=11 // pred_region
        _
      $region36: #{forward.5} parent=11 // pred_fallthru
        _
      // Predicated region
      $region37: #{forward.5} parent=11 // pred_check
        %p405 = pneg %p220
      $region38: #{forward.5} parent=11 // pred_check_branch
        %407 = sbr.rel (%p405) target = $region40
      $region39: #{forward.5} parent=11 // pred_region
        _
      $region40: #{forward.5} parent=11 // pred_fallthru
        _
      // Predicated region
      $region41: #{forward.5} parent=11 // pred_check
        %p408 = pneg %p241
      $region42: #{forward.5} parent=11 // pred_check_branch
        %410 = sbr.rel (%p408) target = $region44
      $region43: #{forward.5} parent=11 // pred_region
        _
      $region44: #{forward.5} parent=11 // pred_fallthru
        _
      // Predicated region
      $region45: #{forward.5} parent=11 // pred_check
        %p411 = pneg %p262
      $region46: #{forward.5} parent=11 // pred_check_branch
        %413 = sbr.rel (%p411) target = $region48
      $region47: #{forward.5} parent=11 // pred_region
        _
      $region48: #{forward.5} parent=11 // pred_fallthru
        _
      // Predicated region
      $region49: #{forward.5} parent=11 // pred_check
        %p414 = pneg %p283
      $region50: #{forward.5} parent=11 // pred_check_branch
        %416 = sbr.rel (%p414) target = $region52
      $region51: #{forward.5} parent=11 // pred_region
        _
      $region52: #{forward.5} parent=11 // pred_fallthru
        _
      // Predicated region
      $region53: #{forward.5} parent=11 // pred_check
        %p417 = pneg %p304
      $region54: #{forward.5} parent=11 // pred_check_branch
        %419 = sbr.rel (%p417) target = $region56
      $region55: #{forward.5} parent=11 // pred_region
        _
      $region56: #{forward.5} parent=11 // pred_fallthru
        _
      // Predicated region
      $region57: #{forward.5} parent=11 // pred_check
        %p420 = pneg %p325
      $region58: #{forward.5} parent=11 // pred_check_branch
        %422 = sbr.rel (%p420) target = $region60
      $region59: #{forward.5} parent=11 // pred_region
        _
      $region60: #{forward.5} parent=11 // pred_fallthru
        _
      // Predicated region
      $region61: #{forward.5} parent=11 // pred_check
        %p423 = pneg %p346
      $region62: #{forward.5} parent=11 // pred_check_branch
        %425 = sbr.rel (%p423) target = $region64
      $region63: #{forward.5} parent=11 // pred_region
        _
      $region64: #{forward.5} parent=11 // pred_fallthru
        _
    $region12: #{forward.5} parent=5 // pred_fallthru
      _
    %p426 = scmp.lt.s32.totalorder %s21, 8
    // Predicated region
    $region65: #{forward.5} parent=5 // pred_check
      %p427 = pneg %p426
    $region66: #{forward.5} parent=5 // pred_check_branch
      %429 = sbr.rel (%p427) target = $region68
    $region67: #{forward.5} parent=5 // pred_region
      // Predicated region
      $region69: #{forward.5} parent=67 // pred_check
        %p430 = pneg %p41
      $region70: #{forward.5} parent=67 // pred_check_branch
        %432 = sbr.rel (%p430) target = $region72
      $region71: #{forward.5} parent=67 // pred_region
        %p433 = scmp.lt.s32.totalorder %s21, 7
        %s434 = scalar_select %p433, %s21, 7
        %s435 = smul.addr %s434, 2
        %s436 = smul.addr %s435, 8
        %s437 = scalar_lea.vmem %s0, %s436
      $region72: #{forward.5} parent=67 // pred_fallthru
        _
      // Predicated region
      $region73: #{forward.5} parent=67 // pred_check
        %p438 = pneg %p67
      $region74: #{forward.5} parent=67 // pred_check_branch
        %440 = sbr.rel (%p438) target = $region76
      $region75: #{forward.5} parent=67 // pred_region
        %p441 = scmp.lt.s32.totalorder %s21, 7
        %s442 = scalar_select %p441, %s21, 7
        %s443 = smul.addr %s442, 2
        %s444 = smul.addr %s443, 8
        %s445 = scalar_lea.vmem %s1, %s444
      $region76: #{forward.5} parent=67 // pred_fallthru
        _
    $region68: #{forward.5} parent=5 // pred_fallthru
      _
    %p446 = scmp.le.s32.totalorder 1, %s21
    %p447 = scmp.lt.s32.totalorder %s21, 9
    %p448 = pnand %p446, %p447
    %p449 = pneg %p448
    // Predicated region
    $region77: #{forward.5} parent=5 // pred_check
      _
    $region78: #{forward.5} parent=5 // pred_check_branch
      %451 = sbr.rel (%p448) target = $region80
    $region79: #{forward.5} parent=5 // pred_region
      %s452 = ssub.s32 %s21, 1
      %p453 = scmp.lt.s32.totalorder %s26, 7
      %s454 = scalar_select %p453, %s26, 7
      %s455 = smul.addr %s454, 2
      %s456 = smul.addr %s455, 8
      %s457 = scalar_lea.vmem %s0, %s456
      %p458 = pneg %p47
      %p459 = pneg %p44
      %p460 = scmp.lt.s32.totalorder %s26, 7
      %s461 = scalar_select %p460, %s26, 7
      %s462 = smul.addr %s461, 2
      %s463 = smul.addr %s462, 8
      %s464 = scalar_lea.vmem %s1, %s463
      %p465 = pneg %p73
      %p466 = pneg %p70
      %p467 = pneg %p94
      %p468 = pneg %p91
      %p469 = pneg %p115
      %p470 = pneg %p112
      %p471 = pneg %p136
      %p472 = pneg %p133
      %p473 = pneg %p157
      %p474 = pneg %p154
      %p475 = pneg %p178
      %p476 = pneg %p175
      %p477 = pneg %p199
      %p478 = pneg %p196
      %p479 = pneg %p220
      %p480 = pneg %p217
      %p481 = pneg %p241
      %p482 = pneg %p238
      %p483 = pneg %p262
      %p484 = pneg %p259
      %p485 = pneg %p283
      %p486 = pneg %p280
      %p487 = pneg %p304
      %p488 = pneg %p301
      %p489 = pneg %p325
      %p490 = pneg %p322
      %p491 = pneg %p346
      %p492 = pneg %p343
      %p493 = pneg %p372
      %p494 = pneg %p369
      %p495 = scmp.lt.s32.totalorder %s26, 7
      %s496 = scalar_select %p495, %s26, 7
      %s497 = smul.addr %s496, 2
      %s498 = smul.addr %s497, 8
      %s499 = scalar_lea.vmem %s15, %s498
      %p500 = scmp.lt.s32.totalorder %s26, 7
      %s501 = scalar_select %p500, %s26, 7
      %s502 = smul.addr %s501, 2
      %s503 = smul.addr %s502, 8
      %s504 = scalar_lea.vmem %s0, %s503
      %p505 = scmp.lt.s32.totalorder %s26, 7
      %s506 = scalar_select %p505, %s26, 7
      %s507 = smul.addr %s506, 2
      %s508 = smul.addr %s507, 8
      %s509 = scalar_lea.vmem %s1, %s508
      %p510 = scmp.lt.s32.totalorder %s26, 7
      %s511 = scalar_select %p510, %s26, 7
      %s512 = smul.addr %s511, 2
      %s513 = smul.addr %s512, 8
      %s514 = scalar_lea.vmem %s15, %s513
      %v515 = vld [vmem:[%s504] sm:$0xff]
      %v516 = vld [vmem:[%s504 + $0x8] sm:$0xff]
      %v517 = vld [vmem:[%s509] sm:$0xff]
      %v518 = vld [vmem:[%s509 + $0x8] sm:$0xff]
      %v519 = vlaneseq
      %v520 = vshrl.u32 %v519, 7
      %v521 = vadd.s32 %v520, 8
      %v522 = vlaneseq
      %v523 = vand.u32 %v522, 127
      %vm524 = vcmp.ne.f32.partialorder %v517, 0.0
      %vm525 = vcmp.ne.f32.partialorder %v518, 0.0
      %vm526 = vcmp.eq.s32.totalorder %v520, %v523
      %vm527 = vcmp.eq.s32.totalorder %v521, %v523
      %vm528 = vmor %vm524, %vm526
      %vm529 = vmor %vm525, %vm527
      %v530 = vld [vmem:[%s2] sm:$0xff]
      %v531 = vld [vmem:[%s2 + $0x8] sm:$0xff]
      %v532 = vld [vmem:[%s2 + $0x10] sm:$0xff]
      %v533 = vld [vmem:[%s2 + $0x18] sm:$0xff]
      %v534 = vld [vmem:[%s3] sm:$0x3]
      %v535 = vld [vmem:[%s4] sm:$0x3]
      %v536 = vld [vmem:[%s5] sm:$0x3]
      %v537 = vld [vmem:[%s6] sm:$0x1]
      %vm538 = vcmask 261120
      %v540 = vsel %vm538, %v515, 0
      %v543 = vsel %vm538, %v516, 0
      %545 = vmatprep.subr.mxu0 0.0
      %546 = vmatpush1.msra.mxu0 %v530
      %547 = vmatprep.subr.mxu0 0.0
      %548 = vmatpush1.msra.mxu0 %v531
      %549 = vmatprep.subr.mxu0 0.0
      %550 = vmatpush1.msra.mxu0 %v532
      %551 = vmatprep.subr.mxu0 0.0
      %552 = vmatpush1.msra.mxu0 %v533
      %553 = vmatprep.subr.mxu0 0.0
      %554 = vmatpush1.msra.mxu0 0.0
      %555 = vmatprep.subr.mxu0 0.0
      %556 = vmatpush1.msra.mxu0 0.0
      %557 = vmatprep.subr.mxu0 0.0
      %558 = vmatpush1.msra.mxu0 0.0
      %559 = vmatprep.subr.mxu0 0.0
      %560 = vmatpush1.msra.mxu0 0.0
      %561 = vmatprep.subr.mxu0 0.0
      %562 = vmatpush1.msra.mxu0 0.0
      %563 = vmatprep.subr.mxu0 0.0
      %564 = vmatpush1.msra.mxu0 0.0
      %565 = vmatprep.subr.mxu0 0.0
      %566 = vmatpush1.msra.mxu0 0.0
      %567 = vmatprep.subr.mxu0 0.0
      %568 = vmatpush1.msra.mxu0 0.0
      %569 = vmatprep.subr.mxu0 0.0
      %570 = vmatpush1.msra.mxu0 0.0
      %571 = vmatprep.subr.mxu0 0.0
      %572 = vmatpush1.msra.mxu0 0.0
      %573 = vmatprep.subr.mxu0 0.0
      %574 = vmatpush1.msra.mxu0 0.0
      %575 = vmatprep.subr.mxu0 0.0
      %576 = vmatpush1.msra.mxu0 0.0
      %577 = vmatprep.subr.mxu0 0.0
      %578 = vmatpush1.msra.mxu0 0.0
      %579 = vmatprep.subr.mxu0 0.0
      %580 = vmatpush1.msra.mxu0 0.0
      %581 = vmatprep.subr.mxu0 0.0
      %582 = vmatpush1.msra.mxu0 0.0
      %583 = vmatprep.subr.mxu0 0.0
      %584 = vmatpush1.msra.mxu0 0.0
      %585 = vmatprep.subr.mxu0 0.0
      %586 = vmatpush1.msra.mxu0 0.0
      %587 = vmatprep.subr.mxu0 0.0
      %588 = vmatpush1.msra.mxu0 0.0
      %589 = vmatprep.subr.mxu0 0.0
      %590 = vmatpush1.msra.mxu0 0.0
      %591 = vmatprep.subr.mxu0 0.0
      %592 = vmatpush1.msra.mxu0 0.0
      %593 = vmatprep.subr.mxu0 0.0
      %594 = vmatpush1.msra.mxu0 0.0
      %595 = vmatprep.subr.mxu0 0.0
      %596 = vmatpush1.msra.mxu0 0.0
      %597 = vmatprep.subr.mxu0 0.0
      %598 = vmatpush1.msra.mxu0 0.0
      %599 = vmatprep.subr.mxu0 0.0
      %600 = vmatpush1.msra.mxu0 0.0
      %601 = vmatprep.subr.mxu0 0.0
      %602 = vmatpush1.msra.mxu0 0.0
      %603 = vmatprep.subr.mxu0 0.0
      %604 = vmatpush1.msra.mxu0 0.0
      %605 = vmatprep.subr.mxu0 0.0
      %606 = vmatpush1.msra.mxu0 0.0
      %607 = vmatprep.subr.mxu0 0.0
      %608 = vmatpush1.msra.mxu0 0.0
      %609 = vmatprep.mubr.f32.mxu0 0.0
      %610 = vmatmul.mubr.f32.gmra.mrb[0].mxu0 %v540
      %v611 = vpop.f32.mrb[0].mxu0
      %v612 = vadd.f32 0.0, %v611
      %v613 = vpop.f32.mrb[0].mxu0
      %614 = vmatprep.mubr.f32.mxu0 0.0
      %615 = vmatmul.mubr.f32.gmra.mrb[0].mxu0 %v543
      %v616 = vpop.f32.mrb[0].mxu0
      %v617 = vadd.f32 0.0, %v616
      %v618 = vpop.f32.mrb[0].mxu0
      %619 = vdwg.mxu0
      %v620 = vlaneseq
      %v621 = vshrl.u32 %v620, 7
      %v622 = vsub.s32 0, %v621
      %v623 = vrot.slane %v534, %v622
      %v624 = vmul.f32 %v612, %v623
      %v625 = vmul.f32 %v617, %v623
      %v626 = vsel %vm538, %v624, 0.0
      %627 = vadd.xlane.f32.xlu0 %v626
      %v628 = vpop.xlane.xlu0 %627
      %v629 = vsel %vm538, %v625, 0.0
      %630 = vadd.xlane.f32.xlu0 %v629
      %v631 = vpop.xlane.xlu0 %630
      %v632 = vlaneseq
      %v633 = vshrl.u32 %v632, 7
      %v634 = vsub.s32 0, %v633
      %v635 = vrot.slane %v535, %v634
      %v636 = vmul.f32 %v612, %v635
      %v637 = vmul.f32 %v617, %v635
      %v638 = vsel %vm538, %v636, 0.0
      %639 = vadd.xlane.f32.xlu0 %v638
      %v640 = vpop.xlane.xlu0 %639
      %v641 = vsel %vm538, %v637, 0.0
      %642 = vadd.xlane.f32.xlu0 %v641
      %v643 = vpop.xlane.xlu0 %642
      %644 = vxpose.xlu0.b32.start [1/16] %v640, 128
      %645 = vxpose.xlu0.b32.cont [2/16] %v643, 128
      %646 = vxpose.xlu0.b32.cont [3/16] 0.0, 128
      %647 = vxpose.xlu0.b32.cont [4/16] 0.0, 128
      %648 = vxpose.xlu0.b32.cont [5/16] 0.0, 128
      %649 = vxpose.xlu0.b32.cont [6/16] 0.0, 128
      %650 = vxpose.xlu0.b32.cont [7/16] 0.0, 128
      %651 = vxpose.xlu0.b32.cont [8/16] 0.0, 128
      %652 = vxpose.xlu0.b32.cont [9/16] 0.0, 128
      %653 = vxpose.xlu0.b32.cont [10/16] 0.0, 128
      %654 = vxpose.xlu0.b32.cont [11/16] 0.0, 128
      %655 = vxpose.xlu0.b32.cont [12/16] 0.0, 128
      %656 = vxpose.xlu0.b32.cont [13/16] 0.0, 128
      %657 = vxpose.xlu0.b32.cont [14/16] 0.0, 128
      %658 = vxpose.xlu0.b32.cont [15/16] 0.0, 128
      %659 = vxpose.xlu0.b32.end [16/16] 0.0, 128
      %v660 = vpop.trf.xlu0
      %v661 = vpop.trf.xlu0
      %v662 = vpop.trf.xlu0
      %v663 = vpop.trf.xlu0
      %v664 = vpop.trf.xlu0
      %v665 = vpop.trf.xlu0
      %v666 = vpop.trf.xlu0
      %v667 = vpop.trf.xlu0
      %v668 = vpop.trf.xlu0
      %v669 = vpop.trf.xlu0
      %v670 = vpop.trf.xlu0
      %v671 = vpop.trf.xlu0
      %v672 = vpop.trf.xlu0
      %v673 = vpop.trf.xlu0
      %v674 = vpop.trf.xlu0
      %v675 = vpop.trf.xlu0
      %v676 = vlaneseq
      %v677 = vshrl.u32 %v676, 7
      %v678 = vsub.s32 0, %v677
      %v679 = vrot.slane %v660, %v678
      %v680 = vadd.f32 %v628, %v679
      %v681 = vadd.f32 %v631, %v679
      %vm682 = vcmp.gt.f32.partialorder %v680, 0.0
      %vm683 = vcmp.gt.f32.partialorder %v681, 0.0
      %v684 = vmul.f32 %v680, 0.2
      %v685 = vmul.f32 %v681, 0.2
      %v686 = vsel %vm682, %v680, %v684
      %v687 = vsel %vm683, %v681, %v685
      %v688 = vsel %vm528, %v686, -1e+30
      %v689 = vsel %vm529, %v687, -1e+30
      %vm690 = vcmask 130048
      %v691 = vsel %vm690, %v688, -inf
      %v692 = vsel %vm690, %v689, -inf
      %v693 = vmax.f32 %v691, %v692
      %v694 = vrot.slane %v693, 4
      %v695 = vmax.f32 %v693, %v694
      %v696 = vrot.slane %v695, 2
      %v697 = vmax.f32 %v695, %v696
      %v698 = vrot.slane %v697, 1
      %v699 = vmax.f32 %v697, %v698
      %v700 = vsub.f32 %v688, %v699
      %v701 = vsub.f32 %v689, %v699
      %v702 = vmul.f32 %v700, 1.442695
      %v703 = vpow.pop %v702
      %v704 = vmul.f32 %v701, 1.442695
      %v705 = vpow.pop %v704
      %v706 = vsel %vm528, %v703, 0.0
      %v707 = vsel %vm529, %v705, 0.0
      %v708 = vsel %vm690, %v706, 0.0
      %v709 = vsel %vm690, %v707, 0.0
      %v710 = vadd.f32 %v708, %v709
      %v711 = vrot.slane %v710, 4
      %v712 = vadd.f32 %v710, %v711
      %v713 = vrot.slane %v712, 2
      %v714 = vadd.f32 %v712, %v713
      %v715 = vrot.slane %v714, 1
      %v716 = vadd.f32 %v714, %v715
      %v717 = vrcp.pop %v716
      %v718 = vmul.f32 %v706, %v717
      %v719 = vmul.f32 %v707, %v717
      %720 = vxpose.xlu0.b32.start [1/16] %v718, 128
      %721 = vxpose.xlu0.b32.cont [2/16] %v719, 128
      %722 = vxpose.xlu0.b32.cont [3/16] 0.0, 128
      %723 = vxpose.xlu0.b32.cont [4/16] 0.0, 128
      %724 = vxpose.xlu0.b32.cont [5/16] 0.0, 128
      %725 = vxpose.xlu0.b32.cont [6/16] 0.0, 128
      %726 = vxpose.xlu0.b32.cont [7/16] 0.0, 128
      %727 = vxpose.xlu0.b32.cont [8/16] 0.0, 128
      %728 = vxpose.xlu0.b32.cont [9/16] 0.0, 128
      %729 = vxpose.xlu0.b32.cont [10/16] 0.0, 128
      %730 = vxpose.xlu0.b32.cont [11/16] 0.0, 128
      %731 = vxpose.xlu0.b32.cont [12/16] 0.0, 128
      %732 = vxpose.xlu0.b32.cont [13/16] 0.0, 128
      %733 = vxpose.xlu0.b32.cont [14/16] 0.0, 128
      %734 = vxpose.xlu0.b32.cont [15/16] 0.0, 128
      %735 = vxpose.xlu0.b32.end [16/16] 0.0, 128
      %v736 = vpop.trf.xlu0
      %v737 = vpop.trf.xlu0
      %v738 = vpop.trf.xlu0
      %v739 = vpop.trf.xlu0
      %v740 = vpop.trf.xlu0
      %v741 = vpop.trf.xlu0
      %v742 = vpop.trf.xlu0
      %v743 = vpop.trf.xlu0
      %v744 = vpop.trf.xlu0
      %v745 = vpop.trf.xlu0
      %v746 = vpop.trf.xlu0
      %v747 = vpop.trf.xlu0
      %v748 = vpop.trf.xlu0
      %v749 = vpop.trf.xlu0
      %v750 = vpop.trf.xlu0
      %v751 = vpop.trf.xlu0
      %v753 = vsel %vm690, %v736, 0
      %v756 = vsel %vm690, %v737, 0
      %758 = vmatprep.subr.mxu0 0.0
      %759 = vmatpush1.msra.mxu0 %v612
      %760 = vmatprep.subr.mxu0 0.0
      %761 = vmatpush1.msra.mxu0 %v617
      %762 = vmatprep.subr.mxu0 0.0
      %763 = vmatpush1.msra.mxu0 0.0
      %764 = vmatprep.subr.mxu0 0.0
      %765 = vmatpush1.msra.mxu0 0.0
      %766 = vmatprep.subr.mxu0 0.0
      %767 = vmatpush1.msra.mxu0 0.0
      %768 = vmatprep.subr.mxu0 0.0
      %769 = vmatpush1.msra.mxu0 0.0
      %770 = vmatprep.subr.mxu0 0.0
      %771 = vmatpush1.msra.mxu0 0.0
      %772 = vmatprep.subr.mxu0 0.0
      %773 = vmatpush1.msra.mxu0 0.0
      %774 = vmatprep.subr.mxu0 0.0
      %775 = vmatpush1.msra.mxu0 0.0
      %776 = vmatprep.subr.mxu0 0.0
      %777 = vmatpush1.msra.mxu0 0.0
      %778 = vmatprep.subr.mxu0 0.0
      %779 = vmatpush1.msra.mxu0 0.0
      %780 = vmatprep.subr.mxu0 0.0
      %781 = vmatpush1.msra.mxu0 0.0
      %782 = vmatprep.subr.mxu0 0.0
      %783 = vmatpush1.msra.mxu0 0.0
      %784 = vmatprep.subr.mxu0 0.0
      %785 = vmatpush1.msra.mxu0 0.0
      %786 = vmatprep.subr.mxu0 0.0
      %787 = vmatpush1.msra.mxu0 0.0
      %788 = vmatprep.subr.mxu0 0.0
      %789 = vmatpush1.msra.mxu0 0.0
      %790 = vmatprep.subr.mxu0 0.0
      %791 = vmatpush1.msra.mxu0 0.0
      %792 = vmatprep.subr.mxu0 0.0
      %793 = vmatpush1.msra.mxu0 0.0
      %794 = vmatprep.subr.mxu0 0.0
      %795 = vmatpush1.msra.mxu0 0.0
      %796 = vmatprep.subr.mxu0 0.0
      %797 = vmatpush1.msra.mxu0 0.0
      %798 = vmatprep.subr.mxu0 0.0
      %799 = vmatpush1.msra.mxu0 0.0
      %800 = vmatprep.subr.mxu0 0.0
      %801 = vmatpush1.msra.mxu0 0.0
      %802 = vmatprep.subr.mxu0 0.0
      %803 = vmatpush1.msra.mxu0 0.0
      %804 = vmatprep.subr.mxu0 0.0
      %805 = vmatpush1.msra.mxu0 0.0
      %806 = vmatprep.subr.mxu0 0.0
      %807 = vmatpush1.msra.mxu0 0.0
      %808 = vmatprep.subr.mxu0 0.0
      %809 = vmatpush1.msra.mxu0 0.0
      %810 = vmatprep.subr.mxu0 0.0
      %811 = vmatpush1.msra.mxu0 0.0
      %812 = vmatprep.subr.mxu0 0.0
      %813 = vmatpush1.msra.mxu0 0.0
      %814 = vmatprep.subr.mxu0 0.0
      %815 = vmatpush1.msra.mxu0 0.0
      %816 = vmatprep.subr.mxu0 0.0
      %817 = vmatpush1.msra.mxu0 0.0
      %818 = vmatprep.subr.mxu0 0.0
      %819 = vmatpush1.msra.mxu0 0.0
      %820 = vmatprep.subr.mxu0 0.0
      %821 = vmatpush1.msra.mxu0 0.0
      %822 = vmatprep.mubr.f32.mxu0 0.0
      %823 = vmatmul.mubr.f32.gmra.mrb[0].mxu0 %v753
      %v824 = vpop.f32.mrb[0].mxu0
      %v825 = vadd.f32 0.0, %v824
      %v826 = vpop.f32.mrb[0].mxu0
      %827 = vmatprep.mubr.f32.mxu0 0.0
      %828 = vmatmul.mubr.f32.gmra.mrb[0].mxu0 %v756
      %v829 = vpop.f32.mrb[0].mxu0
      %v830 = vadd.f32 0.0, %v829
      %v831 = vpop.f32.mrb[0].mxu0
      %832 = vdwg.mxu0
      %v833 = vlaneseq
      %v834 = vshrl.u32 %v833, 7
      %v835 = vsub.s32 0, %v834
      %v836 = vrot.slane %v536, %v835
      %v837 = vmul.f32 %v825, %v836
      %v838 = vmul.f32 %v830, %v836
      %v839 = vadd.f32 %v837, 0.0
      %v840 = vadd.f32 %v838, 0.0
      %v841 = vlaneseq
      %v842 = vshrl.u32 %v841, 7
      %v843 = vsub.s32 1, %v842
      %v844 = vrot.slane %v534, %v843
      %v845 = vmul.f32 %v612, %v844
      %v846 = vmul.f32 %v617, %v844
      %v847 = vsel %vm538, %v845, 0.0
      %848 = vadd.xlane.f32.xlu0 %v847
      %v849 = vpop.xlane.xlu0 %848
      %v850 = vsel %vm538, %v846, 0.0
      %851 = vadd.xlane.f32.xlu0 %v850
      %v852 = vpop.xlane.xlu0 %851
      %v853 = vlaneseq
      %v854 = vshrl.u32 %v853, 7
      %v855 = vsub.s32 1, %v854
      %v856 = vrot.slane %v535, %v855
      %v857 = vmul.f32 %v612, %v856
      %v858 = vmul.f32 %v617, %v856
      %v859 = vsel %vm538, %v857, 0.0
      %860 = vadd.xlane.f32.xlu0 %v859
      %v861 = vpop.xlane.xlu0 %860
      %v862 = vsel %vm538, %v858, 0.0
      %863 = vadd.xlane.f32.xlu0 %v862
      %v864 = vpop.xlane.xlu0 %863
      %865 = vxpose.xlu0.b32.start [1/16] %v861, 128
      %866 = vxpose.xlu0.b32.cont [2/16] %v864, 128
      %867 = vxpose.xlu0.b32.cont [3/16] 0.0, 128
      %868 = vxpose.xlu0.b32.cont [4/16] 0.0, 128
      %869 = vxpose.xlu0.b32.cont [5/16] 0.0, 128
      %870 = vxpose.xlu0.b32.cont [6/16] 0.0, 128
      %871 = vxpose.xlu0.b32.cont [7/16] 0.0, 128
      %872 = vxpose.xlu0.b32.cont [8/16] 0.0, 128
      %873 = vxpose.xlu0.b32.cont [9/16] 0.0, 128
      %874 = vxpose.xlu0.b32.cont [10/16] 0.0, 128
      %875 = vxpose.xlu0.b32.cont [11/16] 0.0, 128
      %876 = vxpose.xlu0.b32.cont [12/16] 0.0, 128
      %877 = vxpose.xlu0.b32.cont [13/16] 0.0, 128
      %878 = vxpose.xlu0.b32.cont [14/16] 0.0, 128
      %879 = vxpose.xlu0.b32.cont [15/16] 0.0, 128
      %880 = vxpose.xlu0.b32.end [16/16] 0.0, 128
      %v881 = vpop.trf.xlu0
      %v882 = vpop.trf.xlu0
      %v883 = vpop.trf.xlu0
      %v884 = vpop.trf.xlu0
      %v885 = vpop.trf.xlu0
      %v886 = vpop.trf.xlu0
      %v887 = vpop.trf.xlu0
      %v888 = vpop.trf.xlu0
      %v889 = vpop.trf.xlu0
      %v890 = vpop.trf.xlu0
      %v891 = vpop.trf.xlu0
      %v892 = vpop.trf.xlu0
      %v893 = vpop.trf.xlu0
      %v894 = vpop.trf.xlu0
      %v895 = vpop.trf.xlu0
      %v896 = vpop.trf.xlu0
      %v897 = vlaneseq
      %v898 = vshrl.u32 %v897, 7
      %v899 = vsub.s32 0, %v898
      %v900 = vrot.slane %v881, %v899
      %v901 = vadd.f32 %v849, %v900
      %v902 = vadd.f32 %v852, %v900
      %vm903 = vcmp.gt.f32.partialorder %v901, 0.0
      %vm904 = vcmp.gt.f32.partialorder %v902, 0.0
      %v905 = vmul.f32 %v901, 0.2
      %v906 = vmul.f32 %v902, 0.2
      %v907 = vsel %vm903, %v901, %v905
      %v908 = vsel %vm904, %v902, %v906
      %v909 = vsel %vm528, %v907, -1e+30
      %v910 = vsel %vm529, %v908, -1e+30
      %v911 = vsel %vm690, %v909, -inf
      %v912 = vsel %vm690, %v910, -inf
      %v913 = vmax.f32 %v911, %v912
      %v914 = vrot.slane %v913, 4
      %v915 = vmax.f32 %v913, %v914
      %v916 = vrot.slane %v915, 2
      %v917 = vmax.f32 %v915, %v916
      %v918 = vrot.slane %v917, 1
      %v919 = vmax.f32 %v917, %v918
      %v920 = vsub.f32 %v909, %v919
      %v921 = vsub.f32 %v910, %v919
      %v922 = vmul.f32 %v920, 1.442695
      %v923 = vpow.pop %v922
      %v924 = vmul.f32 %v921, 1.442695
      %v925 = vpow.pop %v924
      %v926 = vsel %vm528, %v923, 0.0
      %v927 = vsel %vm529, %v925, 0.0
      %v928 = vsel %vm690, %v926, 0.0
      %v929 = vsel %vm690, %v927, 0.0
      %v930 = vadd.f32 %v928, %v929
      %v931 = vrot.slane %v930, 4
      %v932 = vadd.f32 %v930, %v931
      %v933 = vrot.slane %v932, 2
      %v934 = vadd.f32 %v932, %v933
      %v935 = vrot.slane %v934, 1
      %v936 = vadd.f32 %v934, %v935
      %v937 = vrcp.pop %v936
      %v938 = vmul.f32 %v926, %v937
      %v939 = vmul.f32 %v927, %v937
      %940 = vxpose.xlu0.b32.start [1/16] %v938, 128
      %941 = vxpose.xlu0.b32.cont [2/16] %v939, 128
      %942 = vxpose.xlu0.b32.cont [3/16] 0.0, 128
      %943 = vxpose.xlu0.b32.cont [4/16] 0.0, 128
      %944 = vxpose.xlu0.b32.cont [5/16] 0.0, 128
      %945 = vxpose.xlu0.b32.cont [6/16] 0.0, 128
      %946 = vxpose.xlu0.b32.cont [7/16] 0.0, 128
      %947 = vxpose.xlu0.b32.cont [8/16] 0.0, 128
      %948 = vxpose.xlu0.b32.cont [9/16] 0.0, 128
      %949 = vxpose.xlu0.b32.cont [10/16] 0.0, 128
      %950 = vxpose.xlu0.b32.cont [11/16] 0.0, 128
      %951 = vxpose.xlu0.b32.cont [12/16] 0.0, 128
      %952 = vxpose.xlu0.b32.cont [13/16] 0.0, 128
      %953 = vxpose.xlu0.b32.cont [14/16] 0.0, 128
      %954 = vxpose.xlu0.b32.cont [15/16] 0.0, 128
      %955 = vxpose.xlu0.b32.end [16/16] 0.0, 128
      %v956 = vpop.trf.xlu0
      %v957 = vpop.trf.xlu0
      %v958 = vpop.trf.xlu0
      %v959 = vpop.trf.xlu0
      %v960 = vpop.trf.xlu0
      %v961 = vpop.trf.xlu0
      %v962 = vpop.trf.xlu0
      %v963 = vpop.trf.xlu0
      %v964 = vpop.trf.xlu0
      %v965 = vpop.trf.xlu0
      %v966 = vpop.trf.xlu0
      %v967 = vpop.trf.xlu0
      %v968 = vpop.trf.xlu0
      %v969 = vpop.trf.xlu0
      %v970 = vpop.trf.xlu0
      %v971 = vpop.trf.xlu0
      %v973 = vsel %vm690, %v956, 0
      %v976 = vsel %vm690, %v957, 0
      %978 = vmatprep.subr.mxu0 0.0
      %979 = vmatpush1.msra.mxu0 %v612
      %980 = vmatprep.subr.mxu0 0.0
      %981 = vmatpush1.msra.mxu0 %v617
      %982 = vmatprep.subr.mxu0 0.0
      %983 = vmatpush1.msra.mxu0 0.0
      %984 = vmatprep.subr.mxu0 0.0
      %985 = vmatpush1.msra.mxu0 0.0
      %986 = vmatprep.subr.mxu0 0.0
      %987 = vmatpush1.msra.mxu0 0.0
      %988 = vmatprep.subr.mxu0 0.0
      %989 = vmatpush1.msra.mxu0 0.0
      %990 = vmatprep.subr.mxu0 0.0
      %991 = vmatpush1.msra.mxu0 0.0
      %992 = vmatprep.subr.mxu0 0.0
      %993 = vmatpush1.msra.mxu0 0.0
      %994 = vmatprep.subr.mxu0 0.0
      %995 = vmatpush1.msra.mxu0 0.0
      %996 = vmatprep.subr.mxu0 0.0
      %997 = vmatpush1.msra.mxu0 0.0
      %998 = vmatprep.subr.mxu0 0.0
      %999 = vmatpush1.msra.mxu0 0.0
      %1000 = vmatprep.subr.mxu0 0.0
      %1001 = vmatpush1.msra.mxu0 0.0
      %1002 = vmatprep.subr.mxu0 0.0
      %1003 = vmatpush1.msra.mxu0 0.0
      %1004 = vmatprep.subr.mxu0 0.0
      %1005 = vmatpush1.msra.mxu0 0.0
      %1006 = vmatprep.subr.mxu0 0.0
      %1007 = vmatpush1.msra.mxu0 0.0
      %1008 = vmatprep.subr.mxu0 0.0
      %1009 = vmatpush1.msra.mxu0 0.0
      %1010 = vmatprep.subr.mxu0 0.0
      %1011 = vmatpush1.msra.mxu0 0.0
      %1012 = vmatprep.subr.mxu0 0.0
      %1013 = vmatpush1.msra.mxu0 0.0
      %1014 = vmatprep.subr.mxu0 0.0
      %1015 = vmatpush1.msra.mxu0 0.0
      %1016 = vmatprep.subr.mxu0 0.0
      %1017 = vmatpush1.msra.mxu0 0.0
      %1018 = vmatprep.subr.mxu0 0.0
      %1019 = vmatpush1.msra.mxu0 0.0
      %1020 = vmatprep.subr.mxu0 0.0
      %1021 = vmatpush1.msra.mxu0 0.0
      %1022 = vmatprep.subr.mxu0 0.0
      %1023 = vmatpush1.msra.mxu0 0.0
      %1024 = vmatprep.subr.mxu0 0.0
      %1025 = vmatpush1.msra.mxu0 0.0
      %1026 = vmatprep.subr.mxu0 0.0
      %1027 = vmatpush1.msra.mxu0 0.0
      %1028 = vmatprep.subr.mxu0 0.0
      %1029 = vmatpush1.msra.mxu0 0.0
      %1030 = vmatprep.subr.mxu0 0.0
      %1031 = vmatpush1.msra.mxu0 0.0
      %1032 = vmatprep.subr.mxu0 0.0
      %1033 = vmatpush1.msra.mxu0 0.0
      %1034 = vmatprep.subr.mxu0 0.0
      %1035 = vmatpush1.msra.mxu0 0.0
      %1036 = vmatprep.subr.mxu0 0.0
      %1037 = vmatpush1.msra.mxu0 0.0
      %1038 = vmatprep.subr.mxu0 0.0
      %1039 = vmatpush1.msra.mxu0 0.0
      %1040 = vmatprep.subr.mxu0 0.0
      %1041 = vmatpush1.msra.mxu0 0.0
      %1042 = vmatprep.mubr.f32.mxu0 0.0
      %1043 = vmatmul.mubr.f32.gmra.mrb[0].mxu0 %v973
      %v1044 = vpop.f32.mrb[0].mxu0
      %v1045 = vadd.f32 0.0, %v1044
      %v1046 = vpop.f32.mrb[0].mxu0
      %1047 = vmatprep.mubr.f32.mxu0 0.0
      %1048 = vmatmul.mubr.f32.gmra.mrb[0].mxu0 %v976
      %v1049 = vpop.f32.mrb[0].mxu0
      %v1050 = vadd.f32 0.0, %v1049
      %v1051 = vpop.f32.mrb[0].mxu0
      %1052 = vdwg.mxu0
      %v1053 = vlaneseq
      %v1054 = vshrl.u32 %v1053, 7
      %v1055 = vsub.s32 1, %v1054
      %v1056 = vrot.slane %v536, %v1055
      %v1057 = vmul.f32 %v1045, %v1056
      %v1058 = vmul.f32 %v1050, %v1056
      %v1059 = vadd.f32 %v839, %v1057
      %v1060 = vadd.f32 %v840, %v1058
      %v1062 = vlaneseq
      %v1063 = vshrl.u32 %v1062, 7
      %v1064 = vsub.s32 0, %v1063
      %v1065 = vrot.slane %v537, %v1064
      %v1067 = vadd.f32 %v1059, %v1065
      %v1068 = vadd.f32 %v1060, %v1065
      %vm1069 = vcmp.gt.f32.partialorder %v1067, 0.0
      %vm1070 = vcmp.gt.f32.partialorder %v1068, 0.0
      %v1071 = vmul.f32 %v1067, 0.25
      %v1072 = vmul.f32 %v1068, 0.25
      %v1073 = vsel %vm1069, %v1067, %v1071
      %v1074 = vsel %vm1070, %v1068, %v1072
      %v1075 = vadd.f32 %v1073, %v515
      %v1076 = vadd.f32 %v1074, %v516
      %v1077 = vld [vmem:[%s7] sm:$0xff]
      %v1078 = vld [vmem:[%s7 + $0x8] sm:$0xff]
      %v1079 = vld [vmem:[%s7 + $0x10] sm:$0xff]
      %v1080 = vld [vmem:[%s7 + $0x18] sm:$0xff]
      %v1081 = vld [vmem:[%s8] sm:$0x1]
      %v1082 = vld [vmem:[%s9] sm:$0x1]
      %v1083 = vld [vmem:[%s10] sm:$0x1]
      %v1085 = vsel %vm538, %v1075, 0
      %v1088 = vsel %vm538, %v1076, 0
      %1090 = vmatprep.subr.mxu0 0.0
      %1091 = vmatpush1.msra.mxu0 %v1077
      %1092 = vmatprep.subr.mxu0 0.0
      %1093 = vmatpush1.msra.mxu0 %v1078
      %1094 = vmatprep.subr.mxu0 0.0
      %1095 = vmatpush1.msra.mxu0 %v1079
      %1096 = vmatprep.subr.mxu0 0.0
      %1097 = vmatpush1.msra.mxu0 %v1080
      %1098 = vmatprep.subr.mxu0 0.0
      %1099 = vmatpush1.msra.mxu0 0.0
      %1100 = vmatprep.subr.mxu0 0.0
      %1101 = vmatpush1.msra.mxu0 0.0
      %1102 = vmatprep.subr.mxu0 0.0
      %1103 = vmatpush1.msra.mxu0 0.0
      %1104 = vmatprep.subr.mxu0 0.0
      %1105 = vmatpush1.msra.mxu0 0.0
      %1106 = vmatprep.subr.mxu0 0.0
      %1107 = vmatpush1.msra.mxu0 0.0
      %1108 = vmatprep.subr.mxu0 0.0
      %1109 = vmatpush1.msra.mxu0 0.0
      %1110 = vmatprep.subr.mxu0 0.0
      %1111 = vmatpush1.msra.mxu0 0.0
      %1112 = vmatprep.subr.mxu0 0.0
      %1113 = vmatpush1.msra.mxu0 0.0
      %1114 = vmatprep.subr.mxu0 0.0
      %1115 = vmatpush1.msra.mxu0 0.0
      %1116 = vmatprep.subr.mxu0 0.0
      %1117 = vmatpush1.msra.mxu0 0.0
      %1118 = vmatprep.subr.mxu0 0.0
      %1119 = vmatpush1.msra.mxu0 0.0
      %1120 = vmatprep.subr.mxu0 0.0
      %1121 = vmatpush1.msra.mxu0 0.0
      %1122 = vmatprep.subr.mxu0 0.0
      %1123 = vmatpush1.msra.mxu0 0.0
      %1124 = vmatprep.subr.mxu0 0.0
      %1125 = vmatpush1.msra.mxu0 0.0
      %1126 = vmatprep.subr.mxu0 0.0
      %1127 = vmatpush1.msra.mxu0 0.0
      %1128 = vmatprep.subr.mxu0 0.0
      %1129 = vmatpush1.msra.mxu0 0.0
      %1130 = vmatprep.subr.mxu0 0.0
      %1131 = vmatpush1.msra.mxu0 0.0
      %1132 = vmatprep.subr.mxu0 0.0
      %1133 = vmatpush1.msra.mxu0 0.0
      %1134 = vmatprep.subr.mxu0 0.0
      %1135 = vmatpush1.msra.mxu0 0.0
      %1136 = vmatprep.subr.mxu0 0.0
      %1137 = vmatpush1.msra.mxu0 0.0
      %1138 = vmatprep.subr.mxu0 0.0
      %1139 = vmatpush1.msra.mxu0 0.0
      %1140 = vmatprep.subr.mxu0 0.0
      %1141 = vmatpush1.msra.mxu0 0.0
      %1142 = vmatprep.subr.mxu0 0.0
      %1143 = vmatpush1.msra.mxu0 0.0
      %1144 = vmatprep.subr.mxu0 0.0
      %1145 = vmatpush1.msra.mxu0 0.0
      %1146 = vmatprep.subr.mxu0 0.0
      %1147 = vmatpush1.msra.mxu0 0.0
      %1148 = vmatprep.subr.mxu0 0.0
      %1149 = vmatpush1.msra.mxu0 0.0
      %1150 = vmatprep.subr.mxu0 0.0
      %1151 = vmatpush1.msra.mxu0 0.0
      %1152 = vmatprep.subr.mxu0 0.0
      %1153 = vmatpush1.msra.mxu0 0.0
      %1154 = vmatprep.mubr.f32.mxu0 0.0
      %1155 = vmatmul.mubr.f32.gmra.mrb[0].mxu0 %v1085
      %v1156 = vpop.f32.mrb[0].mxu0
      %v1157 = vadd.f32 0.0, %v1156
      %v1158 = vpop.f32.mrb[0].mxu0
      %1159 = vmatprep.mubr.f32.mxu0 0.0
      %1160 = vmatmul.mubr.f32.gmra.mrb[0].mxu0 %v1088
      %v1161 = vpop.f32.mrb[0].mxu0
      %v1162 = vadd.f32 0.0, %v1161
      %v1163 = vpop.f32.mrb[0].mxu0
      %1164 = vdwg.mxu0
      %v1166 = vlaneseq
      %v1167 = vshrl.u32 %v1166, 7
      %v1168 = vsub.s32 0, %v1167
      %v1169 = vrot.slane %v1081, %v1168
      %v1171 = vmul.f32 %v1157, %v1169
      %v1172 = vmul.f32 %v1162, %v1169
      %v1173 = vsel %vm538, %v1171, 0.0
      %1174 = vadd.xlane.f32.xlu0 %v1173
      %v1175 = vpop.xlane.xlu0 %1174
      %v1176 = vsel %vm538, %v1172, 0.0
      %1177 = vadd.xlane.f32.xlu0 %v1176
      %v1178 = vpop.xlane.xlu0 %1177
      %v1180 = vlaneseq
      %v1181 = vshrl.u32 %v1180, 7
      %v1182 = vsub.s32 0, %v1181
      %v1183 = vrot.slane %v1082, %v1182
      %v1185 = vmul.f32 %v1157, %v1183
      %v1186 = vmul.f32 %v1162, %v1183
      %v1187 = vsel %vm538, %v1185, 0.0
      %1188 = vadd.xlane.f32.xlu0 %v1187
      %v1189 = vpop.xlane.xlu0 %1188
      %v1190 = vsel %vm538, %v1186, 0.0
      %1191 = vadd.xlane.f32.xlu0 %v1190
      %v1192 = vpop.xlane.xlu0 %1191
      %1193 = vxpose.xlu0.b32.start [1/16] %v1189, 128
      %1194 = vxpose.xlu0.b32.cont [2/16] %v1192, 128
      %1195 = vxpose.xlu0.b32.cont [3/16] 0.0, 128
      %1196 = vxpose.xlu0.b32.cont [4/16] 0.0, 128
      %1197 = vxpose.xlu0.b32.cont [5/16] 0.0, 128
      %1198 = vxpose.xlu0.b32.cont [6/16] 0.0, 128
      %1199 = vxpose.xlu0.b32.cont [7/16] 0.0, 128
      %1200 = vxpose.xlu0.b32.cont [8/16] 0.0, 128
      %1201 = vxpose.xlu0.b32.cont [9/16] 0.0, 128
      %1202 = vxpose.xlu0.b32.cont [10/16] 0.0, 128
      %1203 = vxpose.xlu0.b32.cont [11/16] 0.0, 128
      %1204 = vxpose.xlu0.b32.cont [12/16] 0.0, 128
      %1205 = vxpose.xlu0.b32.cont [13/16] 0.0, 128
      %1206 = vxpose.xlu0.b32.cont [14/16] 0.0, 128
      %1207 = vxpose.xlu0.b32.cont [15/16] 0.0, 128
      %1208 = vxpose.xlu0.b32.end [16/16] 0.0, 128
      %v1209 = vpop.trf.xlu0
      %v1210 = vpop.trf.xlu0
      %v1211 = vpop.trf.xlu0
      %v1212 = vpop.trf.xlu0
      %v1213 = vpop.trf.xlu0
      %v1214 = vpop.trf.xlu0
      %v1215 = vpop.trf.xlu0
      %v1216 = vpop.trf.xlu0
      %v1217 = vpop.trf.xlu0
      %v1218 = vpop.trf.xlu0
      %v1219 = vpop.trf.xlu0
      %v1220 = vpop.trf.xlu0
      %v1221 = vpop.trf.xlu0
      %v1222 = vpop.trf.xlu0
      %v1223 = vpop.trf.xlu0
      %v1224 = vpop.trf.xlu0
      %v1225 = vlaneseq
      %v1226 = vshrl.u32 %v1225, 7
      %v1227 = vsub.s32 0, %v1226
      %v1228 = vrot.slane %v1209, %v1227
      %v1229 = vadd.f32 %v1175, %v1228
      %v1230 = vadd.f32 %v1178, %v1228
      %vm1231 = vcmp.gt.f32.partialorder %v1229, 0.0
      %vm1232 = vcmp.gt.f32.partialorder %v1230, 0.0
      %v1233 = vmul.f32 %v1229, 0.2
      %v1234 = vmul.f32 %v1230, 0.2
      %v1235 = vsel %vm1231, %v1229, %v1233
      %v1236 = vsel %vm1232, %v1230, %v1234
      %v1237 = vsel %vm528, %v1235, -1e+30
      %v1238 = vsel %vm529, %v1236, -1e+30
      %v1239 = vsel %vm690, %v1237, -inf
      %v1240 = vsel %vm690, %v1238, -inf
      %v1241 = vmax.f32 %v1239, %v1240
      %v1242 = vrot.slane %v1241, 4
      %v1243 = vmax.f32 %v1241, %v1242
      %v1244 = vrot.slane %v1243, 2
      %v1245 = vmax.f32 %v1243, %v1244
      %v1246 = vrot.slane %v1245, 1
      %v1247 = vmax.f32 %v1245, %v1246
      %v1248 = vsub.f32 %v1237, %v1247
      %v1249 = vsub.f32 %v1238, %v1247
      %v1250 = vmul.f32 %v1248, 1.442695
      %v1251 = vpow.pop %v1250
      %v1252 = vmul.f32 %v1249, 1.442695
      %v1253 = vpow.pop %v1252
      %v1254 = vsel %vm528, %v1251, 0.0
      %v1255 = vsel %vm529, %v1253, 0.0
      %v1256 = vsel %vm690, %v1254, 0.0
      %v1257 = vsel %vm690, %v1255, 0.0
      %v1258 = vadd.f32 %v1256, %v1257
      %v1259 = vrot.slane %v1258, 4
      %v1260 = vadd.f32 %v1258, %v1259
      %v1261 = vrot.slane %v1260, 2
      %v1262 = vadd.f32 %v1260, %v1261
      %v1263 = vrot.slane %v1262, 1
      %v1264 = vadd.f32 %v1262, %v1263
      %v1265 = vrcp.pop %v1264
      %v1266 = vmul.f32 %v1254, %v1265
      %v1267 = vmul.f32 %v1255, %v1265
      %v1269 = vlaneseq
      %v1270 = vshrl.u32 %v1269, 7
      %v1271 = vsub.s32 0, %v1270
      %v1272 = vrot.slane %v1083, %v1271
      %1274 = vxpose.xlu0.b32.start [1/16] %v1266, 128
      %1275 = vxpose.xlu0.b32.cont [2/16] %v1267, 128
      %1276 = vxpose.xlu0.b32.cont [3/16] 0.0, 128
      %1277 = vxpose.xlu0.b32.cont [4/16] 0.0, 128
      %1278 = vxpose.xlu0.b32.cont [5/16] 0.0, 128
      %1279 = vxpose.xlu0.b32.cont [6/16] 0.0, 128
      %1280 = vxpose.xlu0.b32.cont [7/16] 0.0, 128
      %1281 = vxpose.xlu0.b32.cont [8/16] 0.0, 128
      %1282 = vxpose.xlu0.b32.cont [9/16] 0.0, 128
      %1283 = vxpose.xlu0.b32.cont [10/16] 0.0, 128
      %1284 = vxpose.xlu0.b32.cont [11/16] 0.0, 128
      %1285 = vxpose.xlu0.b32.cont [12/16] 0.0, 128
      %1286 = vxpose.xlu0.b32.cont [13/16] 0.0, 128
      %1287 = vxpose.xlu0.b32.cont [14/16] 0.0, 128
      %1288 = vxpose.xlu0.b32.cont [15/16] 0.0, 128
      %1289 = vxpose.xlu0.b32.end [16/16] 0.0, 128
      %v1290 = vpop.trf.xlu0
      %v1291 = vpop.trf.xlu0
      %v1292 = vpop.trf.xlu0
      %v1293 = vpop.trf.xlu0
      %v1294 = vpop.trf.xlu0
      %v1295 = vpop.trf.xlu0
      %v1296 = vpop.trf.xlu0
      %v1297 = vpop.trf.xlu0
      %v1298 = vpop.trf.xlu0
      %v1299 = vpop.trf.xlu0
      %v1300 = vpop.trf.xlu0
      %v1301 = vpop.trf.xlu0
      %v1302 = vpop.trf.xlu0
      %v1303 = vpop.trf.xlu0
      %v1304 = vpop.trf.xlu0
      %v1305 = vpop.trf.xlu0
      %v1307 = vsel %vm690, %v1290, 0
      %v1310 = vsel %vm690, %v1291, 0
      %1312 = vmatprep.subr.mxu0 0.0
      %1313 = vmatpush1.msra.mxu0 %v1157
      %1314 = vmatprep.subr.mxu0 0.0
      %1315 = vmatpush1.msra.mxu0 %v1162
      %1316 = vmatprep.subr.mxu0 0.0
      %1317 = vmatpush1.msra.mxu0 0.0
      %1318 = vmatprep.subr.mxu0 0.0
      %1319 = vmatpush1.msra.mxu0 0.0
      %1320 = vmatprep.subr.mxu0 0.0
      %1321 = vmatpush1.msra.mxu0 0.0
      %1322 = vmatprep.subr.mxu0 0.0
      %1323 = vmatpush1.msra.mxu0 0.0
      %1324 = vmatprep.subr.mxu0 0.0
      %1325 = vmatpush1.msra.mxu0 0.0
      %1326 = vmatprep.subr.mxu0 0.0
      %1327 = vmatpush1.msra.mxu0 0.0
      %1328 = vmatprep.subr.mxu0 0.0
      %1329 = vmatpush1.msra.mxu0 0.0
      %1330 = vmatprep.subr.mxu0 0.0
      %1331 = vmatpush1.msra.mxu0 0.0
      %1332 = vmatprep.subr.mxu0 0.0
      %1333 = vmatpush1.msra.mxu0 0.0
      %1334 = vmatprep.subr.mxu0 0.0
      %1335 = vmatpush1.msra.mxu0 0.0
      %1336 = vmatprep.subr.mxu0 0.0
      %1337 = vmatpush1.msra.mxu0 0.0
      %1338 = vmatprep.subr.mxu0 0.0
      %1339 = vmatpush1.msra.mxu0 0.0
      %1340 = vmatprep.subr.mxu0 0.0
      %1341 = vmatpush1.msra.mxu0 0.0
      %1342 = vmatprep.subr.mxu0 0.0
      %1343 = vmatpush1.msra.mxu0 0.0
      %1344 = vmatprep.subr.mxu0 0.0
      %1345 = vmatpush1.msra.mxu0 0.0
      %1346 = vmatprep.subr.mxu0 0.0
      %1347 = vmatpush1.msra.mxu0 0.0
      %1348 = vmatprep.subr.mxu0 0.0
      %1349 = vmatpush1.msra.mxu0 0.0
      %1350 = vmatprep.subr.mxu0 0.0
      %1351 = vmatpush1.msra.mxu0 0.0
      %1352 = vmatprep.subr.mxu0 0.0
      %1353 = vmatpush1.msra.mxu0 0.0
      %1354 = vmatprep.subr.mxu0 0.0
      %1355 = vmatpush1.msra.mxu0 0.0
      %1356 = vmatprep.subr.mxu0 0.0
      %1357 = vmatpush1.msra.mxu0 0.0
      %1358 = vmatprep.subr.mxu0 0.0
      %1359 = vmatpush1.msra.mxu0 0.0
      %1360 = vmatprep.subr.mxu0 0.0
      %1361 = vmatpush1.msra.mxu0 0.0
      %1362 = vmatprep.subr.mxu0 0.0
      %1363 = vmatpush1.msra.mxu0 0.0
      %1364 = vmatprep.subr.mxu0 0.0
      %1365 = vmatpush1.msra.mxu0 0.0
      %1366 = vmatprep.subr.mxu0 0.0
      %1367 = vmatpush1.msra.mxu0 0.0
      %1368 = vmatprep.subr.mxu0 0.0
      %1369 = vmatpush1.msra.mxu0 0.0
      %1370 = vmatprep.subr.mxu0 0.0
      %1371 = vmatpush1.msra.mxu0 0.0
      %1372 = vmatprep.subr.mxu0 0.0
      %1373 = vmatpush1.msra.mxu0 0.0
      %1374 = vmatprep.subr.mxu0 0.0
      %1375 = vmatpush1.msra.mxu0 0.0
      %1376 = vmatprep.mubr.f32.mxu0 0.0
      %1377 = vmatmul.mubr.f32.gmra.mrb[0].mxu0 %v1307
      %v1378 = vpop.f32.mrb[0].mxu0
      %v1379 = vadd.f32 %v1272, %v1378
      %v1380 = vpop.f32.mrb[0].mxu0
      %1381 = vmatprep.mubr.f32.mxu0 0.0
      %1382 = vmatmul.mubr.f32.gmra.mrb[0].mxu0 %v1310
      %v1383 = vpop.f32.mrb[0].mxu0
      %v1384 = vadd.f32 %v1272, %v1383
      %v1385 = vpop.f32.mrb[0].mxu0
      %1386 = vdwg.mxu0
      %vm1387 = vcmp.gt.f32.partialorder %v1379, 0.0
      %vm1388 = vcmp.gt.f32.partialorder %v1384, 0.0
      %v1389 = vmul.f32 %v1379, 0.25
      %v1390 = vmul.f32 %v1384, 0.25
      %v1391 = vsel %vm1387, %v1379, %v1389
      %v1392 = vsel %vm1388, %v1384, %v1390
      %v1393 = vadd.f32 %v1391, %v1075
      %v1394 = vadd.f32 %v1392, %v1076
      %v1395 = vld [vmem:[%s11] sm:$0xff]
      %v1396 = vld [vmem:[%s11 + $0x8] sm:$0xff]
      %v1397 = vld [vmem:[%s11 + $0x10] sm:$0xff]
      %v1398 = vld [vmem:[%s11 + $0x18] sm:$0xff]
      %v1399 = vld [vmem:[%s12] sm:$0x1]
      %v1401 = vlaneseq
      %v1402 = vshrl.u32 %v1401, 7
      %v1403 = vsub.s32 0, %v1402
      %v1404 = vrot.slane %v1399, %v1403
      %v1407 = vsel %vm538, %v1393, 0
      %v1410 = vsel %vm538, %v1394, 0
      %1412 = vmatprep.subr.mxu0 0.0
      %1413 = vmatpush1.msra.mxu0 %v1395
      %1414 = vmatprep.subr.mxu0 0.0
      %1415 = vmatpush1.msra.mxu0 %v1396
      %1416 = vmatprep.subr.mxu0 0.0
      %1417 = vmatpush1.msra.mxu0 %v1397
      %1418 = vmatprep.subr.mxu0 0.0
      %1419 = vmatpush1.msra.mxu0 %v1398
      %1420 = vmatprep.subr.mxu0 0.0
      %1421 = vmatpush1.msra.mxu0 0.0
      %1422 = vmatprep.subr.mxu0 0.0
      %1423 = vmatpush1.msra.mxu0 0.0
      %1424 = vmatprep.subr.mxu0 0.0
      %1425 = vmatpush1.msra.mxu0 0.0
      %1426 = vmatprep.subr.mxu0 0.0
      %1427 = vmatpush1.msra.mxu0 0.0
      %1428 = vmatprep.subr.mxu0 0.0
      %1429 = vmatpush1.msra.mxu0 0.0
      %1430 = vmatprep.subr.mxu0 0.0
      %1431 = vmatpush1.msra.mxu0 0.0
      %1432 = vmatprep.subr.mxu0 0.0
      %1433 = vmatpush1.msra.mxu0 0.0
      %1434 = vmatprep.subr.mxu0 0.0
      %1435 = vmatpush1.msra.mxu0 0.0
      %1436 = vmatprep.subr.mxu0 0.0
      %1437 = vmatpush1.msra.mxu0 0.0
      %1438 = vmatprep.subr.mxu0 0.0
      %1439 = vmatpush1.msra.mxu0 0.0
      %1440 = vmatprep.subr.mxu0 0.0
      %1441 = vmatpush1.msra.mxu0 0.0
      %1442 = vmatprep.subr.mxu0 0.0
      %1443 = vmatpush1.msra.mxu0 0.0
      %1444 = vmatprep.subr.mxu0 0.0
      %1445 = vmatpush1.msra.mxu0 0.0
      %1446 = vmatprep.subr.mxu0 0.0
      %1447 = vmatpush1.msra.mxu0 0.0
      %1448 = vmatprep.subr.mxu0 0.0
      %1449 = vmatpush1.msra.mxu0 0.0
      %1450 = vmatprep.subr.mxu0 0.0
      %1451 = vmatpush1.msra.mxu0 0.0
      %1452 = vmatprep.subr.mxu0 0.0
      %1453 = vmatpush1.msra.mxu0 0.0
      %1454 = vmatprep.subr.mxu0 0.0
      %1455 = vmatpush1.msra.mxu0 0.0
      %1456 = vmatprep.subr.mxu0 0.0
      %1457 = vmatpush1.msra.mxu0 0.0
      %1458 = vmatprep.subr.mxu0 0.0
      %1459 = vmatpush1.msra.mxu0 0.0
      %1460 = vmatprep.subr.mxu0 0.0
      %1461 = vmatpush1.msra.mxu0 0.0
      %1462 = vmatprep.subr.mxu0 0.0
      %1463 = vmatpush1.msra.mxu0 0.0
      %1464 = vmatprep.subr.mxu0 0.0
      %1465 = vmatpush1.msra.mxu0 0.0
      %1466 = vmatprep.subr.mxu0 0.0
      %1467 = vmatpush1.msra.mxu0 0.0
      %1468 = vmatprep.subr.mxu0 0.0
      %1469 = vmatpush1.msra.mxu0 0.0
      %1470 = vmatprep.subr.mxu0 0.0
      %1471 = vmatpush1.msra.mxu0 0.0
      %1472 = vmatprep.subr.mxu0 0.0
      %1473 = vmatpush1.msra.mxu0 0.0
      %1474 = vmatprep.subr.mxu0 0.0
      %1475 = vmatpush1.msra.mxu0 0.0
      %1476 = vmatprep.mubr.f32.mxu0 0.0
      %1477 = vmatmul.mubr.f32.gmra.mrb[0].mxu0 %v1407
      %v1478 = vpop.f32.mrb[0].mxu0
      %v1479 = vadd.f32 %v1404, %v1478
      %v1480 = vpop.f32.mrb[0].mxu0
      %1481 = vmatprep.mubr.f32.mxu0 0.0
      %1482 = vmatmul.mubr.f32.gmra.mrb[0].mxu0 %v1410
      %v1483 = vpop.f32.mrb[0].mxu0
      %v1484 = vadd.f32 %v1404, %v1483
      %v1485 = vpop.f32.mrb[0].mxu0
      %1486 = vdwg.mxu0
      %v1487 = vmax.f32 %v1479, 0.0
      %v1488 = vmax.f32 %v1484, 0.0
      %v1489 = vld [vmem:[%s13] sm:$0xff]
      %v1490 = vld [vmem:[%s13 + $0x8] sm:$0xff]
      %v1491 = vld [vmem:[%s13 + $0x10] sm:$0xff]
      %v1492 = vld [vmem:[%s13 + $0x18] sm:$0xff]
      %v1493 = vld [vmem:[%s13 + $0x20] sm:$0xff]
      %v1494 = vld [vmem:[%s13 + $0x28] sm:$0xff]
      %v1495 = vld [vmem:[%s13 + $0x30] sm:$0xff]
      %v1496 = vld [vmem:[%s13 + $0x38] sm:$0xff]
      %v1497 = vld [vmem:[%s14] sm:$0x1]
      %v1499 = vlaneseq
      %v1500 = vshrl.u32 %v1499, 7
      %v1501 = vsub.s32 0, %v1500
      %v1502 = vrot.slane %v1497, %v1501
      %vm1504 = vcmask 523264
      %v1506 = vsel %vm1504, %v1487, 0
      %v1509 = vsel %vm1504, %v1488, 0
      %1511 = vmatprep.subr.mxu0 0.0
      %1512 = vmatpush1.msra.mxu0 %v1489
      %1513 = vmatprep.subr.mxu0 0.0
      %1514 = vmatpush1.msra.mxu0 %v1490
      %1515 = vmatprep.subr.mxu0 0.0
      %1516 = vmatpush1.msra.mxu0 %v1491
      %1517 = vmatprep.subr.mxu0 0.0
      %1518 = vmatpush1.msra.mxu0 %v1492
      %1519 = vmatprep.subr.mxu0 0.0
      %1520 = vmatpush1.msra.mxu0 %v1493
      %1521 = vmatprep.subr.mxu0 0.0
      %1522 = vmatpush1.msra.mxu0 %v1494
      %1523 = vmatprep.subr.mxu0 0.0
      %1524 = vmatpush1.msra.mxu0 %v1495
      %1525 = vmatprep.subr.mxu0 0.0
      %1526 = vmatpush1.msra.mxu0 %v1496
      %1527 = vmatprep.subr.mxu0 0.0
      %1528 = vmatpush1.msra.mxu0 0.0
      %1529 = vmatprep.subr.mxu0 0.0
      %1530 = vmatpush1.msra.mxu0 0.0
      %1531 = vmatprep.subr.mxu0 0.0
      %1532 = vmatpush1.msra.mxu0 0.0
      %1533 = vmatprep.subr.mxu0 0.0
      %1534 = vmatpush1.msra.mxu0 0.0
      %1535 = vmatprep.subr.mxu0 0.0
      %1536 = vmatpush1.msra.mxu0 0.0
      %1537 = vmatprep.subr.mxu0 0.0
      %1538 = vmatpush1.msra.mxu0 0.0
      %1539 = vmatprep.subr.mxu0 0.0
      %1540 = vmatpush1.msra.mxu0 0.0
      %1541 = vmatprep.subr.mxu0 0.0
      %1542 = vmatpush1.msra.mxu0 0.0
      %1543 = vmatprep.subr.mxu0 0.0
      %1544 = vmatpush1.msra.mxu0 0.0
      %1545 = vmatprep.subr.mxu0 0.0
      %1546 = vmatpush1.msra.mxu0 0.0
      %1547 = vmatprep.subr.mxu0 0.0
      %1548 = vmatpush1.msra.mxu0 0.0
      %1549 = vmatprep.subr.mxu0 0.0
      %1550 = vmatpush1.msra.mxu0 0.0
      %1551 = vmatprep.subr.mxu0 0.0
      %1552 = vmatpush1.msra.mxu0 0.0
      %1553 = vmatprep.subr.mxu0 0.0
      %1554 = vmatpush1.msra.mxu0 0.0
      %1555 = vmatprep.subr.mxu0 0.0
      %1556 = vmatpush1.msra.mxu0 0.0
      %1557 = vmatprep.subr.mxu0 0.0
      %1558 = vmatpush1.msra.mxu0 0.0
      %1559 = vmatprep.subr.mxu0 0.0
      %1560 = vmatpush1.msra.mxu0 0.0
      %1561 = vmatprep.subr.mxu0 0.0
      %1562 = vmatpush1.msra.mxu0 0.0
      %1563 = vmatprep.subr.mxu0 0.0
      %1564 = vmatpush1.msra.mxu0 0.0
      %1565 = vmatprep.subr.mxu0 0.0
      %1566 = vmatpush1.msra.mxu0 0.0
      %1567 = vmatprep.subr.mxu0 0.0
      %1568 = vmatpush1.msra.mxu0 0.0
      %1569 = vmatprep.subr.mxu0 0.0
      %1570 = vmatpush1.msra.mxu0 0.0
      %1571 = vmatprep.subr.mxu0 0.0
      %1572 = vmatpush1.msra.mxu0 0.0
      %1573 = vmatprep.subr.mxu0 0.0
      %1574 = vmatpush1.msra.mxu0 0.0
      %1575 = vmatprep.mubr.f32.mxu0 0.0
      %1576 = vmatmul.mubr.f32.gmra.mrb[0].mxu0 %v1506
      %v1577 = vpop.f32.mrb[0].mxu0
      %v1578 = vadd.f32 %v1502, %v1577
      %v1579 = vpop.f32.mrb[0].mxu0
      %1580 = vmatprep.mubr.f32.mxu0 0.0
      %1581 = vmatmul.mubr.f32.gmra.mrb[0].mxu0 %v1509
      %v1582 = vpop.f32.mrb[0].mxu0
      %v1583 = vadd.f32 %v1502, %v1582
      %v1584 = vpop.f32.mrb[0].mxu0
      %1585 = vdwg.mxu0
      %vm1586 = vcmp.gt.f32.partialorder %v1578, 0.0
      %vm1587 = vcmp.gt.f32.partialorder %v1583, 0.0
      %v1588 = vmul.f32 %v1578, 0.25
      %v1589 = vmul.f32 %v1583, 0.25
      %v1590 = vsel %vm1586, %v1578, %v1588
      %v1591 = vsel %vm1587, %v1583, %v1589
      %1592 = vst.msk [vmem:[%s514] sm:$0xff] %vm538, %v1590
      %1593 = vst.msk [vmem:[%s514 + $0x8] sm:$0xff] %vm538, %v1591
      %p1594 = scmp.lt.s32.totalorder %s26, 7
      %s1595 = scalar_select %p1594, %s26, 7
      %s1596 = smul.addr %s1595, 2
      %s1597 = smul.addr %s1596, 8
      %s1598 = scalar_lea.vmem %s15, %s1597
      // Predicated region
      $region81: #{forward.5} parent=79 // pred_check
        %p1599 = pneg %p369
      $region82: #{forward.5} parent=79 // pred_check_branch
        %1601 = sbr.rel (%p1599) target = $region84
      $region83: #{forward.5} parent=79 // pred_region
        _
      $region84: #{forward.5} parent=79 // pred_fallthru
        _
    $region80: #{forward.5} parent=5 // pred_fallthru
      _
    %p1602 = scmp.le.s32.totalorder 2, %s21
    // Predicated region
    $region85: #{forward.5} parent=5 // pred_check
      %p1603 = pneg %p1602
    $region86: #{forward.5} parent=5 // pred_check_branch
      %1605 = sbr.rel (%p1603) target = $region88
    $region87: #{forward.5} parent=5 // pred_region
      %s1606 = ssub.s32 %s21, 2
      // Predicated region
      $region89: #{forward.5} parent=87 // pred_check
        %p1607 = pneg %p375
      $region90: #{forward.5} parent=87 // pred_check_branch
        %1609 = sbr.rel (%p1607) target = $region92
      $region91: #{forward.5} parent=87 // pred_region
        %p1610 = scmp.lt.s32.totalorder %s27, 7
        %s1611 = scalar_select %p1610, %s27, 7
        %s1612 = smul.addr %s1611, 2
        %s1613 = smul.addr %s1612, 8
        %s1614 = scalar_lea.vmem %s15, %s1613
      $region92: #{forward.5} parent=87 // pred_fallthru
        _
    $region88: #{forward.5} parent=5 // pred_fallthru
      _
  $region6: #{forward.5} parent=0 // loop_footer
    %s25 = sadd.s32 1, %s21
  $region7: #{forward.5} parent=0 // loop_footer_branch
    %20 = sbr.rel target = $region3
  $region8: #{forward.5} parent=0 // loop_exit
    _

// kernel: forward.4
$region0: #{forward.4}
  #allocation0 [shape = 'u32[]', space=smem, size = 0x4, offset = 0x4, fixed_abs, tag = 'smem constant byte address 0x4 - core index']
  #allocation1 [shape = 'u32[144,128]{1,0:T(1,128)}', space=vmem, size = 0x12000, scoped, tag = 'internal scratch']
  #allocation2 [shape = 'f32[128,128]{1,0:T(8,128)}', space=vmem, size = 0x10000, scoped, tag = 'scratch operand']
  %s0 = inlined_call_operand.vmem [shape: f32[128,4], index: 0, kind: input, shape index: {}]
  %s1 = inlined_call_operand.vmem [shape: f32[4,32], index: 1, kind: input, shape index: {}]
  %s2 = inlined_call_operand.vmem [shape: f32[1,32], index: 2, kind: input, shape index: {}]
  %s3 = inlined_call_operand.vmem [shape: f32[32,128], index: 3, kind: input, shape index: {}]
  %s4 = inlined_call_operand.vmem [shape: f32[32,128], index: 4, kind: input, shape index: {}]
  %s5 = inlined_call_operand.vmem [shape: f32[1,128], index: 5, kind: input, shape index: {}]
  %s6 = inlined_call_operand.vmem [shape: f32[128,32], index: 6, kind: output, shape index: {}]
  %s7 = sld [smem:[#allocation0]]
  $region34: #{forward.4} parent=0
    _
  %s9 = ssub.s32 1, %s7
  %s10 = scalar_select 0, %s9, %s7
  // Predicated region
  $region2: #{forward.4} parent=0 // pred_check
    _
  $region3: #{forward.4} parent=0 // pred_check_branch
    %12 = sbr.rel (0) target = $region5
  $region4: #{forward.4} parent=0 // pred_region
    _
  $region5: #{forward.4} parent=0 // pred_fallthru
    _
  // Predicated region
  $region6: #{forward.4} parent=0 // pred_check
    _
  $region7: #{forward.4} parent=0 // pred_check_branch
    %14 = sbr.rel (0) target = $region9
  $region8: #{forward.4} parent=0 // pred_region
    _
  $region9: #{forward.4} parent=0 // pred_fallthru
    _
  // Predicated region
  $region10: #{forward.4} parent=0 // pred_check
    _
  $region11: #{forward.4} parent=0 // pred_check_branch
    %16 = sbr.rel (0) target = $region13
  $region12: #{forward.4} parent=0 // pred_region
    _
  $region13: #{forward.4} parent=0 // pred_fallthru
    _
  // Predicated region
  $region14: #{forward.4} parent=0 // pred_check
    _
  $region15: #{forward.4} parent=0 // pred_check_branch
    %18 = sbr.rel (0) target = $region17
  $region16: #{forward.4} parent=0 // pred_region
    _
  $region17: #{forward.4} parent=0 // pred_fallthru
    _
  // Predicated region
  $region18: #{forward.4} parent=0 // pred_check
    _
  $region19: #{forward.4} parent=0 // pred_check_branch
    %20 = sbr.rel (0) target = $region21
  $region20: #{forward.4} parent=0 // pred_region
    _
  $region21: #{forward.4} parent=0 // pred_fallthru
    _
  // Predicated region
  $region22: #{forward.4} parent=0 // pred_check
    _
  $region23: #{forward.4} parent=0 // pred_check_branch
    %22 = sbr.rel (0) target = $region25
  $region24: #{forward.4} parent=0 // pred_region
    _
  $region25: #{forward.4} parent=0 // pred_fallthru
    _
  %v23 = vld [vmem:[%s0] sm:$0xff]
  %v24 = vld [vmem:[%s0 + $0x8] sm:$0xff]
  %v25 = vld [vmem:[%s0 + $0x10] sm:$0xff]
  %v26 = vld [vmem:[%s0 + $0x18] sm:$0xff]
  %v27 = vld [vmem:[%s0 + $0x20] sm:$0xff]
  %v28 = vld [vmem:[%s0 + $0x28] sm:$0xff]
  %v29 = vld [vmem:[%s0 + $0x30] sm:$0xff]
  %v30 = vld [vmem:[%s0 + $0x38] sm:$0xff]
  %v31 = vld [vmem:[%s0 + $0x40] sm:$0xff]
  %v32 = vld [vmem:[%s0 + $0x48] sm:$0xff]
  %v33 = vld [vmem:[%s0 + $0x50] sm:$0xff]
  %v34 = vld [vmem:[%s0 + $0x58] sm:$0xff]
  %v35 = vld [vmem:[%s0 + $0x60] sm:$0xff]
  %v36 = vld [vmem:[%s0 + $0x68] sm:$0xff]
  %v37 = vld [vmem:[%s0 + $0x70] sm:$0xff]
  %v38 = vld [vmem:[%s0 + $0x78] sm:$0xff]
  %v39 = vld [vmem:[%s1] sm:$0xf]
  %v40 = vld [vmem:[%s2] sm:$0x1]
  %v42 = vlaneseq
  %v43 = vshrl.u32 %v42, 7
  %v44 = vsub.s32 0, %v43
  %v45 = vrot.slane %v40, %v44
  %vm47 = vcmask 31744
  %v49 = vsel %vm47, %v23, 0
  %v52 = vsel %vm47, %v24, 0
  %v55 = vsel %vm47, %v25, 0
  %v58 = vsel %vm47, %v26, 0
  %v61 = vsel %vm47, %v27, 0
  %v64 = vsel %vm47, %v28, 0
  %v67 = vsel %vm47, %v29, 0
  %v70 = vsel %vm47, %v30, 0
  %v73 = vsel %vm47, %v31, 0
  %v76 = vsel %vm47, %v32, 0
  %v79 = vsel %vm47, %v33, 0
  %v82 = vsel %vm47, %v34, 0
  %v85 = vsel %vm47, %v35, 0
  %v88 = vsel %vm47, %v36, 0
  %v91 = vsel %vm47, %v37, 0
  %v94 = vsel %vm47, %v38, 0
  %vm96 = vcmask 1043456
  %v98 = vsel %vm96, %v39, 0
  %100 = vmatprep.subr.mxu0 0.0
  %101 = vmatpush1.msra.mxu0 %v98
  %102 = vmatprep.subr.mxu0 0.0
  %103 = vmatpush1.msra.mxu0 0.0
  %104 = vmatprep.subr.mxu0 0.0
  %105 = vmatpush1.msra.mxu0 0.0
  %106 = vmatprep.subr.mxu0 0.0
  %107 = vmatpush1.msra.mxu0 0.0
  %108 = vmatprep.subr.mxu0 0.0
  %109 = vmatpush1.msra.mxu0 0.0
  %110 = vmatprep.subr.mxu0 0.0
  %111 = vmatpush1.msra.mxu0 0.0
  %112 = vmatprep.subr.mxu0 0.0
  %113 = vmatpush1.msra.mxu0 0.0
  %114 = vmatprep.subr.mxu0 0.0
  %115 = vmatpush1.msra.mxu0 0.0
  %116 = vmatprep.subr.mxu0 0.0
  %117 = vmatpush1.msra.mxu0 0.0
  %118 = vmatprep.subr.mxu0 0.0
  %119 = vmatpush1.msra.mxu0 0.0
  %120 = vmatprep.subr.mxu0 0.0
  %121 = vmatpush1.msra.mxu0 0.0
  %122 = vmatprep.subr.mxu0 0.0
  %123 = vmatpush1.msra.mxu0 0.0
  %124 = vmatprep.subr.mxu0 0.0
  %125 = vmatpush1.msra.mxu0 0.0
  %126 = vmatprep.subr.mxu0 0.0
  %127 = vmatpush1.msra.mxu0 0.0
  %128 = vmatprep.subr.mxu0 0.0
  %129 = vmatpush1.msra.mxu0 0.0
  %130 = vmatprep.subr.mxu0 0.0
  %131 = vmatpush1.msra.mxu0 0.0
  %132 = vmatprep.subr.mxu0 0.0
  %133 = vmatpush1.msra.mxu0 0.0
  %134 = vmatprep.subr.mxu0 0.0
  %135 = vmatpush1.msra.mxu0 0.0
  %136 = vmatprep.subr.mxu0 0.0
  %137 = vmatpush1.msra.mxu0 0.0
  %138 = vmatprep.subr.mxu0 0.0
  %139 = vmatpush1.msra.mxu0 0.0
  %140 = vmatprep.subr.mxu0 0.0
  %141 = vmatpush1.msra.mxu0 0.0
  %142 = vmatprep.subr.mxu0 0.0
  %143 = vmatpush1.msra.mxu0 0.0
  %144 = vmatprep.subr.mxu0 0.0
  %145 = vmatpush1.msra.mxu0 0.0
  %146 = vmatprep.subr.mxu0 0.0
  %147 = vmatpush1.msra.mxu0 0.0
  %148 = vmatprep.subr.mxu0 0.0
  %149 = vmatpush1.msra.mxu0 0.0
  %150 = vmatprep.subr.mxu0 0.0
  %151 = vmatpush1.msra.mxu0 0.0
  %152 = vmatprep.subr.mxu0 0.0
  %153 = vmatpush1.msra.mxu0 0.0
  %154 = vmatprep.subr.mxu0 0.0
  %155 = vmatpush1.msra.mxu0 0.0
  %156 = vmatprep.subr.mxu0 0.0
  %157 = vmatpush1.msra.mxu0 0.0
  %158 = vmatprep.subr.mxu0 0.0
  %159 = vmatpush1.msra.mxu0 0.0
  %160 = vmatprep.subr.mxu0 0.0
  %161 = vmatpush1.msra.mxu0 0.0
  %162 = vmatprep.subr.mxu0 0.0
  %163 = vmatpush1.msra.mxu0 0.0
  %164 = vmatprep.mubr.f32.mxu0 0.0
  %165 = vmatmul.mubr.f32.gmra.mrb[0].mxu0 %v49
  %v166 = vpop.f32.mrb[0].mxu0
  %v167 = vadd.f32 %v45, %v166
  %v168 = vpop.f32.mrb[0].mxu0
  %169 = vmatprep.mubr.f32.mxu0 0.0
  %170 = vmatmul.mubr.f32.gmra.mrb[0].mxu0 %v52
  %v171 = vpop.f32.mrb[0].mxu0
  %v172 = vadd.f32 %v45, %v171
  %v173 = vpop.f32.mrb[0].mxu0
  %174 = vmatprep.mubr.f32.mxu0 0.0
  %175 = vmatmul.mubr.f32.gmra.mrb[0].mxu0 %v55
  %v176 = vpop.f32.mrb[0].mxu0
  %v177 = vadd.f32 %v45, %v176
  %v178 = vpop.f32.mrb[0].mxu0
  %179 = vmatprep.mubr.f32.mxu0 0.0
  %180 = vmatmul.mubr.f32.gmra.mrb[0].mxu0 %v58
  %v181 = vpop.f32.mrb[0].mxu0
  %v182 = vadd.f32 %v45, %v181
  %v183 = vpop.f32.mrb[0].mxu0
  %184 = vmatprep.mubr.f32.mxu0 0.0
  %185 = vmatmul.mubr.f32.gmra.mrb[0].mxu0 %v61
  %v186 = vpop.f32.mrb[0].mxu0
  %v187 = vadd.f32 %v45, %v186
  %v188 = vpop.f32.mrb[0].mxu0
  %189 = vmatprep.mubr.f32.mxu0 0.0
  %190 = vmatmul.mubr.f32.gmra.mrb[0].mxu0 %v64
  %v191 = vpop.f32.mrb[0].mxu0
  %v192 = vadd.f32 %v45, %v191
  %v193 = vpop.f32.mrb[0].mxu0
  %194 = vmatprep.mubr.f32.mxu0 0.0
  %195 = vmatmul.mubr.f32.gmra.mrb[0].mxu0 %v67
  %v196 = vpop.f32.mrb[0].mxu0
  %v197 = vadd.f32 %v45, %v196
  %v198 = vpop.f32.mrb[0].mxu0
  %199 = vmatprep.mubr.f32.mxu0 0.0
  %200 = vmatmul.mubr.f32.gmra.mrb[0].mxu0 %v70
  %v201 = vpop.f32.mrb[0].mxu0
  %v202 = vadd.f32 %v45, %v201
  %v203 = vpop.f32.mrb[0].mxu0
  %204 = vmatprep.mubr.f32.mxu0 0.0
  %205 = vmatmul.mubr.f32.gmra.mrb[0].mxu0 %v73
  %v206 = vpop.f32.mrb[0].mxu0
  %v207 = vadd.f32 %v45, %v206
  %v208 = vpop.f32.mrb[0].mxu0
  %209 = vmatprep.mubr.f32.mxu0 0.0
  %210 = vmatmul.mubr.f32.gmra.mrb[0].mxu0 %v76
  %v211 = vpop.f32.mrb[0].mxu0
  %v212 = vadd.f32 %v45, %v211
  %v213 = vpop.f32.mrb[0].mxu0
  %214 = vmatprep.mubr.f32.mxu0 0.0
  %215 = vmatmul.mubr.f32.gmra.mrb[0].mxu0 %v79
  %v216 = vpop.f32.mrb[0].mxu0
  %v217 = vadd.f32 %v45, %v216
  %v218 = vpop.f32.mrb[0].mxu0
  %219 = vmatprep.mubr.f32.mxu0 0.0
  %220 = vmatmul.mubr.f32.gmra.mrb[0].mxu0 %v82
  %v221 = vpop.f32.mrb[0].mxu0
  %v222 = vadd.f32 %v45, %v221
  %v223 = vpop.f32.mrb[0].mxu0
  %224 = vmatprep.mubr.f32.mxu0 0.0
  %225 = vmatmul.mubr.f32.gmra.mrb[0].mxu0 %v85
  %v226 = vpop.f32.mrb[0].mxu0
  %v227 = vadd.f32 %v45, %v226
  %v228 = vpop.f32.mrb[0].mxu0
  %229 = vmatprep.mubr.f32.mxu0 0.0
  %230 = vmatmul.mubr.f32.gmra.mrb[0].mxu0 %v88
  %v231 = vpop.f32.mrb[0].mxu0
  %v232 = vadd.f32 %v45, %v231
  %v233 = vpop.f32.mrb[0].mxu0
  %234 = vmatprep.mubr.f32.mxu0 0.0
  %235 = vmatmul.mubr.f32.gmra.mrb[0].mxu0 %v91
  %v236 = vpop.f32.mrb[0].mxu0
  %v237 = vadd.f32 %v45, %v236
  %v238 = vpop.f32.mrb[0].mxu0
  %239 = vmatprep.mubr.f32.mxu0 0.0
  %240 = vmatmul.mubr.f32.gmra.mrb[0].mxu0 %v94
  %v241 = vpop.f32.mrb[0].mxu0
  %v242 = vadd.f32 %v45, %v241
  %v243 = vpop.f32.mrb[0].mxu0
  %244 = vdwg.mxu0
  %vm245 = vcmp.gt.f32.partialorder %v167, 0.0
  %vm246 = vcmp.gt.f32.partialorder %v172, 0.0
  %vm247 = vcmp.gt.f32.partialorder %v177, 0.0
  %vm248 = vcmp.gt.f32.partialorder %v182, 0.0
  %vm249 = vcmp.gt.f32.partialorder %v187, 0.0
  %vm250 = vcmp.gt.f32.partialorder %v192, 0.0
  %vm251 = vcmp.gt.f32.partialorder %v197, 0.0
  %vm252 = vcmp.gt.f32.partialorder %v202, 0.0
  %vm253 = vcmp.gt.f32.partialorder %v207, 0.0
  %vm254 = vcmp.gt.f32.partialorder %v212, 0.0
  %vm255 = vcmp.gt.f32.partialorder %v217, 0.0
  %vm256 = vcmp.gt.f32.partialorder %v222, 0.0
  %vm257 = vcmp.gt.f32.partialorder %v227, 0.0
  %vm258 = vcmp.gt.f32.partialorder %v232, 0.0
  %vm259 = vcmp.gt.f32.partialorder %v237, 0.0
  %vm260 = vcmp.gt.f32.partialorder %v242, 0.0
  %v261 = vmul.f32 %v167, 0.25
  %v262 = vmul.f32 %v172, 0.25
  %v263 = vmul.f32 %v177, 0.25
  %v264 = vmul.f32 %v182, 0.25
  %v265 = vmul.f32 %v187, 0.25
  %v266 = vmul.f32 %v192, 0.25
  %v267 = vmul.f32 %v197, 0.25
  %v268 = vmul.f32 %v202, 0.25
  %v269 = vmul.f32 %v207, 0.25
  %v270 = vmul.f32 %v212, 0.25
  %v271 = vmul.f32 %v217, 0.25
  %v272 = vmul.f32 %v222, 0.25
  %v273 = vmul.f32 %v227, 0.25
  %v274 = vmul.f32 %v232, 0.25
  %v275 = vmul.f32 %v237, 0.25
  %v276 = vmul.f32 %v242, 0.25
  %v277 = vsel %vm245, %v167, %v261
  %v278 = vsel %vm246, %v172, %v262
  %v279 = vsel %vm247, %v177, %v263
  %v280 = vsel %vm248, %v182, %v264
  %v281 = vsel %vm249, %v187, %v265
  %v282 = vsel %vm250, %v192, %v266
  %v283 = vsel %vm251, %v197, %v267
  %v284 = vsel %vm252, %v202, %v268
  %v285 = vsel %vm253, %v207, %v269
  %v286 = vsel %vm254, %v212, %v270
  %v287 = vsel %vm255, %v217, %v271
  %v288 = vsel %vm256, %v222, %v272
  %v289 = vsel %vm257, %v227, %v273
  %v290 = vsel %vm258, %v232, %v274
  %v291 = vsel %vm259, %v237, %v275
  %v292 = vsel %vm260, %v242, %v276
  %v293 = vld [vmem:[%s3] sm:$0xff]
  %v294 = vld [vmem:[%s3 + $0x8] sm:$0xff]
  %v295 = vld [vmem:[%s3 + $0x10] sm:$0xff]
  %v296 = vld [vmem:[%s3 + $0x18] sm:$0xff]
  %v297 = vld [vmem:[%s5] sm:$0x1]
  %v299 = vlaneseq
  %v300 = vshrl.u32 %v299, 7
  %v301 = vsub.s32 0, %v300
  %v302 = vrot.slane %v297, %v301
  %vm304 = vcmask 261120
  %v306 = vsel %vm304, %v277, 0
  %v309 = vsel %vm304, %v278, 0
  %v312 = vsel %vm304, %v279, 0
  %v315 = vsel %vm304, %v280, 0
  %v318 = vsel %vm304, %v281, 0
  %v321 = vsel %vm304, %v282, 0
  %v324 = vsel %vm304, %v283, 0
  %v327 = vsel %vm304, %v284, 0
  %v330 = vsel %vm304, %v285, 0
  %v333 = vsel %vm304, %v286, 0
  %v336 = vsel %vm304, %v287, 0
  %v339 = vsel %vm304, %v288, 0
  %v342 = vsel %vm304, %v289, 0
  %v345 = vsel %vm304, %v290, 0
  %v348 = vsel %vm304, %v291, 0
  %v351 = vsel %vm304, %v292, 0
  %353 = vmatprep.subr.mxu0 0.0
  %354 = vmatpush1.msra.mxu0 %v293
  %355 = vmatprep.subr.mxu0 0.0
  %356 = vmatpush1.msra.mxu0 %v294
  %357 = vmatprep.subr.mxu0 0.0
  %358 = vmatpush1.msra.mxu0 %v295
  %359 = vmatprep.subr.mxu0 0.0
  %360 = vmatpush1.msra.mxu0 %v296
  %361 = vmatprep.subr.mxu0 0.0
  %362 = vmatpush1.msra.mxu0 0.0
  %363 = vmatprep.subr.mxu0 0.0
  %364 = vmatpush1.msra.mxu0 0.0
  %365 = vmatprep.subr.mxu0 0.0
  %366 = vmatpush1.msra.mxu0 0.0
  %367 = vmatprep.subr.mxu0 0.0
  %368 = vmatpush1.msra.mxu0 0.0
  %369 = vmatprep.subr.mxu0 0.0
  %370 = vmatpush1.msra.mxu0 0.0
  %371 = vmatprep.subr.mxu0 0.0
  %372 = vmatpush1.msra.mxu0 0.0
  %373 = vmatprep.subr.mxu0 0.0
  %374 = vmatpush1.msra.mxu0 0.0
  %375 = vmatprep.subr.mxu0 0.0
  %376 = vmatpush1.msra.mxu0 0.0
  %377 = vmatprep.subr.mxu0 0.0
  %378 = vmatpush1.msra.mxu0 0.0
  %379 = vmatprep.subr.mxu0 0.0
  %380 = vmatpush1.msra.mxu0 0.0
  %381 = vmatprep.subr.mxu0 0.0
  %382 = vmatpush1.msra.mxu0 0.0
  %383 = vmatprep.subr.mxu0 0.0
  %384 = vmatpush1.msra.mxu0 0.0
  %385 = vmatprep.subr.mxu0 0.0
  %386 = vmatpush1.msra.mxu0 0.0
  %387 = vmatprep.subr.mxu0 0.0
  %388 = vmatpush1.msra.mxu0 0.0
  %389 = vmatprep.subr.mxu0 0.0
  %390 = vmatpush1.msra.mxu0 0.0
  %391 = vmatprep.subr.mxu0 0.0
  %392 = vmatpush1.msra.mxu0 0.0
  %393 = vmatprep.subr.mxu0 0.0
  %394 = vmatpush1.msra.mxu0 0.0
  %395 = vmatprep.subr.mxu0 0.0
  %396 = vmatpush1.msra.mxu0 0.0
  %397 = vmatprep.subr.mxu0 0.0
  %398 = vmatpush1.msra.mxu0 0.0
  %399 = vmatprep.subr.mxu0 0.0
  %400 = vmatpush1.msra.mxu0 0.0
  %401 = vmatprep.subr.mxu0 0.0
  %402 = vmatpush1.msra.mxu0 0.0
  %403 = vmatprep.subr.mxu0 0.0
  %404 = vmatpush1.msra.mxu0 0.0
  %405 = vmatprep.subr.mxu0 0.0
  %406 = vmatpush1.msra.mxu0 0.0
  %407 = vmatprep.subr.mxu0 0.0
  %408 = vmatpush1.msra.mxu0 0.0
  %409 = vmatprep.subr.mxu0 0.0
  %410 = vmatpush1.msra.mxu0 0.0
  %411 = vmatprep.subr.mxu0 0.0
  %412 = vmatpush1.msra.mxu0 0.0
  %413 = vmatprep.subr.mxu0 0.0
  %414 = vmatpush1.msra.mxu0 0.0
  %415 = vmatprep.subr.mxu0 0.0
  %416 = vmatpush1.msra.mxu0 0.0
  %417 = vmatprep.mubr.f32.mxu0 0.0
  %418 = vmatmul.mubr.f32.gmra.mrb[0].mxu0 %v306
  %v419 = vpop.f32.mrb[0].mxu0
  %v420 = vadd.f32 %v302, %v419
  %v421 = vpop.f32.mrb[0].mxu0
  %422 = vmatprep.mubr.f32.mxu0 0.0
  %423 = vmatmul.mubr.f32.gmra.mrb[0].mxu0 %v309
  %v424 = vpop.f32.mrb[0].mxu0
  %v425 = vadd.f32 %v302, %v424
  %v426 = vpop.f32.mrb[0].mxu0
  %427 = vmatprep.mubr.f32.mxu0 0.0
  %428 = vmatmul.mubr.f32.gmra.mrb[0].mxu0 %v312
  %v429 = vpop.f32.mrb[0].mxu0
  %v430 = vadd.f32 %v302, %v429
  %v431 = vpop.f32.mrb[0].mxu0
  %432 = vmatprep.mubr.f32.mxu0 0.0
  %433 = vmatmul.mubr.f32.gmra.mrb[0].mxu0 %v315
  %v434 = vpop.f32.mrb[0].mxu0
  %v435 = vadd.f32 %v302, %v434
  %v436 = vpop.f32.mrb[0].mxu0
  %437 = vmatprep.mubr.f32.mxu0 0.0
  %438 = vmatmul.mubr.f32.gmra.mrb[0].mxu0 %v318
  %v439 = vpop.f32.mrb[0].mxu0
  %v440 = vadd.f32 %v302, %v439
  %v441 = vpop.f32.mrb[0].mxu0
  %442 = vmatprep.mubr.f32.mxu0 0.0
  %443 = vmatmul.mubr.f32.gmra.mrb[0].mxu0 %v321
  %v444 = vpop.f32.mrb[0].mxu0
  %v445 = vadd.f32 %v302, %v444
  %v446 = vpop.f32.mrb[0].mxu0
  %447 = vmatprep.mubr.f32.mxu0 0.0
  %448 = vmatmul.mubr.f32.gmra.mrb[0].mxu0 %v324
  %v449 = vpop.f32.mrb[0].mxu0
  %v450 = vadd.f32 %v302, %v449
  %v451 = vpop.f32.mrb[0].mxu0
  %452 = vmatprep.mubr.f32.mxu0 0.0
  %453 = vmatmul.mubr.f32.gmra.mrb[0].mxu0 %v327
  %v454 = vpop.f32.mrb[0].mxu0
  %v455 = vadd.f32 %v302, %v454
  %v456 = vpop.f32.mrb[0].mxu0
  %457 = vmatprep.mubr.f32.mxu0 0.0
  %458 = vmatmul.mubr.f32.gmra.mrb[0].mxu0 %v330
  %v459 = vpop.f32.mrb[0].mxu0
  %v460 = vadd.f32 %v302, %v459
  %v461 = vpop.f32.mrb[0].mxu0
  %462 = vmatprep.mubr.f32.mxu0 0.0
  %463 = vmatmul.mubr.f32.gmra.mrb[0].mxu0 %v333
  %v464 = vpop.f32.mrb[0].mxu0
  %v465 = vadd.f32 %v302, %v464
  %v466 = vpop.f32.mrb[0].mxu0
  %467 = vmatprep.mubr.f32.mxu0 0.0
  %468 = vmatmul.mubr.f32.gmra.mrb[0].mxu0 %v336
  %v469 = vpop.f32.mrb[0].mxu0
  %v470 = vadd.f32 %v302, %v469
  %v471 = vpop.f32.mrb[0].mxu0
  %472 = vmatprep.mubr.f32.mxu0 0.0
  %473 = vmatmul.mubr.f32.gmra.mrb[0].mxu0 %v339
  %v474 = vpop.f32.mrb[0].mxu0
  %v475 = vadd.f32 %v302, %v474
  %v476 = vpop.f32.mrb[0].mxu0
  %477 = vmatprep.mubr.f32.mxu0 0.0
  %478 = vmatmul.mubr.f32.gmra.mrb[0].mxu0 %v342
  %v479 = vpop.f32.mrb[0].mxu0
  %v480 = vadd.f32 %v302, %v479
  %v481 = vpop.f32.mrb[0].mxu0
  %482 = vmatprep.mubr.f32.mxu0 0.0
  %483 = vmatmul.mubr.f32.gmra.mrb[0].mxu0 %v345
  %v484 = vpop.f32.mrb[0].mxu0
  %v485 = vadd.f32 %v302, %v484
  %v486 = vpop.f32.mrb[0].mxu0
  %487 = vmatprep.mubr.f32.mxu0 0.0
  %488 = vmatmul.mubr.f32.gmra.mrb[0].mxu0 %v348
  %v489 = vpop.f32.mrb[0].mxu0
  %v490 = vadd.f32 %v302, %v489
  %v491 = vpop.f32.mrb[0].mxu0
  %492 = vmatprep.mubr.f32.mxu0 0.0
  %493 = vmatmul.mubr.f32.gmra.mrb[0].mxu0 %v351
  %v494 = vpop.f32.mrb[0].mxu0
  %v495 = vadd.f32 %v302, %v494
  %v496 = vpop.f32.mrb[0].mxu0
  %497 = vdwg.mxu0
  %498 = vst [vmem:[#allocation2] sm:$0xff] %v420
  %499 = vst [vmem:[#allocation2 + $0x8] sm:$0xff] %v425
  %500 = vst [vmem:[#allocation2 + $0x10] sm:$0xff] %v430
  %501 = vst [vmem:[#allocation2 + $0x18] sm:$0xff] %v435
  %502 = vst [vmem:[#allocation2 + $0x20] sm:$0xff] %v440
  %503 = vst [vmem:[#allocation2 + $0x28] sm:$0xff] %v445
  %504 = vst [vmem:[#allocation2 + $0x30] sm:$0xff] %v450
  %505 = vst [vmem:[#allocation2 + $0x38] sm:$0xff] %v455
  %506 = vst [vmem:[#allocation2 + $0x40] sm:$0xff] %v460
  %507 = vst [vmem:[#allocation2 + $0x48] sm:$0xff] %v465
  %508 = vst [vmem:[#allocation2 + $0x50] sm:$0xff] %v470
  %509 = vst [vmem:[#allocation2 + $0x58] sm:$0xff] %v475
  %510 = vst [vmem:[#allocation2 + $0x60] sm:$0xff] %v480
  %511 = vst [vmem:[#allocation2 + $0x68] sm:$0xff] %v485
  %512 = vst [vmem:[#allocation2 + $0x70] sm:$0xff] %v490
  %513 = vst [vmem:[#allocation2 + $0x78] sm:$0xff] %v495
  %v514 = vld [vmem:[%s4] sm:$0xff]
  %v515 = vld [vmem:[%s4 + $0x8] sm:$0xff]
  %v516 = vld [vmem:[%s4 + $0x10] sm:$0xff]
  %v517 = vld [vmem:[%s4 + $0x18] sm:$0xff]
  %v518 = vld [vmem:[#allocation2] sm:$0xff]
  %v519 = vld [vmem:[#allocation2 + $0x8] sm:$0xff]
  %v521 = vsel %vm304, 0.0, 0
  %523 = vmatprep.subr.mxu0 0.0
  %524 = vmatpush1.msra.mxu0 %v514
  %525 = vmatprep.subr.mxu0 0.0
  %526 = vmatpush1.msra.mxu0 %v515
  %527 = vmatprep.subr.mxu0 0.0
  %528 = vmatpush1.msra.mxu0 %v516
  %529 = vmatprep.subr.mxu0 0.0
  %530 = vmatpush1.msra.mxu0 %v517
  %531 = vmatprep.subr.mxu0 0.0
  %532 = vmatpush1.msra.mxu0 0.0
  %533 = vmatprep.subr.mxu0 0.0
  %534 = vmatpush1.msra.mxu0 0.0
  %535 = vmatprep.subr.mxu0 0.0
  %536 = vmatpush1.msra.mxu0 0.0
  %537 = vmatprep.subr.mxu0 0.0
  %538 = vmatpush1.msra.mxu0 0.0
  %539 = vmatprep.subr.mxu0 0.0
  %540 = vmatpush1.msra.mxu0 0.0
  %541 = vmatprep.subr.mxu0 0.0
  %542 = vmatpush1.msra.mxu0 0.0
  %543 = vmatprep.subr.mxu0 0.0
  %544 = vmatpush1.msra.mxu0 0.0
  %545 = vmatprep.subr.mxu0 0.0
  %546 = vmatpush1.msra.mxu0 0.0
  %547 = vmatprep.subr.mxu0 0.0
  %548 = vmatpush1.msra.mxu0 0.0
  %549 = vmatprep.subr.mxu0 0.0
  %550 = vmatpush1.msra.mxu0 0.0
  %551 = vmatprep.subr.mxu0 0.0
  %552 = vmatpush1.msra.mxu0 0.0
  %553 = vmatprep.subr.mxu0 0.0
  %554 = vmatpush1.msra.mxu0 0.0
  %555 = vmatprep.subr.mxu0 0.0
  %556 = vmatpush1.msra.mxu0 0.0
  %557 = vmatprep.subr.mxu0 0.0
  %558 = vmatpush1.msra.mxu0 0.0
  %559 = vmatprep.subr.mxu0 0.0
  %560 = vmatpush1.msra.mxu0 0.0
  %561 = vmatprep.subr.mxu0 0.0
  %562 = vmatpush1.msra.mxu0 0.0
  %563 = vmatprep.subr.mxu0 0.0
  %564 = vmatpush1.msra.mxu0 0.0
  %565 = vmatprep.subr.mxu0 0.0
  %566 = vmatpush1.msra.mxu0 0.0
  %567 = vmatprep.subr.mxu0 0.0
  %568 = vmatpush1.msra.mxu0 0.0
  %569 = vmatprep.subr.mxu0 0.0
  %570 = vmatpush1.msra.mxu0 0.0
  %571 = vmatprep.subr.mxu0 0.0
  %572 = vmatpush1.msra.mxu0 0.0
  %573 = vmatprep.subr.mxu0 0.0
  %574 = vmatpush1.msra.mxu0 0.0
  %575 = vmatprep.subr.mxu0 0.0
  %576 = vmatpush1.msra.mxu0 0.0
  %577 = vmatprep.subr.mxu0 0.0
  %578 = vmatpush1.msra.mxu0 0.0
  %579 = vmatprep.subr.mxu0 0.0
  %580 = vmatpush1.msra.mxu0 0.0
  %581 = vmatprep.subr.mxu0 0.0
  %582 = vmatpush1.msra.mxu0 0.0
  %583 = vmatprep.subr.mxu0 0.0
  %584 = vmatpush1.msra.mxu0 0.0
  %585 = vmatprep.subr.mxu0 0.0
  %586 = vmatpush1.msra.mxu0 0.0
  %587 = vmatprep.mubr.f32.mxu0 0.0
  %588 = vmatmul.mubr.f32.gmra.mrb[0].mxu0 %v521
  %v589 = vpop.f32.mrb[0].mxu0
  %v590 = vadd.f32 0.0, %v589
  %v591 = vpop.f32.mrb[0].mxu0
  %592 = vmatprep.mubr.f32.mxu0 0.0
  %593 = vmatmul.mubr.f32.gmra.mrb[0].mxu0 %v521
  %v594 = vpop.f32.mrb[0].mxu0
  %v595 = vadd.f32 0.0, %v594
  %v596 = vpop.f32.mrb[0].mxu0
  %597 = vdwg.mxu0
  %v598 = vadd.f32 %v518, %v590
  %v599 = vadd.f32 %v519, %v595
  %v600 = vxor.u32 %v598, 2147483648
  %v601 = vxor.u32 %v599, 2147483648
  %v602 = vmul.f32 %v600, 1.442695
  %v603 = vpow.pop %v602
  %v604 = vmul.f32 %v601, 1.442695
  %v605 = vpow.pop %v604
  %v606 = vadd.f32 %v603, 1.0
  %v607 = vadd.f32 %v605, 1.0
  %v608 = vrcp.pop %v606
  %v609 = vmul.f32 1.0, %v608
  %v610 = vrcp.pop %v607
  %v611 = vmul.f32 1.0, %v610
  %v612 = vtanh.pop %v598
  %v613 = vtanh.pop %v599
  %v614 = vmul.f32 %v609, 0.0
  %v615 = vmul.f32 %v611, 0.0
  %618 = vrot.lane.b32.xlu0 %v612, 64
  %v619 = vpop.permute.xlu0 %618
  %620 = vrot.lane.b32.xlu0 %v613, 64
  %v621 = vpop.permute.xlu0 %620
  %v624 = vmul.f32 %v609, %v619
  %v625 = vmul.f32 %v611, %v621
  %628 = vrot.lane.b32.xlu0 %v624, 32
  %v629 = vpop.permute.xlu0 %628
  %630 = vrot.lane.b32.xlu0 %v625, 32
  %v631 = vpop.permute.xlu0 %630
  %v634 = vadd.f32 %v614, %v629
  %v635 = vadd.f32 %v615, %v631
  %v636 = vtanh.pop %v634
  %v637 = vtanh.pop %v635
  %640 = vrot.lane.b32.xlu0 %v636, 64
  %v641 = vpop.permute.xlu0 %640
  %642 = vrot.lane.b32.xlu0 %v637, 64
  %v643 = vpop.permute.xlu0 %642
  %v646 = vmul.f32 %v609, %v641
  %v647 = vmul.f32 %v611, %v643
  %vm648 = vcmp.gt.f32.partialorder %v646, 0.0
  %vm649 = vcmp.gt.f32.partialorder %v647, 0.0
  %v650 = vmul.f32 %v646, 0.25
  %v651 = vmul.f32 %v647, 0.25
  %v652 = vsel %vm648, %v646, %v650
  %v653 = vsel %vm649, %v647, %v651
  %656 = vrot.lane.b32.xlu0 %v652, 32
  %v657 = vpop.permute.xlu0 %656
  %658 = vrot.lane.b32.xlu0 %v653, 32
  %v659 = vpop.permute.xlu0 %658
  %662 = vst.msk [vmem:[%s6] sm:$0xff] %vm304, %v657
  %663 = vst.msk [vmem:[%s6 + $0x8] sm:$0xff] %vm304, %v659
  %v664 = vld [vmem:[#allocation2 + $0x10] sm:$0xff]
  %v665 = vld [vmem:[#allocation2 + $0x18] sm:$0xff]
  %668 = vrot.lane.b32.xlu0 %v646, 32
  %v669 = vpop.permute.xlu0 %668
  %670 = vrot.lane.b32.xlu0 %v647, 32
  %v671 = vpop.permute.xlu0 %670
  %v672 = vsel %vm304, %v669, 0
  %v674 = vsel %vm304, %v671, 0
  %676 = vmatprep.subr.mxu0 0.0
  %677 = vmatpush1.msra.mxu0 %v514
  %678 = vmatprep.subr.mxu0 0.0
  %679 = vmatpush1.msra.mxu0 %v515
  %680 = vmatprep.subr.mxu0 0.0
  %681 = vmatpush1.msra.mxu0 %v516
  %682 = vmatprep.subr.mxu0 0.0
  %683 = vmatpush1.msra.mxu0 %v517
  %684 = vmatprep.subr.mxu0 0.0
  %685 = vmatpush1.msra.mxu0 0.0
  %686 = vmatprep.subr.mxu0 0.0
  %687 = vmatpush1.msra.mxu0 0.0
  %688 = vmatprep.subr.mxu0 0.0
  %689 = vmatpush1.msra.mxu0 0.0
  %690 = vmatprep.subr.mxu0 0.0
  %691 = vmatpush1.msra.mxu0 0.0
  %692 = vmatprep.subr.mxu0 0.0
  %693 = vmatpush1.msra.mxu0 0.0
  %694 = vmatprep.subr.mxu0 0.0
  %695 = vmatpush1.msra.mxu0 0.0
  %696 = vmatprep.subr.mxu0 0.0
  %697 = vmatpush1.msra.mxu0 0.0
  %698 = vmatprep.subr.mxu0 0.0
  %699 = vmatpush1.msra.mxu0 0.0
  %700 = vmatprep.subr.mxu0 0.0
  %701 = vmatpush1.msra.mxu0 0.0
  %702 = vmatprep.subr.mxu0 0.0
  %703 = vmatpush1.msra.mxu0 0.0
  %704 = vmatprep.subr.mxu0 0.0
  %705 = vmatpush1.msra.mxu0 0.0
  %706 = vmatprep.subr.mxu0 0.0
  %707 = vmatpush1.msra.mxu0 0.0
  %708 = vmatprep.subr.mxu0 0.0
  %709 = vmatpush1.msra.mxu0 0.0
  %710 = vmatprep.subr.mxu0 0.0
  %711 = vmatpush1.msra.mxu0 0.0
  %712 = vmatprep.subr.mxu0 0.0
  %713 = vmatpush1.msra.mxu0 0.0
  %714 = vmatprep.subr.mxu0 0.0
  %715 = vmatpush1.msra.mxu0 0.0
  %716 = vmatprep.subr.mxu0 0.0
  %717 = vmatpush1.msra.mxu0 0.0
  %718 = vmatprep.subr.mxu0 0.0
  %719 = vmatpush1.msra.mxu0 0.0
  %720 = vmatprep.subr.mxu0 0.0
  %721 = vmatpush1.msra.mxu0 0.0
  %722 = vmatprep.subr.mxu0 0.0
  %723 = vmatpush1.msra.mxu0 0.0
  %724 = vmatprep.subr.mxu0 0.0
  %725 = vmatpush1.msra.mxu0 0.0
  %726 = vmatprep.subr.mxu0 0.0
  %727 = vmatpush1.msra.mxu0 0.0
  %728 = vmatprep.subr.mxu0 0.0
  %729 = vmatpush1.msra.mxu0 0.0
  %730 = vmatprep.subr.mxu0 0.0
  %731 = vmatpush1.msra.mxu0 0.0
  %732 = vmatprep.subr.mxu0 0.0
  %733 = vmatpush1.msra.mxu0 0.0
  %734 = vmatprep.subr.mxu0 0.0
  %735 = vmatpush1.msra.mxu0 0.0
  %736 = vmatprep.subr.mxu0 0.0
  %737 = vmatpush1.msra.mxu0 0.0
  %738 = vmatprep.subr.mxu0 0.0
  %739 = vmatpush1.msra.mxu0 0.0
  %740 = vmatprep.mubr.f32.mxu0 0.0
  %741 = vmatmul.mubr.f32.gmra.mrb[0].mxu0 %v672
  %v742 = vpop.f32.mrb[0].mxu0
  %v743 = vadd.f32 0.0, %v742
  %v744 = vpop.f32.mrb[0].mxu0
  %745 = vmatprep.mubr.f32.mxu0 0.0
  %746 = vmatmul.mubr.f32.gmra.mrb[0].mxu0 %v674
  %v747 = vpop.f32.mrb[0].mxu0
  %v748 = vadd.f32 0.0, %v747
  %v749 = vpop.f32.mrb[0].mxu0
  %750 = vdwg.mxu0
  %v751 = vadd.f32 %v664, %v743
  %v752 = vadd.f32 %v665, %v748
  %v753 = vxor.u32 %v751, 2147483648
  %v754 = vxor.u32 %v752, 2147483648
  %v755 = vmul.f32 %v753, 1.442695
  %v756 = vpow.pop %v755
  %v757 = vmul.f32 %v754, 1.442695
  %v758 = vpow.pop %v757
  %v759 = vadd.f32 %v756, 1.0
  %v760 = vadd.f32 %v758, 1.0
  %v761 = vrcp.pop %v759
  %v762 = vmul.f32 1.0, %v761
  %v763 = vrcp.pop %v760
  %v764 = vmul.f32 1.0, %v763
  %v765 = vtanh.pop %v751
  %v766 = vtanh.pop %v752
  %v767 = vmul.f32 %v762, %v634
  %v768 = vmul.f32 %v764, %v635
  %771 = vrot.lane.b32.xlu0 %v765, 64
  %v772 = vpop.permute.xlu0 %771
  %773 = vrot.lane.b32.xlu0 %v766, 64
  %v774 = vpop.permute.xlu0 %773
  %v777 = vmul.f32 %v762, %v772
  %v778 = vmul.f32 %v764, %v774
  %781 = vrot.lane.b32.xlu0 %v777, 32
  %v782 = vpop.permute.xlu0 %781
  %783 = vrot.lane.b32.xlu0 %v778, 32
  %v784 = vpop.permute.xlu0 %783
  %v787 = vadd.f32 %v767, %v782
  %v788 = vadd.f32 %v768, %v784
  %v789 = vtanh.pop %v787
  %v790 = vtanh.pop %v788
  %793 = vrot.lane.b32.xlu0 %v789, 64
  %v794 = vpop.permute.xlu0 %793
  %795 = vrot.lane.b32.xlu0 %v790, 64
  %v796 = vpop.permute.xlu0 %795
  %v799 = vmul.f32 %v762, %v794
  %v800 = vmul.f32 %v764, %v796
  %vm801 = vcmp.gt.f32.partialorder %v799, 0.0
  %vm802 = vcmp.gt.f32.partialorder %v800, 0.0
  %v803 = vmul.f32 %v799, 0.25
  %v804 = vmul.f32 %v800, 0.25
  %v805 = vsel %vm801, %v799, %v803
  %v806 = vsel %vm802, %v800, %v804
  %809 = vrot.lane.b32.xlu0 %v805, 32
  %v810 = vpop.permute.xlu0 %809
  %811 = vrot.lane.b32.xlu0 %v806, 32
  %v812 = vpop.permute.xlu0 %811
  %815 = vst.msk [vmem:[%s6 + $0x10] sm:$0xff] %vm304, %v810
  %816 = vst.msk [vmem:[%s6 + $0x18] sm:$0xff] %vm304, %v812
  %v817 = vld [vmem:[#allocation2 + $0x20] sm:$0xff]
  %v818 = vld [vmem:[#allocation2 + $0x28] sm:$0xff]
  %821 = vrot.lane.b32.xlu0 %v799, 32
  %v822 = vpop.permute.xlu0 %821
  %823 = vrot.lane.b32.xlu0 %v800, 32
  %v824 = vpop.permute.xlu0 %823
  %v825 = vsel %vm304, %v822, 0
  %v827 = vsel %vm304, %v824, 0
  %829 = vmatprep.subr.mxu0 0.0
  %830 = vmatpush1.msra.mxu0 %v514
  %831 = vmatprep.subr.mxu0 0.0
  %832 = vmatpush1.msra.mxu0 %v515
  %833 = vmatprep.subr.mxu0 0.0
  %834 = vmatpush1.msra.mxu0 %v516
  %835 = vmatprep.subr.mxu0 0.0
  %836 = vmatpush1.msra.mxu0 %v517
  %837 = vmatprep.subr.mxu0 0.0
  %838 = vmatpush1.msra.mxu0 0.0
  %839 = vmatprep.subr.mxu0 0.0
  %840 = vmatpush1.msra.mxu0 0.0
  %841 = vmatprep.subr.mxu0 0.0
  %842 = vmatpush1.msra.mxu0 0.0
  %843 = vmatprep.subr.mxu0 0.0
  %844 = vmatpush1.msra.mxu0 0.0
  %845 = vmatprep.subr.mxu0 0.0
  %846 = vmatpush1.msra.mxu0 0.0
  %847 = vmatprep.subr.mxu0 0.0
  %848 = vmatpush1.msra.mxu0 0.0
  %849 = vmatprep.subr.mxu0 0.0
  %850 = vmatpush1.msra.mxu0 0.0
  %851 = vmatprep.subr.mxu0 0.0
  %852 = vmatpush1.msra.mxu0 0.0
  %853 = vmatprep.subr.mxu0 0.0
  %854 = vmatpush1.msra.mxu0 0.0
  %855 = vmatprep.subr.mxu0 0.0
  %856 = vmatpush1.msra.mxu0 0.0
  %857 = vmatprep.subr.mxu0 0.0
  %858 = vmatpush1.msra.mxu0 0.0
  %859 = vmatprep.subr.mxu0 0.0
  %860 = vmatpush1.msra.mxu0 0.0
  %861 = vmatprep.subr.mxu0 0.0
  %862 = vmatpush1.msra.mxu0 0.0
  %863 = vmatprep.subr.mxu0 0.0
  %864 = vmatpush1.msra.mxu0 0.0
  %865 = vmatprep.subr.mxu0 0.0
  %866 = vmatpush1.msra.mxu0 0.0
  %867 = vmatprep.subr.mxu0 0.0
  %868 = vmatpush1.msra.mxu0 0.0
  %869 = vmatprep.subr.mxu0 0.0
  %870 = vmatpush1.msra.mxu0 0.0
  %871 = vmatprep.subr.mxu0 0.0
  %872 = vmatpush1.msra.mxu0 0.0
  %873 = vmatprep.subr.mxu0 0.0
  %874 = vmatpush1.msra.mxu0 0.0
  %875 = vmatprep.subr.mxu0 0.0
  %876 = vmatpush1.msra.mxu0 0.0
  %877 = vmatprep.subr.mxu0 0.0
  %878 = vmatpush1.msra.mxu0 0.0
  %879 = vmatprep.subr.mxu0 0.0
  %880 = vmatpush1.msra.mxu0 0.0
  %881 = vmatprep.subr.mxu0 0.0
  %882 = vmatpush1.msra.mxu0 0.0
  %883 = vmatprep.subr.mxu0 0.0
  %884 = vmatpush1.msra.mxu0 0.0
  %885 = vmatprep.subr.mxu0 0.0
  %886 = vmatpush1.msra.mxu0 0.0
  %887 = vmatprep.subr.mxu0 0.0
  %888 = vmatpush1.msra.mxu0 0.0
  %889 = vmatprep.subr.mxu0 0.0
  %890 = vmatpush1.msra.mxu0 0.0
  %891 = vmatprep.subr.mxu0 0.0
  %892 = vmatpush1.msra.mxu0 0.0
  %893 = vmatprep.mubr.f32.mxu0 0.0
  %894 = vmatmul.mubr.f32.gmra.mrb[0].mxu0 %v825
  %v895 = vpop.f32.mrb[0].mxu0
  %v896 = vadd.f32 0.0, %v895
  %v897 = vpop.f32.mrb[0].mxu0
  %898 = vmatprep.mubr.f32.mxu0 0.0
  %899 = vmatmul.mubr.f32.gmra.mrb[0].mxu0 %v827
  %v900 = vpop.f32.mrb[0].mxu0
  %v901 = vadd.f32 0.0, %v900
  %v902 = vpop.f32.mrb[0].mxu0
  %903 = vdwg.mxu0
  %v904 = vadd.f32 %v817, %v896
  %v905 = vadd.f32 %v818, %v901
  %v906 = vxor.u32 %v904, 2147483648
  %v907 = vxor.u32 %v905, 2147483648
  %v908 = vmul.f32 %v906, 1.442695
  %v909 = vpow.pop %v908
  %v910 = vmul.f32 %v907, 1.442695
  %v911 = vpow.pop %v910
  %v912 = vadd.f32 %v909, 1.0
  %v913 = vadd.f32 %v911, 1.0
  %v914 = vrcp.pop %v912
  %v915 = vmul.f32 1.0, %v914
  %v916 = vrcp.pop %v913
  %v917 = vmul.f32 1.0, %v916
  %v918 = vtanh.pop %v904
  %v919 = vtanh.pop %v905
  %v920 = vmul.f32 %v915, %v787
  %v921 = vmul.f32 %v917, %v788
  %924 = vrot.lane.b32.xlu0 %v918, 64
  %v925 = vpop.permute.xlu0 %924
  %926 = vrot.lane.b32.xlu0 %v919, 64
  %v927 = vpop.permute.xlu0 %926
  %v930 = vmul.f32 %v915, %v925
  %v931 = vmul.f32 %v917, %v927
  %934 = vrot.lane.b32.xlu0 %v930, 32
  %v935 = vpop.permute.xlu0 %934
  %936 = vrot.lane.b32.xlu0 %v931, 32
  %v937 = vpop.permute.xlu0 %936
  %v940 = vadd.f32 %v920, %v935
  %v941 = vadd.f32 %v921, %v937
  %v942 = vtanh.pop %v940
  %v943 = vtanh.pop %v941
  %946 = vrot.lane.b32.xlu0 %v942, 64
  %v947 = vpop.permute.xlu0 %946
  %948 = vrot.lane.b32.xlu0 %v943, 64
  %v949 = vpop.permute.xlu0 %948
  %v952 = vmul.f32 %v915, %v947
  %v953 = vmul.f32 %v917, %v949
  %vm954 = vcmp.gt.f32.partialorder %v952, 0.0
  %vm955 = vcmp.gt.f32.partialorder %v953, 0.0
  %v956 = vmul.f32 %v952, 0.25
  %v957 = vmul.f32 %v953, 0.25
  %v958 = vsel %vm954, %v952, %v956
  %v959 = vsel %vm955, %v953, %v957
  %962 = vrot.lane.b32.xlu0 %v958, 32
  %v963 = vpop.permute.xlu0 %962
  %964 = vrot.lane.b32.xlu0 %v959, 32
  %v965 = vpop.permute.xlu0 %964
  %968 = vst.msk [vmem:[%s6 + $0x20] sm:$0xff] %vm304, %v963
  %969 = vst.msk [vmem:[%s6 + $0x28] sm:$0xff] %vm304, %v965
  %v970 = vld [vmem:[#allocation2 + $0x30] sm:$0xff]
  %v971 = vld [vmem:[#allocation2 + $0x38] sm:$0xff]
  %974 = vrot.lane.b32.xlu0 %v952, 32
  %v975 = vpop.permute.xlu0 %974
  %976 = vrot.lane.b32.xlu0 %v953, 32
  %v977 = vpop.permute.xlu0 %976
  %v978 = vsel %vm304, %v975, 0
  %v980 = vsel %vm304, %v977, 0
  %982 = vmatprep.subr.mxu0 0.0
  %983 = vmatpush1.msra.mxu0 %v514
  %984 = vmatprep.subr.mxu0 0.0
  %985 = vmatpush1.msra.mxu0 %v515
  %986 = vmatprep.subr.mxu0 0.0
  %987 = vmatpush1.msra.mxu0 %v516
  %988 = vmatprep.subr.mxu0 0.0
  %989 = vmatpush1.msra.mxu0 %v517
  %990 = vmatprep.subr.mxu0 0.0
  %991 = vmatpush1.msra.mxu0 0.0
  %992 = vmatprep.subr.mxu0 0.0
  %993 = vmatpush1.msra.mxu0 0.0
  %994 = vmatprep.subr.mxu0 0.0
  %995 = vmatpush1.msra.mxu0 0.0
  %996 = vmatprep.subr.mxu0 0.0
  %997 = vmatpush1.msra.mxu0 0.0
  %998 = vmatprep.subr.mxu0 0.0
  %999 = vmatpush1.msra.mxu0 0.0
  %1000 = vmatprep.subr.mxu0 0.0
  %1001 = vmatpush1.msra.mxu0 0.0
  %1002 = vmatprep.subr.mxu0 0.0
  %1003 = vmatpush1.msra.mxu0 0.0
  %1004 = vmatprep.subr.mxu0 0.0
  %1005 = vmatpush1.msra.mxu0 0.0
  %1006 = vmatprep.subr.mxu0 0.0
  %1007 = vmatpush1.msra.mxu0 0.0
  %1008 = vmatprep.subr.mxu0 0.0
  %1009 = vmatpush1.msra.mxu0 0.0
  %1010 = vmatprep.subr.mxu0 0.0
  %1011 = vmatpush1.msra.mxu0 0.0
  %1012 = vmatprep.subr.mxu0 0.0
  %1013 = vmatpush1.msra.mxu0 0.0
  %1014 = vmatprep.subr.mxu0 0.0
  %1015 = vmatpush1.msra.mxu0 0.0
  %1016 = vmatprep.subr.mxu0 0.0
  %1017 = vmatpush1.msra.mxu0 0.0
  %1018 = vmatprep.subr.mxu0 0.0
  %1019 = vmatpush1.msra.mxu0 0.0
  %1020 = vmatprep.subr.mxu0 0.0
  %1021 = vmatpush1.msra.mxu0 0.0
  %1022 = vmatprep.subr.mxu0 0.0
  %1023 = vmatpush1.msra.mxu0 0.0
  %1024 = vmatprep.subr.mxu0 0.0
  %1025 = vmatpush1.msra.mxu0 0.0
  %1026 = vmatprep.subr.mxu0 0.0
  %1027 = vmatpush1.msra.mxu0 0.0
  %1028 = vmatprep.subr.mxu0 0.0
  %1029 = vmatpush1.msra.mxu0 0.0
  %1030 = vmatprep.subr.mxu0 0.0
  %1031 = vmatpush1.msra.mxu0 0.0
  %1032 = vmatprep.subr.mxu0 0.0
  %1033 = vmatpush1.msra.mxu0 0.0
  %1034 = vmatprep.subr.mxu0 0.0
  %1035 = vmatpush1.msra.mxu0 0.0
  %1036 = vmatprep.subr.mxu0 0.0
  %1037 = vmatpush1.msra.mxu0 0.0
  %1038 = vmatprep.subr.mxu0 0.0
  %1039 = vmatpush1.msra.mxu0 0.0
  %1040 = vmatprep.subr.mxu0 0.0
  %1041 = vmatpush1.msra.mxu0 0.0
  %1042 = vmatprep.subr.mxu0 0.0
  %1043 = vmatpush1.msra.mxu0 0.0
  %1044 = vmatprep.subr.mxu0 0.0
  %1045 = vmatpush1.msra.mxu0 0.0
  %1046 = vmatprep.mubr.f32.mxu0 0.0
  %1047 = vmatmul.mubr.f32.gmra.mrb[0].mxu0 %v978
  %v1048 = vpop.f32.mrb[0].mxu0
  %v1049 = vadd.f32 0.0, %v1048
  %v1050 = vpop.f32.mrb[0].mxu0
  %1051 = vmatprep.mubr.f32.mxu0 0.0
  %1052 = vmatmul.mubr.f32.gmra.mrb[0].mxu0 %v980
  %v1053 = vpop.f32.mrb[0].mxu0
  %v1054 = vadd.f32 0.0, %v1053
  %v1055 = vpop.f32.mrb[0].mxu0
  %1056 = vdwg.mxu0
  %v1057 = vadd.f32 %v970, %v1049
  %v1058 = vadd.f32 %v971, %v1054
  %v1059 = vxor.u32 %v1057, 2147483648
  %v1060 = vxor.u32 %v1058, 2147483648
  %v1061 = vmul.f32 %v1059, 1.442695
  %v1062 = vpow.pop %v1061
  %v1063 = vmul.f32 %v1060, 1.442695
  %v1064 = vpow.pop %v1063
  %v1065 = vadd.f32 %v1062, 1.0
  %v1066 = vadd.f32 %v1064, 1.0
  %v1067 = vrcp.pop %v1065
  %v1068 = vmul.f32 1.0, %v1067
  %v1069 = vrcp.pop %v1066
  %v1070 = vmul.f32 1.0, %v1069
  %v1071 = vtanh.pop %v1057
  %v1072 = vtanh.pop %v1058
  %v1073 = vmul.f32 %v1068, %v940
  %v1074 = vmul.f32 %v1070, %v941
  %1077 = vrot.lane.b32.xlu0 %v1071, 64
  %v1078 = vpop.permute.xlu0 %1077
  %1079 = vrot.lane.b32.xlu0 %v1072, 64
  %v1080 = vpop.permute.xlu0 %1079
  %v1083 = vmul.f32 %v1068, %v1078
  %v1084 = vmul.f32 %v1070, %v1080
  %1087 = vrot.lane.b32.xlu0 %v1083, 32
  %v1088 = vpop.permute.xlu0 %1087
  %1089 = vrot.lane.b32.xlu0 %v1084, 32
  %v1090 = vpop.permute.xlu0 %1089
  %v1093 = vadd.f32 %v1073, %v1088
  %v1094 = vadd.f32 %v1074, %v1090
  %v1095 = vtanh.pop %v1093
  %v1096 = vtanh.pop %v1094
  %1099 = vrot.lane.b32.xlu0 %v1095, 64
  %v1100 = vpop.permute.xlu0 %1099
  %1101 = vrot.lane.b32.xlu0 %v1096, 64
  %v1102 = vpop.permute.xlu0 %1101
  %v1105 = vmul.f32 %v1068, %v1100
  %v1106 = vmul.f32 %v1070, %v1102
  %vm1107 = vcmp.gt.f32.partialorder %v1105, 0.0
  %vm1108 = vcmp.gt.f32.partialorder %v1106, 0.0
  %v1109 = vmul.f32 %v1105, 0.25
  %v1110 = vmul.f32 %v1106, 0.25
  %v1111 = vsel %vm1107, %v1105, %v1109
  %v1112 = vsel %vm1108, %v1106, %v1110
  %1115 = vrot.lane.b32.xlu0 %v1111, 32
  %v1116 = vpop.permute.xlu0 %1115
  %1117 = vrot.lane.b32.xlu0 %v1112, 32
  %v1118 = vpop.permute.xlu0 %1117
  %1121 = vst.msk [vmem:[%s6 + $0x30] sm:$0xff] %vm304, %v1116
  %1122 = vst.msk [vmem:[%s6 + $0x38] sm:$0xff] %vm304, %v1118
  %v1123 = vld [vmem:[#allocation2 + $0x40] sm:$0xff]
  %v1124 = vld [vmem:[#allocation2 + $0x48] sm:$0xff]
  %1127 = vrot.lane.b32.xlu0 %v1105, 32
  %v1128 = vpop.permute.xlu0 %1127
  %1129 = vrot.lane.b32.xlu0 %v1106, 32
  %v1130 = vpop.permute.xlu0 %1129
  %v1131 = vsel %vm304, %v1128, 0
  %v1133 = vsel %vm304, %v1130, 0
  %1135 = vmatprep.subr.mxu0 0.0
  %1136 = vmatpush1.msra.mxu0 %v514
  %1137 = vmatprep.subr.mxu0 0.0
  %1138 = vmatpush1.msra.mxu0 %v515
  %1139 = vmatprep.subr.mxu0 0.0
  %1140 = vmatpush1.msra.mxu0 %v516
  %1141 = vmatprep.subr.mxu0 0.0
  %1142 = vmatpush1.msra.mxu0 %v517
  %1143 = vmatprep.subr.mxu0 0.0
  %1144 = vmatpush1.msra.mxu0 0.0
  %1145 = vmatprep.subr.mxu0 0.0
  %1146 = vmatpush1.msra.mxu0 0.0
  %1147 = vmatprep.subr.mxu0 0.0
  %1148 = vmatpush1.msra.mxu0 0.0
  %1149 = vmatprep.subr.mxu0 0.0
  %1150 = vmatpush1.msra.mxu0 0.0
  %1151 = vmatprep.subr.mxu0 0.0
  %1152 = vmatpush1.msra.mxu0 0.0
  %1153 = vmatprep.subr.mxu0 0.0
  %1154 = vmatpush1.msra.mxu0 0.0
  %1155 = vmatprep.subr.mxu0 0.0
  %1156 = vmatpush1.msra.mxu0 0.0
  %1157 = vmatprep.subr.mxu0 0.0
  %1158 = vmatpush1.msra.mxu0 0.0
  %1159 = vmatprep.subr.mxu0 0.0
  %1160 = vmatpush1.msra.mxu0 0.0
  %1161 = vmatprep.subr.mxu0 0.0
  %1162 = vmatpush1.msra.mxu0 0.0
  %1163 = vmatprep.subr.mxu0 0.0
  %1164 = vmatpush1.msra.mxu0 0.0
  %1165 = vmatprep.subr.mxu0 0.0
  %1166 = vmatpush1.msra.mxu0 0.0
  %1167 = vmatprep.subr.mxu0 0.0
  %1168 = vmatpush1.msra.mxu0 0.0
  %1169 = vmatprep.subr.mxu0 0.0
  %1170 = vmatpush1.msra.mxu0 0.0
  %1171 = vmatprep.subr.mxu0 0.0
  %1172 = vmatpush1.msra.mxu0 0.0
  %1173 = vmatprep.subr.mxu0 0.0
  %1174 = vmatpush1.msra.mxu0 0.0
  %1175 = vmatprep.subr.mxu0 0.0
  %1176 = vmatpush1.msra.mxu0 0.0
  %1177 = vmatprep.subr.mxu0 0.0
  %1178 = vmatpush1.msra.mxu0 0.0
  %1179 = vmatprep.subr.mxu0 0.0
  %1180 = vmatpush1.msra.mxu0 0.0
  %1181 = vmatprep.subr.mxu0 0.0
  %1182 = vmatpush1.msra.mxu0 0.0
  %1183 = vmatprep.subr.mxu0 0.0
  %1184 = vmatpush1.msra.mxu0 0.0
  %1185 = vmatprep.subr.mxu0 0.0
  %1186 = vmatpush1.msra.mxu0 0.0
  %1187 = vmatprep.subr.mxu0 0.0
  %1188 = vmatpush1.msra.mxu0 0.0
  %1189 = vmatprep.subr.mxu0 0.0
  %1190 = vmatpush1.msra.mxu0 0.0
  %1191 = vmatprep.subr.mxu0 0.0
  %1192 = vmatpush1.msra.mxu0 0.0
  %1193 = vmatprep.subr.mxu0 0.0
  %1194 = vmatpush1.msra.mxu0 0.0
  %1195 = vmatprep.subr.mxu0 0.0
  %1196 = vmatpush1.msra.mxu0 0.0
  %1197 = vmatprep.subr.mxu0 0.0
  %1198 = vmatpush1.msra.mxu0 0.0
  %1199 = vmatprep.mubr.f32.mxu0 0.0
  %1200 = vmatmul.mubr.f32.gmra.mrb[0].mxu0 %v1131
  %v1201 = vpop.f32.mrb[0].mxu0
  %v1202 = vadd.f32 0.0, %v1201
  %v1203 = vpop.f32.mrb[0].mxu0
  %1204 = vmatprep.mubr.f32.mxu0 0.0
  %1205 = vmatmul.mubr.f32.gmra.mrb[0].mxu0 %v1133
  %v1206 = vpop.f32.mrb[0].mxu0
  %v1207 = vadd.f32 0.0, %v1206
  %v1208 = vpop.f32.mrb[0].mxu0
  %1209 = vdwg.mxu0
  %v1210 = vadd.f32 %v1123, %v1202
  %v1211 = vadd.f32 %v1124, %v1207
  %v1212 = vxor.u32 %v1210, 2147483648
  %v1213 = vxor.u32 %v1211, 2147483648
  %v1214 = vmul.f32 %v1212, 1.442695
  %v1215 = vpow.pop %v1214
  %v1216 = vmul.f32 %v1213, 1.442695
  %v1217 = vpow.pop %v1216
  %v1218 = vadd.f32 %v1215, 1.0
  %v1219 = vadd.f32 %v1217, 1.0
  %v1220 = vrcp.pop %v1218
  %v1221 = vmul.f32 1.0, %v1220
  %v1222 = vrcp.pop %v1219
  %v1223 = vmul.f32 1.0, %v1222
  %v1224 = vtanh.pop %v1210
  %v1225 = vtanh.pop %v1211
  %v1226 = vmul.f32 %v1221, %v1093
  %v1227 = vmul.f32 %v1223, %v1094
  %1230 = vrot.lane.b32.xlu0 %v1224, 64
  %v1231 = vpop.permute.xlu0 %1230
  %1232 = vrot.lane.b32.xlu0 %v1225, 64
  %v1233 = vpop.permute.xlu0 %1232
  %v1236 = vmul.f32 %v1221, %v1231
  %v1237 = vmul.f32 %v1223, %v1233
  %1240 = vrot.lane.b32.xlu0 %v1236, 32
  %v1241 = vpop.permute.xlu0 %1240
  %1242 = vrot.lane.b32.xlu0 %v1237, 32
  %v1243 = vpop.permute.xlu0 %1242
  %v1246 = vadd.f32 %v1226, %v1241
  %v1247 = vadd.f32 %v1227, %v1243
  %v1248 = vtanh.pop %v1246
  %v1249 = vtanh.pop %v1247
  %1252 = vrot.lane.b32.xlu0 %v1248, 64
  %v1253 = vpop.permute.xlu0 %1252
  %1254 = vrot.lane.b32.xlu0 %v1249, 64
  %v1255 = vpop.permute.xlu0 %1254
  %v1258 = vmul.f32 %v1221, %v1253
  %v1259 = vmul.f32 %v1223, %v1255
  %vm1260 = vcmp.gt.f32.partialorder %v1258, 0.0
  %vm1261 = vcmp.gt.f32.partialorder %v1259, 0.0
  %v1262 = vmul.f32 %v1258, 0.25
  %v1263 = vmul.f32 %v1259, 0.25
  %v1264 = vsel %vm1260, %v1258, %v1262
  %v1265 = vsel %vm1261, %v1259, %v1263
  %1268 = vrot.lane.b32.xlu0 %v1264, 32
  %v1269 = vpop.permute.xlu0 %1268
  %1270 = vrot.lane.b32.xlu0 %v1265, 32
  %v1271 = vpop.permute.xlu0 %1270
  %1274 = vst.msk [vmem:[%s6 + $0x40] sm:$0xff] %vm304, %v1269
  %1275 = vst.msk [vmem:[%s6 + $0x48] sm:$0xff] %vm304, %v1271
  %v1276 = vld [vmem:[#allocation2 + $0x50] sm:$0xff]
  %v1277 = vld [vmem:[#allocation2 + $0x58] sm:$0xff]
  %1280 = vrot.lane.b32.xlu0 %v1258, 32
  %v1281 = vpop.permute.xlu0 %1280
  %1282 = vrot.lane.b32.xlu0 %v1259, 32
  %v1283 = vpop.permute.xlu0 %1282
  %v1284 = vsel %vm304, %v1281, 0
  %v1286 = vsel %vm304, %v1283, 0
  %1288 = vmatprep.subr.mxu0 0.0
  %1289 = vmatpush1.msra.mxu0 %v514
  %1290 = vmatprep.subr.mxu0 0.0
  %1291 = vmatpush1.msra.mxu0 %v515
  %1292 = vmatprep.subr.mxu0 0.0
  %1293 = vmatpush1.msra.mxu0 %v516
  %1294 = vmatprep.subr.mxu0 0.0
  %1295 = vmatpush1.msra.mxu0 %v517
  %1296 = vmatprep.subr.mxu0 0.0
  %1297 = vmatpush1.msra.mxu0 0.0
  %1298 = vmatprep.subr.mxu0 0.0
  %1299 = vmatpush1.msra.mxu0 0.0
  %1300 = vmatprep.subr.mxu0 0.0
  %1301 = vmatpush1.msra.mxu0 0.0
  %1302 = vmatprep.subr.mxu0 0.0
  %1303 = vmatpush1.msra.mxu0 0.0
  %1304 = vmatprep.subr.mxu0 0.0
  %1305 = vmatpush1.msra.mxu0 0.0
  %1306 = vmatprep.subr.mxu0 0.0
  %1307 = vmatpush1.msra.mxu0 0.0
  %1308 = vmatprep.subr.mxu0 0.0
  %1309 = vmatpush1.msra.mxu0 0.0
  %1310 = vmatprep.subr.mxu0 0.0
  %1311 = vmatpush1.msra.mxu0 0.0
  %1312 = vmatprep.subr.mxu0 0.0
  %1313 = vmatpush1.msra.mxu0 0.0
  %1314 = vmatprep.subr.mxu0 0.0
  %1315 = vmatpush1.msra.mxu0 0.0
  %1316 = vmatprep.subr.mxu0 0.0
  %1317 = vmatpush1.msra.mxu0 0.0
  %1318 = vmatprep.subr.mxu0 0.0
  %1319 = vmatpush1.msra.mxu0 0.0
  %1320 = vmatprep.subr.mxu0 0.0
  %1321 = vmatpush1.msra.mxu0 0.0
  %1322 = vmatprep.subr.mxu0 0.0
  %1323 = vmatpush1.msra.mxu0 0.0
  %1324 = vmatprep.subr.mxu0 0.0
  %1325 = vmatpush1.msra.mxu0 0.0
  %1326 = vmatprep.subr.mxu0 0.0
  %1327 = vmatpush1.msra.mxu0 0.0
  %1328 = vmatprep.subr.mxu0 0.0
  %1329 = vmatpush1.msra.mxu0 0.0
  %1330 = vmatprep.subr.mxu0 0.0
  %1331 = vmatpush1.msra.mxu0 0.0
  %1332 = vmatprep.subr.mxu0 0.0
  %1333 = vmatpush1.msra.mxu0 0.0
  %1334 = vmatprep.subr.mxu0 0.0
  %1335 = vmatpush1.msra.mxu0 0.0
  %1336 = vmatprep.subr.mxu0 0.0
  %1337 = vmatpush1.msra.mxu0 0.0
  %1338 = vmatprep.subr.mxu0 0.0
  %1339 = vmatpush1.msra.mxu0 0.0
  %1340 = vmatprep.subr.mxu0 0.0
  %1341 = vmatpush1.msra.mxu0 0.0
  %1342 = vmatprep.subr.mxu0 0.0
  %1343 = vmatpush1.msra.mxu0 0.0
  %1344 = vmatprep.subr.mxu0 0.0
  %1345 = vmatpush1.msra.mxu0 0.0
  %1346 = vmatprep.subr.mxu0 0.0
  %1347 = vmatpush1.msra.mxu0 0.0
  %1348 = vmatprep.subr.mxu0 0.0
  %1349 = vmatpush1.msra.mxu0 0.0
  %1350 = vmatprep.subr.mxu0 0.0
  %1351 = vmatpush1.msra.mxu0 0.0
  %1352 = vmatprep.mubr.f32.mxu0 0.0
  %1353 = vmatmul.mubr.f32.gmra.mrb[0].mxu0 %v1284
  %v1354 = vpop.f32.mrb[0].mxu0
  %v1355 = vadd.f32 0.0, %v1354
  %v1356 = vpop.f32.mrb[0].mxu0
  %1357 = vmatprep.mubr.f32.mxu0 0.0
  %1358 = vmatmul.mubr.f32.gmra.mrb[0].mxu0 %v1286
  %v1359 = vpop.f32.mrb[0].mxu0
  %v1360 = vadd.f32 0.0, %v1359
  %v1361 = vpop.f32.mrb[0].mxu0
  %1362 = vdwg.mxu0
  %v1363 = vadd.f32 %v1276, %v1355
  %v1364 = vadd.f32 %v1277, %v1360
  %v1365 = vxor.u32 %v1363, 2147483648
  %v1366 = vxor.u32 %v1364, 2147483648
  %v1367 = vmul.f32 %v1365, 1.442695
  %v1368 = vpow.pop %v1367
  %v1369 = vmul.f32 %v1366, 1.442695
  %v1370 = vpow.pop %v1369
  %v1371 = vadd.f32 %v1368, 1.0
  %v1372 = vadd.f32 %v1370, 1.0
  %v1373 = vrcp.pop %v1371
  %v1374 = vmul.f32 1.0, %v1373
  %v1375 = vrcp.pop %v1372
  %v1376 = vmul.f32 1.0, %v1375
  %v1377 = vtanh.pop %v1363
  %v1378 = vtanh.pop %v1364
  %v1379 = vmul.f32 %v1374, %v1246
  %v1380 = vmul.f32 %v1376, %v1247
  %1383 = vrot.lane.b32.xlu0 %v1377, 64
  %v1384 = vpop.permute.xlu0 %1383
  %1385 = vrot.lane.b32.xlu0 %v1378, 64
  %v1386 = vpop.permute.xlu0 %1385
  %v1389 = vmul.f32 %v1374, %v1384
  %v1390 = vmul.f32 %v1376, %v1386
  %1393 = vrot.lane.b32.xlu0 %v1389, 32
  %v1394 = vpop.permute.xlu0 %1393
  %1395 = vrot.lane.b32.xlu0 %v1390, 32
  %v1396 = vpop.permute.xlu0 %1395
  %v1399 = vadd.f32 %v1379, %v1394
  %v1400 = vadd.f32 %v1380, %v1396
  %v1401 = vtanh.pop %v1399
  %v1402 = vtanh.pop %v1400
  %1405 = vrot.lane.b32.xlu0 %v1401, 64
  %v1406 = vpop.permute.xlu0 %1405
  %1407 = vrot.lane.b32.xlu0 %v1402, 64
  %v1408 = vpop.permute.xlu0 %1407
  %v1411 = vmul.f32 %v1374, %v1406
  %v1412 = vmul.f32 %v1376, %v1408
  %vm1413 = vcmp.gt.f32.partialorder %v1411, 0.0
  %vm1414 = vcmp.gt.f32.partialorder %v1412, 0.0
  %v1415 = vmul.f32 %v1411, 0.25
  %v1416 = vmul.f32 %v1412, 0.25
  %v1417 = vsel %vm1413, %v1411, %v1415
  %v1418 = vsel %vm1414, %v1412, %v1416
  %1421 = vrot.lane.b32.xlu0 %v1417, 32
  %v1422 = vpop.permute.xlu0 %1421
  %1423 = vrot.lane.b32.xlu0 %v1418, 32
  %v1424 = vpop.permute.xlu0 %1423
  %1427 = vst.msk [vmem:[%s6 + $0x50] sm:$0xff] %vm304, %v1422
  %1428 = vst.msk [vmem:[%s6 + $0x58] sm:$0xff] %vm304, %v1424
  %v1429 = vld [vmem:[#allocation2 + $0x60] sm:$0xff]
  %v1430 = vld [vmem:[#allocation2 + $0x68] sm:$0xff]
  %1433 = vrot.lane.b32.xlu0 %v1411, 32
  %v1434 = vpop.permute.xlu0 %1433
  %1435 = vrot.lane.b32.xlu0 %v1412, 32
  %v1436 = vpop.permute.xlu0 %1435
  %v1437 = vsel %vm304, %v1434, 0
  %v1439 = vsel %vm304, %v1436, 0
  %1441 = vmatprep.subr.mxu0 0.0
  %1442 = vmatpush1.msra.mxu0 %v514
  %1443 = vmatprep.subr.mxu0 0.0
  %1444 = vmatpush1.msra.mxu0 %v515
  %1445 = vmatprep.subr.mxu0 0.0
  %1446 = vmatpush1.msra.mxu0 %v516
  %1447 = vmatprep.subr.mxu0 0.0
  %1448 = vmatpush1.msra.mxu0 %v517
  %1449 = vmatprep.subr.mxu0 0.0
  %1450 = vmatpush1.msra.mxu0 0.0
  %1451 = vmatprep.subr.mxu0 0.0
  %1452 = vmatpush1.msra.mxu0 0.0
  %1453 = vmatprep.subr.mxu0 0.0
  %1454 = vmatpush1.msra.mxu0 0.0
  %1455 = vmatprep.subr.mxu0 0.0
  %1456 = vmatpush1.msra.mxu0 0.0
  %1457 = vmatprep.subr.mxu0 0.0
  %1458 = vmatpush1.msra.mxu0 0.0
  %1459 = vmatprep.subr.mxu0 0.0
  %1460 = vmatpush1.msra.mxu0 0.0
  %1461 = vmatprep.subr.mxu0 0.0
  %1462 = vmatpush1.msra.mxu0 0.0
  %1463 = vmatprep.subr.mxu0 0.0
  %1464 = vmatpush1.msra.mxu0 0.0
  %1465 = vmatprep.subr.mxu0 0.0
  %1466 = vmatpush1.msra.mxu0 0.0
  %1467 = vmatprep.subr.mxu0 0.0
  %1468 = vmatpush1.msra.mxu0 0.0
  %1469 = vmatprep.subr.mxu0 0.0
  %1470 = vmatpush1.msra.mxu0 0.0
  %1471 = vmatprep.subr.mxu0 0.0
  %1472 = vmatpush1.msra.mxu0 0.0
  %1473 = vmatprep.subr.mxu0 0.0
  %1474 = vmatpush1.msra.mxu0 0.0
  %1475 = vmatprep.subr.mxu0 0.0
  %1476 = vmatpush1.msra.mxu0 0.0
  %1477 = vmatprep.subr.mxu0 0.0
  %1478 = vmatpush1.msra.mxu0 0.0
  %1479 = vmatprep.subr.mxu0 0.0
  %1480 = vmatpush1.msra.mxu0 0.0
  %1481 = vmatprep.subr.mxu0 0.0
  %1482 = vmatpush1.msra.mxu0 0.0
  %1483 = vmatprep.subr.mxu0 0.0
  %1484 = vmatpush1.msra.mxu0 0.0
  %1485 = vmatprep.subr.mxu0 0.0
  %1486 = vmatpush1.msra.mxu0 0.0
  %1487 = vmatprep.subr.mxu0 0.0
  %1488 = vmatpush1.msra.mxu0 0.0
  %1489 = vmatprep.subr.mxu0 0.0
  %1490 = vmatpush1.msra.mxu0 0.0
  %1491 = vmatprep.subr.mxu0 0.0
  %1492 = vmatpush1.msra.mxu0 0.0
  %1493 = vmatprep.subr.mxu0 0.0
  %1494 = vmatpush1.msra.mxu0 0.0
  %1495 = vmatprep.subr.mxu0 0.0
  %1496 = vmatpush1.msra.mxu0 0.0
  %1497 = vmatprep.subr.mxu0 0.0
  %1498 = vmatpush1.msra.mxu0 0.0
  %1499 = vmatprep.subr.mxu0 0.0
  %1500 = vmatpush1.msra.mxu0 0.0
  %1501 = vmatprep.subr.mxu0 0.0
  %1502 = vmatpush1.msra.mxu0 0.0
  %1503 = vmatprep.subr.mxu0 0.0
  %1504 = vmatpush1.msra.mxu0 0.0
  %1505 = vmatprep.mubr.f32.mxu0 0.0
  %1506 = vmatmul.mubr.f32.gmra.mrb[0].mxu0 %v1437
  %v1507 = vpop.f32.mrb[0].mxu0
  %v1508 = vadd.f32 0.0, %v1507
  %v1509 = vpop.f32.mrb[0].mxu0
  %1510 = vmatprep.mubr.f32.mxu0 0.0
  %1511 = vmatmul.mubr.f32.gmra.mrb[0].mxu0 %v1439
  %v1512 = vpop.f32.mrb[0].mxu0
  %v1513 = vadd.f32 0.0, %v1512
  %v1514 = vpop.f32.mrb[0].mxu0
  %1515 = vdwg.mxu0
  %v1516 = vadd.f32 %v1429, %v1508
  %v1517 = vadd.f32 %v1430, %v1513
  %v1518 = vxor.u32 %v1516, 2147483648
  %v1519 = vxor.u32 %v1517, 2147483648
  %v1520 = vmul.f32 %v1518, 1.442695
  %v1521 = vpow.pop %v1520
  %v1522 = vmul.f32 %v1519, 1.442695
  %v1523 = vpow.pop %v1522
  %v1524 = vadd.f32 %v1521, 1.0
  %v1525 = vadd.f32 %v1523, 1.0
  %v1526 = vrcp.pop %v1524
  %v1527 = vmul.f32 1.0, %v1526
  %v1528 = vrcp.pop %v1525
  %v1529 = vmul.f32 1.0, %v1528
  %v1530 = vtanh.pop %v1516
  %v1531 = vtanh.pop %v1517
  %v1532 = vmul.f32 %v1527, %v1399
  %v1533 = vmul.f32 %v1529, %v1400
  %1536 = vrot.lane.b32.xlu0 %v1530, 64
  %v1537 = vpop.permute.xlu0 %1536
  %1538 = vrot.lane.b32.xlu0 %v1531, 64
  %v1539 = vpop.permute.xlu0 %1538
  %v1542 = vmul.f32 %v1527, %v1537
  %v1543 = vmul.f32 %v1529, %v1539
  %1546 = vrot.lane.b32.xlu0 %v1542, 32
  %v1547 = vpop.permute.xlu0 %1546
  %1548 = vrot.lane.b32.xlu0 %v1543, 32
  %v1549 = vpop.permute.xlu0 %1548
  %v1552 = vadd.f32 %v1532, %v1547
  %v1553 = vadd.f32 %v1533, %v1549
  %v1554 = vtanh.pop %v1552
  %v1555 = vtanh.pop %v1553
  %1558 = vrot.lane.b32.xlu0 %v1554, 64
  %v1559 = vpop.permute.xlu0 %1558
  %1560 = vrot.lane.b32.xlu0 %v1555, 64
  %v1561 = vpop.permute.xlu0 %1560
  %v1564 = vmul.f32 %v1527, %v1559
  %v1565 = vmul.f32 %v1529, %v1561
  %vm1566 = vcmp.gt.f32.partialorder %v1564, 0.0
  %vm1567 = vcmp.gt.f32.partialorder %v1565, 0.0
  %v1568 = vmul.f32 %v1564, 0.25
  %v1569 = vmul.f32 %v1565, 0.25
  %v1570 = vsel %vm1566, %v1564, %v1568
  %v1571 = vsel %vm1567, %v1565, %v1569
  %1574 = vrot.lane.b32.xlu0 %v1570, 32
  %v1575 = vpop.permute.xlu0 %1574
  %1576 = vrot.lane.b32.xlu0 %v1571, 32
  %v1577 = vpop.permute.xlu0 %1576
  %1580 = vst.msk [vmem:[%s6 + $0x60] sm:$0xff] %vm304, %v1575
  %1581 = vst.msk [vmem:[%s6 + $0x68] sm:$0xff] %vm304, %v1577
  %v1582 = vld [vmem:[#allocation2 + $0x70] sm:$0xff]
  %v1583 = vld [vmem:[#allocation2 + $0x78] sm:$0xff]
  %1586 = vrot.lane.b32.xlu0 %v1564, 32
  %v1587 = vpop.permute.xlu0 %1586
  %1588 = vrot.lane.b32.xlu0 %v1565, 32
  %v1589 = vpop.permute.xlu0 %1588
  %v1590 = vsel %vm304, %v1587, 0
  %v1592 = vsel %vm304, %v1589, 0
  %1594 = vmatprep.subr.mxu0 0.0
  %1595 = vmatpush1.msra.mxu0 %v514
  %1596 = vmatprep.subr.mxu0 0.0
  %1597 = vmatpush1.msra.mxu0 %v515
  %1598 = vmatprep.subr.mxu0 0.0
  %1599 = vmatpush1.msra.mxu0 %v516
  %1600 = vmatprep.subr.mxu0 0.0
  %1601 = vmatpush1.msra.mxu0 %v517
  %1602 = vmatprep.subr.mxu0 0.0
  %1603 = vmatpush1.msra.mxu0 0.0
  %1604 = vmatprep.subr.mxu0 0.0
  %1605 = vmatpush1.msra.mxu0 0.0
  %1606 = vmatprep.subr.mxu0 0.0
  %1607 = vmatpush1.msra.mxu0 0.0
  %1608 = vmatprep.subr.mxu0 0.0
  %1609 = vmatpush1.msra.mxu0 0.0
  %1610 = vmatprep.subr.mxu0 0.0
  %1611 = vmatpush1.msra.mxu0 0.0
  %1612 = vmatprep.subr.mxu0 0.0
  %1613 = vmatpush1.msra.mxu0 0.0
  %1614 = vmatprep.subr.mxu0 0.0
  %1615 = vmatpush1.msra.mxu0 0.0
  %1616 = vmatprep.subr.mxu0 0.0
  %1617 = vmatpush1.msra.mxu0 0.0
  %1618 = vmatprep.subr.mxu0 0.0
  %1619 = vmatpush1.msra.mxu0 0.0
  %1620 = vmatprep.subr.mxu0 0.0
  %1621 = vmatpush1.msra.mxu0 0.0
  %1622 = vmatprep.subr.mxu0 0.0
  %1623 = vmatpush1.msra.mxu0 0.0
  %1624 = vmatprep.subr.mxu0 0.0
  %1625 = vmatpush1.msra.mxu0 0.0
  %1626 = vmatprep.subr.mxu0 0.0
  %1627 = vmatpush1.msra.mxu0 0.0
  %1628 = vmatprep.subr.mxu0 0.0
  %1629 = vmatpush1.msra.mxu0 0.0
  %1630 = vmatprep.subr.mxu0 0.0
  %1631 = vmatpush1.msra.mxu0 0.0
  %1632 = vmatprep.subr.mxu0 0.0
  %1633 = vmatpush1.msra.mxu0 0.0
  %1634 = vmatprep.subr.mxu0 0.0
  %1635 = vmatpush1.msra.mxu0 0.0
  %1636 = vmatprep.subr.mxu0 0.0
  %1637 = vmatpush1.msra.mxu0 0.0
  %1638 = vmatprep.subr.mxu0 0.0
  %1639 = vmatpush1.msra.mxu0 0.0
  %1640 = vmatprep.subr.mxu0 0.0
  %1641 = vmatpush1.msra.mxu0 0.0
  %1642 = vmatprep.subr.mxu0 0.0
  %1643 = vmatpush1.msra.mxu0 0.0
  %1644 = vmatprep.subr.mxu0 0.0
  %1645 = vmatpush1.msra.mxu0 0.0
  %1646 = vmatprep.subr.mxu0 0.0
  %1647 = vmatpush1.msra.mxu0 0.0
  %1648 = vmatprep.subr.mxu0 0.0
  %1649 = vmatpush1.msra.mxu0 0.0
  %1650 = vmatprep.subr.mxu0 0.0
  %1651 = vmatpush1.msra.mxu0 0.0
  %1652 = vmatprep.subr.mxu0 0.0
  %1653 = vmatpush1.msra.mxu0 0.0
  %1654 = vmatprep.subr.mxu0 0.0
  %1655 = vmatpush1.msra.mxu0 0.0
  %1656 = vmatprep.subr.mxu0 0.0
  %1657 = vmatpush1.msra.mxu0 0.0
  %1658 = vmatprep.mubr.f32.mxu0 0.0
  %1659 = vmatmul.mubr.f32.gmra.mrb[0].mxu0 %v1590
  %v1660 = vpop.f32.mrb[0].mxu0
  %v1661 = vadd.f32 0.0, %v1660
  %v1662 = vpop.f32.mrb[0].mxu0
  %1663 = vmatprep.mubr.f32.mxu0 0.0
  %1664 = vmatmul.mubr.f32.gmra.mrb[0].mxu0 %v1592
  %v1665 = vpop.f32.mrb[0].mxu0
  %v1666 = vadd.f32 0.0, %v1665
  %v1667 = vpop.f32.mrb[0].mxu0
  %1668 = vdwg.mxu0
  %v1669 = vadd.f32 %v1582, %v1661
  %v1670 = vadd.f32 %v1583, %v1666
  %v1671 = vxor.u32 %v1669, 2147483648
  %v1672 = vxor.u32 %v1670, 2147483648
  %v1673 = vmul.f32 %v1671, 1.442695
  %v1674 = vpow.pop %v1673
  %v1675 = vmul.f32 %v1672, 1.442695
  %v1676 = vpow.pop %v1675
  %v1677 = vadd.f32 %v1674, 1.0
  %v1678 = vadd.f32 %v1676, 1.0
  %v1679 = vrcp.pop %v1677
  %v1680 = vmul.f32 1.0, %v1679
  %v1681 = vrcp.pop %v1678
  %v1682 = vmul.f32 1.0, %v1681
  %v1683 = vtanh.pop %v1669
  %v1684 = vtanh.pop %v1670
  %v1685 = vmul.f32 %v1680, %v1552
  %v1686 = vmul.f32 %v1682, %v1553
  %1689 = vrot.lane.b32.xlu0 %v1683, 64
  %v1690 = vpop.permute.xlu0 %1689
  %1691 = vrot.lane.b32.xlu0 %v1684, 64
  %v1692 = vpop.permute.xlu0 %1691
  %v1695 = vmul.f32 %v1680, %v1690
  %v1696 = vmul.f32 %v1682, %v1692
  %1699 = vrot.lane.b32.xlu0 %v1695, 32
  %v1700 = vpop.permute.xlu0 %1699
  %1701 = vrot.lane.b32.xlu0 %v1696, 32
  %v1702 = vpop.permute.xlu0 %1701
  %v1705 = vadd.f32 %v1685, %v1700
  %v1706 = vadd.f32 %v1686, %v1702
  %v1707 = vtanh.pop %v1705
  %v1708 = vtanh.pop %v1706
  %1711 = vrot.lane.b32.xlu0 %v1707, 64
  %v1712 = vpop.permute.xlu0 %1711
  %1713 = vrot.lane.b32.xlu0 %v1708, 64
  %v1714 = vpop.permute.xlu0 %1713
  %v1717 = vmul.f32 %v1680, %v1712
  %v1718 = vmul.f32 %v1682, %v1714
  %vm1719 = vcmp.gt.f32.partialorder %v1717, 0.0
  %vm1720 = vcmp.gt.f32.partialorder %v1718, 0.0
  %v1721 = vmul.f32 %v1717, 0.25
  %v1722 = vmul.f32 %v1718, 0.25
  %v1723 = vsel %vm1719, %v1717, %v1721
  %v1724 = vsel %vm1720, %v1718, %v1722
  %1727 = vrot.lane.b32.xlu0 %v1723, 32
  %v1728 = vpop.permute.xlu0 %1727
  %1729 = vrot.lane.b32.xlu0 %v1724, 32
  %v1730 = vpop.permute.xlu0 %1729
  %1733 = vst.msk [vmem:[%s6 + $0x70] sm:$0xff] %vm304, %v1728
  %1734 = vst.msk [vmem:[%s6 + $0x78] sm:$0xff] %vm304, %v1730
  // Predicated region
  $region26: #{forward.4} parent=0 // pred_check
    _
  $region27: #{forward.4} parent=0 // pred_check_branch
    %1736 = sbr.rel (0) target = $region29
  $region28: #{forward.4} parent=0 // pred_region
    _
  $region29: #{forward.4} parent=0 // pred_fallthru
    _
  // Predicated region
  $region30: #{forward.4} parent=0 // pred_check
    _
  $region31: #{forward.4} parent=0 // pred_check_branch
    %1738 = sbr.rel (0) target = $region33
  $region32: #{forward.4} parent=0 // pred_region
    _
  $region33: #{forward.4} parent=0 // pred_fallthru
    _

// kernel: forward.6
$region0: #{forward.6}
  #allocation0 [shape = 'u32[]', space=smem, size = 0x4, offset = 0x4, fixed_abs, tag = 'smem constant byte address 0x4 - core index']
  #allocation1 [shape = 'u32[144,128]{1,0:T(1,128)}', space=vmem, size = 0x12000, scoped, tag = 'internal scratch']
  #allocation2 [shape = 'f32[128,128]{1,0:T(8,128)}', space=vmem, size = 0x10000, scoped, tag = 'scratch operand']
  #allocation3 [shape = 'f32[128,32]{1,0:T(8,128)}', space=vmem, size = 0x10000, scoped, tag = 'scratch operand']
  %s0 = inlined_call_operand.vmem [shape: f32[128,32], index: 0, kind: input, shape index: {}]
  %s1 = inlined_call_operand.vmem [shape: f32[32,128], index: 1, kind: input, shape index: {}]
  %s2 = inlined_call_operand.vmem [shape: f32[32,128], index: 2, kind: input, shape index: {}]
  %s3 = inlined_call_operand.vmem [shape: f32[1,128], index: 3, kind: input, shape index: {}]
  %s4 = inlined_call_operand.vmem [shape: f32[32,128], index: 4, kind: input, shape index: {}]
  %s5 = inlined_call_operand.vmem [shape: f32[32,128], index: 5, kind: input, shape index: {}]
  %s6 = inlined_call_operand.vmem [shape: f32[1,128], index: 6, kind: input, shape index: {}]
  %s7 = inlined_call_operand.vmem [shape: f32[128,32], index: 7, kind: output, shape index: {}]
  %s8 = sld [smem:[#allocation0]]
  $region38: #{forward.6} parent=0
    _
  %s10 = ssub.s32 1, %s8
  %s11 = scalar_select 0, %s10, %s8
  // Predicated region
  $region2: #{forward.6} parent=0 // pred_check
    _
  $region3: #{forward.6} parent=0 // pred_check_branch
    %13 = sbr.rel (0) target = $region5
  $region4: #{forward.6} parent=0 // pred_region
    _
  $region5: #{forward.6} parent=0 // pred_fallthru
    _
  // Predicated region
  $region6: #{forward.6} parent=0 // pred_check
    _
  $region7: #{forward.6} parent=0 // pred_check_branch
    %15 = sbr.rel (0) target = $region9
  $region8: #{forward.6} parent=0 // pred_region
    _
  $region9: #{forward.6} parent=0 // pred_fallthru
    _
  // Predicated region
  $region10: #{forward.6} parent=0 // pred_check
    _
  $region11: #{forward.6} parent=0 // pred_check_branch
    %17 = sbr.rel (0) target = $region13
  $region12: #{forward.6} parent=0 // pred_region
    _
  $region13: #{forward.6} parent=0 // pred_fallthru
    _
  // Predicated region
  $region14: #{forward.6} parent=0 // pred_check
    _
  $region15: #{forward.6} parent=0 // pred_check_branch
    %19 = sbr.rel (0) target = $region17
  $region16: #{forward.6} parent=0 // pred_region
    _
  $region17: #{forward.6} parent=0 // pred_fallthru
    _
  // Predicated region
  $region18: #{forward.6} parent=0 // pred_check
    _
  $region19: #{forward.6} parent=0 // pred_check_branch
    %21 = sbr.rel (0) target = $region21
  $region20: #{forward.6} parent=0 // pred_region
    _
  $region21: #{forward.6} parent=0 // pred_fallthru
    _
  // Predicated region
  $region22: #{forward.6} parent=0 // pred_check
    _
  $region23: #{forward.6} parent=0 // pred_check_branch
    %23 = sbr.rel (0) target = $region25
  $region24: #{forward.6} parent=0 // pred_region
    _
  $region25: #{forward.6} parent=0 // pred_fallthru
    _
  // Predicated region
  $region26: #{forward.6} parent=0 // pred_check
    _
  $region27: #{forward.6} parent=0 // pred_check_branch
    %25 = sbr.rel (0) target = $region29
  $region28: #{forward.6} parent=0 // pred_region
    _
  $region29: #{forward.6} parent=0 // pred_fallthru
    _
  %v26 = vld [vmem:[%s0] sm:$0xff]
  %v27 = vld [vmem:[%s0 + $0x8] sm:$0xff]
  %v28 = vld [vmem:[%s0 + $0x10] sm:$0xff]
  %v29 = vld [vmem:[%s0 + $0x18] sm:$0xff]
  %v30 = vld [vmem:[%s0 + $0x20] sm:$0xff]
  %v31 = vld [vmem:[%s0 + $0x28] sm:$0xff]
  %v32 = vld [vmem:[%s0 + $0x30] sm:$0xff]
  %v33 = vld [vmem:[%s0 + $0x38] sm:$0xff]
  %v34 = vld [vmem:[%s0 + $0x40] sm:$0xff]
  %v35 = vld [vmem:[%s0 + $0x48] sm:$0xff]
  %v36 = vld [vmem:[%s0 + $0x50] sm:$0xff]
  %v37 = vld [vmem:[%s0 + $0x58] sm:$0xff]
  %v38 = vld [vmem:[%s0 + $0x60] sm:$0xff]
  %v39 = vld [vmem:[%s0 + $0x68] sm:$0xff]
  %v40 = vld [vmem:[%s0 + $0x70] sm:$0xff]
  %v41 = vld [vmem:[%s0 + $0x78] sm:$0xff]
  %v42 = vld [vmem:[%s1] sm:$0xff]
  %v43 = vld [vmem:[%s1 + $0x8] sm:$0xff]
  %v44 = vld [vmem:[%s1 + $0x10] sm:$0xff]
  %v45 = vld [vmem:[%s1 + $0x18] sm:$0xff]
  %v46 = vld [vmem:[%s3] sm:$0x1]
  %v48 = vlaneseq
  %v49 = vshrl.u32 %v48, 7
  %v50 = vsub.s32 0, %v49
  %v51 = vrot.slane %v46, %v50
  %vm53 = vcmask 261120
  %v55 = vsel %vm53, %v26, 0
  %v58 = vsel %vm53, %v27, 0
  %v61 = vsel %vm53, %v28, 0
  %v64 = vsel %vm53, %v29, 0
  %v67 = vsel %vm53, %v30, 0
  %v70 = vsel %vm53, %v31, 0
  %v73 = vsel %vm53, %v32, 0
  %v76 = vsel %vm53, %v33, 0
  %v79 = vsel %vm53, %v34, 0
  %v82 = vsel %vm53, %v35, 0
  %v85 = vsel %vm53, %v36, 0
  %v88 = vsel %vm53, %v37, 0
  %v91 = vsel %vm53, %v38, 0
  %v94 = vsel %vm53, %v39, 0
  %v97 = vsel %vm53, %v40, 0
  %v100 = vsel %vm53, %v41, 0
  %102 = vmatprep.subr.mxu0 0.0
  %103 = vmatpush1.msra.mxu0 %v42
  %104 = vmatprep.subr.mxu0 0.0
  %105 = vmatpush1.msra.mxu0 %v43
  %106 = vmatprep.subr.mxu0 0.0
  %107 = vmatpush1.msra.mxu0 %v44
  %108 = vmatprep.subr.mxu0 0.0
  %109 = vmatpush1.msra.mxu0 %v45
  %110 = vmatprep.subr.mxu0 0.0
  %111 = vmatpush1.msra.mxu0 0.0
  %112 = vmatprep.subr.mxu0 0.0
  %113 = vmatpush1.msra.mxu0 0.0
  %114 = vmatprep.subr.mxu0 0.0
  %115 = vmatpush1.msra.mxu0 0.0
  %116 = vmatprep.subr.mxu0 0.0
  %117 = vmatpush1.msra.mxu0 0.0
  %118 = vmatprep.subr.mxu0 0.0
  %119 = vmatpush1.msra.mxu0 0.0
  %120 = vmatprep.subr.mxu0 0.0
  %121 = vmatpush1.msra.mxu0 0.0
  %122 = vmatprep.subr.mxu0 0.0
  %123 = vmatpush1.msra.mxu0 0.0
  %124 = vmatprep.subr.mxu0 0.0
  %125 = vmatpush1.msra.mxu0 0.0
  %126 = vmatprep.subr.mxu0 0.0
  %127 = vmatpush1.msra.mxu0 0.0
  %128 = vmatprep.subr.mxu0 0.0
  %129 = vmatpush1.msra.mxu0 0.0
  %130 = vmatprep.subr.mxu0 0.0
  %131 = vmatpush1.msra.mxu0 0.0
  %132 = vmatprep.subr.mxu0 0.0
  %133 = vmatpush1.msra.mxu0 0.0
  %134 = vmatprep.subr.mxu0 0.0
  %135 = vmatpush1.msra.mxu0 0.0
  %136 = vmatprep.subr.mxu0 0.0
  %137 = vmatpush1.msra.mxu0 0.0
  %138 = vmatprep.subr.mxu0 0.0
  %139 = vmatpush1.msra.mxu0 0.0
  %140 = vmatprep.subr.mxu0 0.0
  %141 = vmatpush1.msra.mxu0 0.0
  %142 = vmatprep.subr.mxu0 0.0
  %143 = vmatpush1.msra.mxu0 0.0
  %144 = vmatprep.subr.mxu0 0.0
  %145 = vmatpush1.msra.mxu0 0.0
  %146 = vmatprep.subr.mxu0 0.0
  %147 = vmatpush1.msra.mxu0 0.0
  %148 = vmatprep.subr.mxu0 0.0
  %149 = vmatpush1.msra.mxu0 0.0
  %150 = vmatprep.subr.mxu0 0.0
  %151 = vmatpush1.msra.mxu0 0.0
  %152 = vmatprep.subr.mxu0 0.0
  %153 = vmatpush1.msra.mxu0 0.0
  %154 = vmatprep.subr.mxu0 0.0
  %155 = vmatpush1.msra.mxu0 0.0
  %156 = vmatprep.subr.mxu0 0.0
  %157 = vmatpush1.msra.mxu0 0.0
  %158 = vmatprep.subr.mxu0 0.0
  %159 = vmatpush1.msra.mxu0 0.0
  %160 = vmatprep.subr.mxu0 0.0
  %161 = vmatpush1.msra.mxu0 0.0
  %162 = vmatprep.subr.mxu0 0.0
  %163 = vmatpush1.msra.mxu0 0.0
  %164 = vmatprep.subr.mxu0 0.0
  %165 = vmatpush1.msra.mxu0 0.0
  %166 = vmatprep.mubr.f32.mxu0 0.0
  %167 = vmatmul.mubr.f32.gmra.mrb[0].mxu0 %v55
  %v168 = vpop.f32.mrb[0].mxu0
  %v169 = vadd.f32 %v51, %v168
  %v170 = vpop.f32.mrb[0].mxu0
  %171 = vmatprep.mubr.f32.mxu0 0.0
  %172 = vmatmul.mubr.f32.gmra.mrb[0].mxu0 %v58
  %v173 = vpop.f32.mrb[0].mxu0
  %v174 = vadd.f32 %v51, %v173
  %v175 = vpop.f32.mrb[0].mxu0
  %176 = vmatprep.mubr.f32.mxu0 0.0
  %177 = vmatmul.mubr.f32.gmra.mrb[0].mxu0 %v61
  %v178 = vpop.f32.mrb[0].mxu0
  %v179 = vadd.f32 %v51, %v178
  %v180 = vpop.f32.mrb[0].mxu0
  %181 = vmatprep.mubr.f32.mxu0 0.0
  %182 = vmatmul.mubr.f32.gmra.mrb[0].mxu0 %v64
  %v183 = vpop.f32.mrb[0].mxu0
  %v184 = vadd.f32 %v51, %v183
  %v185 = vpop.f32.mrb[0].mxu0
  %186 = vmatprep.mubr.f32.mxu0 0.0
  %187 = vmatmul.mubr.f32.gmra.mrb[0].mxu0 %v67
  %v188 = vpop.f32.mrb[0].mxu0
  %v189 = vadd.f32 %v51, %v188
  %v190 = vpop.f32.mrb[0].mxu0
  %191 = vmatprep.mubr.f32.mxu0 0.0
  %192 = vmatmul.mubr.f32.gmra.mrb[0].mxu0 %v70
  %v193 = vpop.f32.mrb[0].mxu0
  %v194 = vadd.f32 %v51, %v193
  %v195 = vpop.f32.mrb[0].mxu0
  %196 = vmatprep.mubr.f32.mxu0 0.0
  %197 = vmatmul.mubr.f32.gmra.mrb[0].mxu0 %v73
  %v198 = vpop.f32.mrb[0].mxu0
  %v199 = vadd.f32 %v51, %v198
  %v200 = vpop.f32.mrb[0].mxu0
  %201 = vmatprep.mubr.f32.mxu0 0.0
  %202 = vmatmul.mubr.f32.gmra.mrb[0].mxu0 %v76
  %v203 = vpop.f32.mrb[0].mxu0
  %v204 = vadd.f32 %v51, %v203
  %v205 = vpop.f32.mrb[0].mxu0
  %206 = vmatprep.mubr.f32.mxu0 0.0
  %207 = vmatmul.mubr.f32.gmra.mrb[0].mxu0 %v79
  %v208 = vpop.f32.mrb[0].mxu0
  %v209 = vadd.f32 %v51, %v208
  %v210 = vpop.f32.mrb[0].mxu0
  %211 = vmatprep.mubr.f32.mxu0 0.0
  %212 = vmatmul.mubr.f32.gmra.mrb[0].mxu0 %v82
  %v213 = vpop.f32.mrb[0].mxu0
  %v214 = vadd.f32 %v51, %v213
  %v215 = vpop.f32.mrb[0].mxu0
  %216 = vmatprep.mubr.f32.mxu0 0.0
  %217 = vmatmul.mubr.f32.gmra.mrb[0].mxu0 %v85
  %v218 = vpop.f32.mrb[0].mxu0
  %v219 = vadd.f32 %v51, %v218
  %v220 = vpop.f32.mrb[0].mxu0
  %221 = vmatprep.mubr.f32.mxu0 0.0
  %222 = vmatmul.mubr.f32.gmra.mrb[0].mxu0 %v88
  %v223 = vpop.f32.mrb[0].mxu0
  %v224 = vadd.f32 %v51, %v223
  %v225 = vpop.f32.mrb[0].mxu0
  %226 = vmatprep.mubr.f32.mxu0 0.0
  %227 = vmatmul.mubr.f32.gmra.mrb[0].mxu0 %v91
  %v228 = vpop.f32.mrb[0].mxu0
  %v229 = vadd.f32 %v51, %v228
  %v230 = vpop.f32.mrb[0].mxu0
  %231 = vmatprep.mubr.f32.mxu0 0.0
  %232 = vmatmul.mubr.f32.gmra.mrb[0].mxu0 %v94
  %v233 = vpop.f32.mrb[0].mxu0
  %v234 = vadd.f32 %v51, %v233
  %v235 = vpop.f32.mrb[0].mxu0
  %236 = vmatprep.mubr.f32.mxu0 0.0
  %237 = vmatmul.mubr.f32.gmra.mrb[0].mxu0 %v97
  %v238 = vpop.f32.mrb[0].mxu0
  %v239 = vadd.f32 %v51, %v238
  %v240 = vpop.f32.mrb[0].mxu0
  %241 = vmatprep.mubr.f32.mxu0 0.0
  %242 = vmatmul.mubr.f32.gmra.mrb[0].mxu0 %v100
  %v243 = vpop.f32.mrb[0].mxu0
  %v244 = vadd.f32 %v51, %v243
  %v245 = vpop.f32.mrb[0].mxu0
  %246 = vdwg.mxu0
  %247 = vst [vmem:[#allocation2] sm:$0xff] %v169
  %248 = vst [vmem:[#allocation2 + $0x8] sm:$0xff] %v174
  %249 = vst [vmem:[#allocation2 + $0x10] sm:$0xff] %v179
  %250 = vst [vmem:[#allocation2 + $0x18] sm:$0xff] %v184
  %251 = vst [vmem:[#allocation2 + $0x20] sm:$0xff] %v189
  %252 = vst [vmem:[#allocation2 + $0x28] sm:$0xff] %v194
  %253 = vst [vmem:[#allocation2 + $0x30] sm:$0xff] %v199
  %254 = vst [vmem:[#allocation2 + $0x38] sm:$0xff] %v204
  %255 = vst [vmem:[#allocation2 + $0x40] sm:$0xff] %v209
  %256 = vst [vmem:[#allocation2 + $0x48] sm:$0xff] %v214
  %257 = vst [vmem:[#allocation2 + $0x50] sm:$0xff] %v219
  %258 = vst [vmem:[#allocation2 + $0x58] sm:$0xff] %v224
  %259 = vst [vmem:[#allocation2 + $0x60] sm:$0xff] %v229
  %260 = vst [vmem:[#allocation2 + $0x68] sm:$0xff] %v234
  %261 = vst [vmem:[#allocation2 + $0x70] sm:$0xff] %v239
  %262 = vst [vmem:[#allocation2 + $0x78] sm:$0xff] %v244
  %v263 = vld [vmem:[%s2] sm:$0xff]
  %v264 = vld [vmem:[%s2 + $0x8] sm:$0xff]
  %v265 = vld [vmem:[%s2 + $0x10] sm:$0xff]
  %v266 = vld [vmem:[%s2 + $0x18] sm:$0xff]
  %v267 = vld [vmem:[#allocation2] sm:$0xff]
  %v268 = vld [vmem:[#allocation2 + $0x8] sm:$0xff]
  %v270 = vsel %vm53, 0.0, 0
  %272 = vmatprep.subr.mxu0 0.0
  %273 = vmatpush1.msra.mxu0 %v263
  %274 = vmatprep.subr.mxu0 0.0
  %275 = vmatpush1.msra.mxu0 %v264
  %276 = vmatprep.subr.mxu0 0.0
  %277 = vmatpush1.msra.mxu0 %v265
  %278 = vmatprep.subr.mxu0 0.0
  %279 = vmatpush1.msra.mxu0 %v266
  %280 = vmatprep.subr.mxu0 0.0
  %281 = vmatpush1.msra.mxu0 0.0
  %282 = vmatprep.subr.mxu0 0.0
  %283 = vmatpush1.msra.mxu0 0.0
  %284 = vmatprep.subr.mxu0 0.0
  %285 = vmatpush1.msra.mxu0 0.0
  %286 = vmatprep.subr.mxu0 0.0
  %287 = vmatpush1.msra.mxu0 0.0
  %288 = vmatprep.subr.mxu0 0.0
  %289 = vmatpush1.msra.mxu0 0.0
  %290 = vmatprep.subr.mxu0 0.0
  %291 = vmatpush1.msra.mxu0 0.0
  %292 = vmatprep.subr.mxu0 0.0
  %293 = vmatpush1.msra.mxu0 0.0
  %294 = vmatprep.subr.mxu0 0.0
  %295 = vmatpush1.msra.mxu0 0.0
  %296 = vmatprep.subr.mxu0 0.0
  %297 = vmatpush1.msra.mxu0 0.0
  %298 = vmatprep.subr.mxu0 0.0
  %299 = vmatpush1.msra.mxu0 0.0
  %300 = vmatprep.subr.mxu0 0.0
  %301 = vmatpush1.msra.mxu0 0.0
  %302 = vmatprep.subr.mxu0 0.0
  %303 = vmatpush1.msra.mxu0 0.0
  %304 = vmatprep.subr.mxu0 0.0
  %305 = vmatpush1.msra.mxu0 0.0
  %306 = vmatprep.subr.mxu0 0.0
  %307 = vmatpush1.msra.mxu0 0.0
  %308 = vmatprep.subr.mxu0 0.0
  %309 = vmatpush1.msra.mxu0 0.0
  %310 = vmatprep.subr.mxu0 0.0
  %311 = vmatpush1.msra.mxu0 0.0
  %312 = vmatprep.subr.mxu0 0.0
  %313 = vmatpush1.msra.mxu0 0.0
  %314 = vmatprep.subr.mxu0 0.0
  %315 = vmatpush1.msra.mxu0 0.0
  %316 = vmatprep.subr.mxu0 0.0
  %317 = vmatpush1.msra.mxu0 0.0
  %318 = vmatprep.subr.mxu0 0.0
  %319 = vmatpush1.msra.mxu0 0.0
  %320 = vmatprep.subr.mxu0 0.0
  %321 = vmatpush1.msra.mxu0 0.0
  %322 = vmatprep.subr.mxu0 0.0
  %323 = vmatpush1.msra.mxu0 0.0
  %324 = vmatprep.subr.mxu0 0.0
  %325 = vmatpush1.msra.mxu0 0.0
  %326 = vmatprep.subr.mxu0 0.0
  %327 = vmatpush1.msra.mxu0 0.0
  %328 = vmatprep.subr.mxu0 0.0
  %329 = vmatpush1.msra.mxu0 0.0
  %330 = vmatprep.subr.mxu0 0.0
  %331 = vmatpush1.msra.mxu0 0.0
  %332 = vmatprep.subr.mxu0 0.0
  %333 = vmatpush1.msra.mxu0 0.0
  %334 = vmatprep.subr.mxu0 0.0
  %335 = vmatpush1.msra.mxu0 0.0
  %336 = vmatprep.mubr.f32.mxu0 0.0
  %337 = vmatmul.mubr.f32.gmra.mrb[0].mxu0 %v270
  %v338 = vpop.f32.mrb[0].mxu0
  %v339 = vadd.f32 0.0, %v338
  %v340 = vpop.f32.mrb[0].mxu0
  %341 = vmatprep.mubr.f32.mxu0 0.0
  %342 = vmatmul.mubr.f32.gmra.mrb[0].mxu0 %v270
  %v343 = vpop.f32.mrb[0].mxu0
  %v344 = vadd.f32 0.0, %v343
  %v345 = vpop.f32.mrb[0].mxu0
  %346 = vdwg.mxu0
  %v347 = vadd.f32 %v267, %v339
  %v348 = vadd.f32 %v268, %v344
  %v349 = vxor.u32 %v347, 2147483648
  %v350 = vxor.u32 %v348, 2147483648
  %v351 = vmul.f32 %v349, 1.442695
  %v352 = vpow.pop %v351
  %v353 = vmul.f32 %v350, 1.442695
  %v354 = vpow.pop %v353
  %v355 = vadd.f32 %v352, 1.0
  %v356 = vadd.f32 %v354, 1.0
  %v357 = vrcp.pop %v355
  %v358 = vmul.f32 1.0, %v357
  %v359 = vrcp.pop %v356
  %v360 = vmul.f32 1.0, %v359
  %v361 = vtanh.pop %v347
  %v362 = vtanh.pop %v348
  %v363 = vmul.f32 %v358, 0.0
  %v364 = vmul.f32 %v360, 0.0
  %367 = vrot.lane.b32.xlu0 %v361, 64
  %v368 = vpop.permute.xlu0 %367
  %369 = vrot.lane.b32.xlu0 %v362, 64
  %v370 = vpop.permute.xlu0 %369
  %v373 = vmul.f32 %v358, %v368
  %v374 = vmul.f32 %v360, %v370
  %377 = vrot.lane.b32.xlu0 %v373, 32
  %v378 = vpop.permute.xlu0 %377
  %379 = vrot.lane.b32.xlu0 %v374, 32
  %v380 = vpop.permute.xlu0 %379
  %v383 = vadd.f32 %v363, %v378
  %v384 = vadd.f32 %v364, %v380
  %v385 = vtanh.pop %v383
  %v386 = vtanh.pop %v384
  %389 = vrot.lane.b32.xlu0 %v385, 64
  %v390 = vpop.permute.xlu0 %389
  %391 = vrot.lane.b32.xlu0 %v386, 64
  %v392 = vpop.permute.xlu0 %391
  %v395 = vmul.f32 %v358, %v390
  %v396 = vmul.f32 %v360, %v392
  %399 = vrot.lane.b32.xlu0 %v395, 32
  %v400 = vpop.permute.xlu0 %399
  %401 = vrot.lane.b32.xlu0 %v396, 32
  %v402 = vpop.permute.xlu0 %401
  %405 = vst.msk [vmem:[#allocation3] sm:$0xff] %vm53, %v400
  %406 = vst.msk [vmem:[#allocation3 + $0x8] sm:$0xff] %vm53, %v402
  %v407 = vld [vmem:[#allocation2 + $0x10] sm:$0xff]
  %v408 = vld [vmem:[#allocation2 + $0x18] sm:$0xff]
  %v409 = vsel %vm53, %v400, 0
  %v411 = vsel %vm53, %v402, 0
  %413 = vmatprep.subr.mxu0 0.0
  %414 = vmatpush1.msra.mxu0 %v263
  %415 = vmatprep.subr.mxu0 0.0
  %416 = vmatpush1.msra.mxu0 %v264
  %417 = vmatprep.subr.mxu0 0.0
  %418 = vmatpush1.msra.mxu0 %v265
  %419 = vmatprep.subr.mxu0 0.0
  %420 = vmatpush1.msra.mxu0 %v266
  %421 = vmatprep.subr.mxu0 0.0
  %422 = vmatpush1.msra.mxu0 0.0
  %423 = vmatprep.subr.mxu0 0.0
  %424 = vmatpush1.msra.mxu0 0.0
  %425 = vmatprep.subr.mxu0 0.0
  %426 = vmatpush1.msra.mxu0 0.0
  %427 = vmatprep.subr.mxu0 0.0
  %428 = vmatpush1.msra.mxu0 0.0
  %429 = vmatprep.subr.mxu0 0.0
  %430 = vmatpush1.msra.mxu0 0.0
  %431 = vmatprep.subr.mxu0 0.0
  %432 = vmatpush1.msra.mxu0 0.0
  %433 = vmatprep.subr.mxu0 0.0
  %434 = vmatpush1.msra.mxu0 0.0
  %435 = vmatprep.subr.mxu0 0.0
  %436 = vmatpush1.msra.mxu0 0.0
  %437 = vmatprep.subr.mxu0 0.0
  %438 = vmatpush1.msra.mxu0 0.0
  %439 = vmatprep.subr.mxu0 0.0
  %440 = vmatpush1.msra.mxu0 0.0
  %441 = vmatprep.subr.mxu0 0.0
  %442 = vmatpush1.msra.mxu0 0.0
  %443 = vmatprep.subr.mxu0 0.0
  %444 = vmatpush1.msra.mxu0 0.0
  %445 = vmatprep.subr.mxu0 0.0
  %446 = vmatpush1.msra.mxu0 0.0
  %447 = vmatprep.subr.mxu0 0.0
  %448 = vmatpush1.msra.mxu0 0.0
  %449 = vmatprep.subr.mxu0 0.0
  %450 = vmatpush1.msra.mxu0 0.0
  %451 = vmatprep.subr.mxu0 0.0
  %452 = vmatpush1.msra.mxu0 0.0
  %453 = vmatprep.subr.mxu0 0.0
  %454 = vmatpush1.msra.mxu0 0.0
  %455 = vmatprep.subr.mxu0 0.0
  %456 = vmatpush1.msra.mxu0 0.0
  %457 = vmatprep.subr.mxu0 0.0
  %458 = vmatpush1.msra.mxu0 0.0
  %459 = vmatprep.subr.mxu0 0.0
  %460 = vmatpush1.msra.mxu0 0.0
  %461 = vmatprep.subr.mxu0 0.0
  %462 = vmatpush1.msra.mxu0 0.0
  %463 = vmatprep.subr.mxu0 0.0
  %464 = vmatpush1.msra.mxu0 0.0
  %465 = vmatprep.subr.mxu0 0.0
  %466 = vmatpush1.msra.mxu0 0.0
  %467 = vmatprep.subr.mxu0 0.0
  %468 = vmatpush1.msra.mxu0 0.0
  %469 = vmatprep.subr.mxu0 0.0
  %470 = vmatpush1.msra.mxu0 0.0
  %471 = vmatprep.subr.mxu0 0.0
  %472 = vmatpush1.msra.mxu0 0.0
  %473 = vmatprep.subr.mxu0 0.0
  %474 = vmatpush1.msra.mxu0 0.0
  %475 = vmatprep.subr.mxu0 0.0
  %476 = vmatpush1.msra.mxu0 0.0
  %477 = vmatprep.mubr.f32.mxu0 0.0
  %478 = vmatmul.mubr.f32.gmra.mrb[0].mxu0 %v409
  %v479 = vpop.f32.mrb[0].mxu0
  %v480 = vadd.f32 0.0, %v479
  %v481 = vpop.f32.mrb[0].mxu0
  %482 = vmatprep.mubr.f32.mxu0 0.0
  %483 = vmatmul.mubr.f32.gmra.mrb[0].mxu0 %v411
  %v484 = vpop.f32.mrb[0].mxu0
  %v485 = vadd.f32 0.0, %v484
  %v486 = vpop.f32.mrb[0].mxu0
  %487 = vdwg.mxu0
  %v488 = vadd.f32 %v407, %v480
  %v489 = vadd.f32 %v408, %v485
  %v490 = vxor.u32 %v488, 2147483648
  %v491 = vxor.u32 %v489, 2147483648
  %v492 = vmul.f32 %v490, 1.442695
  %v493 = vpow.pop %v492
  %v494 = vmul.f32 %v491, 1.442695
  %v495 = vpow.pop %v494
  %v496 = vadd.f32 %v493, 1.0
  %v497 = vadd.f32 %v495, 1.0
  %v498 = vrcp.pop %v496
  %v499 = vmul.f32 1.0, %v498
  %v500 = vrcp.pop %v497
  %v501 = vmul.f32 1.0, %v500
  %v502 = vtanh.pop %v488
  %v503 = vtanh.pop %v489
  %v504 = vmul.f32 %v499, %v383
  %v505 = vmul.f32 %v501, %v384
  %508 = vrot.lane.b32.xlu0 %v502, 64
  %v509 = vpop.permute.xlu0 %508
  %510 = vrot.lane.b32.xlu0 %v503, 64
  %v511 = vpop.permute.xlu0 %510
  %v514 = vmul.f32 %v499, %v509
  %v515 = vmul.f32 %v501, %v511
  %518 = vrot.lane.b32.xlu0 %v514, 32
  %v519 = vpop.permute.xlu0 %518
  %520 = vrot.lane.b32.xlu0 %v515, 32
  %v521 = vpop.permute.xlu0 %520
  %v524 = vadd.f32 %v504, %v519
  %v525 = vadd.f32 %v505, %v521
  %v526 = vtanh.pop %v524
  %v527 = vtanh.pop %v525
  %530 = vrot.lane.b32.xlu0 %v526, 64
  %v531 = vpop.permute.xlu0 %530
  %532 = vrot.lane.b32.xlu0 %v527, 64
  %v533 = vpop.permute.xlu0 %532
  %v536 = vmul.f32 %v499, %v531
  %v537 = vmul.f32 %v501, %v533
  %540 = vrot.lane.b32.xlu0 %v536, 32
  %v541 = vpop.permute.xlu0 %540
  %542 = vrot.lane.b32.xlu0 %v537, 32
  %v543 = vpop.permute.xlu0 %542
  %546 = vst.msk [vmem:[#allocation3 + $0x10] sm:$0xff] %vm53, %v541
  %547 = vst.msk [vmem:[#allocation3 + $0x18] sm:$0xff] %vm53, %v543
  %v548 = vld [vmem:[#allocation2 + $0x20] sm:$0xff]
  %v549 = vld [vmem:[#allocation2 + $0x28] sm:$0xff]
  %v550 = vsel %vm53, %v541, 0
  %v552 = vsel %vm53, %v543, 0
  %554 = vmatprep.subr.mxu0 0.0
  %555 = vmatpush1.msra.mxu0 %v263
  %556 = vmatprep.subr.mxu0 0.0
  %557 = vmatpush1.msra.mxu0 %v264
  %558 = vmatprep.subr.mxu0 0.0
  %559 = vmatpush1.msra.mxu0 %v265
  %560 = vmatprep.subr.mxu0 0.0
  %561 = vmatpush1.msra.mxu0 %v266
  %562 = vmatprep.subr.mxu0 0.0
  %563 = vmatpush1.msra.mxu0 0.0
  %564 = vmatprep.subr.mxu0 0.0
  %565 = vmatpush1.msra.mxu0 0.0
  %566 = vmatprep.subr.mxu0 0.0
  %567 = vmatpush1.msra.mxu0 0.0
  %568 = vmatprep.subr.mxu0 0.0
  %569 = vmatpush1.msra.mxu0 0.0
  %570 = vmatprep.subr.mxu0 0.0
  %571 = vmatpush1.msra.mxu0 0.0
  %572 = vmatprep.subr.mxu0 0.0
  %573 = vmatpush1.msra.mxu0 0.0
  %574 = vmatprep.subr.mxu0 0.0
  %575 = vmatpush1.msra.mxu0 0.0
  %576 = vmatprep.subr.mxu0 0.0
  %577 = vmatpush1.msra.mxu0 0.0
  %578 = vmatprep.subr.mxu0 0.0
  %579 = vmatpush1.msra.mxu0 0.0
  %580 = vmatprep.subr.mxu0 0.0
  %581 = vmatpush1.msra.mxu0 0.0
  %582 = vmatprep.subr.mxu0 0.0
  %583 = vmatpush1.msra.mxu0 0.0
  %584 = vmatprep.subr.mxu0 0.0
  %585 = vmatpush1.msra.mxu0 0.0
  %586 = vmatprep.subr.mxu0 0.0
  %587 = vmatpush1.msra.mxu0 0.0
  %588 = vmatprep.subr.mxu0 0.0
  %589 = vmatpush1.msra.mxu0 0.0
  %590 = vmatprep.subr.mxu0 0.0
  %591 = vmatpush1.msra.mxu0 0.0
  %592 = vmatprep.subr.mxu0 0.0
  %593 = vmatpush1.msra.mxu0 0.0
  %594 = vmatprep.subr.mxu0 0.0
  %595 = vmatpush1.msra.mxu0 0.0
  %596 = vmatprep.subr.mxu0 0.0
  %597 = vmatpush1.msra.mxu0 0.0
  %598 = vmatprep.subr.mxu0 0.0
  %599 = vmatpush1.msra.mxu0 0.0
  %600 = vmatprep.subr.mxu0 0.0
  %601 = vmatpush1.msra.mxu0 0.0
  %602 = vmatprep.subr.mxu0 0.0
  %603 = vmatpush1.msra.mxu0 0.0
  %604 = vmatprep.subr.mxu0 0.0
  %605 = vmatpush1.msra.mxu0 0.0
  %606 = vmatprep.subr.mxu0 0.0
  %607 = vmatpush1.msra.mxu0 0.0
  %608 = vmatprep.subr.mxu0 0.0
  %609 = vmatpush1.msra.mxu0 0.0
  %610 = vmatprep.subr.mxu0 0.0
  %611 = vmatpush1.msra.mxu0 0.0
  %612 = vmatprep.subr.mxu0 0.0
  %613 = vmatpush1.msra.mxu0 0.0
  %614 = vmatprep.subr.mxu0 0.0
  %615 = vmatpush1.msra.mxu0 0.0
  %616 = vmatprep.subr.mxu0 0.0
  %617 = vmatpush1.msra.mxu0 0.0
  %618 = vmatprep.mubr.f32.mxu0 0.0
  %619 = vmatmul.mubr.f32.gmra.mrb[0].mxu0 %v550
  %v620 = vpop.f32.mrb[0].mxu0
  %v621 = vadd.f32 0.0, %v620
  %v622 = vpop.f32.mrb[0].mxu0
  %623 = vmatprep.mubr.f32.mxu0 0.0
  %624 = vmatmul.mubr.f32.gmra.mrb[0].mxu0 %v552
  %v625 = vpop.f32.mrb[0].mxu0
  %v626 = vadd.f32 0.0, %v625
  %v627 = vpop.f32.mrb[0].mxu0
  %628 = vdwg.mxu0
  %v629 = vadd.f32 %v548, %v621
  %v630 = vadd.f32 %v549, %v626
  %v631 = vxor.u32 %v629, 2147483648
  %v632 = vxor.u32 %v630, 2147483648
  %v633 = vmul.f32 %v631, 1.442695
  %v634 = vpow.pop %v633
  %v635 = vmul.f32 %v632, 1.442695
  %v636 = vpow.pop %v635
  %v637 = vadd.f32 %v634, 1.0
  %v638 = vadd.f32 %v636, 1.0
  %v639 = vrcp.pop %v637
  %v640 = vmul.f32 1.0, %v639
  %v641 = vrcp.pop %v638
  %v642 = vmul.f32 1.0, %v641
  %v643 = vtanh.pop %v629
  %v644 = vtanh.pop %v630
  %v645 = vmul.f32 %v640, %v524
  %v646 = vmul.f32 %v642, %v525
  %649 = vrot.lane.b32.xlu0 %v643, 64
  %v650 = vpop.permute.xlu0 %649
  %651 = vrot.lane.b32.xlu0 %v644, 64
  %v652 = vpop.permute.xlu0 %651
  %v655 = vmul.f32 %v640, %v650
  %v656 = vmul.f32 %v642, %v652
  %659 = vrot.lane.b32.xlu0 %v655, 32
  %v660 = vpop.permute.xlu0 %659
  %661 = vrot.lane.b32.xlu0 %v656, 32
  %v662 = vpop.permute.xlu0 %661
  %v665 = vadd.f32 %v645, %v660
  %v666 = vadd.f32 %v646, %v662
  %v667 = vtanh.pop %v665
  %v668 = vtanh.pop %v666
  %671 = vrot.lane.b32.xlu0 %v667, 64
  %v672 = vpop.permute.xlu0 %671
  %673 = vrot.lane.b32.xlu0 %v668, 64
  %v674 = vpop.permute.xlu0 %673
  %v677 = vmul.f32 %v640, %v672
  %v678 = vmul.f32 %v642, %v674
  %681 = vrot.lane.b32.xlu0 %v677, 32
  %v682 = vpop.permute.xlu0 %681
  %683 = vrot.lane.b32.xlu0 %v678, 32
  %v684 = vpop.permute.xlu0 %683
  %687 = vst.msk [vmem:[#allocation3 + $0x20] sm:$0xff] %vm53, %v682
  %688 = vst.msk [vmem:[#allocation3 + $0x28] sm:$0xff] %vm53, %v684
  %v689 = vld [vmem:[#allocation2 + $0x30] sm:$0xff]
  %v690 = vld [vmem:[#allocation2 + $0x38] sm:$0xff]
  %v691 = vsel %vm53, %v682, 0
  %v693 = vsel %vm53, %v684, 0
  %695 = vmatprep.subr.mxu0 0.0
  %696 = vmatpush1.msra.mxu0 %v263
  %697 = vmatprep.subr.mxu0 0.0
  %698 = vmatpush1.msra.mxu0 %v264
  %699 = vmatprep.subr.mxu0 0.0
  %700 = vmatpush1.msra.mxu0 %v265
  %701 = vmatprep.subr.mxu0 0.0
  %702 = vmatpush1.msra.mxu0 %v266
  %703 = vmatprep.subr.mxu0 0.0
  %704 = vmatpush1.msra.mxu0 0.0
  %705 = vmatprep.subr.mxu0 0.0
  %706 = vmatpush1.msra.mxu0 0.0
  %707 = vmatprep.subr.mxu0 0.0
  %708 = vmatpush1.msra.mxu0 0.0
  %709 = vmatprep.subr.mxu0 0.0
  %710 = vmatpush1.msra.mxu0 0.0
  %711 = vmatprep.subr.mxu0 0.0
  %712 = vmatpush1.msra.mxu0 0.0
  %713 = vmatprep.subr.mxu0 0.0
  %714 = vmatpush1.msra.mxu0 0.0
  %715 = vmatprep.subr.mxu0 0.0
  %716 = vmatpush1.msra.mxu0 0.0
  %717 = vmatprep.subr.mxu0 0.0
  %718 = vmatpush1.msra.mxu0 0.0
  %719 = vmatprep.subr.mxu0 0.0
  %720 = vmatpush1.msra.mxu0 0.0
  %721 = vmatprep.subr.mxu0 0.0
  %722 = vmatpush1.msra.mxu0 0.0
  %723 = vmatprep.subr.mxu0 0.0
  %724 = vmatpush1.msra.mxu0 0.0
  %725 = vmatprep.subr.mxu0 0.0
  %726 = vmatpush1.msra.mxu0 0.0
  %727 = vmatprep.subr.mxu0 0.0
  %728 = vmatpush1.msra.mxu0 0.0
  %729 = vmatprep.subr.mxu0 0.0
  %730 = vmatpush1.msra.mxu0 0.0
  %731 = vmatprep.subr.mxu0 0.0
  %732 = vmatpush1.msra.mxu0 0.0
  %733 = vmatprep.subr.mxu0 0.0
  %734 = vmatpush1.msra.mxu0 0.0
  %735 = vmatprep.subr.mxu0 0.0
  %736 = vmatpush1.msra.mxu0 0.0
  %737 = vmatprep.subr.mxu0 0.0
  %738 = vmatpush1.msra.mxu0 0.0
  %739 = vmatprep.subr.mxu0 0.0
  %740 = vmatpush1.msra.mxu0 0.0
  %741 = vmatprep.subr.mxu0 0.0
  %742 = vmatpush1.msra.mxu0 0.0
  %743 = vmatprep.subr.mxu0 0.0
  %744 = vmatpush1.msra.mxu0 0.0
  %745 = vmatprep.subr.mxu0 0.0
  %746 = vmatpush1.msra.mxu0 0.0
  %747 = vmatprep.subr.mxu0 0.0
  %748 = vmatpush1.msra.mxu0 0.0
  %749 = vmatprep.subr.mxu0 0.0
  %750 = vmatpush1.msra.mxu0 0.0
  %751 = vmatprep.subr.mxu0 0.0
  %752 = vmatpush1.msra.mxu0 0.0
  %753 = vmatprep.subr.mxu0 0.0
  %754 = vmatpush1.msra.mxu0 0.0
  %755 = vmatprep.subr.mxu0 0.0
  %756 = vmatpush1.msra.mxu0 0.0
  %757 = vmatprep.subr.mxu0 0.0
  %758 = vmatpush1.msra.mxu0 0.0
  %759 = vmatprep.mubr.f32.mxu0 0.0
  %760 = vmatmul.mubr.f32.gmra.mrb[0].mxu0 %v691
  %v761 = vpop.f32.mrb[0].mxu0
  %v762 = vadd.f32 0.0, %v761
  %v763 = vpop.f32.mrb[0].mxu0
  %764 = vmatprep.mubr.f32.mxu0 0.0
  %765 = vmatmul.mubr.f32.gmra.mrb[0].mxu0 %v693
  %v766 = vpop.f32.mrb[0].mxu0
  %v767 = vadd.f32 0.0, %v766
  %v768 = vpop.f32.mrb[0].mxu0
  %769 = vdwg.mxu0
  %v770 = vadd.f32 %v689, %v762
  %v771 = vadd.f32 %v690, %v767
  %v772 = vxor.u32 %v770, 2147483648
  %v773 = vxor.u32 %v771, 2147483648
  %v774 = vmul.f32 %v772, 1.442695
  %v775 = vpow.pop %v774
  %v776 = vmul.f32 %v773, 1.442695
  %v777 = vpow.pop %v776
  %v778 = vadd.f32 %v775, 1.0
  %v779 = vadd.f32 %v777, 1.0
  %v780 = vrcp.pop %v778
  %v781 = vmul.f32 1.0, %v780
  %v782 = vrcp.pop %v779
  %v783 = vmul.f32 1.0, %v782
  %v784 = vtanh.pop %v770
  %v785 = vtanh.pop %v771
  %v786 = vmul.f32 %v781, %v665
  %v787 = vmul.f32 %v783, %v666
  %790 = vrot.lane.b32.xlu0 %v784, 64
  %v791 = vpop.permute.xlu0 %790
  %792 = vrot.lane.b32.xlu0 %v785, 64
  %v793 = vpop.permute.xlu0 %792
  %v796 = vmul.f32 %v781, %v791
  %v797 = vmul.f32 %v783, %v793
  %800 = vrot.lane.b32.xlu0 %v796, 32
  %v801 = vpop.permute.xlu0 %800
  %802 = vrot.lane.b32.xlu0 %v797, 32
  %v803 = vpop.permute.xlu0 %802
  %v806 = vadd.f32 %v786, %v801
  %v807 = vadd.f32 %v787, %v803
  %v808 = vtanh.pop %v806
  %v809 = vtanh.pop %v807
  %812 = vrot.lane.b32.xlu0 %v808, 64
  %v813 = vpop.permute.xlu0 %812
  %814 = vrot.lane.b32.xlu0 %v809, 64
  %v815 = vpop.permute.xlu0 %814
  %v818 = vmul.f32 %v781, %v813
  %v819 = vmul.f32 %v783, %v815
  %822 = vrot.lane.b32.xlu0 %v818, 32
  %v823 = vpop.permute.xlu0 %822
  %824 = vrot.lane.b32.xlu0 %v819, 32
  %v825 = vpop.permute.xlu0 %824
  %828 = vst.msk [vmem:[#allocation3 + $0x30] sm:$0xff] %vm53, %v823
  %829 = vst.msk [vmem:[#allocation3 + $0x38] sm:$0xff] %vm53, %v825
  %v830 = vld [vmem:[#allocation2 + $0x40] sm:$0xff]
  %v831 = vld [vmem:[#allocation2 + $0x48] sm:$0xff]
  %v832 = vsel %vm53, %v823, 0
  %v834 = vsel %vm53, %v825, 0
  %836 = vmatprep.subr.mxu0 0.0
  %837 = vmatpush1.msra.mxu0 %v263
  %838 = vmatprep.subr.mxu0 0.0
  %839 = vmatpush1.msra.mxu0 %v264
  %840 = vmatprep.subr.mxu0 0.0
  %841 = vmatpush1.msra.mxu0 %v265
  %842 = vmatprep.subr.mxu0 0.0
  %843 = vmatpush1.msra.mxu0 %v266
  %844 = vmatprep.subr.mxu0 0.0
  %845 = vmatpush1.msra.mxu0 0.0
  %846 = vmatprep.subr.mxu0 0.0
  %847 = vmatpush1.msra.mxu0 0.0
  %848 = vmatprep.subr.mxu0 0.0
  %849 = vmatpush1.msra.mxu0 0.0
  %850 = vmatprep.subr.mxu0 0.0
  %851 = vmatpush1.msra.mxu0 0.0
  %852 = vmatprep.subr.mxu0 0.0
  %853 = vmatpush1.msra.mxu0 0.0
  %854 = vmatprep.subr.mxu0 0.0
  %855 = vmatpush1.msra.mxu0 0.0
  %856 = vmatprep.subr.mxu0 0.0
  %857 = vmatpush1.msra.mxu0 0.0
  %858 = vmatprep.subr.mxu0 0.0
  %859 = vmatpush1.msra.mxu0 0.0
  %860 = vmatprep.subr.mxu0 0.0
  %861 = vmatpush1.msra.mxu0 0.0
  %862 = vmatprep.subr.mxu0 0.0
  %863 = vmatpush1.msra.mxu0 0.0
  %864 = vmatprep.subr.mxu0 0.0
  %865 = vmatpush1.msra.mxu0 0.0
  %866 = vmatprep.subr.mxu0 0.0
  %867 = vmatpush1.msra.mxu0 0.0
  %868 = vmatprep.subr.mxu0 0.0
  %869 = vmatpush1.msra.mxu0 0.0
  %870 = vmatprep.subr.mxu0 0.0
  %871 = vmatpush1.msra.mxu0 0.0
  %872 = vmatprep.subr.mxu0 0.0
  %873 = vmatpush1.msra.mxu0 0.0
  %874 = vmatprep.subr.mxu0 0.0
  %875 = vmatpush1.msra.mxu0 0.0
  %876 = vmatprep.subr.mxu0 0.0
  %877 = vmatpush1.msra.mxu0 0.0
  %878 = vmatprep.subr.mxu0 0.0
  %879 = vmatpush1.msra.mxu0 0.0
  %880 = vmatprep.subr.mxu0 0.0
  %881 = vmatpush1.msra.mxu0 0.0
  %882 = vmatprep.subr.mxu0 0.0
  %883 = vmatpush1.msra.mxu0 0.0
  %884 = vmatprep.subr.mxu0 0.0
  %885 = vmatpush1.msra.mxu0 0.0
  %886 = vmatprep.subr.mxu0 0.0
  %887 = vmatpush1.msra.mxu0 0.0
  %888 = vmatprep.subr.mxu0 0.0
  %889 = vmatpush1.msra.mxu0 0.0
  %890 = vmatprep.subr.mxu0 0.0
  %891 = vmatpush1.msra.mxu0 0.0
  %892 = vmatprep.subr.mxu0 0.0
  %893 = vmatpush1.msra.mxu0 0.0
  %894 = vmatprep.subr.mxu0 0.0
  %895 = vmatpush1.msra.mxu0 0.0
  %896 = vmatprep.subr.mxu0 0.0
  %897 = vmatpush1.msra.mxu0 0.0
  %898 = vmatprep.subr.mxu0 0.0
  %899 = vmatpush1.msra.mxu0 0.0
  %900 = vmatprep.mubr.f32.mxu0 0.0
  %901 = vmatmul.mubr.f32.gmra.mrb[0].mxu0 %v832
  %v902 = vpop.f32.mrb[0].mxu0
  %v903 = vadd.f32 0.0, %v902
  %v904 = vpop.f32.mrb[0].mxu0
  %905 = vmatprep.mubr.f32.mxu0 0.0
  %906 = vmatmul.mubr.f32.gmra.mrb[0].mxu0 %v834
  %v907 = vpop.f32.mrb[0].mxu0
  %v908 = vadd.f32 0.0, %v907
  %v909 = vpop.f32.mrb[0].mxu0
  %910 = vdwg.mxu0
  %v911 = vadd.f32 %v830, %v903
  %v912 = vadd.f32 %v831, %v908
  %v913 = vxor.u32 %v911, 2147483648
  %v914 = vxor.u32 %v912, 2147483648
  %v915 = vmul.f32 %v913, 1.442695
  %v916 = vpow.pop %v915
  %v917 = vmul.f32 %v914, 1.442695
  %v918 = vpow.pop %v917
  %v919 = vadd.f32 %v916, 1.0
  %v920 = vadd.f32 %v918, 1.0
  %v921 = vrcp.pop %v919
  %v922 = vmul.f32 1.0, %v921
  %v923 = vrcp.pop %v920
  %v924 = vmul.f32 1.0, %v923
  %v925 = vtanh.pop %v911
  %v926 = vtanh.pop %v912
  %v927 = vmul.f32 %v922, %v806
  %v928 = vmul.f32 %v924, %v807
  %931 = vrot.lane.b32.xlu0 %v925, 64
  %v932 = vpop.permute.xlu0 %931
  %933 = vrot.lane.b32.xlu0 %v926, 64
  %v934 = vpop.permute.xlu0 %933
  %v937 = vmul.f32 %v922, %v932
  %v938 = vmul.f32 %v924, %v934
  %941 = vrot.lane.b32.xlu0 %v937, 32
  %v942 = vpop.permute.xlu0 %941
  %943 = vrot.lane.b32.xlu0 %v938, 32
  %v944 = vpop.permute.xlu0 %943
  %v947 = vadd.f32 %v927, %v942
  %v948 = vadd.f32 %v928, %v944
  %v949 = vtanh.pop %v947
  %v950 = vtanh.pop %v948
  %953 = vrot.lane.b32.xlu0 %v949, 64
  %v954 = vpop.permute.xlu0 %953
  %955 = vrot.lane.b32.xlu0 %v950, 64
  %v956 = vpop.permute.xlu0 %955
  %v959 = vmul.f32 %v922, %v954
  %v960 = vmul.f32 %v924, %v956
  %963 = vrot.lane.b32.xlu0 %v959, 32
  %v964 = vpop.permute.xlu0 %963
  %965 = vrot.lane.b32.xlu0 %v960, 32
  %v966 = vpop.permute.xlu0 %965
  %969 = vst.msk [vmem:[#allocation3 + $0x40] sm:$0xff] %vm53, %v964
  %970 = vst.msk [vmem:[#allocation3 + $0x48] sm:$0xff] %vm53, %v966
  %v971 = vld [vmem:[#allocation2 + $0x50] sm:$0xff]
  %v972 = vld [vmem:[#allocation2 + $0x58] sm:$0xff]
  %v973 = vsel %vm53, %v964, 0
  %v975 = vsel %vm53, %v966, 0
  %977 = vmatprep.subr.mxu0 0.0
  %978 = vmatpush1.msra.mxu0 %v263
  %979 = vmatprep.subr.mxu0 0.0
  %980 = vmatpush1.msra.mxu0 %v264
  %981 = vmatprep.subr.mxu0 0.0
  %982 = vmatpush1.msra.mxu0 %v265
  %983 = vmatprep.subr.mxu0 0.0
  %984 = vmatpush1.msra.mxu0 %v266
  %985 = vmatprep.subr.mxu0 0.0
  %986 = vmatpush1.msra.mxu0 0.0
  %987 = vmatprep.subr.mxu0 0.0
  %988 = vmatpush1.msra.mxu0 0.0
  %989 = vmatprep.subr.mxu0 0.0
  %990 = vmatpush1.msra.mxu0 0.0
  %991 = vmatprep.subr.mxu0 0.0
  %992 = vmatpush1.msra.mxu0 0.0
  %993 = vmatprep.subr.mxu0 0.0
  %994 = vmatpush1.msra.mxu0 0.0
  %995 = vmatprep.subr.mxu0 0.0
  %996 = vmatpush1.msra.mxu0 0.0
  %997 = vmatprep.subr.mxu0 0.0
  %998 = vmatpush1.msra.mxu0 0.0
  %999 = vmatprep.subr.mxu0 0.0
  %1000 = vmatpush1.msra.mxu0 0.0
  %1001 = vmatprep.subr.mxu0 0.0
  %1002 = vmatpush1.msra.mxu0 0.0
  %1003 = vmatprep.subr.mxu0 0.0
  %1004 = vmatpush1.msra.mxu0 0.0
  %1005 = vmatprep.subr.mxu0 0.0
  %1006 = vmatpush1.msra.mxu0 0.0
  %1007 = vmatprep.subr.mxu0 0.0
  %1008 = vmatpush1.msra.mxu0 0.0
  %1009 = vmatprep.subr.mxu0 0.0
  %1010 = vmatpush1.msra.mxu0 0.0
  %1011 = vmatprep.subr.mxu0 0.0
  %1012 = vmatpush1.msra.mxu0 0.0
  %1013 = vmatprep.subr.mxu0 0.0
  %1014 = vmatpush1.msra.mxu0 0.0
  %1015 = vmatprep.subr.mxu0 0.0
  %1016 = vmatpush1.msra.mxu0 0.0
  %1017 = vmatprep.subr.mxu0 0.0
  %1018 = vmatpush1.msra.mxu0 0.0
  %1019 = vmatprep.subr.mxu0 0.0
  %1020 = vmatpush1.msra.mxu0 0.0
  %1021 = vmatprep.subr.mxu0 0.0
  %1022 = vmatpush1.msra.mxu0 0.0
  %1023 = vmatprep.subr.mxu0 0.0
  %1024 = vmatpush1.msra.mxu0 0.0
  %1025 = vmatprep.subr.mxu0 0.0
  %1026 = vmatpush1.msra.mxu0 0.0
  %1027 = vmatprep.subr.mxu0 0.0
  %1028 = vmatpush1.msra.mxu0 0.0
  %1029 = vmatprep.subr.mxu0 0.0
  %1030 = vmatpush1.msra.mxu0 0.0
  %1031 = vmatprep.subr.mxu0 0.0
  %1032 = vmatpush1.msra.mxu0 0.0
  %1033 = vmatprep.subr.mxu0 0.0
  %1034 = vmatpush1.msra.mxu0 0.0
  %1035 = vmatprep.subr.mxu0 0.0
  %1036 = vmatpush1.msra.mxu0 0.0
  %1037 = vmatprep.subr.mxu0 0.0
  %1038 = vmatpush1.msra.mxu0 0.0
  %1039 = vmatprep.subr.mxu0 0.0
  %1040 = vmatpush1.msra.mxu0 0.0
  %1041 = vmatprep.mubr.f32.mxu0 0.0
  %1042 = vmatmul.mubr.f32.gmra.mrb[0].mxu0 %v973
  %v1043 = vpop.f32.mrb[0].mxu0
  %v1044 = vadd.f32 0.0, %v1043
  %v1045 = vpop.f32.mrb[0].mxu0
  %1046 = vmatprep.mubr.f32.mxu0 0.0
  %1047 = vmatmul.mubr.f32.gmra.mrb[0].mxu0 %v975
  %v1048 = vpop.f32.mrb[0].mxu0
  %v1049 = vadd.f32 0.0, %v1048
  %v1050 = vpop.f32.mrb[0].mxu0
  %1051 = vdwg.mxu0
  %v1052 = vadd.f32 %v971, %v1044
  %v1053 = vadd.f32 %v972, %v1049
  %v1054 = vxor.u32 %v1052, 2147483648
  %v1055 = vxor.u32 %v1053, 2147483648
  %v1056 = vmul.f32 %v1054, 1.442695
  %v1057 = vpow.pop %v1056
  %v1058 = vmul.f32 %v1055, 1.442695
  %v1059 = vpow.pop %v1058
  %v1060 = vadd.f32 %v1057, 1.0
  %v1061 = vadd.f32 %v1059, 1.0
  %v1062 = vrcp.pop %v1060
  %v1063 = vmul.f32 1.0, %v1062
  %v1064 = vrcp.pop %v1061
  %v1065 = vmul.f32 1.0, %v1064
  %v1066 = vtanh.pop %v1052
  %v1067 = vtanh.pop %v1053
  %v1068 = vmul.f32 %v1063, %v947
  %v1069 = vmul.f32 %v1065, %v948
  %1072 = vrot.lane.b32.xlu0 %v1066, 64
  %v1073 = vpop.permute.xlu0 %1072
  %1074 = vrot.lane.b32.xlu0 %v1067, 64
  %v1075 = vpop.permute.xlu0 %1074
  %v1078 = vmul.f32 %v1063, %v1073
  %v1079 = vmul.f32 %v1065, %v1075
  %1082 = vrot.lane.b32.xlu0 %v1078, 32
  %v1083 = vpop.permute.xlu0 %1082
  %1084 = vrot.lane.b32.xlu0 %v1079, 32
  %v1085 = vpop.permute.xlu0 %1084
  %v1088 = vadd.f32 %v1068, %v1083
  %v1089 = vadd.f32 %v1069, %v1085
  %v1090 = vtanh.pop %v1088
  %v1091 = vtanh.pop %v1089
  %1094 = vrot.lane.b32.xlu0 %v1090, 64
  %v1095 = vpop.permute.xlu0 %1094
  %1096 = vrot.lane.b32.xlu0 %v1091, 64
  %v1097 = vpop.permute.xlu0 %1096
  %v1100 = vmul.f32 %v1063, %v1095
  %v1101 = vmul.f32 %v1065, %v1097
  %1104 = vrot.lane.b32.xlu0 %v1100, 32
  %v1105 = vpop.permute.xlu0 %1104
  %1106 = vrot.lane.b32.xlu0 %v1101, 32
  %v1107 = vpop.permute.xlu0 %1106
  %1110 = vst.msk [vmem:[#allocation3 + $0x50] sm:$0xff] %vm53, %v1105
  %1111 = vst.msk [vmem:[#allocation3 + $0x58] sm:$0xff] %vm53, %v1107
  %v1112 = vld [vmem:[#allocation2 + $0x60] sm:$0xff]
  %v1113 = vld [vmem:[#allocation2 + $0x68] sm:$0xff]
  %v1114 = vsel %vm53, %v1105, 0
  %v1116 = vsel %vm53, %v1107, 0
  %1118 = vmatprep.subr.mxu0 0.0
  %1119 = vmatpush1.msra.mxu0 %v263
  %1120 = vmatprep.subr.mxu0 0.0
  %1121 = vmatpush1.msra.mxu0 %v264
  %1122 = vmatprep.subr.mxu0 0.0
  %1123 = vmatpush1.msra.mxu0 %v265
  %1124 = vmatprep.subr.mxu0 0.0
  %1125 = vmatpush1.msra.mxu0 %v266
  %1126 = vmatprep.subr.mxu0 0.0
  %1127 = vmatpush1.msra.mxu0 0.0
  %1128 = vmatprep.subr.mxu0 0.0
  %1129 = vmatpush1.msra.mxu0 0.0
  %1130 = vmatprep.subr.mxu0 0.0
  %1131 = vmatpush1.msra.mxu0 0.0
  %1132 = vmatprep.subr.mxu0 0.0
  %1133 = vmatpush1.msra.mxu0 0.0
  %1134 = vmatprep.subr.mxu0 0.0
  %1135 = vmatpush1.msra.mxu0 0.0
  %1136 = vmatprep.subr.mxu0 0.0
  %1137 = vmatpush1.msra.mxu0 0.0
  %1138 = vmatprep.subr.mxu0 0.0
  %1139 = vmatpush1.msra.mxu0 0.0
  %1140 = vmatprep.subr.mxu0 0.0
  %1141 = vmatpush1.msra.mxu0 0.0
  %1142 = vmatprep.subr.mxu0 0.0
  %1143 = vmatpush1.msra.mxu0 0.0
  %1144 = vmatprep.subr.mxu0 0.0
  %1145 = vmatpush1.msra.mxu0 0.0
  %1146 = vmatprep.subr.mxu0 0.0
  %1147 = vmatpush1.msra.mxu0 0.0
  %1148 = vmatprep.subr.mxu0 0.0
  %1149 = vmatpush1.msra.mxu0 0.0
  %1150 = vmatprep.subr.mxu0 0.0
  %1151 = vmatpush1.msra.mxu0 0.0
  %1152 = vmatprep.subr.mxu0 0.0
  %1153 = vmatpush1.msra.mxu0 0.0
  %1154 = vmatprep.subr.mxu0 0.0
  %1155 = vmatpush1.msra.mxu0 0.0
  %1156 = vmatprep.subr.mxu0 0.0
  %1157 = vmatpush1.msra.mxu0 0.0
  %1158 = vmatprep.subr.mxu0 0.0
  %1159 = vmatpush1.msra.mxu0 0.0
  %1160 = vmatprep.subr.mxu0 0.0
  %1161 = vmatpush1.msra.mxu0 0.0
  %1162 = vmatprep.subr.mxu0 0.0
  %1163 = vmatpush1.msra.mxu0 0.0
  %1164 = vmatprep.subr.mxu0 0.0
  %1165 = vmatpush1.msra.mxu0 0.0
  %1166 = vmatprep.subr.mxu0 0.0
  %1167 = vmatpush1.msra.mxu0 0.0
  %1168 = vmatprep.subr.mxu0 0.0
  %1169 = vmatpush1.msra.mxu0 0.0
  %1170 = vmatprep.subr.mxu0 0.0
  %1171 = vmatpush1.msra.mxu0 0.0
  %1172 = vmatprep.subr.mxu0 0.0
  %1173 = vmatpush1.msra.mxu0 0.0
  %1174 = vmatprep.subr.mxu0 0.0
  %1175 = vmatpush1.msra.mxu0 0.0
  %1176 = vmatprep.subr.mxu0 0.0
  %1177 = vmatpush1.msra.mxu0 0.0
  %1178 = vmatprep.subr.mxu0 0.0
  %1179 = vmatpush1.msra.mxu0 0.0
  %1180 = vmatprep.subr.mxu0 0.0
  %1181 = vmatpush1.msra.mxu0 0.0
  %1182 = vmatprep.mubr.f32.mxu0 0.0
  %1183 = vmatmul.mubr.f32.gmra.mrb[0].mxu0 %v1114
  %v1184 = vpop.f32.mrb[0].mxu0
  %v1185 = vadd.f32 0.0, %v1184
  %v1186 = vpop.f32.mrb[0].mxu0
  %1187 = vmatprep.mubr.f32.mxu0 0.0
  %1188 = vmatmul.mubr.f32.gmra.mrb[0].mxu0 %v1116
  %v1189 = vpop.f32.mrb[0].mxu0
  %v1190 = vadd.f32 0.0, %v1189
  %v1191 = vpop.f32.mrb[0].mxu0
  %1192 = vdwg.mxu0
  %v1193 = vadd.f32 %v1112, %v1185
  %v1194 = vadd.f32 %v1113, %v1190
  %v1195 = vxor.u32 %v1193, 2147483648
  %v1196 = vxor.u32 %v1194, 2147483648
  %v1197 = vmul.f32 %v1195, 1.442695
  %v1198 = vpow.pop %v1197
  %v1199 = vmul.f32 %v1196, 1.442695
  %v1200 = vpow.pop %v1199
  %v1201 = vadd.f32 %v1198, 1.0
  %v1202 = vadd.f32 %v1200, 1.0
  %v1203 = vrcp.pop %v1201
  %v1204 = vmul.f32 1.0, %v1203
  %v1205 = vrcp.pop %v1202
  %v1206 = vmul.f32 1.0, %v1205
  %v1207 = vtanh.pop %v1193
  %v1208 = vtanh.pop %v1194
  %v1209 = vmul.f32 %v1204, %v1088
  %v1210 = vmul.f32 %v1206, %v1089
  %1213 = vrot.lane.b32.xlu0 %v1207, 64
  %v1214 = vpop.permute.xlu0 %1213
  %1215 = vrot.lane.b32.xlu0 %v1208, 64
  %v1216 = vpop.permute.xlu0 %1215
  %v1219 = vmul.f32 %v1204, %v1214
  %v1220 = vmul.f32 %v1206, %v1216
  %1223 = vrot.lane.b32.xlu0 %v1219, 32
  %v1224 = vpop.permute.xlu0 %1223
  %1225 = vrot.lane.b32.xlu0 %v1220, 32
  %v1226 = vpop.permute.xlu0 %1225
  %v1229 = vadd.f32 %v1209, %v1224
  %v1230 = vadd.f32 %v1210, %v1226
  %v1231 = vtanh.pop %v1229
  %v1232 = vtanh.pop %v1230
  %1235 = vrot.lane.b32.xlu0 %v1231, 64
  %v1236 = vpop.permute.xlu0 %1235
  %1237 = vrot.lane.b32.xlu0 %v1232, 64
  %v1238 = vpop.permute.xlu0 %1237
  %v1241 = vmul.f32 %v1204, %v1236
  %v1242 = vmul.f32 %v1206, %v1238
  %1245 = vrot.lane.b32.xlu0 %v1241, 32
  %v1246 = vpop.permute.xlu0 %1245
  %1247 = vrot.lane.b32.xlu0 %v1242, 32
  %v1248 = vpop.permute.xlu0 %1247
  %1251 = vst.msk [vmem:[#allocation3 + $0x60] sm:$0xff] %vm53, %v1246
  %1252 = vst.msk [vmem:[#allocation3 + $0x68] sm:$0xff] %vm53, %v1248
  %v1253 = vld [vmem:[#allocation2 + $0x70] sm:$0xff]
  %v1254 = vld [vmem:[#allocation2 + $0x78] sm:$0xff]
  %v1255 = vsel %vm53, %v1246, 0
  %v1257 = vsel %vm53, %v1248, 0
  %1259 = vmatprep.subr.mxu0 0.0
  %1260 = vmatpush1.msra.mxu0 %v263
  %1261 = vmatprep.subr.mxu0 0.0
  %1262 = vmatpush1.msra.mxu0 %v264
  %1263 = vmatprep.subr.mxu0 0.0
  %1264 = vmatpush1.msra.mxu0 %v265
  %1265 = vmatprep.subr.mxu0 0.0
  %1266 = vmatpush1.msra.mxu0 %v266
  %1267 = vmatprep.subr.mxu0 0.0
  %1268 = vmatpush1.msra.mxu0 0.0
  %1269 = vmatprep.subr.mxu0 0.0
  %1270 = vmatpush1.msra.mxu0 0.0
  %1271 = vmatprep.subr.mxu0 0.0
  %1272 = vmatpush1.msra.mxu0 0.0
  %1273 = vmatprep.subr.mxu0 0.0
  %1274 = vmatpush1.msra.mxu0 0.0
  %1275 = vmatprep.subr.mxu0 0.0
  %1276 = vmatpush1.msra.mxu0 0.0
  %1277 = vmatprep.subr.mxu0 0.0
  %1278 = vmatpush1.msra.mxu0 0.0
  %1279 = vmatprep.subr.mxu0 0.0
  %1280 = vmatpush1.msra.mxu0 0.0
  %1281 = vmatprep.subr.mxu0 0.0
  %1282 = vmatpush1.msra.mxu0 0.0
  %1283 = vmatprep.subr.mxu0 0.0
  %1284 = vmatpush1.msra.mxu0 0.0
  %1285 = vmatprep.subr.mxu0 0.0
  %1286 = vmatpush1.msra.mxu0 0.0
  %1287 = vmatprep.subr.mxu0 0.0
  %1288 = vmatpush1.msra.mxu0 0.0
  %1289 = vmatprep.subr.mxu0 0.0
  %1290 = vmatpush1.msra.mxu0 0.0
  %1291 = vmatprep.subr.mxu0 0.0
  %1292 = vmatpush1.msra.mxu0 0.0
  %1293 = vmatprep.subr.mxu0 0.0
  %1294 = vmatpush1.msra.mxu0 0.0
  %1295 = vmatprep.subr.mxu0 0.0
  %1296 = vmatpush1.msra.mxu0 0.0
  %1297 = vmatprep.subr.mxu0 0.0
  %1298 = vmatpush1.msra.mxu0 0.0
  %1299 = vmatprep.subr.mxu0 0.0
  %1300 = vmatpush1.msra.mxu0 0.0
  %1301 = vmatprep.subr.mxu0 0.0
  %1302 = vmatpush1.msra.mxu0 0.0
  %1303 = vmatprep.subr.mxu0 0.0
  %1304 = vmatpush1.msra.mxu0 0.0
  %1305 = vmatprep.subr.mxu0 0.0
  %1306 = vmatpush1.msra.mxu0 0.0
  %1307 = vmatprep.subr.mxu0 0.0
  %1308 = vmatpush1.msra.mxu0 0.0
  %1309 = vmatprep.subr.mxu0 0.0
  %1310 = vmatpush1.msra.mxu0 0.0
  %1311 = vmatprep.subr.mxu0 0.0
  %1312 = vmatpush1.msra.mxu0 0.0
  %1313 = vmatprep.subr.mxu0 0.0
  %1314 = vmatpush1.msra.mxu0 0.0
  %1315 = vmatprep.subr.mxu0 0.0
  %1316 = vmatpush1.msra.mxu0 0.0
  %1317 = vmatprep.subr.mxu0 0.0
  %1318 = vmatpush1.msra.mxu0 0.0
  %1319 = vmatprep.subr.mxu0 0.0
  %1320 = vmatpush1.msra.mxu0 0.0
  %1321 = vmatprep.subr.mxu0 0.0
  %1322 = vmatpush1.msra.mxu0 0.0
  %1323 = vmatprep.mubr.f32.mxu0 0.0
  %1324 = vmatmul.mubr.f32.gmra.mrb[0].mxu0 %v1255
  %v1325 = vpop.f32.mrb[0].mxu0
  %v1326 = vadd.f32 0.0, %v1325
  %v1327 = vpop.f32.mrb[0].mxu0
  %1328 = vmatprep.mubr.f32.mxu0 0.0
  %1329 = vmatmul.mubr.f32.gmra.mrb[0].mxu0 %v1257
  %v1330 = vpop.f32.mrb[0].mxu0
  %v1331 = vadd.f32 0.0, %v1330
  %v1332 = vpop.f32.mrb[0].mxu0
  %1333 = vdwg.mxu0
  %v1334 = vadd.f32 %v1253, %v1326
  %v1335 = vadd.f32 %v1254, %v1331
  %v1336 = vxor.u32 %v1334, 2147483648
  %v1337 = vxor.u32 %v1335, 2147483648
  %v1338 = vmul.f32 %v1336, 1.442695
  %v1339 = vpow.pop %v1338
  %v1340 = vmul.f32 %v1337, 1.442695
  %v1341 = vpow.pop %v1340
  %v1342 = vadd.f32 %v1339, 1.0
  %v1343 = vadd.f32 %v1341, 1.0
  %v1344 = vrcp.pop %v1342
  %v1345 = vmul.f32 1.0, %v1344
  %v1346 = vrcp.pop %v1343
  %v1347 = vmul.f32 1.0, %v1346
  %v1348 = vtanh.pop %v1334
  %v1349 = vtanh.pop %v1335
  %v1350 = vmul.f32 %v1345, %v1229
  %v1351 = vmul.f32 %v1347, %v1230
  %1354 = vrot.lane.b32.xlu0 %v1348, 64
  %v1355 = vpop.permute.xlu0 %1354
  %1356 = vrot.lane.b32.xlu0 %v1349, 64
  %v1357 = vpop.permute.xlu0 %1356
  %v1360 = vmul.f32 %v1345, %v1355
  %v1361 = vmul.f32 %v1347, %v1357
  %1364 = vrot.lane.b32.xlu0 %v1360, 32
  %v1365 = vpop.permute.xlu0 %1364
  %1366 = vrot.lane.b32.xlu0 %v1361, 32
  %v1367 = vpop.permute.xlu0 %1366
  %v1370 = vadd.f32 %v1350, %v1365
  %v1371 = vadd.f32 %v1351, %v1367
  %v1372 = vtanh.pop %v1370
  %v1373 = vtanh.pop %v1371
  %1376 = vrot.lane.b32.xlu0 %v1372, 64
  %v1377 = vpop.permute.xlu0 %1376
  %1378 = vrot.lane.b32.xlu0 %v1373, 64
  %v1379 = vpop.permute.xlu0 %1378
  %v1382 = vmul.f32 %v1345, %v1377
  %v1383 = vmul.f32 %v1347, %v1379
  %1386 = vrot.lane.b32.xlu0 %v1382, 32
  %v1387 = vpop.permute.xlu0 %1386
  %1388 = vrot.lane.b32.xlu0 %v1383, 32
  %v1389 = vpop.permute.xlu0 %1388
  %1392 = vst.msk [vmem:[#allocation3 + $0x70] sm:$0xff] %vm53, %v1387
  %1393 = vst.msk [vmem:[#allocation3 + $0x78] sm:$0xff] %vm53, %v1389
  %v1394 = vld [vmem:[#allocation3] sm:$0xff]
  %v1395 = vld [vmem:[#allocation3 + $0x8] sm:$0xff]
  %v1396 = vld [vmem:[#allocation3 + $0x10] sm:$0xff]
  %v1397 = vld [vmem:[#allocation3 + $0x18] sm:$0xff]
  %v1398 = vld [vmem:[#allocation3 + $0x20] sm:$0xff]
  %v1399 = vld [vmem:[#allocation3 + $0x28] sm:$0xff]
  %v1400 = vld [vmem:[#allocation3 + $0x30] sm:$0xff]
  %v1401 = vld [vmem:[#allocation3 + $0x38] sm:$0xff]
  %v1402 = vld [vmem:[#allocation3 + $0x40] sm:$0xff]
  %v1403 = vld [vmem:[#allocation3 + $0x48] sm:$0xff]
  %v1404 = vld [vmem:[#allocation3 + $0x50] sm:$0xff]
  %v1405 = vld [vmem:[#allocation3 + $0x58] sm:$0xff]
  %v1406 = vld [vmem:[#allocation3 + $0x60] sm:$0xff]
  %v1407 = vld [vmem:[#allocation3 + $0x68] sm:$0xff]
  %v1408 = vld [vmem:[#allocation3 + $0x70] sm:$0xff]
  %v1409 = vld [vmem:[#allocation3 + $0x78] sm:$0xff]
  %v1410 = vld [vmem:[%s4] sm:$0xff]
  %v1411 = vld [vmem:[%s4 + $0x8] sm:$0xff]
  %v1412 = vld [vmem:[%s4 + $0x10] sm:$0xff]
  %v1413 = vld [vmem:[%s4 + $0x18] sm:$0xff]
  %v1414 = vld [vmem:[%s6] sm:$0x1]
  %v1416 = vlaneseq
  %v1417 = vshrl.u32 %v1416, 7
  %v1418 = vsub.s32 0, %v1417
  %v1419 = vrot.slane %v1414, %v1418
  %v1422 = vsel %vm53, %v1394, 0
  %v1425 = vsel %vm53, %v1395, 0
  %v1428 = vsel %vm53, %v1396, 0
  %v1431 = vsel %vm53, %v1397, 0
  %v1434 = vsel %vm53, %v1398, 0
  %v1437 = vsel %vm53, %v1399, 0
  %v1440 = vsel %vm53, %v1400, 0
  %v1443 = vsel %vm53, %v1401, 0
  %v1446 = vsel %vm53, %v1402, 0
  %v1449 = vsel %vm53, %v1403, 0
  %v1452 = vsel %vm53, %v1404, 0
  %v1455 = vsel %vm53, %v1405, 0
  %v1458 = vsel %vm53, %v1406, 0
  %v1461 = vsel %vm53, %v1407, 0
  %v1464 = vsel %vm53, %v1408, 0
  %v1467 = vsel %vm53, %v1409, 0
  %1469 = vmatprep.subr.mxu0 0.0
  %1470 = vmatpush1.msra.mxu0 %v1410
  %1471 = vmatprep.subr.mxu0 0.0
  %1472 = vmatpush1.msra.mxu0 %v1411
  %1473 = vmatprep.subr.mxu0 0.0
  %1474 = vmatpush1.msra.mxu0 %v1412
  %1475 = vmatprep.subr.mxu0 0.0
  %1476 = vmatpush1.msra.mxu0 %v1413
  %1477 = vmatprep.subr.mxu0 0.0
  %1478 = vmatpush1.msra.mxu0 0.0
  %1479 = vmatprep.subr.mxu0 0.0
  %1480 = vmatpush1.msra.mxu0 0.0
  %1481 = vmatprep.subr.mxu0 0.0
  %1482 = vmatpush1.msra.mxu0 0.0
  %1483 = vmatprep.subr.mxu0 0.0
  %1484 = vmatpush1.msra.mxu0 0.0
  %1485 = vmatprep.subr.mxu0 0.0
  %1486 = vmatpush1.msra.mxu0 0.0
  %1487 = vmatprep.subr.mxu0 0.0
  %1488 = vmatpush1.msra.mxu0 0.0
  %1489 = vmatprep.subr.mxu0 0.0
  %1490 = vmatpush1.msra.mxu0 0.0
  %1491 = vmatprep.subr.mxu0 0.0
  %1492 = vmatpush1.msra.mxu0 0.0
  %1493 = vmatprep.subr.mxu0 0.0
  %1494 = vmatpush1.msra.mxu0 0.0
  %1495 = vmatprep.subr.mxu0 0.0
  %1496 = vmatpush1.msra.mxu0 0.0
  %1497 = vmatprep.subr.mxu0 0.0
  %1498 = vmatpush1.msra.mxu0 0.0
  %1499 = vmatprep.subr.mxu0 0.0
  %1500 = vmatpush1.msra.mxu0 0.0
  %1501 = vmatprep.subr.mxu0 0.0
  %1502 = vmatpush1.msra.mxu0 0.0
  %1503 = vmatprep.subr.mxu0 0.0
  %1504 = vmatpush1.msra.mxu0 0.0
  %1505 = vmatprep.subr.mxu0 0.0
  %1506 = vmatpush1.msra.mxu0 0.0
  %1507 = vmatprep.subr.mxu0 0.0
  %1508 = vmatpush1.msra.mxu0 0.0
  %1509 = vmatprep.subr.mxu0 0.0
  %1510 = vmatpush1.msra.mxu0 0.0
  %1511 = vmatprep.subr.mxu0 0.0
  %1512 = vmatpush1.msra.mxu0 0.0
  %1513 = vmatprep.subr.mxu0 0.0
  %1514 = vmatpush1.msra.mxu0 0.0
  %1515 = vmatprep.subr.mxu0 0.0
  %1516 = vmatpush1.msra.mxu0 0.0
  %1517 = vmatprep.subr.mxu0 0.0
  %1518 = vmatpush1.msra.mxu0 0.0
  %1519 = vmatprep.subr.mxu0 0.0
  %1520 = vmatpush1.msra.mxu0 0.0
  %1521 = vmatprep.subr.mxu0 0.0
  %1522 = vmatpush1.msra.mxu0 0.0
  %1523 = vmatprep.subr.mxu0 0.0
  %1524 = vmatpush1.msra.mxu0 0.0
  %1525 = vmatprep.subr.mxu0 0.0
  %1526 = vmatpush1.msra.mxu0 0.0
  %1527 = vmatprep.subr.mxu0 0.0
  %1528 = vmatpush1.msra.mxu0 0.0
  %1529 = vmatprep.subr.mxu0 0.0
  %1530 = vmatpush1.msra.mxu0 0.0
  %1531 = vmatprep.subr.mxu0 0.0
  %1532 = vmatpush1.msra.mxu0 0.0
  %1533 = vmatprep.mubr.f32.mxu0 0.0
  %1534 = vmatmul.mubr.f32.gmra.mrb[0].mxu0 %v1422
  %v1535 = vpop.f32.mrb[0].mxu0
  %v1536 = vadd.f32 %v1419, %v1535
  %v1537 = vpop.f32.mrb[0].mxu0
  %1538 = vmatprep.mubr.f32.mxu0 0.0
  %1539 = vmatmul.mubr.f32.gmra.mrb[0].mxu0 %v1425
  %v1540 = vpop.f32.mrb[0].mxu0
  %v1541 = vadd.f32 %v1419, %v1540
  %v1542 = vpop.f32.mrb[0].mxu0
  %1543 = vmatprep.mubr.f32.mxu0 0.0
  %1544 = vmatmul.mubr.f32.gmra.mrb[0].mxu0 %v1428
  %v1545 = vpop.f32.mrb[0].mxu0
  %v1546 = vadd.f32 %v1419, %v1545
  %v1547 = vpop.f32.mrb[0].mxu0
  %1548 = vmatprep.mubr.f32.mxu0 0.0
  %1549 = vmatmul.mubr.f32.gmra.mrb[0].mxu0 %v1431
  %v1550 = vpop.f32.mrb[0].mxu0
  %v1551 = vadd.f32 %v1419, %v1550
  %v1552 = vpop.f32.mrb[0].mxu0
  %1553 = vmatprep.mubr.f32.mxu0 0.0
  %1554 = vmatmul.mubr.f32.gmra.mrb[0].mxu0 %v1434
  %v1555 = vpop.f32.mrb[0].mxu0
  %v1556 = vadd.f32 %v1419, %v1555
  %v1557 = vpop.f32.mrb[0].mxu0
  %1558 = vmatprep.mubr.f32.mxu0 0.0
  %1559 = vmatmul.mubr.f32.gmra.mrb[0].mxu0 %v1437
  %v1560 = vpop.f32.mrb[0].mxu0
  %v1561 = vadd.f32 %v1419, %v1560
  %v1562 = vpop.f32.mrb[0].mxu0
  %1563 = vmatprep.mubr.f32.mxu0 0.0
  %1564 = vmatmul.mubr.f32.gmra.mrb[0].mxu0 %v1440
  %v1565 = vpop.f32.mrb[0].mxu0
  %v1566 = vadd.f32 %v1419, %v1565
  %v1567 = vpop.f32.mrb[0].mxu0
  %1568 = vmatprep.mubr.f32.mxu0 0.0
  %1569 = vmatmul.mubr.f32.gmra.mrb[0].mxu0 %v1443
  %v1570 = vpop.f32.mrb[0].mxu0
  %v1571 = vadd.f32 %v1419, %v1570
  %v1572 = vpop.f32.mrb[0].mxu0
  %1573 = vmatprep.mubr.f32.mxu0 0.0
  %1574 = vmatmul.mubr.f32.gmra.mrb[0].mxu0 %v1446
  %v1575 = vpop.f32.mrb[0].mxu0
  %v1576 = vadd.f32 %v1419, %v1575
  %v1577 = vpop.f32.mrb[0].mxu0
  %1578 = vmatprep.mubr.f32.mxu0 0.0
  %1579 = vmatmul.mubr.f32.gmra.mrb[0].mxu0 %v1449
  %v1580 = vpop.f32.mrb[0].mxu0
  %v1581 = vadd.f32 %v1419, %v1580
  %v1582 = vpop.f32.mrb[0].mxu0
  %1583 = vmatprep.mubr.f32.mxu0 0.0
  %1584 = vmatmul.mubr.f32.gmra.mrb[0].mxu0 %v1452
  %v1585 = vpop.f32.mrb[0].mxu0
  %v1586 = vadd.f32 %v1419, %v1585
  %v1587 = vpop.f32.mrb[0].mxu0
  %1588 = vmatprep.mubr.f32.mxu0 0.0
  %1589 = vmatmul.mubr.f32.gmra.mrb[0].mxu0 %v1455
  %v1590 = vpop.f32.mrb[0].mxu0
  %v1591 = vadd.f32 %v1419, %v1590
  %v1592 = vpop.f32.mrb[0].mxu0
  %1593 = vmatprep.mubr.f32.mxu0 0.0
  %1594 = vmatmul.mubr.f32.gmra.mrb[0].mxu0 %v1458
  %v1595 = vpop.f32.mrb[0].mxu0
  %v1596 = vadd.f32 %v1419, %v1595
  %v1597 = vpop.f32.mrb[0].mxu0
  %1598 = vmatprep.mubr.f32.mxu0 0.0
  %1599 = vmatmul.mubr.f32.gmra.mrb[0].mxu0 %v1461
  %v1600 = vpop.f32.mrb[0].mxu0
  %v1601 = vadd.f32 %v1419, %v1600
  %v1602 = vpop.f32.mrb[0].mxu0
  %1603 = vmatprep.mubr.f32.mxu0 0.0
  %1604 = vmatmul.mubr.f32.gmra.mrb[0].mxu0 %v1464
  %v1605 = vpop.f32.mrb[0].mxu0
  %v1606 = vadd.f32 %v1419, %v1605
  %v1607 = vpop.f32.mrb[0].mxu0
  %1608 = vmatprep.mubr.f32.mxu0 0.0
  %1609 = vmatmul.mubr.f32.gmra.mrb[0].mxu0 %v1467
  %v1610 = vpop.f32.mrb[0].mxu0
  %v1611 = vadd.f32 %v1419, %v1610
  %v1612 = vpop.f32.mrb[0].mxu0
  %1613 = vdwg.mxu0
  %1614 = vst [vmem:[#allocation2] sm:$0xff] %v1536
  %1615 = vst [vmem:[#allocation2 + $0x8] sm:$0xff] %v1541
  %1616 = vst [vmem:[#allocation2 + $0x10] sm:$0xff] %v1546
  %1617 = vst [vmem:[#allocation2 + $0x18] sm:$0xff] %v1551
  %1618 = vst [vmem:[#allocation2 + $0x20] sm:$0xff] %v1556
  %1619 = vst [vmem:[#allocation2 + $0x28] sm:$0xff] %v1561
  %1620 = vst [vmem:[#allocation2 + $0x30] sm:$0xff] %v1566
  %1621 = vst [vmem:[#allocation2 + $0x38] sm:$0xff] %v1571
  %1622 = vst [vmem:[#allocation2 + $0x40] sm:$0xff] %v1576
  %1623 = vst [vmem:[#allocation2 + $0x48] sm:$0xff] %v1581
  %1624 = vst [vmem:[#allocation2 + $0x50] sm:$0xff] %v1586
  %1625 = vst [vmem:[#allocation2 + $0x58] sm:$0xff] %v1591
  %1626 = vst [vmem:[#allocation2 + $0x60] sm:$0xff] %v1596
  %1627 = vst [vmem:[#allocation2 + $0x68] sm:$0xff] %v1601
  %1628 = vst [vmem:[#allocation2 + $0x70] sm:$0xff] %v1606
  %1629 = vst [vmem:[#allocation2 + $0x78] sm:$0xff] %v1611
  %v1630 = vld [vmem:[%s5] sm:$0xff]
  %v1631 = vld [vmem:[%s5 + $0x8] sm:$0xff]
  %v1632 = vld [vmem:[%s5 + $0x10] sm:$0xff]
  %v1633 = vld [vmem:[%s5 + $0x18] sm:$0xff]
  %v1634 = vld [vmem:[#allocation2] sm:$0xff]
  %v1635 = vld [vmem:[#allocation2 + $0x8] sm:$0xff]
  %1636 = vmatprep.subr.mxu0 0.0
  %1637 = vmatpush1.msra.mxu0 %v1630
  %1638 = vmatprep.subr.mxu0 0.0
  %1639 = vmatpush1.msra.mxu0 %v1631
  %1640 = vmatprep.subr.mxu0 0.0
  %1641 = vmatpush1.msra.mxu0 %v1632
  %1642 = vmatprep.subr.mxu0 0.0
  %1643 = vmatpush1.msra.mxu0 %v1633
  %1644 = vmatprep.subr.mxu0 0.0
  %1645 = vmatpush1.msra.mxu0 0.0
  %1646 = vmatprep.subr.mxu0 0.0
  %1647 = vmatpush1.msra.mxu0 0.0
  %1648 = vmatprep.subr.mxu0 0.0
  %1649 = vmatpush1.msra.mxu0 0.0
  %1650 = vmatprep.subr.mxu0 0.0
  %1651 = vmatpush1.msra.mxu0 0.0
  %1652 = vmatprep.subr.mxu0 0.0
  %1653 = vmatpush1.msra.mxu0 0.0
  %1654 = vmatprep.subr.mxu0 0.0
  %1655 = vmatpush1.msra.mxu0 0.0
  %1656 = vmatprep.subr.mxu0 0.0
  %1657 = vmatpush1.msra.mxu0 0.0
  %1658 = vmatprep.subr.mxu0 0.0
  %1659 = vmatpush1.msra.mxu0 0.0
  %1660 = vmatprep.subr.mxu0 0.0
  %1661 = vmatpush1.msra.mxu0 0.0
  %1662 = vmatprep.subr.mxu0 0.0
  %1663 = vmatpush1.msra.mxu0 0.0
  %1664 = vmatprep.subr.mxu0 0.0
  %1665 = vmatpush1.msra.mxu0 0.0
  %1666 = vmatprep.subr.mxu0 0.0
  %1667 = vmatpush1.msra.mxu0 0.0
  %1668 = vmatprep.subr.mxu0 0.0
  %1669 = vmatpush1.msra.mxu0 0.0
  %1670 = vmatprep.subr.mxu0 0.0
  %1671 = vmatpush1.msra.mxu0 0.0
  %1672 = vmatprep.subr.mxu0 0.0
  %1673 = vmatpush1.msra.mxu0 0.0
  %1674 = vmatprep.subr.mxu0 0.0
  %1675 = vmatpush1.msra.mxu0 0.0
  %1676 = vmatprep.subr.mxu0 0.0
  %1677 = vmatpush1.msra.mxu0 0.0
  %1678 = vmatprep.subr.mxu0 0.0
  %1679 = vmatpush1.msra.mxu0 0.0
  %1680 = vmatprep.subr.mxu0 0.0
  %1681 = vmatpush1.msra.mxu0 0.0
  %1682 = vmatprep.subr.mxu0 0.0
  %1683 = vmatpush1.msra.mxu0 0.0
  %1684 = vmatprep.subr.mxu0 0.0
  %1685 = vmatpush1.msra.mxu0 0.0
  %1686 = vmatprep.subr.mxu0 0.0
  %1687 = vmatpush1.msra.mxu0 0.0
  %1688 = vmatprep.subr.mxu0 0.0
  %1689 = vmatpush1.msra.mxu0 0.0
  %1690 = vmatprep.subr.mxu0 0.0
  %1691 = vmatpush1.msra.mxu0 0.0
  %1692 = vmatprep.subr.mxu0 0.0
  %1693 = vmatpush1.msra.mxu0 0.0
  %1694 = vmatprep.subr.mxu0 0.0
  %1695 = vmatpush1.msra.mxu0 0.0
  %1696 = vmatprep.subr.mxu0 0.0
  %1697 = vmatpush1.msra.mxu0 0.0
  %1698 = vmatprep.subr.mxu0 0.0
  %1699 = vmatpush1.msra.mxu0 0.0
  %1700 = vmatprep.mubr.f32.mxu0 0.0
  %1701 = vmatmul.mubr.f32.gmra.mrb[0].mxu0 %v270
  %v1702 = vpop.f32.mrb[0].mxu0
  %v1703 = vadd.f32 0.0, %v1702
  %v1704 = vpop.f32.mrb[0].mxu0
  %1705 = vmatprep.mubr.f32.mxu0 0.0
  %1706 = vmatmul.mubr.f32.gmra.mrb[0].mxu0 %v270
  %v1707 = vpop.f32.mrb[0].mxu0
  %v1708 = vadd.f32 0.0, %v1707
  %v1709 = vpop.f32.mrb[0].mxu0
  %1710 = vdwg.mxu0
  %v1711 = vadd.f32 %v1634, %v1703
  %v1712 = vadd.f32 %v1635, %v1708
  %v1713 = vxor.u32 %v1711, 2147483648
  %v1714 = vxor.u32 %v1712, 2147483648
  %v1715 = vmul.f32 %v1713, 1.442695
  %v1716 = vpow.pop %v1715
  %v1717 = vmul.f32 %v1714, 1.442695
  %v1718 = vpow.pop %v1717
  %v1719 = vadd.f32 %v1716, 1.0
  %v1720 = vadd.f32 %v1718, 1.0
  %v1721 = vrcp.pop %v1719
  %v1722 = vmul.f32 1.0, %v1721
  %v1723 = vrcp.pop %v1720
  %v1724 = vmul.f32 1.0, %v1723
  %v1725 = vtanh.pop %v1711
  %v1726 = vtanh.pop %v1712
  %v1727 = vmul.f32 %v1722, 0.0
  %v1728 = vmul.f32 %v1724, 0.0
  %1731 = vrot.lane.b32.xlu0 %v1725, 64
  %v1732 = vpop.permute.xlu0 %1731
  %1733 = vrot.lane.b32.xlu0 %v1726, 64
  %v1734 = vpop.permute.xlu0 %1733
  %v1737 = vmul.f32 %v1722, %v1732
  %v1738 = vmul.f32 %v1724, %v1734
  %1741 = vrot.lane.b32.xlu0 %v1737, 32
  %v1742 = vpop.permute.xlu0 %1741
  %1743 = vrot.lane.b32.xlu0 %v1738, 32
  %v1744 = vpop.permute.xlu0 %1743
  %v1747 = vadd.f32 %v1727, %v1742
  %v1748 = vadd.f32 %v1728, %v1744
  %v1749 = vtanh.pop %v1747
  %v1750 = vtanh.pop %v1748
  %1753 = vrot.lane.b32.xlu0 %v1749, 64
  %v1754 = vpop.permute.xlu0 %1753
  %1755 = vrot.lane.b32.xlu0 %v1750, 64
  %v1756 = vpop.permute.xlu0 %1755
  %v1759 = vmul.f32 %v1722, %v1754
  %v1760 = vmul.f32 %v1724, %v1756
  %vm1761 = vcmp.gt.f32.partialorder %v1759, 0.0
  %vm1762 = vcmp.gt.f32.partialorder %v1760, 0.0
  %v1763 = vmul.f32 %v1759, 0.25
  %v1764 = vmul.f32 %v1760, 0.25
  %v1765 = vsel %vm1761, %v1759, %v1763
  %v1766 = vsel %vm1762, %v1760, %v1764
  %1769 = vrot.lane.b32.xlu0 %v1765, 32
  %v1770 = vpop.permute.xlu0 %1769
  %1771 = vrot.lane.b32.xlu0 %v1766, 32
  %v1772 = vpop.permute.xlu0 %1771
  %1775 = vst.msk [vmem:[%s7] sm:$0xff] %vm53, %v1770
  %1776 = vst.msk [vmem:[%s7 + $0x8] sm:$0xff] %vm53, %v1772
  %v1777 = vld [vmem:[#allocation2 + $0x10] sm:$0xff]
  %v1778 = vld [vmem:[#allocation2 + $0x18] sm:$0xff]
  %1781 = vrot.lane.b32.xlu0 %v1759, 32
  %v1782 = vpop.permute.xlu0 %1781
  %1783 = vrot.lane.b32.xlu0 %v1760, 32
  %v1784 = vpop.permute.xlu0 %1783
  %v1785 = vsel %vm53, %v1782, 0
  %v1787 = vsel %vm53, %v1784, 0
  %1789 = vmatprep.subr.mxu0 0.0
  %1790 = vmatpush1.msra.mxu0 %v1630
  %1791 = vmatprep.subr.mxu0 0.0
  %1792 = vmatpush1.msra.mxu0 %v1631
  %1793 = vmatprep.subr.mxu0 0.0
  %1794 = vmatpush1.msra.mxu0 %v1632
  %1795 = vmatprep.subr.mxu0 0.0
  %1796 = vmatpush1.msra.mxu0 %v1633
  %1797 = vmatprep.subr.mxu0 0.0
  %1798 = vmatpush1.msra.mxu0 0.0
  %1799 = vmatprep.subr.mxu0 0.0
  %1800 = vmatpush1.msra.mxu0 0.0
  %1801 = vmatprep.subr.mxu0 0.0
  %1802 = vmatpush1.msra.mxu0 0.0
  %1803 = vmatprep.subr.mxu0 0.0
  %1804 = vmatpush1.msra.mxu0 0.0
  %1805 = vmatprep.subr.mxu0 0.0
  %1806 = vmatpush1.msra.mxu0 0.0
  %1807 = vmatprep.subr.mxu0 0.0
  %1808 = vmatpush1.msra.mxu0 0.0
  %1809 = vmatprep.subr.mxu0 0.0
  %1810 = vmatpush1.msra.mxu0 0.0
  %1811 = vmatprep.subr.mxu0 0.0
  %1812 = vmatpush1.msra.mxu0 0.0
  %1813 = vmatprep.subr.mxu0 0.0
  %1814 = vmatpush1.msra.mxu0 0.0
  %1815 = vmatprep.subr.mxu0 0.0
  %1816 = vmatpush1.msra.mxu0 0.0
  %1817 = vmatprep.subr.mxu0 0.0
  %1818 = vmatpush1.msra.mxu0 0.0
  %1819 = vmatprep.subr.mxu0 0.0
  %1820 = vmatpush1.msra.mxu0 0.0
  %1821 = vmatprep.subr.mxu0 0.0
  %1822 = vmatpush1.msra.mxu0 0.0
  %1823 = vmatprep.subr.mxu0 0.0
  %1824 = vmatpush1.msra.mxu0 0.0
  %1825 = vmatprep.subr.mxu0 0.0
  %1826 = vmatpush1.msra.mxu0 0.0
  %1827 = vmatprep.subr.mxu0 0.0
  %1828 = vmatpush1.msra.mxu0 0.0
  %1829 = vmatprep.subr.mxu0 0.0
  %1830 = vmatpush1.msra.mxu0 0.0
  %1831 = vmatprep.subr.mxu0 0.0
  %1832 = vmatpush1.msra.mxu0 0.0
  %1833 = vmatprep.subr.mxu0 0.0
  %1834 = vmatpush1.msra.mxu0 0.0
  %1835 = vmatprep.subr.mxu0 0.0
  %1836 = vmatpush1.msra.mxu0 0.0
  %1837 = vmatprep.subr.mxu0 0.0
  %1838 = vmatpush1.msra.mxu0 0.0
  %1839 = vmatprep.subr.mxu0 0.0
  %1840 = vmatpush1.msra.mxu0 0.0
  %1841 = vmatprep.subr.mxu0 0.0
  %1842 = vmatpush1.msra.mxu0 0.0
  %1843 = vmatprep.subr.mxu0 0.0
  %1844 = vmatpush1.msra.mxu0 0.0
  %1845 = vmatprep.subr.mxu0 0.0
  %1846 = vmatpush1.msra.mxu0 0.0
  %1847 = vmatprep.subr.mxu0 0.0
  %1848 = vmatpush1.msra.mxu0 0.0
  %1849 = vmatprep.subr.mxu0 0.0
  %1850 = vmatpush1.msra.mxu0 0.0
  %1851 = vmatprep.subr.mxu0 0.0
  %1852 = vmatpush1.msra.mxu0 0.0
  %1853 = vmatprep.mubr.f32.mxu0 0.0
  %1854 = vmatmul.mubr.f32.gmra.mrb[0].mxu0 %v1785
  %v1855 = vpop.f32.mrb[0].mxu0
  %v1856 = vadd.f32 0.0, %v1855
  %v1857 = vpop.f32.mrb[0].mxu0
  %1858 = vmatprep.mubr.f32.mxu0 0.0
  %1859 = vmatmul.mubr.f32.gmra.mrb[0].mxu0 %v1787
  %v1860 = vpop.f32.mrb[0].mxu0
  %v1861 = vadd.f32 0.0, %v1860
  %v1862 = vpop.f32.mrb[0].mxu0
  %1863 = vdwg.mxu0
  %v1864 = vadd.f32 %v1777, %v1856
  %v1865 = vadd.f32 %v1778, %v1861
  %v1866 = vxor.u32 %v1864, 2147483648
  %v1867 = vxor.u32 %v1865, 2147483648
  %v1868 = vmul.f32 %v1866, 1.442695
  %v1869 = vpow.pop %v1868
  %v1870 = vmul.f32 %v1867, 1.442695
  %v1871 = vpow.pop %v1870
  %v1872 = vadd.f32 %v1869, 1.0
  %v1873 = vadd.f32 %v1871, 1.0
  %v1874 = vrcp.pop %v1872
  %v1875 = vmul.f32 1.0, %v1874
  %v1876 = vrcp.pop %v1873
  %v1877 = vmul.f32 1.0, %v1876
  %v1878 = vtanh.pop %v1864
  %v1879 = vtanh.pop %v1865
  %v1880 = vmul.f32 %v1875, %v1747
  %v1881 = vmul.f32 %v1877, %v1748
  %1884 = vrot.lane.b32.xlu0 %v1878, 64
  %v1885 = vpop.permute.xlu0 %1884
  %1886 = vrot.lane.b32.xlu0 %v1879, 64
  %v1887 = vpop.permute.xlu0 %1886
  %v1890 = vmul.f32 %v1875, %v1885
  %v1891 = vmul.f32 %v1877, %v1887
  %1894 = vrot.lane.b32.xlu0 %v1890, 32
  %v1895 = vpop.permute.xlu0 %1894
  %1896 = vrot.lane.b32.xlu0 %v1891, 32
  %v1897 = vpop.permute.xlu0 %1896
  %v1900 = vadd.f32 %v1880, %v1895
  %v1901 = vadd.f32 %v1881, %v1897
  %v1902 = vtanh.pop %v1900
  %v1903 = vtanh.pop %v1901
  %1906 = vrot.lane.b32.xlu0 %v1902, 64
  %v1907 = vpop.permute.xlu0 %1906
  %1908 = vrot.lane.b32.xlu0 %v1903, 64
  %v1909 = vpop.permute.xlu0 %1908
  %v1912 = vmul.f32 %v1875, %v1907
  %v1913 = vmul.f32 %v1877, %v1909
  %vm1914 = vcmp.gt.f32.partialorder %v1912, 0.0
  %vm1915 = vcmp.gt.f32.partialorder %v1913, 0.0
  %v1916 = vmul.f32 %v1912, 0.25
  %v1917 = vmul.f32 %v1913, 0.25
  %v1918 = vsel %vm1914, %v1912, %v1916
  %v1919 = vsel %vm1915, %v1913, %v1917
  %1922 = vrot.lane.b32.xlu0 %v1918, 32
  %v1923 = vpop.permute.xlu0 %1922
  %1924 = vrot.lane.b32.xlu0 %v1919, 32
  %v1925 = vpop.permute.xlu0 %1924
  %1928 = vst.msk [vmem:[%s7 + $0x10] sm:$0xff] %vm53, %v1923
  %1929 = vst.msk [vmem:[%s7 + $0x18] sm:$0xff] %vm53, %v1925
  %v1930 = vld [vmem:[#allocation2 + $0x20] sm:$0xff]
  %v1931 = vld [vmem:[#allocation2 + $0x28] sm:$0xff]
  %1934 = vrot.lane.b32.xlu0 %v1912, 32
  %v1935 = vpop.permute.xlu0 %1934
  %1936 = vrot.lane.b32.xlu0 %v1913, 32
  %v1937 = vpop.permute.xlu0 %1936
  %v1938 = vsel %vm53, %v1935, 0
  %v1940 = vsel %vm53, %v1937, 0
  %1942 = vmatprep.subr.mxu0 0.0
  %1943 = vmatpush1.msra.mxu0 %v1630
  %1944 = vmatprep.subr.mxu0 0.0
  %1945 = vmatpush1.msra.mxu0 %v1631
  %1946 = vmatprep.subr.mxu0 0.0
  %1947 = vmatpush1.msra.mxu0 %v1632
  %1948 = vmatprep.subr.mxu0 0.0
  %1949 = vmatpush1.msra.mxu0 %v1633
  %1950 = vmatprep.subr.mxu0 0.0
  %1951 = vmatpush1.msra.mxu0 0.0
  %1952 = vmatprep.subr.mxu0 0.0
  %1953 = vmatpush1.msra.mxu0 0.0
  %1954 = vmatprep.subr.mxu0 0.0
  %1955 = vmatpush1.msra.mxu0 0.0
  %1956 = vmatprep.subr.mxu0 0.0
  %1957 = vmatpush1.msra.mxu0 0.0
  %1958 = vmatprep.subr.mxu0 0.0
  %1959 = vmatpush1.msra.mxu0 0.0
  %1960 = vmatprep.subr.mxu0 0.0
  %1961 = vmatpush1.msra.mxu0 0.0
  %1962 = vmatprep.subr.mxu0 0.0
  %1963 = vmatpush1.msra.mxu0 0.0
  %1964 = vmatprep.subr.mxu0 0.0
  %1965 = vmatpush1.msra.mxu0 0.0
  %1966 = vmatprep.subr.mxu0 0.0
  %1967 = vmatpush1.msra.mxu0 0.0
  %1968 = vmatprep.subr.mxu0 0.0
  %1969 = vmatpush1.msra.mxu0 0.0
  %1970 = vmatprep.subr.mxu0 0.0
  %1971 = vmatpush1.msra.mxu0 0.0
  %1972 = vmatprep.subr.mxu0 0.0
  %1973 = vmatpush1.msra.mxu0 0.0
  %1974 = vmatprep.subr.mxu0 0.0
  %1975 = vmatpush1.msra.mxu0 0.0
  %1976 = vmatprep.subr.mxu0 0.0
  %1977 = vmatpush1.msra.mxu0 0.0
  %1978 = vmatprep.subr.mxu0 0.0
  %1979 = vmatpush1.msra.mxu0 0.0
  %1980 = vmatprep.subr.mxu0 0.0
  %1981 = vmatpush1.msra.mxu0 0.0
  %1982 = vmatprep.subr.mxu0 0.0
  %1983 = vmatpush1.msra.mxu0 0.0
  %1984 = vmatprep.subr.mxu0 0.0
  %1985 = vmatpush1.msra.mxu0 0.0
  %1986 = vmatprep.subr.mxu0 0.0
  %1987 = vmatpush1.msra.mxu0 0.0
  %1988 = vmatprep.subr.mxu0 0.0
  %1989 = vmatpush1.msra.mxu0 0.0
  %1990 = vmatprep.subr.mxu0 0.0
  %1991 = vmatpush1.msra.mxu0 0.0
  %1992 = vmatprep.subr.mxu0 0.0
  %1993 = vmatpush1.msra.mxu0 0.0
  %1994 = vmatprep.subr.mxu0 0.0
  %1995 = vmatpush1.msra.mxu0 0.0
  %1996 = vmatprep.subr.mxu0 0.0
  %1997 = vmatpush1.msra.mxu0 0.0
  %1998 = vmatprep.subr.mxu0 0.0
  %1999 = vmatpush1.msra.mxu0 0.0
  %2000 = vmatprep.subr.mxu0 0.0
  %2001 = vmatpush1.msra.mxu0 0.0
  %2002 = vmatprep.subr.mxu0 0.0
  %2003 = vmatpush1.msra.mxu0 0.0
  %2004 = vmatprep.subr.mxu0 0.0
  %2005 = vmatpush1.msra.mxu0 0.0
  %2006 = vmatprep.mubr.f32.mxu0 0.0
  %2007 = vmatmul.mubr.f32.gmra.mrb[0].mxu0 %v1938
  %v2008 = vpop.f32.mrb[0].mxu0
  %v2009 = vadd.f32 0.0, %v2008
  %v2010 = vpop.f32.mrb[0].mxu0
  %2011 = vmatprep.mubr.f32.mxu0 0.0
  %2012 = vmatmul.mubr.f32.gmra.mrb[0].mxu0 %v1940
  %v2013 = vpop.f32.mrb[0].mxu0
  %v2014 = vadd.f32 0.0, %v2013
  %v2015 = vpop.f32.mrb[0].mxu0
  %2016 = vdwg.mxu0
  %v2017 = vadd.f32 %v1930, %v2009
  %v2018 = vadd.f32 %v1931, %v2014
  %v2019 = vxor.u32 %v2017, 2147483648
  %v2020 = vxor.u32 %v2018, 2147483648
  %v2021 = vmul.f32 %v2019, 1.442695
  %v2022 = vpow.pop %v2021
  %v2023 = vmul.f32 %v2020, 1.442695
  %v2024 = vpow.pop %v2023
  %v2025 = vadd.f32 %v2022, 1.0
  %v2026 = vadd.f32 %v2024, 1.0
  %v2027 = vrcp.pop %v2025
  %v2028 = vmul.f32 1.0, %v2027
  %v2029 = vrcp.pop %v2026
  %v2030 = vmul.f32 1.0, %v2029
  %v2031 = vtanh.pop %v2017
  %v2032 = vtanh.pop %v2018
  %v2033 = vmul.f32 %v2028, %v1900
  %v2034 = vmul.f32 %v2030, %v1901
  %2037 = vrot.lane.b32.xlu0 %v2031, 64
  %v2038 = vpop.permute.xlu0 %2037
  %2039 = vrot.lane.b32.xlu0 %v2032, 64
  %v2040 = vpop.permute.xlu0 %2039
  %v2043 = vmul.f32 %v2028, %v2038
  %v2044 = vmul.f32 %v2030, %v2040
  %2047 = vrot.lane.b32.xlu0 %v2043, 32
  %v2048 = vpop.permute.xlu0 %2047
  %2049 = vrot.lane.b32.xlu0 %v2044, 32
  %v2050 = vpop.permute.xlu0 %2049
  %v2053 = vadd.f32 %v2033, %v2048
  %v2054 = vadd.f32 %v2034, %v2050
  %v2055 = vtanh.pop %v2053
  %v2056 = vtanh.pop %v2054
  %2059 = vrot.lane.b32.xlu0 %v2055, 64
  %v2060 = vpop.permute.xlu0 %2059
  %2061 = vrot.lane.b32.xlu0 %v2056, 64
  %v2062 = vpop.permute.xlu0 %2061
  %v2065 = vmul.f32 %v2028, %v2060
  %v2066 = vmul.f32 %v2030, %v2062
  %vm2067 = vcmp.gt.f32.partialorder %v2065, 0.0
  %vm2068 = vcmp.gt.f32.partialorder %v2066, 0.0
  %v2069 = vmul.f32 %v2065, 0.25
  %v2070 = vmul.f32 %v2066, 0.25
  %v2071 = vsel %vm2067, %v2065, %v2069
  %v2072 = vsel %vm2068, %v2066, %v2070
  %2075 = vrot.lane.b32.xlu0 %v2071, 32
  %v2076 = vpop.permute.xlu0 %2075
  %2077 = vrot.lane.b32.xlu0 %v2072, 32
  %v2078 = vpop.permute.xlu0 %2077
  %2081 = vst.msk [vmem:[%s7 + $0x20] sm:$0xff] %vm53, %v2076
  %2082 = vst.msk [vmem:[%s7 + $0x28] sm:$0xff] %vm53, %v2078
  %v2083 = vld [vmem:[#allocation2 + $0x30] sm:$0xff]
  %v2084 = vld [vmem:[#allocation2 + $0x38] sm:$0xff]
  %2087 = vrot.lane.b32.xlu0 %v2065, 32
  %v2088 = vpop.permute.xlu0 %2087
  %2089 = vrot.lane.b32.xlu0 %v2066, 32
  %v2090 = vpop.permute.xlu0 %2089
  %v2091 = vsel %vm53, %v2088, 0
  %v2093 = vsel %vm53, %v2090, 0
  %2095 = vmatprep.subr.mxu0 0.0
  %2096 = vmatpush1.msra.mxu0 %v1630
  %2097 = vmatprep.subr.mxu0 0.0
  %2098 = vmatpush1.msra.mxu0 %v1631
  %2099 = vmatprep.subr.mxu0 0.0
  %2100 = vmatpush1.msra.mxu0 %v1632
  %2101 = vmatprep.subr.mxu0 0.0
  %2102 = vmatpush1.msra.mxu0 %v1633
  %2103 = vmatprep.subr.mxu0 0.0
  %2104 = vmatpush1.msra.mxu0 0.0
  %2105 = vmatprep.subr.mxu0 0.0
  %2106 = vmatpush1.msra.mxu0 0.0
  %2107 = vmatprep.subr.mxu0 0.0
  %2108 = vmatpush1.msra.mxu0 0.0
  %2109 = vmatprep.subr.mxu0 0.0
  %2110 = vmatpush1.msra.mxu0 0.0
  %2111 = vmatprep.subr.mxu0 0.0
  %2112 = vmatpush1.msra.mxu0 0.0
  %2113 = vmatprep.subr.mxu0 0.0
  %2114 = vmatpush1.msra.mxu0 0.0
  %2115 = vmatprep.subr.mxu0 0.0
  %2116 = vmatpush1.msra.mxu0 0.0
  %2117 = vmatprep.subr.mxu0 0.0
  %2118 = vmatpush1.msra.mxu0 0.0
  %2119 = vmatprep.subr.mxu0 0.0
  %2120 = vmatpush1.msra.mxu0 0.0
  %2121 = vmatprep.subr.mxu0 0.0
  %2122 = vmatpush1.msra.mxu0 0.0
  %2123 = vmatprep.subr.mxu0 0.0
  %2124 = vmatpush1.msra.mxu0 0.0
  %2125 = vmatprep.subr.mxu0 0.0
  %2126 = vmatpush1.msra.mxu0 0.0
  %2127 = vmatprep.subr.mxu0 0.0
  %2128 = vmatpush1.msra.mxu0 0.0
  %2129 = vmatprep.subr.mxu0 0.0
  %2130 = vmatpush1.msra.mxu0 0.0
  %2131 = vmatprep.subr.mxu0 0.0
  %2132 = vmatpush1.msra.mxu0 0.0
  %2133 = vmatprep.subr.mxu0 0.0
  %2134 = vmatpush1.msra.mxu0 0.0
  %2135 = vmatprep.subr.mxu0 0.0
  %2136 = vmatpush1.msra.mxu0 0.0
  %2137 = vmatprep.subr.mxu0 0.0
  %2138 = vmatpush1.msra.mxu0 0.0
  %2139 = vmatprep.subr.mxu0 0.0
  %2140 = vmatpush1.msra.mxu0 0.0
  %2141 = vmatprep.subr.mxu0 0.0
  %2142 = vmatpush1.msra.mxu0 0.0
  %2143 = vmatprep.subr.mxu0 0.0
  %2144 = vmatpush1.msra.mxu0 0.0
  %2145 = vmatprep.subr.mxu0 0.0
  %2146 = vmatpush1.msra.mxu0 0.0
  %2147 = vmatprep.subr.mxu0 0.0
  %2148 = vmatpush1.msra.mxu0 0.0
  %2149 = vmatprep.subr.mxu0 0.0
  %2150 = vmatpush1.msra.mxu0 0.0
  %2151 = vmatprep.subr.mxu0 0.0
  %2152 = vmatpush1.msra.mxu0 0.0
  %2153 = vmatprep.subr.mxu0 0.0
  %2154 = vmatpush1.msra.mxu0 0.0
  %2155 = vmatprep.subr.mxu0 0.0
  %2156 = vmatpush1.msra.mxu0 0.0
  %2157 = vmatprep.subr.mxu0 0.0
  %2158 = vmatpush1.msra.mxu0 0.0
  %2159 = vmatprep.mubr.f32.mxu0 0.0
  %2160 = vmatmul.mubr.f32.gmra.mrb[0].mxu0 %v2091
  %v2161 = vpop.f32.mrb[0].mxu0
  %v2162 = vadd.f32 0.0, %v2161
  %v2163 = vpop.f32.mrb[0].mxu0
  %2164 = vmatprep.mubr.f32.mxu0 0.0
  %2165 = vmatmul.mubr.f32.gmra.mrb[0].mxu0 %v2093
  %v2166 = vpop.f32.mrb[0].mxu0
  %v2167 = vadd.f32 0.0, %v2166
  %v2168 = vpop.f32.mrb[0].mxu0
  %2169 = vdwg.mxu0
  %v2170 = vadd.f32 %v2083, %v2162
  %v2171 = vadd.f32 %v2084, %v2167
  %v2172 = vxor.u32 %v2170, 2147483648
  %v2173 = vxor.u32 %v2171, 2147483648
  %v2174 = vmul.f32 %v2172, 1.442695
  %v2175 = vpow.pop %v2174
  %v2176 = vmul.f32 %v2173, 1.442695
  %v2177 = vpow.pop %v2176
  %v2178 = vadd.f32 %v2175, 1.0
  %v2179 = vadd.f32 %v2177, 1.0
  %v2180 = vrcp.pop %v2178
  %v2181 = vmul.f32 1.0, %v2180
  %v2182 = vrcp.pop %v2179
  %v2183 = vmul.f32 1.0, %v2182
  %v2184 = vtanh.pop %v2170
  %v2185 = vtanh.pop %v2171
  %v2186 = vmul.f32 %v2181, %v2053
  %v2187 = vmul.f32 %v2183, %v2054
  %2190 = vrot.lane.b32.xlu0 %v2184, 64
  %v2191 = vpop.permute.xlu0 %2190
  %2192 = vrot.lane.b32.xlu0 %v2185, 64
  %v2193 = vpop.permute.xlu0 %2192
  %v2196 = vmul.f32 %v2181, %v2191
  %v2197 = vmul.f32 %v2183, %v2193
  %2200 = vrot.lane.b32.xlu0 %v2196, 32
  %v2201 = vpop.permute.xlu0 %2200
  %2202 = vrot.lane.b32.xlu0 %v2197, 32
  %v2203 = vpop.permute.xlu0 %2202
  %v2206 = vadd.f32 %v2186, %v2201
  %v2207 = vadd.f32 %v2187, %v2203
  %v2208 = vtanh.pop %v2206
  %v2209 = vtanh.pop %v2207
  %2212 = vrot.lane.b32.xlu0 %v2208, 64
  %v2213 = vpop.permute.xlu0 %2212
  %2214 = vrot.lane.b32.xlu0 %v2209, 64
  %v2215 = vpop.permute.xlu0 %2214
  %v2218 = vmul.f32 %v2181, %v2213
  %v2219 = vmul.f32 %v2183, %v2215
  %vm2220 = vcmp.gt.f32.partialorder %v2218, 0.0
  %vm2221 = vcmp.gt.f32.partialorder %v2219, 0.0
  %v2222 = vmul.f32 %v2218, 0.25
  %v2223 = vmul.f32 %v2219, 0.25
  %v2224 = vsel %vm2220, %v2218, %v2222
  %v2225 = vsel %vm2221, %v2219, %v2223
  %2228 = vrot.lane.b32.xlu0 %v2224, 32
  %v2229 = vpop.permute.xlu0 %2228
  %2230 = vrot.lane.b32.xlu0 %v2225, 32
  %v2231 = vpop.permute.xlu0 %2230
  %2234 = vst.msk [vmem:[%s7 + $0x30] sm:$0xff] %vm53, %v2229
  %2235 = vst.msk [vmem:[%s7 + $0x38] sm:$0xff] %vm53, %v2231
  %v2236 = vld [vmem:[#allocation2 + $0x40] sm:$0xff]
  %v2237 = vld [vmem:[#allocation2 + $0x48] sm:$0xff]
  %2240 = vrot.lane.b32.xlu0 %v2218, 32
  %v2241 = vpop.permute.xlu0 %2240
  %2242 = vrot.lane.b32.xlu0 %v2219, 32
  %v2243 = vpop.permute.xlu0 %2242
  %v2244 = vsel %vm53, %v2241, 0
  %v2246 = vsel %vm53, %v2243, 0
  %2248 = vmatprep.subr.mxu0 0.0
  %2249 = vmatpush1.msra.mxu0 %v1630
  %2250 = vmatprep.subr.mxu0 0.0
  %2251 = vmatpush1.msra.mxu0 %v1631
  %2252 = vmatprep.subr.mxu0 0.0
  %2253 = vmatpush1.msra.mxu0 %v1632
  %2254 = vmatprep.subr.mxu0 0.0
  %2255 = vmatpush1.msra.mxu0 %v1633
  %2256 = vmatprep.subr.mxu0 0.0
  %2257 = vmatpush1.msra.mxu0 0.0
  %2258 = vmatprep.subr.mxu0 0.0
  %2259 = vmatpush1.msra.mxu0 0.0
  %2260 = vmatprep.subr.mxu0 0.0
  %2261 = vmatpush1.msra.mxu0 0.0
  %2262 = vmatprep.subr.mxu0 0.0
  %2263 = vmatpush1.msra.mxu0 0.0
  %2264 = vmatprep.subr.mxu0 0.0
  %2265 = vmatpush1.msra.mxu0 0.0
  %2266 = vmatprep.subr.mxu0 0.0
  %2267 = vmatpush1.msra.mxu0 0.0
  %2268 = vmatprep.subr.mxu0 0.0
  %2269 = vmatpush1.msra.mxu0 0.0
  %2270 = vmatprep.subr.mxu0 0.0
  %2271 = vmatpush1.msra.mxu0 0.0
  %2272 = vmatprep.subr.mxu0 0.0
  %2273 = vmatpush1.msra.mxu0 0.0
  %2274 = vmatprep.subr.mxu0 0.0
  %2275 = vmatpush1.msra.mxu0 0.0
  %2276 = vmatprep.subr.mxu0 0.0
  %2277 = vmatpush1.msra.mxu0 0.0
  %2278 = vmatprep.subr.mxu0 0.0
  %2279 = vmatpush1.msra.mxu0 0.0
  %2280 = vmatprep.subr.mxu0 0.0
  %2281 = vmatpush1.msra.mxu0 0.0
  %2282 = vmatprep.subr.mxu0 0.0
  %2283 = vmatpush1.msra.mxu0 0.0
  %2284 = vmatprep.subr.mxu0 0.0
  %2285 = vmatpush1.msra.mxu0 0.0
  %2286 = vmatprep.subr.mxu0 0.0
  %2287 = vmatpush1.msra.mxu0 0.0
  %2288 = vmatprep.subr.mxu0 0.0
  %2289 = vmatpush1.msra.mxu0 0.0
  %2290 = vmatprep.subr.mxu0 0.0
  %2291 = vmatpush1.msra.mxu0 0.0
  %2292 = vmatprep.subr.mxu0 0.0
  %2293 = vmatpush1.msra.mxu0 0.0
  %2294 = vmatprep.subr.mxu0 0.0
  %2295 = vmatpush1.msra.mxu0 0.0
  %2296 = vmatprep.subr.mxu0 0.0
  %2297 = vmatpush1.msra.mxu0 0.0
  %2298 = vmatprep.subr.mxu0 0.0
  %2299 = vmatpush1.msra.mxu0 0.0
  %2300 = vmatprep.subr.mxu0 0.0
  %2301 = vmatpush1.msra.mxu0 0.0
  %2302 = vmatprep.subr.mxu0 0.0
  %2303 = vmatpush1.msra.mxu0 0.0
  %2304 = vmatprep.subr.mxu0 0.0
  %2305 = vmatpush1.msra.mxu0 0.0
  %2306 = vmatprep.subr.mxu0 0.0
  %2307 = vmatpush1.msra.mxu0 0.0
  %2308 = vmatprep.subr.mxu0 0.0
  %2309 = vmatpush1.msra.mxu0 0.0
  %2310 = vmatprep.subr.mxu0 0.0
  %2311 = vmatpush1.msra.mxu0 0.0
  %2312 = vmatprep.mubr.f32.mxu0 0.0
  %2313 = vmatmul.mubr.f32.gmra.mrb[0].mxu0 %v2244
  %v2314 = vpop.f32.mrb[0].mxu0
  %v2315 = vadd.f32 0.0, %v2314
  %v2316 = vpop.f32.mrb[0].mxu0
  %2317 = vmatprep.mubr.f32.mxu0 0.0
  %2318 = vmatmul.mubr.f32.gmra.mrb[0].mxu0 %v2246
  %v2319 = vpop.f32.mrb[0].mxu0
  %v2320 = vadd.f32 0.0, %v2319
  %v2321 = vpop.f32.mrb[0].mxu0
  %2322 = vdwg.mxu0
  %v2323 = vadd.f32 %v2236, %v2315
  %v2324 = vadd.f32 %v2237, %v2320
  %v2325 = vxor.u32 %v2323, 2147483648
  %v2326 = vxor.u32 %v2324, 2147483648
  %v2327 = vmul.f32 %v2325, 1.442695
  %v2328 = vpow.pop %v2327
  %v2329 = vmul.f32 %v2326, 1.442695
  %v2330 = vpow.pop %v2329
  %v2331 = vadd.f32 %v2328, 1.0
  %v2332 = vadd.f32 %v2330, 1.0
  %v2333 = vrcp.pop %v2331
  %v2334 = vmul.f32 1.0, %v2333
  %v2335 = vrcp.pop %v2332
  %v2336 = vmul.f32 1.0, %v2335
  %v2337 = vtanh.pop %v2323
  %v2338 = vtanh.pop %v2324
  %v2339 = vmul.f32 %v2334, %v2206
  %v2340 = vmul.f32 %v2336, %v2207
  %2343 = vrot.lane.b32.xlu0 %v2337, 64
  %v2344 = vpop.permute.xlu0 %2343
  %2345 = vrot.lane.b32.xlu0 %v2338, 64
  %v2346 = vpop.permute.xlu0 %2345
  %v2349 = vmul.f32 %v2334, %v2344
  %v2350 = vmul.f32 %v2336, %v2346
  %2353 = vrot.lane.b32.xlu0 %v2349, 32
  %v2354 = vpop.permute.xlu0 %2353
  %2355 = vrot.lane.b32.xlu0 %v2350, 32
  %v2356 = vpop.permute.xlu0 %2355
  %v2359 = vadd.f32 %v2339, %v2354
  %v2360 = vadd.f32 %v2340, %v2356
  %v2361 = vtanh.pop %v2359
  %v2362 = vtanh.pop %v2360
  %2365 = vrot.lane.b32.xlu0 %v2361, 64
  %v2366 = vpop.permute.xlu0 %2365
  %2367 = vrot.lane.b32.xlu0 %v2362, 64
  %v2368 = vpop.permute.xlu0 %2367
  %v2371 = vmul.f32 %v2334, %v2366
  %v2372 = vmul.f32 %v2336, %v2368
  %vm2373 = vcmp.gt.f32.partialorder %v2371, 0.0
  %vm2374 = vcmp.gt.f32.partialorder %v2372, 0.0
  %v2375 = vmul.f32 %v2371, 0.25
  %v2376 = vmul.f32 %v2372, 0.25
  %v2377 = vsel %vm2373, %v2371, %v2375
  %v2378 = vsel %vm2374, %v2372, %v2376
  %2381 = vrot.lane.b32.xlu0 %v2377, 32
  %v2382 = vpop.permute.xlu0 %2381
  %2383 = vrot.lane.b32.xlu0 %v2378, 32
  %v2384 = vpop.permute.xlu0 %2383
  %2387 = vst.msk [vmem:[%s7 + $0x40] sm:$0xff] %vm53, %v2382
  %2388 = vst.msk [vmem:[%s7 + $0x48] sm:$0xff] %vm53, %v2384
  %v2389 = vld [vmem:[#allocation2 + $0x50] sm:$0xff]
  %v2390 = vld [vmem:[#allocation2 + $0x58] sm:$0xff]
  %2393 = vrot.lane.b32.xlu0 %v2371, 32
  %v2394 = vpop.permute.xlu0 %2393
  %2395 = vrot.lane.b32.xlu0 %v2372, 32
  %v2396 = vpop.permute.xlu0 %2395
  %v2397 = vsel %vm53, %v2394, 0
  %v2399 = vsel %vm53, %v2396, 0
  %2401 = vmatprep.subr.mxu0 0.0
  %2402 = vmatpush1.msra.mxu0 %v1630
  %2403 = vmatprep.subr.mxu0 0.0
  %2404 = vmatpush1.msra.mxu0 %v1631
  %2405 = vmatprep.subr.mxu0 0.0
  %2406 = vmatpush1.msra.mxu0 %v1632
  %2407 = vmatprep.subr.mxu0 0.0
  %2408 = vmatpush1.msra.mxu0 %v1633
  %2409 = vmatprep.subr.mxu0 0.0
  %2410 = vmatpush1.msra.mxu0 0.0
  %2411 = vmatprep.subr.mxu0 0.0
  %2412 = vmatpush1.msra.mxu0 0.0
  %2413 = vmatprep.subr.mxu0 0.0
  %2414 = vmatpush1.msra.mxu0 0.0
  %2415 = vmatprep.subr.mxu0 0.0
  %2416 = vmatpush1.msra.mxu0 0.0
  %2417 = vmatprep.subr.mxu0 0.0
  %2418 = vmatpush1.msra.mxu0 0.0
  %2419 = vmatprep.subr.mxu0 0.0
  %2420 = vmatpush1.msra.mxu0 0.0
  %2421 = vmatprep.subr.mxu0 0.0
  %2422 = vmatpush1.msra.mxu0 0.0
  %2423 = vmatprep.subr.mxu0 0.0
  %2424 = vmatpush1.msra.mxu0 0.0
  %2425 = vmatprep.subr.mxu0 0.0
  %2426 = vmatpush1.msra.mxu0 0.0
  %2427 = vmatprep.subr.mxu0 0.0
  %2428 = vmatpush1.msra.mxu0 0.0
  %2429 = vmatprep.subr.mxu0 0.0
  %2430 = vmatpush1.msra.mxu0 0.0
  %2431 = vmatprep.subr.mxu0 0.0
  %2432 = vmatpush1.msra.mxu0 0.0
  %2433 = vmatprep.subr.mxu0 0.0
  %2434 = vmatpush1.msra.mxu0 0.0
  %2435 = vmatprep.subr.mxu0 0.0
  %2436 = vmatpush1.msra.mxu0 0.0
  %2437 = vmatprep.subr.mxu0 0.0
  %2438 = vmatpush1.msra.mxu0 0.0
  %2439 = vmatprep.subr.mxu0 0.0
  %2440 = vmatpush1.msra.mxu0 0.0
  %2441 = vmatprep.subr.mxu0 0.0
  %2442 = vmatpush1.msra.mxu0 0.0
  %2443 = vmatprep.subr.mxu0 0.0
  %2444 = vmatpush1.msra.mxu0 0.0
  %2445 = vmatprep.subr.mxu0 0.0
  %2446 = vmatpush1.msra.mxu0 0.0
  %2447 = vmatprep.subr.mxu0 0.0
  %2448 = vmatpush1.msra.mxu0 0.0
  %2449 = vmatprep.subr.mxu0 0.0
  %2450 = vmatpush1.msra.mxu0 0.0
  %2451 = vmatprep.subr.mxu0 0.0
  %2452 = vmatpush1.msra.mxu0 0.0
  %2453 = vmatprep.subr.mxu0 0.0
  %2454 = vmatpush1.msra.mxu0 0.0
  %2455 = vmatprep.subr.mxu0 0.0
  %2456 = vmatpush1.msra.mxu0 0.0
  %2457 = vmatprep.subr.mxu0 0.0
  %2458 = vmatpush1.msra.mxu0 0.0
  %2459 = vmatprep.subr.mxu0 0.0
  %2460 = vmatpush1.msra.mxu0 0.0
  %2461 = vmatprep.subr.mxu0 0.0
  %2462 = vmatpush1.msra.mxu0 0.0
  %2463 = vmatprep.subr.mxu0 0.0
  %2464 = vmatpush1.msra.mxu0 0.0
  %2465 = vmatprep.mubr.f32.mxu0 0.0
  %2466 = vmatmul.mubr.f32.gmra.mrb[0].mxu0 %v2397
  %v2467 = vpop.f32.mrb[0].mxu0
  %v2468 = vadd.f32 0.0, %v2467
  %v2469 = vpop.f32.mrb[0].mxu0
  %2470 = vmatprep.mubr.f32.mxu0 0.0
  %2471 = vmatmul.mubr.f32.gmra.mrb[0].mxu0 %v2399
  %v2472 = vpop.f32.mrb[0].mxu0
  %v2473 = vadd.f32 0.0, %v2472
  %v2474 = vpop.f32.mrb[0].mxu0
  %2475 = vdwg.mxu0
  %v2476 = vadd.f32 %v2389, %v2468
  %v2477 = vadd.f32 %v2390, %v2473
  %v2478 = vxor.u32 %v2476, 2147483648
  %v2479 = vxor.u32 %v2477, 2147483648
  %v2480 = vmul.f32 %v2478, 1.442695
  %v2481 = vpow.pop %v2480
  %v2482 = vmul.f32 %v2479, 1.442695
  %v2483 = vpow.pop %v2482
  %v2484 = vadd.f32 %v2481, 1.0
  %v2485 = vadd.f32 %v2483, 1.0
  %v2486 = vrcp.pop %v2484
  %v2487 = vmul.f32 1.0, %v2486
  %v2488 = vrcp.pop %v2485
  %v2489 = vmul.f32 1.0, %v2488
  %v2490 = vtanh.pop %v2476
  %v2491 = vtanh.pop %v2477
  %v2492 = vmul.f32 %v2487, %v2359
  %v2493 = vmul.f32 %v2489, %v2360
  %2496 = vrot.lane.b32.xlu0 %v2490, 64
  %v2497 = vpop.permute.xlu0 %2496
  %2498 = vrot.lane.b32.xlu0 %v2491, 64
  %v2499 = vpop.permute.xlu0 %2498
  %v2502 = vmul.f32 %v2487, %v2497
  %v2503 = vmul.f32 %v2489, %v2499
  %2506 = vrot.lane.b32.xlu0 %v2502, 32
  %v2507 = vpop.permute.xlu0 %2506
  %2508 = vrot.lane.b32.xlu0 %v2503, 32
  %v2509 = vpop.permute.xlu0 %2508
  %v2512 = vadd.f32 %v2492, %v2507
  %v2513 = vadd.f32 %v2493, %v2509
  %v2514 = vtanh.pop %v2512
  %v2515 = vtanh.pop %v2513
  %2518 = vrot.lane.b32.xlu0 %v2514, 64
  %v2519 = vpop.permute.xlu0 %2518
  %2520 = vrot.lane.b32.xlu0 %v2515, 64
  %v2521 = vpop.permute.xlu0 %2520
  %v2524 = vmul.f32 %v2487, %v2519
  %v2525 = vmul.f32 %v2489, %v2521
  %vm2526 = vcmp.gt.f32.partialorder %v2524, 0.0
  %vm2527 = vcmp.gt.f32.partialorder %v2525, 0.0
  %v2528 = vmul.f32 %v2524, 0.25
  %v2529 = vmul.f32 %v2525, 0.25
  %v2530 = vsel %vm2526, %v2524, %v2528
  %v2531 = vsel %vm2527, %v2525, %v2529
  %2534 = vrot.lane.b32.xlu0 %v2530, 32
  %v2535 = vpop.permute.xlu0 %2534
  %2536 = vrot.lane.b32.xlu0 %v2531, 32
  %v2537 = vpop.permute.xlu0 %2536
  %2540 = vst.msk [vmem:[%s7 + $0x50] sm:$0xff] %vm53, %v2535
  %2541 = vst.msk [vmem:[%s7 + $0x58] sm:$0xff] %vm53, %v2537
  %v2542 = vld [vmem:[#allocation2 + $0x60] sm:$0xff]
  %v2543 = vld [vmem:[#allocation2 + $0x68] sm:$0xff]
  %2546 = vrot.lane.b32.xlu0 %v2524, 32
  %v2547 = vpop.permute.xlu0 %2546
  %2548 = vrot.lane.b32.xlu0 %v2525, 32
  %v2549 = vpop.permute.xlu0 %2548
  %v2550 = vsel %vm53, %v2547, 0
  %v2552 = vsel %vm53, %v2549, 0
  %2554 = vmatprep.subr.mxu0 0.0
  %2555 = vmatpush1.msra.mxu0 %v1630
  %2556 = vmatprep.subr.mxu0 0.0
  %2557 = vmatpush1.msra.mxu0 %v1631
  %2558 = vmatprep.subr.mxu0 0.0
  %2559 = vmatpush1.msra.mxu0 %v1632
  %2560 = vmatprep.subr.mxu0 0.0
  %2561 = vmatpush1.msra.mxu0 %v1633
  %2562 = vmatprep.subr.mxu0 0.0
  %2563 = vmatpush1.msra.mxu0 0.0
  %2564 = vmatprep.subr.mxu0 0.0
  %2565 = vmatpush1.msra.mxu0 0.0
  %2566 = vmatprep.subr.mxu0 0.0
  %2567 = vmatpush1.msra.mxu0 0.0
  %2568 = vmatprep.subr.mxu0 0.0
  %2569 = vmatpush1.msra.mxu0 0.0
  %2570 = vmatprep.subr.mxu0 0.0
  %2571 = vmatpush1.msra.mxu0 0.0
  %2572 = vmatprep.subr.mxu0 0.0
  %2573 = vmatpush1.msra.mxu0 0.0
  %2574 = vmatprep.subr.mxu0 0.0
  %2575 = vmatpush1.msra.mxu0 0.0
  %2576 = vmatprep.subr.mxu0 0.0
  %2577 = vmatpush1.msra.mxu0 0.0
  %2578 = vmatprep.subr.mxu0 0.0
  %2579 = vmatpush1.msra.mxu0 0.0
  %2580 = vmatprep.subr.mxu0 0.0
  %2581 = vmatpush1.msra.mxu0 0.0
  %2582 = vmatprep.subr.mxu0 0.0
  %2583 = vmatpush1.msra.mxu0 0.0
  %2584 = vmatprep.subr.mxu0 0.0
  %2585 = vmatpush1.msra.mxu0 0.0
  %2586 = vmatprep.subr.mxu0 0.0
  %2587 = vmatpush1.msra.mxu0 0.0
  %2588 = vmatprep.subr.mxu0 0.0
  %2589 = vmatpush1.msra.mxu0 0.0
  %2590 = vmatprep.subr.mxu0 0.0
  %2591 = vmatpush1.msra.mxu0 0.0
  %2592 = vmatprep.subr.mxu0 0.0
  %2593 = vmatpush1.msra.mxu0 0.0
  %2594 = vmatprep.subr.mxu0 0.0
  %2595 = vmatpush1.msra.mxu0 0.0
  %2596 = vmatprep.subr.mxu0 0.0
  %2597 = vmatpush1.msra.mxu0 0.0
  %2598 = vmatprep.subr.mxu0 0.0
  %2599 = vmatpush1.msra.mxu0 0.0
  %2600 = vmatprep.subr.mxu0 0.0
  %2601 = vmatpush1.msra.mxu0 0.0
  %2602 = vmatprep.subr.mxu0 0.0
  %2603 = vmatpush1.msra.mxu0 0.0
  %2604 = vmatprep.subr.mxu0 0.0
  %2605 = vmatpush1.msra.mxu0 0.0
  %2606 = vmatprep.subr.mxu0 0.0
  %2607 = vmatpush1.msra.mxu0 0.0
  %2608 = vmatprep.subr.mxu0 0.0
  %2609 = vmatpush1.msra.mxu0 0.0
  %2610 = vmatprep.subr.mxu0 0.0
  %2611 = vmatpush1.msra.mxu0 0.0
  %2612 = vmatprep.subr.mxu0 0.0
  %2613 = vmatpush1.msra.mxu0 0.0
  %2614 = vmatprep.subr.mxu0 0.0
  %2615 = vmatpush1.msra.mxu0 0.0
  %2616 = vmatprep.subr.mxu0 0.0
  %2617 = vmatpush1.msra.mxu0 0.0
  %2618 = vmatprep.mubr.f32.mxu0 0.0
  %2619 = vmatmul.mubr.f32.gmra.mrb[0].mxu0 %v2550
  %v2620 = vpop.f32.mrb[0].mxu0
  %v2621 = vadd.f32 0.0, %v2620
  %v2622 = vpop.f32.mrb[0].mxu0
  %2623 = vmatprep.mubr.f32.mxu0 0.0
  %2624 = vmatmul.mubr.f32.gmra.mrb[0].mxu0 %v2552
  %v2625 = vpop.f32.mrb[0].mxu0
  %v2626 = vadd.f32 0.0, %v2625
  %v2627 = vpop.f32.mrb[0].mxu0
  %2628 = vdwg.mxu0
  %v2629 = vadd.f32 %v2542, %v2621
  %v2630 = vadd.f32 %v2543, %v2626
  %v2631 = vxor.u32 %v2629, 2147483648
  %v2632 = vxor.u32 %v2630, 2147483648
  %v2633 = vmul.f32 %v2631, 1.442695
  %v2634 = vpow.pop %v2633
  %v2635 = vmul.f32 %v2632, 1.442695
  %v2636 = vpow.pop %v2635
  %v2637 = vadd.f32 %v2634, 1.0
  %v2638 = vadd.f32 %v2636, 1.0
  %v2639 = vrcp.pop %v2637
  %v2640 = vmul.f32 1.0, %v2639
  %v2641 = vrcp.pop %v2638
  %v2642 = vmul.f32 1.0, %v2641
  %v2643 = vtanh.pop %v2629
  %v2644 = vtanh.pop %v2630
  %v2645 = vmul.f32 %v2640, %v2512
  %v2646 = vmul.f32 %v2642, %v2513
  %2649 = vrot.lane.b32.xlu0 %v2643, 64
  %v2650 = vpop.permute.xlu0 %2649
  %2651 = vrot.lane.b32.xlu0 %v2644, 64
  %v2652 = vpop.permute.xlu0 %2651
  %v2655 = vmul.f32 %v2640, %v2650
  %v2656 = vmul.f32 %v2642, %v2652
  %2659 = vrot.lane.b32.xlu0 %v2655, 32
  %v2660 = vpop.permute.xlu0 %2659
  %2661 = vrot.lane.b32.xlu0 %v2656, 32
  %v2662 = vpop.permute.xlu0 %2661
  %v2665 = vadd.f32 %v2645, %v2660
  %v2666 = vadd.f32 %v2646, %v2662
  %v2667 = vtanh.pop %v2665
  %v2668 = vtanh.pop %v2666
  %2671 = vrot.lane.b32.xlu0 %v2667, 64
  %v2672 = vpop.permute.xlu0 %2671
  %2673 = vrot.lane.b32.xlu0 %v2668, 64
  %v2674 = vpop.permute.xlu0 %2673
  %v2677 = vmul.f32 %v2640, %v2672
  %v2678 = vmul.f32 %v2642, %v2674
  %vm2679 = vcmp.gt.f32.partialorder %v2677, 0.0
  %vm2680 = vcmp.gt.f32.partialorder %v2678, 0.0
  %v2681 = vmul.f32 %v2677, 0.25
  %v2682 = vmul.f32 %v2678, 0.25
  %v2683 = vsel %vm2679, %v2677, %v2681
  %v2684 = vsel %vm2680, %v2678, %v2682
  %2687 = vrot.lane.b32.xlu0 %v2683, 32
  %v2688 = vpop.permute.xlu0 %2687
  %2689 = vrot.lane.b32.xlu0 %v2684, 32
  %v2690 = vpop.permute.xlu0 %2689
  %2693 = vst.msk [vmem:[%s7 + $0x60] sm:$0xff] %vm53, %v2688
  %2694 = vst.msk [vmem:[%s7 + $0x68] sm:$0xff] %vm53, %v2690
  %v2695 = vld [vmem:[#allocation2 + $0x70] sm:$0xff]
  %v2696 = vld [vmem:[#allocation2 + $0x78] sm:$0xff]
  %2699 = vrot.lane.b32.xlu0 %v2677, 32
  %v2700 = vpop.permute.xlu0 %2699
  %2701 = vrot.lane.b32.xlu0 %v2678, 32
  %v2702 = vpop.permute.xlu0 %2701
  %v2703 = vsel %vm53, %v2700, 0
  %v2705 = vsel %vm53, %v2702, 0
  %2707 = vmatprep.subr.mxu0 0.0
  %2708 = vmatpush1.msra.mxu0 %v1630
  %2709 = vmatprep.subr.mxu0 0.0
  %2710 = vmatpush1.msra.mxu0 %v1631
  %2711 = vmatprep.subr.mxu0 0.0
  %2712 = vmatpush1.msra.mxu0 %v1632
  %2713 = vmatprep.subr.mxu0 0.0
  %2714 = vmatpush1.msra.mxu0 %v1633
  %2715 = vmatprep.subr.mxu0 0.0
  %2716 = vmatpush1.msra.mxu0 0.0
  %2717 = vmatprep.subr.mxu0 0.0
  %2718 = vmatpush1.msra.mxu0 0.0
  %2719 = vmatprep.subr.mxu0 0.0
  %2720 = vmatpush1.msra.mxu0 0.0
  %2721 = vmatprep.subr.mxu0 0.0
  %2722 = vmatpush1.msra.mxu0 0.0
  %2723 = vmatprep.subr.mxu0 0.0
  %2724 = vmatpush1.msra.mxu0 0.0
  %2725 = vmatprep.subr.mxu0 0.0
  %2726 = vmatpush1.msra.mxu0 0.0
  %2727 = vmatprep.subr.mxu0 0.0
  %2728 = vmatpush1.msra.mxu0 0.0
  %2729 = vmatprep.subr.mxu0 0.0
  %2730 = vmatpush1.msra.mxu0 0.0
  %2731 = vmatprep.subr.mxu0 0.0
  %2732 = vmatpush1.msra.mxu0 0.0
  %2733 = vmatprep.subr.mxu0 0.0
  %2734 = vmatpush1.msra.mxu0 0.0
  %2735 = vmatprep.subr.mxu0 0.0
  %2736 = vmatpush1.msra.mxu0 0.0
  %2737 = vmatprep.subr.mxu0 0.0
  %2738 = vmatpush1.msra.mxu0 0.0
  %2739 = vmatprep.subr.mxu0 0.0
  %2740 = vmatpush1.msra.mxu0 0.0
  %2741 = vmatprep.subr.mxu0 0.0
  %2742 = vmatpush1.msra.mxu0 0.0
  %2743 = vmatprep.subr.mxu0 0.0
  %2744 = vmatpush1.msra.mxu0 0.0
  %2745 = vmatprep.subr.mxu0 0.0
  %2746 = vmatpush1.msra.mxu0 0.0
  %2747 = vmatprep.subr.mxu0 0.0
  %2748 = vmatpush1.msra.mxu0 0.0
  %2749 = vmatprep.subr.mxu0 0.0
  %2750 = vmatpush1.msra.mxu0 0.0
  %2751 = vmatprep.subr.mxu0 0.0
  %2752 = vmatpush1.msra.mxu0 0.0
  %2753 = vmatprep.subr.mxu0 0.0
  %2754 = vmatpush1.msra.mxu0 0.0
  %2755 = vmatprep.subr.mxu0 0.0
  %2756 = vmatpush1.msra.mxu0 0.0
  %2757 = vmatprep.subr.mxu0 0.0
  %2758 = vmatpush1.msra.mxu0 0.0
  %2759 = vmatprep.subr.mxu0 0.0
  %2760 = vmatpush1.msra.mxu0 0.0
  %2761 = vmatprep.subr.mxu0 0.0
  %2762 = vmatpush1.msra.mxu0 0.0
  %2763 = vmatprep.subr.mxu0 0.0
  %2764 = vmatpush1.msra.mxu0 0.0
  %2765 = vmatprep.subr.mxu0 0.0
  %2766 = vmatpush1.msra.mxu0 0.0
  %2767 = vmatprep.subr.mxu0 0.0
  %2768 = vmatpush1.msra.mxu0 0.0
  %2769 = vmatprep.subr.mxu0 0.0
  %2770 = vmatpush1.msra.mxu0 0.0
  %2771 = vmatprep.mubr.f32.mxu0 0.0
  %2772 = vmatmul.mubr.f32.gmra.mrb[0].mxu0 %v2703
  %v2773 = vpop.f32.mrb[0].mxu0
  %v2774 = vadd.f32 0.0, %v2773
  %v2775 = vpop.f32.mrb[0].mxu0
  %2776 = vmatprep.mubr.f32.mxu0 0.0
  %2777 = vmatmul.mubr.f32.gmra.mrb[0].mxu0 %v2705
  %v2778 = vpop.f32.mrb[0].mxu0
  %v2779 = vadd.f32 0.0, %v2778
  %v2780 = vpop.f32.mrb[0].mxu0
  %2781 = vdwg.mxu0
  %v2782 = vadd.f32 %v2695, %v2774
  %v2783 = vadd.f32 %v2696, %v2779
  %v2784 = vxor.u32 %v2782, 2147483648
  %v2785 = vxor.u32 %v2783, 2147483648
  %v2786 = vmul.f32 %v2784, 1.442695
  %v2787 = vpow.pop %v2786
  %v2788 = vmul.f32 %v2785, 1.442695
  %v2789 = vpow.pop %v2788
  %v2790 = vadd.f32 %v2787, 1.0
  %v2791 = vadd.f32 %v2789, 1.0
  %v2792 = vrcp.pop %v2790
  %v2793 = vmul.f32 1.0, %v2792
  %v2794 = vrcp.pop %v2791
  %v2795 = vmul.f32 1.0, %v2794
  %v2796 = vtanh.pop %v2782
  %v2797 = vtanh.pop %v2783
  %v2798 = vmul.f32 %v2793, %v2665
  %v2799 = vmul.f32 %v2795, %v2666
  %2802 = vrot.lane.b32.xlu0 %v2796, 64
  %v2803 = vpop.permute.xlu0 %2802
  %2804 = vrot.lane.b32.xlu0 %v2797, 64
  %v2805 = vpop.permute.xlu0 %2804
  %v2808 = vmul.f32 %v2793, %v2803
  %v2809 = vmul.f32 %v2795, %v2805
  %2812 = vrot.lane.b32.xlu0 %v2808, 32
  %v2813 = vpop.permute.xlu0 %2812
  %2814 = vrot.lane.b32.xlu0 %v2809, 32
  %v2815 = vpop.permute.xlu0 %2814
  %v2818 = vadd.f32 %v2798, %v2813
  %v2819 = vadd.f32 %v2799, %v2815
  %v2820 = vtanh.pop %v2818
  %v2821 = vtanh.pop %v2819
  %2824 = vrot.lane.b32.xlu0 %v2820, 64
  %v2825 = vpop.permute.xlu0 %2824
  %2826 = vrot.lane.b32.xlu0 %v2821, 64
  %v2827 = vpop.permute.xlu0 %2826
  %v2830 = vmul.f32 %v2793, %v2825
  %v2831 = vmul.f32 %v2795, %v2827
  %vm2832 = vcmp.gt.f32.partialorder %v2830, 0.0
  %vm2833 = vcmp.gt.f32.partialorder %v2831, 0.0
  %v2834 = vmul.f32 %v2830, 0.25
  %v2835 = vmul.f32 %v2831, 0.25
  %v2836 = vsel %vm2832, %v2830, %v2834
  %v2837 = vsel %vm2833, %v2831, %v2835
  %2840 = vrot.lane.b32.xlu0 %v2836, 32
  %v2841 = vpop.permute.xlu0 %2840
  %2842 = vrot.lane.b32.xlu0 %v2837, 32
  %v2843 = vpop.permute.xlu0 %2842
  %2846 = vst.msk [vmem:[%s7 + $0x70] sm:$0xff] %vm53, %v2841
  %2847 = vst.msk [vmem:[%s7 + $0x78] sm:$0xff] %vm53, %v2843
  // Predicated region
  $region30: #{forward.6} parent=0 // pred_check
    _
  $region31: #{forward.6} parent=0 // pred_check_branch
    %2849 = sbr.rel (0) target = $region33
  $region32: #{forward.6} parent=0 // pred_region
    _
  $region33: #{forward.6} parent=0 // pred_fallthru
    _
  // Predicated region
  $region34: #{forward.6} parent=0 // pred_check
    _
  $region35: #{forward.6} parent=0 // pred_check_branch
    %2851 = sbr.rel (0) target = $region37
  $region36: #{forward.6} parent=0 // pred_region
    _
  $region37: #{forward.6} parent=0 // pred_fallthru
    _

// kernel: forward.7
$region0: #{forward.7}
  #allocation0 [shape = 'u32[]', space=smem, size = 0x4, offset = 0x4, fixed_abs, tag = 'smem constant byte address 0x4 - core index']
  #allocation1 [shape = 'u32[144,128]{1,0:T(1,128)}', space=vmem, size = 0x12000, scoped, tag = 'internal scratch']
  %s0 = inlined_call_operand.vmem [shape: f32[72,512], index: 0, kind: input, shape index: {}]
  %s1 = inlined_call_operand.vmem [shape: f32[12,72], index: 1, kind: input, shape index: {}]
  %s2 = inlined_call_operand.vmem [shape: f32[12,1], index: 2, kind: input, shape index: {}]
  %s3 = inlined_call_operand.vmem [shape: f32[512,512], index: 3, kind: input, shape index: {}]
  %s4 = inlined_call_operand.vmem [shape: f32[1,512], index: 4, kind: input, shape index: {}]
  %s5 = inlined_call_operand.vmem [shape: f32[512,32], index: 5, kind: input, shape index: {}]
  %s6 = inlined_call_operand.vmem [shape: f32[1,32], index: 6, kind: input, shape index: {}]
  %s7 = inlined_call_operand.vmem [shape: f32[12,32], index: 7, kind: output, shape index: {}]
  %s8 = sld [smem:[#allocation0]]
  $region38: #{forward.7} parent=0
    _
  %s10 = ssub.s32 1, %s8
  %s11 = scalar_select 0, %s10, %s8
  // Predicated region
  $region2: #{forward.7} parent=0 // pred_check
    _
  $region3: #{forward.7} parent=0 // pred_check_branch
    %13 = sbr.rel (0) target = $region5
  $region4: #{forward.7} parent=0 // pred_region
    _
  $region5: #{forward.7} parent=0 // pred_fallthru
    _
  // Predicated region
  $region6: #{forward.7} parent=0 // pred_check
    _
  $region7: #{forward.7} parent=0 // pred_check_branch
    %15 = sbr.rel (0) target = $region9
  $region8: #{forward.7} parent=0 // pred_region
    _
  $region9: #{forward.7} parent=0 // pred_fallthru
    _
  // Predicated region
  $region10: #{forward.7} parent=0 // pred_check
    _
  $region11: #{forward.7} parent=0 // pred_check_branch
    %17 = sbr.rel (0) target = $region13
  $region12: #{forward.7} parent=0 // pred_region
    _
  $region13: #{forward.7} parent=0 // pred_fallthru
    _
  // Predicated region
  $region14: #{forward.7} parent=0 // pred_check
    _
  $region15: #{forward.7} parent=0 // pred_check_branch
    %19 = sbr.rel (0) target = $region17
  $region16: #{forward.7} parent=0 // pred_region
    _
  $region17: #{forward.7} parent=0 // pred_fallthru
    _
  // Predicated region
  $region18: #{forward.7} parent=0 // pred_check
    _
  $region19: #{forward.7} parent=0 // pred_check_branch
    %21 = sbr.rel (0) target = $region21
  $region20: #{forward.7} parent=0 // pred_region
    _
  $region21: #{forward.7} parent=0 // pred_fallthru
    _
  // Predicated region
  $region22: #{forward.7} parent=0 // pred_check
    _
  $region23: #{forward.7} parent=0 // pred_check_branch
    %23 = sbr.rel (0) target = $region25
  $region24: #{forward.7} parent=0 // pred_region
    _
  $region25: #{forward.7} parent=0 // pred_fallthru
    _
  // Predicated region
  $region26: #{forward.7} parent=0 // pred_check
    _
  $region27: #{forward.7} parent=0 // pred_check_branch
    %25 = sbr.rel (0) target = $region29
  $region28: #{forward.7} parent=0 // pred_region
    _
  $region29: #{forward.7} parent=0 // pred_fallthru
    _
  %v26 = vld [vmem:[%s1] sm:$0xff]
  %v27 = vld [vmem:[%s1 + $0x8] sm:$0xf]
  %v28 = vld [vmem:[%s0] sm:$0xff]
  %v29 = vld [vmem:[%s0 + $0x8] sm:$0xff]
  %v30 = vld [vmem:[%s0 + $0x10] sm:$0xff]
  %v31 = vld [vmem:[%s0 + $0x18] sm:$0xff]
  %v32 = vld [vmem:[%s0 + $0x20] sm:$0xff]
  %v33 = vld [vmem:[%s0 + $0x28] sm:$0xff]
  %v34 = vld [vmem:[%s0 + $0x30] sm:$0xff]
  %v35 = vld [vmem:[%s0 + $0x38] sm:$0xff]
  %v36 = vld [vmem:[%s0 + $0x40] sm:$0xff]
  %v37 = vld [vmem:[%s0 + $0x48] sm:$0xff]
  %v38 = vld [vmem:[%s0 + $0x50] sm:$0xff]
  %v39 = vld [vmem:[%s0 + $0x58] sm:$0xff]
  %v40 = vld [vmem:[%s0 + $0x60] sm:$0xff]
  %v41 = vld [vmem:[%s0 + $0x68] sm:$0xff]
  %v42 = vld [vmem:[%s0 + $0x70] sm:$0xff]
  %v43 = vld [vmem:[%s0 + $0x78] sm:$0xff]
  %v44 = vld [vmem:[%s0 + $0x80] sm:$0xff]
  %v45 = vld [vmem:[%s0 + $0x88] sm:$0xff]
  %v46 = vld [vmem:[%s0 + $0x90] sm:$0xff]
  %v47 = vld [vmem:[%s0 + $0x98] sm:$0xff]
  %v48 = vld [vmem:[%s0 + $0xa0] sm:$0xff]
  %v49 = vld [vmem:[%s0 + $0xa8] sm:$0xff]
  %v50 = vld [vmem:[%s0 + $0xb0] sm:$0xff]
  %v51 = vld [vmem:[%s0 + $0xb8] sm:$0xff]
  %v52 = vld [vmem:[%s0 + $0xc0] sm:$0xff]
  %v53 = vld [vmem:[%s0 + $0xc8] sm:$0xff]
  %v54 = vld [vmem:[%s0 + $0xd0] sm:$0xff]
  %v55 = vld [vmem:[%s0 + $0xd8] sm:$0xff]
  %v56 = vld [vmem:[%s0 + $0xe0] sm:$0xff]
  %v57 = vld [vmem:[%s0 + $0xe8] sm:$0xff]
  %v58 = vld [vmem:[%s0 + $0xf0] sm:$0xff]
  %v59 = vld [vmem:[%s0 + $0xf8] sm:$0xff]
  %v60 = vld [vmem:[%s0 + $0x100] sm:$0xff]
  %v61 = vld [vmem:[%s0 + $0x108] sm:$0xff]
  %v62 = vld [vmem:[%s0 + $0x110] sm:$0xff]
  %v63 = vld [vmem:[%s0 + $0x118] sm:$0xff]
  %v64 = vld [vmem:[%s2] sm:$0xff]
  %v65 = vld [vmem:[%s2 + $0x8] sm:$0xf]
  %67 = vset.pattern.permute.xlu0 0
  %68 = vperm.xlu0 %67, %v64
  %v69 = vpop.permute.xlu0 %68
  %72 = vset.pattern.permute.xlu0 0
  %73 = vperm.xlu0 %72, %v65
  %v74 = vpop.permute.xlu0 %73
  %vm76 = vcmask 588800
  %v78 = vsel %vm76, %v26, 0
  %v81 = vsel %vm76, %v27, 0
  %83 = vmatprep.subr.mxu0 %v29
  %84 = vmatpush1.msra.mxu0 %v28
  %85 = vmatprep.subr.mxu0 %v33
  %86 = vmatpush1.msra.mxu0 %v32
  %87 = vmatprep.subr.mxu0 %v37
  %88 = vmatpush1.msra.mxu0 %v36
  %89 = vmatprep.subr.mxu0 %v41
  %90 = vmatpush1.msra.mxu0 %v40
  %91 = vmatprep.subr.mxu0 %v45
  %92 = vmatpush1.msra.mxu0 %v44
  %93 = vmatprep.subr.mxu0 %v49
  %94 = vmatpush1.msra.mxu0 %v48
  %95 = vmatprep.subr.mxu0 %v53
  %96 = vmatpush1.msra.mxu0 %v52
  %97 = vmatprep.subr.mxu0 %v57
  %98 = vmatpush1.msra.mxu0 %v56
  %99 = vmatprep.subr.mxu0 %v61
  %100 = vmatpush1.msra.mxu0 %v60
  %101 = vmatprep.subr.mxu0 0.0
  %102 = vmatpush1.msra.mxu0 0.0
  %103 = vmatprep.subr.mxu0 0.0
  %104 = vmatpush1.msra.mxu0 0.0
  %105 = vmatprep.subr.mxu0 0.0
  %106 = vmatpush1.msra.mxu0 0.0
  %107 = vmatprep.subr.mxu0 0.0
  %108 = vmatpush1.msra.mxu0 0.0
  %109 = vmatprep.subr.mxu0 0.0
  %110 = vmatpush1.msra.mxu0 0.0
  %111 = vmatprep.subr.mxu0 0.0
  %112 = vmatpush1.msra.mxu0 0.0
  %113 = vmatprep.subr.mxu0 0.0
  %114 = vmatpush1.msra.mxu0 0.0
  %115 = vmatprep.subr.mxu0 0.0
  %116 = vmatpush1.msra.mxu0 0.0
  %117 = vmatprep.subr.mxu0 0.0
  %118 = vmatpush1.msra.mxu0 0.0
  %119 = vmatprep.subr.mxu0 0.0
  %120 = vmatpush1.msra.mxu0 0.0
  %121 = vmatprep.subr.mxu0 0.0
  %122 = vmatpush1.msra.mxu0 0.0
  %123 = vmatprep.subr.mxu0 0.0
  %124 = vmatpush1.msra.mxu0 0.0
  %125 = vmatprep.subr.mxu0 0.0
  %126 = vmatpush1.msra.mxu0 0.0
  %127 = vmatprep.subr.mxu0 0.0
  %128 = vmatpush1.msra.mxu0 0.0
  %129 = vmatprep.subr.mxu0 0.0
  %130 = vmatpush1.msra.mxu0 0.0
  %131 = vmatprep.subr.mxu0 0.0
  %132 = vmatpush1.msra.mxu0 0.0
  %133 = vmatprep.subr.mxu0 0.0
  %134 = vmatpush1.msra.mxu0 0.0
  %135 = vmatprep.subr.mxu0 0.0
  %136 = vmatpush1.msra.mxu0 0.0
  %137 = vmatprep.subr.mxu0 0.0
  %138 = vmatpush1.msra.mxu0 0.0
  %139 = vmatprep.subr.mxu0 0.0
  %140 = vmatpush1.msra.mxu0 0.0
  %141 = vmatprep.subr.mxu0 0.0
  %142 = vmatpush1.msra.mxu0 0.0
  %143 = vmatprep.subr.mxu0 0.0
  %144 = vmatpush1.msra.mxu0 0.0
  %145 = vmatprep.subr.mxu0 0.0
  %146 = vmatpush1.msra.mxu0 0.0
  %147 = vmatprep.mubr.f32.mxu0 0.0
  %148 = vmatmul.mubr.f32.gmra.mrb[0].mxu0 %v78
  %v149 = vpop.f32.mrb[0].mxu0
  %v150 = vadd.f32 %v69, %v149
  %v151 = vpop.f32.mrb[0].mxu0
  %v152 = vadd.f32 %v69, %v151
  %153 = vmatprep.mubr.f32.mxu0 0.0
  %154 = vmatmul.mubr.f32.gmra.mrb[0].mxu0 %v81
  %v155 = vpop.f32.mrb[0].mxu0
  %v156 = vadd.f32 %v74, %v155
  %v157 = vpop.f32.mrb[0].mxu0
  %v158 = vadd.f32 %v74, %v157
  %159 = vdwg.mxu0
  %160 = vmatprep.subr.mxu0 %v31
  %161 = vmatpush1.msra.mxu0 %v30
  %162 = vmatprep.subr.mxu0 %v35
  %163 = vmatpush1.msra.mxu0 %v34
  %164 = vmatprep.subr.mxu0 %v39
  %165 = vmatpush1.msra.mxu0 %v38
  %166 = vmatprep.subr.mxu0 %v43
  %167 = vmatpush1.msra.mxu0 %v42
  %168 = vmatprep.subr.mxu0 %v47
  %169 = vmatpush1.msra.mxu0 %v46
  %170 = vmatprep.subr.mxu0 %v51
  %171 = vmatpush1.msra.mxu0 %v50
  %172 = vmatprep.subr.mxu0 %v55
  %173 = vmatpush1.msra.mxu0 %v54
  %174 = vmatprep.subr.mxu0 %v59
  %175 = vmatpush1.msra.mxu0 %v58
  %176 = vmatprep.subr.mxu0 %v63
  %177 = vmatpush1.msra.mxu0 %v62
  %178 = vmatprep.subr.mxu0 0.0
  %179 = vmatpush1.msra.mxu0 0.0
  %180 = vmatprep.subr.mxu0 0.0
  %181 = vmatpush1.msra.mxu0 0.0
  %182 = vmatprep.subr.mxu0 0.0
  %183 = vmatpush1.msra.mxu0 0.0
  %184 = vmatprep.subr.mxu0 0.0
  %185 = vmatpush1.msra.mxu0 0.0
  %186 = vmatprep.subr.mxu0 0.0
  %187 = vmatpush1.msra.mxu0 0.0
  %188 = vmatprep.subr.mxu0 0.0
  %189 = vmatpush1.msra.mxu0 0.0
  %190 = vmatprep.subr.mxu0 0.0
  %191 = vmatpush1.msra.mxu0 0.0
  %192 = vmatprep.subr.mxu0 0.0
  %193 = vmatpush1.msra.mxu0 0.0
  %194 = vmatprep.subr.mxu0 0.0
  %195 = vmatpush1.msra.mxu0 0.0
  %196 = vmatprep.subr.mxu0 0.0
  %197 = vmatpush1.msra.mxu0 0.0
  %198 = vmatprep.subr.mxu0 0.0
  %199 = vmatpush1.msra.mxu0 0.0
  %200 = vmatprep.subr.mxu0 0.0
  %201 = vmatpush1.msra.mxu0 0.0
  %202 = vmatprep.subr.mxu0 0.0
  %203 = vmatpush1.msra.mxu0 0.0
  %204 = vmatprep.subr.mxu0 0.0
  %205 = vmatpush1.msra.mxu0 0.0
  %206 = vmatprep.subr.mxu0 0.0
  %207 = vmatpush1.msra.mxu0 0.0
  %208 = vmatprep.subr.mxu0 0.0
  %209 = vmatpush1.msra.mxu0 0.0
  %210 = vmatprep.subr.mxu0 0.0
  %211 = vmatpush1.msra.mxu0 0.0
  %212 = vmatprep.subr.mxu0 0.0
  %213 = vmatpush1.msra.mxu0 0.0
  %214 = vmatprep.subr.mxu0 0.0
  %215 = vmatpush1.msra.mxu0 0.0
  %216 = vmatprep.subr.mxu0 0.0
  %217 = vmatpush1.msra.mxu0 0.0
  %218 = vmatprep.subr.mxu0 0.0
  %219 = vmatpush1.msra.mxu0 0.0
  %220 = vmatprep.subr.mxu0 0.0
  %221 = vmatpush1.msra.mxu0 0.0
  %222 = vmatprep.subr.mxu0 0.0
  %223 = vmatpush1.msra.mxu0 0.0
  %224 = vmatprep.mubr.f32.mxu0 0.0
  %225 = vmatmul.mubr.f32.gmra.mrb[0].mxu0 %v78
  %v226 = vpop.f32.mrb[0].mxu0
  %v227 = vadd.f32 %v69, %v226
  %v228 = vpop.f32.mrb[0].mxu0
  %v229 = vadd.f32 %v69, %v228
  %230 = vmatprep.mubr.f32.mxu0 0.0
  %231 = vmatmul.mubr.f32.gmra.mrb[0].mxu0 %v81
  %v232 = vpop.f32.mrb[0].mxu0
  %v233 = vadd.f32 %v74, %v232
  %v234 = vpop.f32.mrb[0].mxu0
  %v235 = vadd.f32 %v74, %v234
  %236 = vdwg.mxu0
  %vm237 = vcmp.gt.f32.partialorder %v150, 0.0
  %vm238 = vcmp.gt.f32.partialorder %v152, 0.0
  %vm239 = vcmp.gt.f32.partialorder %v227, 0.0
  %vm240 = vcmp.gt.f32.partialorder %v229, 0.0
  %vm241 = vcmp.gt.f32.partialorder %v156, 0.0
  %vm242 = vcmp.gt.f32.partialorder %v158, 0.0
  %vm243 = vcmp.gt.f32.partialorder %v233, 0.0
  %vm244 = vcmp.gt.f32.partialorder %v235, 0.0
  %v245 = vmul.f32 %v150, 0.25
  %v246 = vmul.f32 %v152, 0.25
  %v247 = vmul.f32 %v227, 0.25
  %v248 = vmul.f32 %v229, 0.25
  %v249 = vmul.f32 %v156, 0.25
  %v250 = vmul.f32 %v158, 0.25
  %v251 = vmul.f32 %v233, 0.25
  %v252 = vmul.f32 %v235, 0.25
  %v253 = vsel %vm237, %v150, %v245
  %v254 = vsel %vm238, %v152, %v246
  %v255 = vsel %vm239, %v227, %v247
  %v256 = vsel %vm240, %v229, %v248
  %v257 = vsel %vm241, %v156, %v249
  %v258 = vsel %vm242, %v158, %v250
  %v259 = vsel %vm243, %v233, %v251
  %v260 = vsel %vm244, %v235, %v252
  %v261 = vld [vmem:[%s3] sm:$0xff]
  %v262 = vld [vmem:[%s3 + $0x8] sm:$0xff]
  %v263 = vld [vmem:[%s3 + $0x10] sm:$0xff]
  %v264 = vld [vmem:[%s3 + $0x18] sm:$0xff]
  %v265 = vld [vmem:[%s3 + $0x20] sm:$0xff]
  %v266 = vld [vmem:[%s3 + $0x28] sm:$0xff]
  %v267 = vld [vmem:[%s3 + $0x30] sm:$0xff]
  %v268 = vld [vmem:[%s3 + $0x38] sm:$0xff]
  %v269 = vld [vmem:[%s3 + $0x40] sm:$0xff]
  %v270 = vld [vmem:[%s3 + $0x48] sm:$0xff]
  %v271 = vld [vmem:[%s3 + $0x50] sm:$0xff]
  %v272 = vld [vmem:[%s3 + $0x58] sm:$0xff]
  %v273 = vld [vmem:[%s3 + $0x60] sm:$0xff]
  %v274 = vld [vmem:[%s3 + $0x68] sm:$0xff]
  %v275 = vld [vmem:[%s3 + $0x70] sm:$0xff]
  %v276 = vld [vmem:[%s3 + $0x78] sm:$0xff]
  %v277 = vld [vmem:[%s3 + $0x80] sm:$0xff]
  %v278 = vld [vmem:[%s3 + $0x88] sm:$0xff]
  %v279 = vld [vmem:[%s3 + $0x90] sm:$0xff]
  %v280 = vld [vmem:[%s3 + $0x98] sm:$0xff]
  %v281 = vld [vmem:[%s3 + $0xa0] sm:$0xff]
  %v282 = vld [vmem:[%s3 + $0xa8] sm:$0xff]
  %v283 = vld [vmem:[%s3 + $0xb0] sm:$0xff]
  %v284 = vld [vmem:[%s3 + $0xb8] sm:$0xff]
  %v285 = vld [vmem:[%s3 + $0xc0] sm:$0xff]
  %v286 = vld [vmem:[%s3 + $0xc8] sm:$0xff]
  %v287 = vld [vmem:[%s3 + $0xd0] sm:$0xff]
  %v288 = vld [vmem:[%s3 + $0xd8] sm:$0xff]
  %v289 = vld [vmem:[%s3 + $0xe0] sm:$0xff]
  %v290 = vld [vmem:[%s3 + $0xe8] sm:$0xff]
  %v291 = vld [vmem:[%s3 + $0xf0] sm:$0xff]
  %v292 = vld [vmem:[%s3 + $0xf8] sm:$0xff]
  %v293 = vld [vmem:[%s3 + $0x100] sm:$0xff]
  %v294 = vld [vmem:[%s3 + $0x108] sm:$0xff]
  %v295 = vld [vmem:[%s3 + $0x110] sm:$0xff]
  %v296 = vld [vmem:[%s3 + $0x118] sm:$0xff]
  %v297 = vld [vmem:[%s3 + $0x120] sm:$0xff]
  %v298 = vld [vmem:[%s3 + $0x128] sm:$0xff]
  %v299 = vld [vmem:[%s3 + $0x130] sm:$0xff]
  %v300 = vld [vmem:[%s3 + $0x138] sm:$0xff]
  %v301 = vld [vmem:[%s3 + $0x140] sm:$0xff]
  %v302 = vld [vmem:[%s3 + $0x148] sm:$0xff]
  %v303 = vld [vmem:[%s3 + $0x150] sm:$0xff]
  %v304 = vld [vmem:[%s3 + $0x158] sm:$0xff]
  %v305 = vld [vmem:[%s3 + $0x160] sm:$0xff]
  %v306 = vld [vmem:[%s3 + $0x168] sm:$0xff]
  %v307 = vld [vmem:[%s3 + $0x170] sm:$0xff]
  %v308 = vld [vmem:[%s3 + $0x178] sm:$0xff]
  %v309 = vld [vmem:[%s3 + $0x180] sm:$0xff]
  %v310 = vld [vmem:[%s3 + $0x188] sm:$0xff]
  %v311 = vld [vmem:[%s3 + $0x190] sm:$0xff]
  %v312 = vld [vmem:[%s3 + $0x198] sm:$0xff]
  %v313 = vld [vmem:[%s3 + $0x1a0] sm:$0xff]
  %v314 = vld [vmem:[%s3 + $0x1a8] sm:$0xff]
  %v315 = vld [vmem:[%s3 + $0x1b0] sm:$0xff]
  %v316 = vld [vmem:[%s3 + $0x1b8] sm:$0xff]
  %v317 = vld [vmem:[%s3 + $0x1c0] sm:$0xff]
  %v318 = vld [vmem:[%s3 + $0x1c8] sm:$0xff]
  %v319 = vld [vmem:[%s3 + $0x1d0] sm:$0xff]
  %v320 = vld [vmem:[%s3 + $0x1d8] sm:$0xff]
  %v321 = vld [vmem:[%s3 + $0x1e0] sm:$0xff]
  %v322 = vld [vmem:[%s3 + $0x1e8] sm:$0xff]
  %v323 = vld [vmem:[%s3 + $0x1f0] sm:$0xff]
  %v324 = vld [vmem:[%s3 + $0x1f8] sm:$0xff]
  %v325 = vld [vmem:[%s3 + $0x200] sm:$0xff]
  %v326 = vld [vmem:[%s3 + $0x208] sm:$0xff]
  %v327 = vld [vmem:[%s3 + $0x210] sm:$0xff]
  %v328 = vld [vmem:[%s3 + $0x218] sm:$0xff]
  %v329 = vld [vmem:[%s3 + $0x220] sm:$0xff]
  %v330 = vld [vmem:[%s3 + $0x228] sm:$0xff]
  %v331 = vld [vmem:[%s3 + $0x230] sm:$0xff]
  %v332 = vld [vmem:[%s3 + $0x238] sm:$0xff]
  %v333 = vld [vmem:[%s3 + $0x240] sm:$0xff]
  %v334 = vld [vmem:[%s3 + $0x248] sm:$0xff]
  %v335 = vld [vmem:[%s3 + $0x250] sm:$0xff]
  %v336 = vld [vmem:[%s3 + $0x258] sm:$0xff]
  %v337 = vld [vmem:[%s3 + $0x260] sm:$0xff]
  %v338 = vld [vmem:[%s3 + $0x268] sm:$0xff]
  %v339 = vld [vmem:[%s3 + $0x270] sm:$0xff]
  %v340 = vld [vmem:[%s3 + $0x278] sm:$0xff]
  %v341 = vld [vmem:[%s3 + $0x280] sm:$0xff]
  %v342 = vld [vmem:[%s3 + $0x288] sm:$0xff]
  %v343 = vld [vmem:[%s3 + $0x290] sm:$0xff]
  %v344 = vld [vmem:[%s3 + $0x298] sm:$0xff]
  %v345 = vld [vmem:[%s3 + $0x2a0] sm:$0xff]
  %v346 = vld [vmem:[%s3 + $0x2a8] sm:$0xff]
  %v347 = vld [vmem:[%s3 + $0x2b0] sm:$0xff]
  %v348 = vld [vmem:[%s3 + $0x2b8] sm:$0xff]
  %v349 = vld [vmem:[%s3 + $0x2c0] sm:$0xff]
  %v350 = vld [vmem:[%s3 + $0x2c8] sm:$0xff]
  %v351 = vld [vmem:[%s3 + $0x2d0] sm:$0xff]
  %v352 = vld [vmem:[%s3 + $0x2d8] sm:$0xff]
  %v353 = vld [vmem:[%s3 + $0x2e0] sm:$0xff]
  %v354 = vld [vmem:[%s3 + $0x2e8] sm:$0xff]
  %v355 = vld [vmem:[%s3 + $0x2f0] sm:$0xff]
  %v356 = vld [vmem:[%s3 + $0x2f8] sm:$0xff]
  %v357 = vld [vmem:[%s3 + $0x300] sm:$0xff]
  %v358 = vld [vmem:[%s3 + $0x308] sm:$0xff]
  %v359 = vld [vmem:[%s3 + $0x310] sm:$0xff]
  %v360 = vld [vmem:[%s3 + $0x318] sm:$0xff]
  %v361 = vld [vmem:[%s3 + $0x320] sm:$0xff]
  %v362 = vld [vmem:[%s3 + $0x328] sm:$0xff]
  %v363 = vld [vmem:[%s3 + $0x330] sm:$0xff]
  %v364 = vld [vmem:[%s3 + $0x338] sm:$0xff]
  %v365 = vld [vmem:[%s3 + $0x340] sm:$0xff]
  %v366 = vld [vmem:[%s3 + $0x348] sm:$0xff]
  %v367 = vld [vmem:[%s3 + $0x350] sm:$0xff]
  %v368 = vld [vmem:[%s3 + $0x358] sm:$0xff]
  %v369 = vld [vmem:[%s3 + $0x360] sm:$0xff]
  %v370 = vld [vmem:[%s3 + $0x368] sm:$0xff]
  %v371 = vld [vmem:[%s3 + $0x370] sm:$0xff]
  %v372 = vld [vmem:[%s3 + $0x378] sm:$0xff]
  %v373 = vld [vmem:[%s3 + $0x380] sm:$0xff]
  %v374 = vld [vmem:[%s3 + $0x388] sm:$0xff]
  %v375 = vld [vmem:[%s3 + $0x390] sm:$0xff]
  %v376 = vld [vmem:[%s3 + $0x398] sm:$0xff]
  %v377 = vld [vmem:[%s3 + $0x3a0] sm:$0xff]
  %v378 = vld [vmem:[%s3 + $0x3a8] sm:$0xff]
  %v379 = vld [vmem:[%s3 + $0x3b0] sm:$0xff]
  %v380 = vld [vmem:[%s3 + $0x3b8] sm:$0xff]
  %v381 = vld [vmem:[%s3 + $0x3c0] sm:$0xff]
  %v382 = vld [vmem:[%s3 + $0x3c8] sm:$0xff]
  %v383 = vld [vmem:[%s3 + $0x3d0] sm:$0xff]
  %v384 = vld [vmem:[%s3 + $0x3d8] sm:$0xff]
  %v385 = vld [vmem:[%s3 + $0x3e0] sm:$0xff]
  %v386 = vld [vmem:[%s3 + $0x3e8] sm:$0xff]
  %v387 = vld [vmem:[%s3 + $0x3f0] sm:$0xff]
  %v388 = vld [vmem:[%s3 + $0x3f8] sm:$0xff]
  %v389 = vld [vmem:[%s3 + $0x400] sm:$0xff]
  %v390 = vld [vmem:[%s3 + $0x408] sm:$0xff]
  %v391 = vld [vmem:[%s3 + $0x410] sm:$0xff]
  %v392 = vld [vmem:[%s3 + $0x418] sm:$0xff]
  %v393 = vld [vmem:[%s3 + $0x420] sm:$0xff]
  %v394 = vld [vmem:[%s3 + $0x428] sm:$0xff]
  %v395 = vld [vmem:[%s3 + $0x430] sm:$0xff]
  %v396 = vld [vmem:[%s3 + $0x438] sm:$0xff]
  %v397 = vld [vmem:[%s3 + $0x440] sm:$0xff]
  %v398 = vld [vmem:[%s3 + $0x448] sm:$0xff]
  %v399 = vld [vmem:[%s3 + $0x450] sm:$0xff]
  %v400 = vld [vmem:[%s3 + $0x458] sm:$0xff]
  %v401 = vld [vmem:[%s3 + $0x460] sm:$0xff]
  %v402 = vld [vmem:[%s3 + $0x468] sm:$0xff]
  %v403 = vld [vmem:[%s3 + $0x470] sm:$0xff]
  %v404 = vld [vmem:[%s3 + $0x478] sm:$0xff]
  %v405 = vld [vmem:[%s3 + $0x480] sm:$0xff]
  %v406 = vld [vmem:[%s3 + $0x488] sm:$0xff]
  %v407 = vld [vmem:[%s3 + $0x490] sm:$0xff]
  %v408 = vld [vmem:[%s3 + $0x498] sm:$0xff]
  %v409 = vld [vmem:[%s3 + $0x4a0] sm:$0xff]
  %v410 = vld [vmem:[%s3 + $0x4a8] sm:$0xff]
  %v411 = vld [vmem:[%s3 + $0x4b0] sm:$0xff]
  %v412 = vld [vmem:[%s3 + $0x4b8] sm:$0xff]
  %v413 = vld [vmem:[%s3 + $0x4c0] sm:$0xff]
  %v414 = vld [vmem:[%s3 + $0x4c8] sm:$0xff]
  %v415 = vld [vmem:[%s3 + $0x4d0] sm:$0xff]
  %v416 = vld [vmem:[%s3 + $0x4d8] sm:$0xff]
  %v417 = vld [vmem:[%s3 + $0x4e0] sm:$0xff]
  %v418 = vld [vmem:[%s3 + $0x4e8] sm:$0xff]
  %v419 = vld [vmem:[%s3 + $0x4f0] sm:$0xff]
  %v420 = vld [vmem:[%s3 + $0x4f8] sm:$0xff]
  %v421 = vld [vmem:[%s3 + $0x500] sm:$0xff]
  %v422 = vld [vmem:[%s3 + $0x508] sm:$0xff]
  %v423 = vld [vmem:[%s3 + $0x510] sm:$0xff]
  %v424 = vld [vmem:[%s3 + $0x518] sm:$0xff]
  %v425 = vld [vmem:[%s3 + $0x520] sm:$0xff]
  %v426 = vld [vmem:[%s3 + $0x528] sm:$0xff]
  %v427 = vld [vmem:[%s3 + $0x530] sm:$0xff]
  %v428 = vld [vmem:[%s3 + $0x538] sm:$0xff]
  %v429 = vld [vmem:[%s3 + $0x540] sm:$0xff]
  %v430 = vld [vmem:[%s3 + $0x548] sm:$0xff]
  %v431 = vld [vmem:[%s3 + $0x550] sm:$0xff]
  %v432 = vld [vmem:[%s3 + $0x558] sm:$0xff]
  %v433 = vld [vmem:[%s3 + $0x560] sm:$0xff]
  %v434 = vld [vmem:[%s3 + $0x568] sm:$0xff]
  %v435 = vld [vmem:[%s3 + $0x570] sm:$0xff]
  %v436 = vld [vmem:[%s3 + $0x578] sm:$0xff]
  %v437 = vld [vmem:[%s3 + $0x580] sm:$0xff]
  %v438 = vld [vmem:[%s3 + $0x588] sm:$0xff]
  %v439 = vld [vmem:[%s3 + $0x590] sm:$0xff]
  %v440 = vld [vmem:[%s3 + $0x598] sm:$0xff]
  %v441 = vld [vmem:[%s3 + $0x5a0] sm:$0xff]
  %v442 = vld [vmem:[%s3 + $0x5a8] sm:$0xff]
  %v443 = vld [vmem:[%s3 + $0x5b0] sm:$0xff]
  %v444 = vld [vmem:[%s3 + $0x5b8] sm:$0xff]
  %v445 = vld [vmem:[%s3 + $0x5c0] sm:$0xff]
  %v446 = vld [vmem:[%s3 + $0x5c8] sm:$0xff]
  %v447 = vld [vmem:[%s3 + $0x5d0] sm:$0xff]
  %v448 = vld [vmem:[%s3 + $0x5d8] sm:$0xff]
  %v449 = vld [vmem:[%s3 + $0x5e0] sm:$0xff]
  %v450 = vld [vmem:[%s3 + $0x5e8] sm:$0xff]
  %v451 = vld [vmem:[%s3 + $0x5f0] sm:$0xff]
  %v452 = vld [vmem:[%s3 + $0x5f8] sm:$0xff]
  %v453 = vld [vmem:[%s3 + $0x600] sm:$0xff]
  %v454 = vld [vmem:[%s3 + $0x608] sm:$0xff]
  %v455 = vld [vmem:[%s3 + $0x610] sm:$0xff]
  %v456 = vld [vmem:[%s3 + $0x618] sm:$0xff]
  %v457 = vld [vmem:[%s3 + $0x620] sm:$0xff]
  %v458 = vld [vmem:[%s3 + $0x628] sm:$0xff]
  %v459 = vld [vmem:[%s3 + $0x630] sm:$0xff]
  %v460 = vld [vmem:[%s3 + $0x638] sm:$0xff]
  %v461 = vld [vmem:[%s3 + $0x640] sm:$0xff]
  %v462 = vld [vmem:[%s3 + $0x648] sm:$0xff]
  %v463 = vld [vmem:[%s3 + $0x650] sm:$0xff]
  %v464 = vld [vmem:[%s3 + $0x658] sm:$0xff]
  %v465 = vld [vmem:[%s3 + $0x660] sm:$0xff]
  %v466 = vld [vmem:[%s3 + $0x668] sm:$0xff]
  %v467 = vld [vmem:[%s3 + $0x670] sm:$0xff]
  %v468 = vld [vmem:[%s3 + $0x678] sm:$0xff]
  %v469 = vld [vmem:[%s3 + $0x680] sm:$0xff]
  %v470 = vld [vmem:[%s3 + $0x688] sm:$0xff]
  %v471 = vld [vmem:[%s3 + $0x690] sm:$0xff]
  %v472 = vld [vmem:[%s3 + $0x698] sm:$0xff]
  %v473 = vld [vmem:[%s3 + $0x6a0] sm:$0xff]
  %v474 = vld [vmem:[%s3 + $0x6a8] sm:$0xff]
  %v475 = vld [vmem:[%s3 + $0x6b0] sm:$0xff]
  %v476 = vld [vmem:[%s3 + $0x6b8] sm:$0xff]
  %v477 = vld [vmem:[%s3 + $0x6c0] sm:$0xff]
  %v478 = vld [vmem:[%s3 + $0x6c8] sm:$0xff]
  %v479 = vld [vmem:[%s3 + $0x6d0] sm:$0xff]
  %v480 = vld [vmem:[%s3 + $0x6d8] sm:$0xff]
  %v481 = vld [vmem:[%s3 + $0x6e0] sm:$0xff]
  %v482 = vld [vmem:[%s3 + $0x6e8] sm:$0xff]
  %v483 = vld [vmem:[%s3 + $0x6f0] sm:$0xff]
  %v484 = vld [vmem:[%s3 + $0x6f8] sm:$0xff]
  %v485 = vld [vmem:[%s3 + $0x700] sm:$0xff]
  %v486 = vld [vmem:[%s3 + $0x708] sm:$0xff]
  %v487 = vld [vmem:[%s3 + $0x710] sm:$0xff]
  %v488 = vld [vmem:[%s3 + $0x718] sm:$0xff]
  %v489 = vld [vmem:[%s3 + $0x720] sm:$0xff]
  %v490 = vld [vmem:[%s3 + $0x728] sm:$0xff]
  %v491 = vld [vmem:[%s3 + $0x730] sm:$0xff]
  %v492 = vld [vmem:[%s3 + $0x738] sm:$0xff]
  %v493 = vld [vmem:[%s3 + $0x740] sm:$0xff]
  %v494 = vld [vmem:[%s3 + $0x748] sm:$0xff]
  %v495 = vld [vmem:[%s3 + $0x750] sm:$0xff]
  %v496 = vld [vmem:[%s3 + $0x758] sm:$0xff]
  %v497 = vld [vmem:[%s3 + $0x760] sm:$0xff]
  %v498 = vld [vmem:[%s3 + $0x768] sm:$0xff]
  %v499 = vld [vmem:[%s3 + $0x770] sm:$0xff]
  %v500 = vld [vmem:[%s3 + $0x778] sm:$0xff]
  %v501 = vld [vmem:[%s3 + $0x780] sm:$0xff]
  %v502 = vld [vmem:[%s3 + $0x788] sm:$0xff]
  %v503 = vld [vmem:[%s3 + $0x790] sm:$0xff]
  %v504 = vld [vmem:[%s3 + $0x798] sm:$0xff]
  %v505 = vld [vmem:[%s3 + $0x7a0] sm:$0xff]
  %v506 = vld [vmem:[%s3 + $0x7a8] sm:$0xff]
  %v507 = vld [vmem:[%s3 + $0x7b0] sm:$0xff]
  %v508 = vld [vmem:[%s3 + $0x7b8] sm:$0xff]
  %v509 = vld [vmem:[%s3 + $0x7c0] sm:$0xff]
  %v510 = vld [vmem:[%s3 + $0x7c8] sm:$0xff]
  %v511 = vld [vmem:[%s3 + $0x7d0] sm:$0xff]
  %v512 = vld [vmem:[%s3 + $0x7d8] sm:$0xff]
  %v513 = vld [vmem:[%s3 + $0x7e0] sm:$0xff]
  %v514 = vld [vmem:[%s3 + $0x7e8] sm:$0xff]
  %v515 = vld [vmem:[%s3 + $0x7f0] sm:$0xff]
  %v516 = vld [vmem:[%s3 + $0x7f8] sm:$0xff]
  %v517 = vld [vmem:[%s4] sm:$0xf]
  %v519 = vlaneseq
  %v520 = vshrl.u32 %v519, 7
  %v521 = vsub.s32 0, %v520
  %v522 = vrot.slane %v517, %v521
  %v523 = vlaneseq
  %v524 = vshrl.u32 %v523, 7
  %v525 = vsub.s32 1, %v524
  %v526 = vrot.slane %v517, %v525
  %v527 = vlaneseq
  %v528 = vshrl.u32 %v527, 7
  %v529 = vsub.s32 2, %v528
  %v530 = vrot.slane %v517, %v529
  %v531 = vlaneseq
  %v532 = vshrl.u32 %v531, 7
  %v533 = vsub.s32 3, %v532
  %v534 = vrot.slane %v517, %v533
  %539 = vmatprep.subr.mxu0 %v262
  %540 = vmatpush1.msra.mxu0 %v261
  %541 = vmatprep.subr.mxu0 %v266
  %542 = vmatpush1.msra.mxu0 %v265
  %543 = vmatprep.subr.mxu0 %v270
  %544 = vmatpush1.msra.mxu0 %v269
  %545 = vmatprep.subr.mxu0 %v274
  %546 = vmatpush1.msra.mxu0 %v273
  %547 = vmatprep.subr.mxu0 %v278
  %548 = vmatpush1.msra.mxu0 %v277
  %549 = vmatprep.subr.mxu0 %v282
  %550 = vmatpush1.msra.mxu0 %v281
  %551 = vmatprep.subr.mxu0 %v286
  %552 = vmatpush1.msra.mxu0 %v285
  %553 = vmatprep.subr.mxu0 %v290
  %554 = vmatpush1.msra.mxu0 %v289
  %555 = vmatprep.subr.mxu0 %v294
  %556 = vmatpush1.msra.mxu0 %v293
  %557 = vmatprep.subr.mxu0 %v298
  %558 = vmatpush1.msra.mxu0 %v297
  %559 = vmatprep.subr.mxu0 %v302
  %560 = vmatpush1.msra.mxu0 %v301
  %561 = vmatprep.subr.mxu0 %v306
  %562 = vmatpush1.msra.mxu0 %v305
  %563 = vmatprep.subr.mxu0 %v310
  %564 = vmatpush1.msra.mxu0 %v309
  %565 = vmatprep.subr.mxu0 %v314
  %566 = vmatpush1.msra.mxu0 %v313
  %567 = vmatprep.subr.mxu0 %v318
  %568 = vmatpush1.msra.mxu0 %v317
  %569 = vmatprep.subr.mxu0 %v322
  %570 = vmatpush1.msra.mxu0 %v321
  %571 = vmatprep.subr.mxu0 %v326
  %572 = vmatpush1.msra.mxu0 %v325
  %573 = vmatprep.subr.mxu0 %v330
  %574 = vmatpush1.msra.mxu0 %v329
  %575 = vmatprep.subr.mxu0 %v334
  %576 = vmatpush1.msra.mxu0 %v333
  %577 = vmatprep.subr.mxu0 %v338
  %578 = vmatpush1.msra.mxu0 %v337
  %579 = vmatprep.subr.mxu0 %v342
  %580 = vmatpush1.msra.mxu0 %v341
  %581 = vmatprep.subr.mxu0 %v346
  %582 = vmatpush1.msra.mxu0 %v345
  %583 = vmatprep.subr.mxu0 %v350
  %584 = vmatpush1.msra.mxu0 %v349
  %585 = vmatprep.subr.mxu0 %v354
  %586 = vmatpush1.msra.mxu0 %v353
  %587 = vmatprep.subr.mxu0 %v358
  %588 = vmatpush1.msra.mxu0 %v357
  %589 = vmatprep.subr.mxu0 %v362
  %590 = vmatpush1.msra.mxu0 %v361
  %591 = vmatprep.subr.mxu0 %v366
  %592 = vmatpush1.msra.mxu0 %v365
  %593 = vmatprep.subr.mxu0 %v370
  %594 = vmatpush1.msra.mxu0 %v369
  %595 = vmatprep.subr.mxu0 %v374
  %596 = vmatpush1.msra.mxu0 %v373
  %597 = vmatprep.subr.mxu0 %v378
  %598 = vmatpush1.msra.mxu0 %v377
  %599 = vmatprep.subr.mxu0 %v382
  %600 = vmatpush1.msra.mxu0 %v381
  %601 = vmatprep.subr.mxu0 %v386
  %602 = vmatpush1.msra.mxu0 %v385
  %603 = vmatprep.mubr.f32.mxu0 %v254
  %604 = vmatmul.mubr.f32.gmra.mrb[0].mxu0 %v253
  %v605 = vpop.f32.mrb[0].mxu0
  %v606 = vadd.f32 %v522, %v605
  %v607 = vpop.f32.mrb[0].mxu0
  %v608 = vadd.f32 %v526, %v607
  %609 = vmatprep.mubr.f32.mxu0 %v258
  %610 = vmatmul.mubr.f32.gmra.mrb[0].mxu0 %v257
  %v611 = vpop.f32.mrb[0].mxu0
  %v612 = vadd.f32 %v522, %v611
  %v613 = vpop.f32.mrb[0].mxu0
  %v614 = vadd.f32 %v526, %v613
  %615 = vdwg.mxu0
  %616 = vmatprep.subr.mxu0 %v390
  %617 = vmatpush1.msra.mxu0 %v389
  %618 = vmatprep.subr.mxu0 %v394
  %619 = vmatpush1.msra.mxu0 %v393
  %620 = vmatprep.subr.mxu0 %v398
  %621 = vmatpush1.msra.mxu0 %v397
  %622 = vmatprep.subr.mxu0 %v402
  %623 = vmatpush1.msra.mxu0 %v401
  %624 = vmatprep.subr.mxu0 %v406
  %625 = vmatpush1.msra.mxu0 %v405
  %626 = vmatprep.subr.mxu0 %v410
  %627 = vmatpush1.msra.mxu0 %v409
  %628 = vmatprep.subr.mxu0 %v414
  %629 = vmatpush1.msra.mxu0 %v413
  %630 = vmatprep.subr.mxu0 %v418
  %631 = vmatpush1.msra.mxu0 %v417
  %632 = vmatprep.subr.mxu0 %v422
  %633 = vmatpush1.msra.mxu0 %v421
  %634 = vmatprep.subr.mxu0 %v426
  %635 = vmatpush1.msra.mxu0 %v425
  %636 = vmatprep.subr.mxu0 %v430
  %637 = vmatpush1.msra.mxu0 %v429
  %638 = vmatprep.subr.mxu0 %v434
  %639 = vmatpush1.msra.mxu0 %v433
  %640 = vmatprep.subr.mxu0 %v438
  %641 = vmatpush1.msra.mxu0 %v437
  %642 = vmatprep.subr.mxu0 %v442
  %643 = vmatpush1.msra.mxu0 %v441
  %644 = vmatprep.subr.mxu0 %v446
  %645 = vmatpush1.msra.mxu0 %v445
  %646 = vmatprep.subr.mxu0 %v450
  %647 = vmatpush1.msra.mxu0 %v449
  %648 = vmatprep.subr.mxu0 %v454
  %649 = vmatpush1.msra.mxu0 %v453
  %650 = vmatprep.subr.mxu0 %v458
  %651 = vmatpush1.msra.mxu0 %v457
  %652 = vmatprep.subr.mxu0 %v462
  %653 = vmatpush1.msra.mxu0 %v461
  %654 = vmatprep.subr.mxu0 %v466
  %655 = vmatpush1.msra.mxu0 %v465
  %656 = vmatprep.subr.mxu0 %v470
  %657 = vmatpush1.msra.mxu0 %v469
  %658 = vmatprep.subr.mxu0 %v474
  %659 = vmatpush1.msra.mxu0 %v473
  %660 = vmatprep.subr.mxu0 %v478
  %661 = vmatpush1.msra.mxu0 %v477
  %662 = vmatprep.subr.mxu0 %v482
  %663 = vmatpush1.msra.mxu0 %v481
  %664 = vmatprep.subr.mxu0 %v486
  %665 = vmatpush1.msra.mxu0 %v485
  %666 = vmatprep.subr.mxu0 %v490
  %667 = vmatpush1.msra.mxu0 %v489
  %668 = vmatprep.subr.mxu0 %v494
  %669 = vmatpush1.msra.mxu0 %v493
  %670 = vmatprep.subr.mxu0 %v498
  %671 = vmatpush1.msra.mxu0 %v497
  %672 = vmatprep.subr.mxu0 %v502
  %673 = vmatpush1.msra.mxu0 %v501
  %674 = vmatprep.subr.mxu0 %v506
  %675 = vmatpush1.msra.mxu0 %v505
  %676 = vmatprep.subr.mxu0 %v510
  %677 = vmatpush1.msra.mxu0 %v509
  %678 = vmatprep.subr.mxu0 %v514
  %679 = vmatpush1.msra.mxu0 %v513
  %680 = vmatprep.mubr.f32.mxu0 %v256
  %681 = vmatmul.mubr.f32.gmra.mrb[0].mxu0 %v255
  %v682 = vpop.f32.mrb[0].mxu0
  %v683 = vadd.f32 %v606, %v682
  %v684 = vpop.f32.mrb[0].mxu0
  %v685 = vadd.f32 %v608, %v684
  %686 = vmatprep.mubr.f32.mxu0 %v260
  %687 = vmatmul.mubr.f32.gmra.mrb[0].mxu0 %v259
  %v688 = vpop.f32.mrb[0].mxu0
  %v689 = vadd.f32 %v612, %v688
  %v690 = vpop.f32.mrb[0].mxu0
  %v691 = vadd.f32 %v614, %v690
  %692 = vdwg.mxu0
  %693 = vmatprep.subr.mxu0 %v264
  %694 = vmatpush1.msra.mxu0 %v263
  %695 = vmatprep.subr.mxu0 %v268
  %696 = vmatpush1.msra.mxu0 %v267
  %697 = vmatprep.subr.mxu0 %v272
  %698 = vmatpush1.msra.mxu0 %v271
  %699 = vmatprep.subr.mxu0 %v276
  %700 = vmatpush1.msra.mxu0 %v275
  %701 = vmatprep.subr.mxu0 %v280
  %702 = vmatpush1.msra.mxu0 %v279
  %703 = vmatprep.subr.mxu0 %v284
  %704 = vmatpush1.msra.mxu0 %v283
  %705 = vmatprep.subr.mxu0 %v288
  %706 = vmatpush1.msra.mxu0 %v287
  %707 = vmatprep.subr.mxu0 %v292
  %708 = vmatpush1.msra.mxu0 %v291
  %709 = vmatprep.subr.mxu0 %v296
  %710 = vmatpush1.msra.mxu0 %v295
  %711 = vmatprep.subr.mxu0 %v300
  %712 = vmatpush1.msra.mxu0 %v299
  %713 = vmatprep.subr.mxu0 %v304
  %714 = vmatpush1.msra.mxu0 %v303
  %715 = vmatprep.subr.mxu0 %v308
  %716 = vmatpush1.msra.mxu0 %v307
  %717 = vmatprep.subr.mxu0 %v312
  %718 = vmatpush1.msra.mxu0 %v311
  %719 = vmatprep.subr.mxu0 %v316
  %720 = vmatpush1.msra.mxu0 %v315
  %721 = vmatprep.subr.mxu0 %v320
  %722 = vmatpush1.msra.mxu0 %v319
  %723 = vmatprep.subr.mxu0 %v324
  %724 = vmatpush1.msra.mxu0 %v323
  %725 = vmatprep.subr.mxu0 %v328
  %726 = vmatpush1.msra.mxu0 %v327
  %727 = vmatprep.subr.mxu0 %v332
  %728 = vmatpush1.msra.mxu0 %v331
  %729 = vmatprep.subr.mxu0 %v336
  %730 = vmatpush1.msra.mxu0 %v335
  %731 = vmatprep.subr.mxu0 %v340
  %732 = vmatpush1.msra.mxu0 %v339
  %733 = vmatprep.subr.mxu0 %v344
  %734 = vmatpush1.msra.mxu0 %v343
  %735 = vmatprep.subr.mxu0 %v348
  %736 = vmatpush1.msra.mxu0 %v347
  %737 = vmatprep.subr.mxu0 %v352
  %738 = vmatpush1.msra.mxu0 %v351
  %739 = vmatprep.subr.mxu0 %v356
  %740 = vmatpush1.msra.mxu0 %v355
  %741 = vmatprep.subr.mxu0 %v360
  %742 = vmatpush1.msra.mxu0 %v359
  %743 = vmatprep.subr.mxu0 %v364
  %744 = vmatpush1.msra.mxu0 %v363
  %745 = vmatprep.subr.mxu0 %v368
  %746 = vmatpush1.msra.mxu0 %v367
  %747 = vmatprep.subr.mxu0 %v372
  %748 = vmatpush1.msra.mxu0 %v371
  %749 = vmatprep.subr.mxu0 %v376
  %750 = vmatpush1.msra.mxu0 %v375
  %751 = vmatprep.subr.mxu0 %v380
  %752 = vmatpush1.msra.mxu0 %v379
  %753 = vmatprep.subr.mxu0 %v384
  %754 = vmatpush1.msra.mxu0 %v383
  %755 = vmatprep.subr.mxu0 %v388
  %756 = vmatpush1.msra.mxu0 %v387
  %757 = vmatprep.mubr.f32.mxu0 %v254
  %758 = vmatmul.mubr.f32.gmra.mrb[0].mxu0 %v253
  %v759 = vpop.f32.mrb[0].mxu0
  %v760 = vadd.f32 %v530, %v759
  %v761 = vpop.f32.mrb[0].mxu0
  %v762 = vadd.f32 %v534, %v761
  %763 = vmatprep.mubr.f32.mxu0 %v258
  %764 = vmatmul.mubr.f32.gmra.mrb[0].mxu0 %v257
  %v765 = vpop.f32.mrb[0].mxu0
  %v766 = vadd.f32 %v530, %v765
  %v767 = vpop.f32.mrb[0].mxu0
  %v768 = vadd.f32 %v534, %v767
  %769 = vdwg.mxu0
  %770 = vmatprep.subr.mxu0 %v392
  %771 = vmatpush1.msra.mxu0 %v391
  %772 = vmatprep.subr.mxu0 %v396
  %773 = vmatpush1.msra.mxu0 %v395
  %774 = vmatprep.subr.mxu0 %v400
  %775 = vmatpush1.msra.mxu0 %v399
  %776 = vmatprep.subr.mxu0 %v404
  %777 = vmatpush1.msra.mxu0 %v403
  %778 = vmatprep.subr.mxu0 %v408
  %779 = vmatpush1.msra.mxu0 %v407
  %780 = vmatprep.subr.mxu0 %v412
  %781 = vmatpush1.msra.mxu0 %v411
  %782 = vmatprep.subr.mxu0 %v416
  %783 = vmatpush1.msra.mxu0 %v415
  %784 = vmatprep.subr.mxu0 %v420
  %785 = vmatpush1.msra.mxu0 %v419
  %786 = vmatprep.subr.mxu0 %v424
  %787 = vmatpush1.msra.mxu0 %v423
  %788 = vmatprep.subr.mxu0 %v428
  %789 = vmatpush1.msra.mxu0 %v427
  %790 = vmatprep.subr.mxu0 %v432
  %791 = vmatpush1.msra.mxu0 %v431
  %792 = vmatprep.subr.mxu0 %v436
  %793 = vmatpush1.msra.mxu0 %v435
  %794 = vmatprep.subr.mxu0 %v440
  %795 = vmatpush1.msra.mxu0 %v439
  %796 = vmatprep.subr.mxu0 %v444
  %797 = vmatpush1.msra.mxu0 %v443
  %798 = vmatprep.subr.mxu0 %v448
  %799 = vmatpush1.msra.mxu0 %v447
  %800 = vmatprep.subr.mxu0 %v452
  %801 = vmatpush1.msra.mxu0 %v451
  %802 = vmatprep.subr.mxu0 %v456
  %803 = vmatpush1.msra.mxu0 %v455
  %804 = vmatprep.subr.mxu0 %v460
  %805 = vmatpush1.msra.mxu0 %v459
  %806 = vmatprep.subr.mxu0 %v464
  %807 = vmatpush1.msra.mxu0 %v463
  %808 = vmatprep.subr.mxu0 %v468
  %809 = vmatpush1.msra.mxu0 %v467
  %810 = vmatprep.subr.mxu0 %v472
  %811 = vmatpush1.msra.mxu0 %v471
  %812 = vmatprep.subr.mxu0 %v476
  %813 = vmatpush1.msra.mxu0 %v475
  %814 = vmatprep.subr.mxu0 %v480
  %815 = vmatpush1.msra.mxu0 %v479
  %816 = vmatprep.subr.mxu0 %v484
  %817 = vmatpush1.msra.mxu0 %v483
  %818 = vmatprep.subr.mxu0 %v488
  %819 = vmatpush1.msra.mxu0 %v487
  %820 = vmatprep.subr.mxu0 %v492
  %821 = vmatpush1.msra.mxu0 %v491
  %822 = vmatprep.subr.mxu0 %v496
  %823 = vmatpush1.msra.mxu0 %v495
  %824 = vmatprep.subr.mxu0 %v500
  %825 = vmatpush1.msra.mxu0 %v499
  %826 = vmatprep.subr.mxu0 %v504
  %827 = vmatpush1.msra.mxu0 %v503
  %828 = vmatprep.subr.mxu0 %v508
  %829 = vmatpush1.msra.mxu0 %v507
  %830 = vmatprep.subr.mxu0 %v512
  %831 = vmatpush1.msra.mxu0 %v511
  %832 = vmatprep.subr.mxu0 %v516
  %833 = vmatpush1.msra.mxu0 %v515
  %834 = vmatprep.mubr.f32.mxu0 %v256
  %835 = vmatmul.mubr.f32.gmra.mrb[0].mxu0 %v255
  %v836 = vpop.f32.mrb[0].mxu0
  %v837 = vadd.f32 %v760, %v836
  %v838 = vpop.f32.mrb[0].mxu0
  %v839 = vadd.f32 %v762, %v838
  %840 = vmatprep.mubr.f32.mxu0 %v260
  %841 = vmatmul.mubr.f32.gmra.mrb[0].mxu0 %v259
  %v842 = vpop.f32.mrb[0].mxu0
  %v843 = vadd.f32 %v766, %v842
  %v844 = vpop.f32.mrb[0].mxu0
  %v845 = vadd.f32 %v768, %v844
  %846 = vdwg.mxu0
  %vm847 = vcmp.gt.f32.partialorder %v683, 0.0
  %vm848 = vcmp.gt.f32.partialorder %v685, 0.0
  %vm849 = vcmp.gt.f32.partialorder %v837, 0.0
  %vm850 = vcmp.gt.f32.partialorder %v839, 0.0
  %vm851 = vcmp.gt.f32.partialorder %v689, 0.0
  %vm852 = vcmp.gt.f32.partialorder %v691, 0.0
  %vm853 = vcmp.gt.f32.partialorder %v843, 0.0
  %vm854 = vcmp.gt.f32.partialorder %v845, 0.0
  %v855 = vmul.f32 %v683, 0.25
  %v856 = vmul.f32 %v685, 0.25
  %v857 = vmul.f32 %v837, 0.25
  %v858 = vmul.f32 %v839, 0.25
  %v859 = vmul.f32 %v689, 0.25
  %v860 = vmul.f32 %v691, 0.25
  %v861 = vmul.f32 %v843, 0.25
  %v862 = vmul.f32 %v845, 0.25
  %v863 = vsel %vm847, %v683, %v855
  %v864 = vsel %vm848, %v685, %v856
  %v865 = vsel %vm849, %v837, %v857
  %v866 = vsel %vm850, %v839, %v858
  %v867 = vsel %vm851, %v689, %v859
  %v868 = vsel %vm852, %v691, %v860
  %v869 = vsel %vm853, %v843, %v861
  %v870 = vsel %vm854, %v845, %v862
  %v871 = vld [vmem:[%s5] sm:$0xff]
  %v872 = vld [vmem:[%s5 + $0x8] sm:$0xff]
  %v873 = vld [vmem:[%s5 + $0x10] sm:$0xff]
  %v874 = vld [vmem:[%s5 + $0x18] sm:$0xff]
  %v875 = vld [vmem:[%s5 + $0x20] sm:$0xff]
  %v876 = vld [vmem:[%s5 + $0x28] sm:$0xff]
  %v877 = vld [vmem:[%s5 + $0x30] sm:$0xff]
  %v878 = vld [vmem:[%s5 + $0x38] sm:$0xff]
  %v879 = vld [vmem:[%s5 + $0x40] sm:$0xff]
  %v880 = vld [vmem:[%s5 + $0x48] sm:$0xff]
  %v881 = vld [vmem:[%s5 + $0x50] sm:$0xff]
  %v882 = vld [vmem:[%s5 + $0x58] sm:$0xff]
  %v883 = vld [vmem:[%s5 + $0x60] sm:$0xff]
  %v884 = vld [vmem:[%s5 + $0x68] sm:$0xff]
  %v885 = vld [vmem:[%s5 + $0x70] sm:$0xff]
  %v886 = vld [vmem:[%s5 + $0x78] sm:$0xff]
  %v887 = vld [vmem:[%s5 + $0x80] sm:$0xff]
  %v888 = vld [vmem:[%s5 + $0x88] sm:$0xff]
  %v889 = vld [vmem:[%s5 + $0x90] sm:$0xff]
  %v890 = vld [vmem:[%s5 + $0x98] sm:$0xff]
  %v891 = vld [vmem:[%s5 + $0xa0] sm:$0xff]
  %v892 = vld [vmem:[%s5 + $0xa8] sm:$0xff]
  %v893 = vld [vmem:[%s5 + $0xb0] sm:$0xff]
  %v894 = vld [vmem:[%s5 + $0xb8] sm:$0xff]
  %v895 = vld [vmem:[%s5 + $0xc0] sm:$0xff]
  %v896 = vld [vmem:[%s5 + $0xc8] sm:$0xff]
  %v897 = vld [vmem:[%s5 + $0xd0] sm:$0xff]
  %v898 = vld [vmem:[%s5 + $0xd8] sm:$0xff]
  %v899 = vld [vmem:[%s5 + $0xe0] sm:$0xff]
  %v900 = vld [vmem:[%s5 + $0xe8] sm:$0xff]
  %v901 = vld [vmem:[%s5 + $0xf0] sm:$0xff]
  %v902 = vld [vmem:[%s5 + $0xf8] sm:$0xff]
  %v903 = vld [vmem:[%s5 + $0x100] sm:$0xff]
  %v904 = vld [vmem:[%s5 + $0x108] sm:$0xff]
  %v905 = vld [vmem:[%s5 + $0x110] sm:$0xff]
  %v906 = vld [vmem:[%s5 + $0x118] sm:$0xff]
  %v907 = vld [vmem:[%s5 + $0x120] sm:$0xff]
  %v908 = vld [vmem:[%s5 + $0x128] sm:$0xff]
  %v909 = vld [vmem:[%s5 + $0x130] sm:$0xff]
  %v910 = vld [vmem:[%s5 + $0x138] sm:$0xff]
  %v911 = vld [vmem:[%s5 + $0x140] sm:$0xff]
  %v912 = vld [vmem:[%s5 + $0x148] sm:$0xff]
  %v913 = vld [vmem:[%s5 + $0x150] sm:$0xff]
  %v914 = vld [vmem:[%s5 + $0x158] sm:$0xff]
  %v915 = vld [vmem:[%s5 + $0x160] sm:$0xff]
  %v916 = vld [vmem:[%s5 + $0x168] sm:$0xff]
  %v917 = vld [vmem:[%s5 + $0x170] sm:$0xff]
  %v918 = vld [vmem:[%s5 + $0x178] sm:$0xff]
  %v919 = vld [vmem:[%s5 + $0x180] sm:$0xff]
  %v920 = vld [vmem:[%s5 + $0x188] sm:$0xff]
  %v921 = vld [vmem:[%s5 + $0x190] sm:$0xff]
  %v922 = vld [vmem:[%s5 + $0x198] sm:$0xff]
  %v923 = vld [vmem:[%s5 + $0x1a0] sm:$0xff]
  %v924 = vld [vmem:[%s5 + $0x1a8] sm:$0xff]
  %v925 = vld [vmem:[%s5 + $0x1b0] sm:$0xff]
  %v926 = vld [vmem:[%s5 + $0x1b8] sm:$0xff]
  %v927 = vld [vmem:[%s5 + $0x1c0] sm:$0xff]
  %v928 = vld [vmem:[%s5 + $0x1c8] sm:$0xff]
  %v929 = vld [vmem:[%s5 + $0x1d0] sm:$0xff]
  %v930 = vld [vmem:[%s5 + $0x1d8] sm:$0xff]
  %v931 = vld [vmem:[%s5 + $0x1e0] sm:$0xff]
  %v932 = vld [vmem:[%s5 + $0x1e8] sm:$0xff]
  %v933 = vld [vmem:[%s5 + $0x1f0] sm:$0xff]
  %v934 = vld [vmem:[%s5 + $0x1f8] sm:$0xff]
  %v935 = vld [vmem:[%s6] sm:$0x1]
  %v937 = vlaneseq
  %v938 = vshrl.u32 %v937, 7
  %v939 = vsub.s32 0, %v938
  %v940 = vrot.slane %v935, %v939
  %942 = vmatprep.subr.mxu0 0.0
  %943 = vmatpush1.msra.mxu0 %v871
  %944 = vmatprep.subr.mxu0 0.0
  %945 = vmatpush1.msra.mxu0 %v872
  %946 = vmatprep.subr.mxu0 0.0
  %947 = vmatpush1.msra.mxu0 %v873
  %948 = vmatprep.subr.mxu0 0.0
  %949 = vmatpush1.msra.mxu0 %v874
  %950 = vmatprep.subr.mxu0 0.0
  %951 = vmatpush1.msra.mxu0 %v875
  %952 = vmatprep.subr.mxu0 0.0
  %953 = vmatpush1.msra.mxu0 %v876
  %954 = vmatprep.subr.mxu0 0.0
  %955 = vmatpush1.msra.mxu0 %v877
  %956 = vmatprep.subr.mxu0 0.0
  %957 = vmatpush1.msra.mxu0 %v878
  %958 = vmatprep.subr.mxu0 0.0
  %959 = vmatpush1.msra.mxu0 %v879
  %960 = vmatprep.subr.mxu0 0.0
  %961 = vmatpush1.msra.mxu0 %v880
  %962 = vmatprep.subr.mxu0 0.0
  %963 = vmatpush1.msra.mxu0 %v881
  %964 = vmatprep.subr.mxu0 0.0
  %965 = vmatpush1.msra.mxu0 %v882
  %966 = vmatprep.subr.mxu0 0.0
  %967 = vmatpush1.msra.mxu0 %v883
  %968 = vmatprep.subr.mxu0 0.0
  %969 = vmatpush1.msra.mxu0 %v884
  %970 = vmatprep.subr.mxu0 0.0
  %971 = vmatpush1.msra.mxu0 %v885
  %972 = vmatprep.subr.mxu0 0.0
  %973 = vmatpush1.msra.mxu0 %v886
  %974 = vmatprep.subr.mxu0 0.0
  %975 = vmatpush1.msra.mxu0 %v887
  %976 = vmatprep.subr.mxu0 0.0
  %977 = vmatpush1.msra.mxu0 %v888
  %978 = vmatprep.subr.mxu0 0.0
  %979 = vmatpush1.msra.mxu0 %v889
  %980 = vmatprep.subr.mxu0 0.0
  %981 = vmatpush1.msra.mxu0 %v890
  %982 = vmatprep.subr.mxu0 0.0
  %983 = vmatpush1.msra.mxu0 %v891
  %984 = vmatprep.subr.mxu0 0.0
  %985 = vmatpush1.msra.mxu0 %v892
  %986 = vmatprep.subr.mxu0 0.0
  %987 = vmatpush1.msra.mxu0 %v893
  %988 = vmatprep.subr.mxu0 0.0
  %989 = vmatpush1.msra.mxu0 %v894
  %990 = vmatprep.subr.mxu0 0.0
  %991 = vmatpush1.msra.mxu0 %v895
  %992 = vmatprep.subr.mxu0 0.0
  %993 = vmatpush1.msra.mxu0 %v896
  %994 = vmatprep.subr.mxu0 0.0
  %995 = vmatpush1.msra.mxu0 %v897
  %996 = vmatprep.subr.mxu0 0.0
  %997 = vmatpush1.msra.mxu0 %v898
  %998 = vmatprep.subr.mxu0 0.0
  %999 = vmatpush1.msra.mxu0 %v899
  %1000 = vmatprep.subr.mxu0 0.0
  %1001 = vmatpush1.msra.mxu0 %v900
  %1002 = vmatprep.subr.mxu0 0.0
  %1003 = vmatpush1.msra.mxu0 %v901
  %1004 = vmatprep.subr.mxu0 0.0
  %1005 = vmatpush1.msra.mxu0 %v902
  %1006 = vmatprep.mubr.f32.mxu0 %v864
  %1007 = vmatmul.mubr.f32.gmra.mrb[0].mxu0 %v863
  %v1008 = vpop.f32.mrb[0].mxu0
  %v1009 = vadd.f32 %v940, %v1008
  %v1010 = vpop.f32.mrb[0].mxu0
  %1011 = vmatprep.mubr.f32.mxu0 %v868
  %1012 = vmatmul.mubr.f32.gmra.mrb[0].mxu0 %v867
  %v1013 = vpop.f32.mrb[0].mxu0
  %v1014 = vadd.f32 %v940, %v1013
  %v1015 = vpop.f32.mrb[0].mxu0
  %1016 = vdwg.mxu0
  %1017 = vmatprep.subr.mxu0 0.0
  %1018 = vmatpush1.msra.mxu0 %v903
  %1019 = vmatprep.subr.mxu0 0.0
  %1020 = vmatpush1.msra.mxu0 %v904
  %1021 = vmatprep.subr.mxu0 0.0
  %1022 = vmatpush1.msra.mxu0 %v905
  %1023 = vmatprep.subr.mxu0 0.0
  %1024 = vmatpush1.msra.mxu0 %v906
  %1025 = vmatprep.subr.mxu0 0.0
  %1026 = vmatpush1.msra.mxu0 %v907
  %1027 = vmatprep.subr.mxu0 0.0
  %1028 = vmatpush1.msra.mxu0 %v908
  %1029 = vmatprep.subr.mxu0 0.0
  %1030 = vmatpush1.msra.mxu0 %v909
  %1031 = vmatprep.subr.mxu0 0.0
  %1032 = vmatpush1.msra.mxu0 %v910
  %1033 = vmatprep.subr.mxu0 0.0
  %1034 = vmatpush1.msra.mxu0 %v911
  %1035 = vmatprep.subr.mxu0 0.0
  %1036 = vmatpush1.msra.mxu0 %v912
  %1037 = vmatprep.subr.mxu0 0.0
  %1038 = vmatpush1.msra.mxu0 %v913
  %1039 = vmatprep.subr.mxu0 0.0
  %1040 = vmatpush1.msra.mxu0 %v914
  %1041 = vmatprep.subr.mxu0 0.0
  %1042 = vmatpush1.msra.mxu0 %v915
  %1043 = vmatprep.subr.mxu0 0.0
  %1044 = vmatpush1.msra.mxu0 %v916
  %1045 = vmatprep.subr.mxu0 0.0
  %1046 = vmatpush1.msra.mxu0 %v917
  %1047 = vmatprep.subr.mxu0 0.0
  %1048 = vmatpush1.msra.mxu0 %v918
  %1049 = vmatprep.subr.mxu0 0.0
  %1050 = vmatpush1.msra.mxu0 %v919
  %1051 = vmatprep.subr.mxu0 0.0
  %1052 = vmatpush1.msra.mxu0 %v920
  %1053 = vmatprep.subr.mxu0 0.0
  %1054 = vmatpush1.msra.mxu0 %v921
  %1055 = vmatprep.subr.mxu0 0.0
  %1056 = vmatpush1.msra.mxu0 %v922
  %1057 = vmatprep.subr.mxu0 0.0
  %1058 = vmatpush1.msra.mxu0 %v923
  %1059 = vmatprep.subr.mxu0 0.0
  %1060 = vmatpush1.msra.mxu0 %v924
  %1061 = vmatprep.subr.mxu0 0.0
  %1062 = vmatpush1.msra.mxu0 %v925
  %1063 = vmatprep.subr.mxu0 0.0
  %1064 = vmatpush1.msra.mxu0 %v926
  %1065 = vmatprep.subr.mxu0 0.0
  %1066 = vmatpush1.msra.mxu0 %v927
  %1067 = vmatprep.subr.mxu0 0.0
  %1068 = vmatpush1.msra.mxu0 %v928
  %1069 = vmatprep.subr.mxu0 0.0
  %1070 = vmatpush1.msra.mxu0 %v929
  %1071 = vmatprep.subr.mxu0 0.0
  %1072 = vmatpush1.msra.mxu0 %v930
  %1073 = vmatprep.subr.mxu0 0.0
  %1074 = vmatpush1.msra.mxu0 %v931
  %1075 = vmatprep.subr.mxu0 0.0
  %1076 = vmatpush1.msra.mxu0 %v932
  %1077 = vmatprep.subr.mxu0 0.0
  %1078 = vmatpush1.msra.mxu0 %v933
  %1079 = vmatprep.subr.mxu0 0.0
  %1080 = vmatpush1.msra.mxu0 %v934
  %1081 = vmatprep.mubr.f32.mxu0 %v866
  %1082 = vmatmul.mubr.f32.gmra.mrb[0].mxu0 %v865
  %v1083 = vpop.f32.mrb[0].mxu0
  %v1084 = vadd.f32 %v1009, %v1083
  %v1085 = vpop.f32.mrb[0].mxu0
  %1086 = vmatprep.mubr.f32.mxu0 %v870
  %1087 = vmatmul.mubr.f32.gmra.mrb[0].mxu0 %v869
  %v1088 = vpop.f32.mrb[0].mxu0
  %v1089 = vadd.f32 %v1014, %v1088
  %v1090 = vpop.f32.mrb[0].mxu0
  %1091 = vdwg.mxu0
  %vm1092 = vcmask 261120
  %1093 = vst.msk [vmem:[%s7] sm:$0xff] %vm1092, %v1084
  %vm1094 = vcmask 257024
  %1095 = vst.msk [vmem:[%s7 + $0x8] sm:$0xf] %vm1094, %v1089
  // Predicated region
  $region30: #{forward.7} parent=0 // pred_check
    _
  $region31: #{forward.7} parent=0 // pred_check_branch
    %1097 = sbr.rel (0) target = $region33
  $region32: #{forward.7} parent=0 // pred_region
    _
  $region33: #{forward.7} parent=0 // pred_fallthru
    _
  // Predicated region
  $region34: #{forward.7} parent=0 // pred_check
    _
  $region35: #{forward.7} parent=0 // pred_check_branch
    %1099 = sbr.rel (0) target = $region37
  $region36: #{forward.7} parent=0 // pred_region
    _
  $region37: #{forward.7} parent=0 // pred_fallthru
    _

</llo_original>
